<compile_context>
chip_gen: v7x
topology: tpu7x:2x2x1
jax: 0.10.0
libtpu: 0.0.40
codegen_flags: <defaults>
</compile_context>

<pallas_src>
import functools

import jax
import jax.numpy as jnp
from jax.experimental import pallas as pl
from jax.experimental.pallas import tpu as pltpu

KSIZE = 5     # conv kernel size (all three layers)
STRIDE = 2    # conv stride (all three layers)
BN_EPS = 1e-5


def conv2d_size_out(size, kernel_size=KSIZE, stride=STRIDE):
    return (size - (kernel_size - 1) - 1) // stride + 1


def _cdiv(a, b):
    return -(-a // b)


# ----------------------------------------------------------------------------- kernel

def _conv_bn_relu_layer(in_ref, out_ref, wr_ref, g_ref, be_ref, pool_ref, bcast_ref,
                        *, n_batch, n_in_slabs, n_out_slabs, oh, ow, cout, eps):
    """One [conv5x5/s2 + BatchNorm(batch stats) + ReLU] layer, fully VMEM-resident.

    in_ref   : [n_in_slabs,  *, Win*Cin]  row-de-interleaved input slabs (batch fastest)
    out_ref  : [n_out_slabs, *, OW*Cout]  (or 2-D when n_out_slabs == 1)
    wr_ref   : [KSIZE, Win*Cin, OW*Cout]  bf16 row-matmul conv weights (kw taps folded in)
    g_ref/be_ref : [1, Cout]              BatchNorm affine parameters
    pool_ref : [OW*Cout, Cout]            0/1 matrix: lane axis -> per-channel sums
    bcast_ref: [Cout, OW*Cout]            0/1 matrix: per-channel -> lane broadcast
    """
    lane = ow * cout
    counts = [_cdiv(oh - p, n_out_slabs) for p in range(n_out_slabs)]

    def out_idx(p, cnt):
        if len(out_ref.shape) == 3:
            return (p, slice(0, cnt * n_batch), slice(None))
        return (slice(0, cnt * n_batch), slice(None))

    # Convolution (write-through to scratch) + single-pass BN statistics (sum, sum-sq).
    s1 = jnp.zeros((1, lane), jnp.float32)
    s2 = jnp.zeros((1, lane), jnp.float32)
    for p in range(n_out_slabs):
        cnt = counts[p]
        acc = None
        for kh in range(KSIZE):
            c = STRIDE * p + kh                       # input-row offset class of this tap
            q, off = c % n_in_slabs, c // n_in_slabs  # -> contiguous slice of slab q
            lhs = in_ref[q, off * n_batch:(off + cnt) * n_batch, :]
            d = jnp.dot(lhs.astype(wr_ref.dtype), wr_ref[kh],
                        preferred_element_type=jnp.float32)
            acc = d if acc is None else acc + d
        # conv bias omitted: exactly cancelled by the training-mode BN mean subtraction.
        out_ref[out_idx(p, cnt)] = acc                # raw conv output -> VMEM scratch
        s1 = s1 + acc.sum(axis=0, keepdims=True)
        s2 = s2 + (acc * acc).sum(axis=0, keepdims=True)

    # Per-channel moments via ONE matmul against the 0/1 pooling matrix.
    cnt_total = float(n_batch * oh * ow)
    mom = jnp.dot(jnp.concatenate([s1, s2], axis=0), pool_ref[...],
                  preferred_element_type=jnp.float32) / cnt_total       # [2, Cout]
    mean, ex2 = mom[0:1, :], mom[1:2, :]
    var = jnp.maximum(ex2 - mean * mean, 0.0)          # biased variance, clamped >= 0
    scale = g_ref[...] * jax.lax.rsqrt(var + eps)
    shift = be_ref[...] - mean * scale
    # Channel -> lane broadcast of (scale, shift) via ONE matmul.
    ssl = jnp.dot(jnp.concatenate([scale, shift], axis=0), bcast_ref[...],
                  preferred_element_type=jnp.float32)                   # [2, OW*Cout]
    scale_l, shift_l = ssl[0:1, :], ssl[1:2, :]

    # Normalize + affine + ReLU in place (re-read scratch; keeps vreg pressure low).
    for p in range(n_out_slabs):
        idx = out_idx(p, counts[p])
        out_ref[idx] = jnp.maximum(out_ref[idx] * scale_l + shift_l, 0.0)


def _dqn_fused_kernel(x8_ref,
                      wr1_ref, g1_ref, be1_ref, p1_ref, q1_ref,
                      wr2_ref, g2_ref, be2_ref, p2_ref, q2_ref,
                      wr3_ref, g3_ref, be3_ref, p3_ref, q3_ref,
                      whr_ref, bh_ref,
                      o_ref,
                      a1_ref, a2_ref, a3_ref,
                      *, dims, eps):
    n = dims["n"]

    # conv1 + bn1 + relu : 8-way de-interleaved input -> 4-way de-interleaved a1.
    _conv_bn_relu_layer(x8_ref, a1_ref, wr1_ref, g1_ref, be1_ref, p1_ref, q1_ref,
                        n_batch=n, n_in_slabs=8, n_out_slabs=4,
                        oh=dims["oh1"], ow=dims["ow1"], cout=dims["c1"], eps=eps)
    # conv2 + bn2 + relu : 4-way -> 2-way (a2).
    _conv_bn_relu_layer(a1_ref, a2_ref, wr2_ref, g2_ref, be2_ref, p2_ref, q2_ref,
                        n_batch=n, n_in_slabs=4, n_out_slabs=2,
                        oh=dims["oh2"], ow=dims["ow2"], cout=dims["c2"], eps=eps)
    # conv3 + bn3 + relu : 2-way -> single flat slab a3 (row = h*N + n).
    _conv_bn_relu_layer(a2_ref, a3_ref, wr3_ref, g3_ref, be3_ref, p3_ref, q3_ref,
                        n_batch=n, n_in_slabs=2, n_out_slabs=1,
                        oh=dims["oh3"], ow=dims["ow3"], cout=dims["c3"], eps=eps)

    # Linear head: oh3 batched dots (M = batch, K = OW3*C3) + one store.  whr has the
    # PyTorch (c, h, w) flatten order pre-permuted into the kernel's (w, c) lane order.
    logits = None
    for hh in range(dims["oh3"]):
        d = jnp.dot(a3_ref[hh * n:(hh + 1) * n, :], whr_ref[hh],
                    preferred_element_type=jnp.float32)
        logits = d if logits is None else logits + d
    o_ref[...] = logits + bh_ref[...]


# ----------------------------------------------------------------------------- wrapper

def _full_spec(shape):
    nd = len(shape)
    return pl.BlockSpec(shape, lambda i, _nd=nd: (0,) * _nd)


def dqn_forward(params, x_nchw):
    n, cin, h, w = x_nchw.shape
    oh1, ow1 = conv2d_size_out(h), conv2d_size_out(w)
    oh2, ow2 = conv2d_size_out(oh1), conv2d_size_out(ow1)
    oh3, ow3 = conv2d_size_out(oh2), conv2d_size_out(ow2)
    c1, c2, c3 = params["g1"].shape[1], params["g2"].shape[1], params["g3"].shape[1]
    outputs = params["bh"].shape[1]

    # Per-forward glue (tiny): 8-way row de-interleave with batch packed fastest:
    # x8[q, i*N + b, w*Cin + c] = x[b, c, q + 8*i, w].
    hp = _cdiv(h, 8) * 8
    xt = jnp.transpose(x_nchw, (2, 0, 3, 1)).reshape(h, n, w * cin)
    if hp != h:
        xt = jnp.concatenate([xt, jnp.zeros((hp - h, n, w * cin), xt.dtype)], axis=0)
    x8 = xt.reshape(hp // 8, 8, n, w * cin).transpose(1, 0, 2, 3)
    x8 = x8.reshape(8, (hp // 8) * n, w * cin)

    kernel = functools.partial(
        _dqn_fused_kernel,
        dims=dict(n=n, oh1=oh1, ow1=ow1, oh2=oh2, ow2=ow2, oh3=oh3, ow3=ow3,
                  c1=c1, c2=c2, c3=c3),
        eps=BN_EPS)

    args = (x8,
            params["wr1"], params["g1"], params["be1"], params["p1"], params["q1"],
            params["wr2"], params["g2"], params["be2"], params["p2"], params["q2"],
            params["wr3"], params["g3"], params["be3"], params["p3"], params["q3"],
            params["whr"], params["bh"])

    return pl.pallas_call(
        kernel,
        out_shape=jax.ShapeDtypeStruct((n, outputs), jnp.float32),
        grid=(1,),
        in_specs=[_full_spec(a.shape) for a in args],
        out_specs=_full_spec((n, outputs)),
        scratch_shapes=[
            pltpu.VMEM((4, _cdiv(oh1, 4) * n, ow1 * c1), jnp.float32),  # conv1 out (4 slabs)
            pltpu.VMEM((2, _cdiv(oh2, 2) * n, ow2 * c2), jnp.float32),  # conv2 out (2 slabs)
            pltpu.VMEM((oh3 * n, ow3 * c3), jnp.float32),               # conv3 out (flat)
        ],
        compiler_params=pltpu.CompilerParams(dimension_semantics=("arbitrary",)),
    )(*args)


# ----------------------------------------------------------------------------- params

def _uniform(key, shape, bound):
    return jax.random.uniform(key, shape, jnp.float32, -bound, bound)


def init_raw_params(key, h, w, outputs, frame_size):
    """Parameters in the PyTorch layouts (Conv2d OIHW, Linear [out, in])."""
    ks = jax.random.split(key, 8)

    def conv_init(kw_, kb_, cin, cout):
        bound = 1.0 / float(cin * KSIZE * KSIZE) ** 0.5
        return _uniform(kw_, (cout, cin, KSIZE, KSIZE), bound), _uniform(kb_, (cout,), bound)

    p = {}
    p["w1"], p["b1"] = conv_init(ks[0], ks[1], frame_size, 16)
    p["w2"], p["b2"] = conv_init(ks[2], ks[3], 16, 32)
    p["w3"], p["b3"] = conv_init(ks[4], ks[5], 32, 32)
    # BatchNorm2d default init: weight=1, bias=0 (running stats unused in training mode).
    p["g1"], p["be1"] = jnp.ones((16,), jnp.float32), jnp.zeros((16,), jnp.float32)
    p["g2"], p["be2"] = jnp.ones((32,), jnp.float32), jnp.zeros((32,), jnp.float32)
    p["g3"], p["be3"] = jnp.ones((32,), jnp.float32), jnp.zeros((32,), jnp.float32)

    convw = conv2d_size_out(conv2d_size_out(conv2d_size_out(w)))
    convh = conv2d_size_out(conv2d_size_out(conv2d_size_out(h)))
    lin_in = convw * convh * 32
    bound = 1.0 / float(lin_in) ** 0.5
    p["wh"] = _uniform(ks[6], (outputs, lin_in), bound)
    p["bh"] = _uniform(ks[7], (outputs,), bound)
    return p


def _row_conv_weight(wgt, win, ow):
    """Torch conv weight [Cout, Cin, KH, KW] -> row-matmul form [KH, Win*Cin, OW*Cout].

    Row index = lane-flattened input position (w_in, cin); column index = lane-flattened
    output position (ow, cout).  The stride-2 kw taps become a block-banded structure,
    so a whole conv layer is just KH batched matmuls on contiguous row slabs.
    """
    cout, cin, kh, kw = wgt.shape
    blocks = jnp.transpose(wgt, (2, 3, 1, 0)).reshape(kh, kw * cin, cout)
    wr = jnp.zeros((kh, win * cin, ow * cout), jnp.float32)
    for j in range(ow):                      # output column j reads input cols 2j..2j+4
        r0 = STRIDE * j * cin
        wr = wr.at[:, r0:r0 + kw * cin, j * cout:(j + 1) * cout].set(blocks)
    return wr


def _pool_matrix(ow, c):
    """[OW*C, C] 0/1 matrix summing the lane-flattened (ow, c) axis down to channels."""
    return jnp.tile(jnp.eye(c, dtype=jnp.float32), (ow, 1))


def prepare_params(raw, h, w):
    """One-time re-layout of PyTorch-style params into the kernel-friendly format.

    Conv row-weights are stored in bf16 (f32 accumulation inside the kernel); conv biases
    are dropped because training-mode BatchNorm cancels them exactly; the head weight is
    pre-permuted from the (c, h, w) flatten order to the kernel's (w, c) lane order.
    """
    oh1, ow1 = conv2d_size_out(h), conv2d_size_out(w)
    oh2, ow2 = conv2d_size_out(oh1), conv2d_size_out(ow1)
    oh3, ow3 = conv2d_size_out(oh2), conv2d_size_out(ow2)
    c1, c2, c3 = raw["w1"].shape[0], raw["w2"].shape[0], raw["w3"].shape[0]
    outputs = raw["wh"].shape[0]
    p1, p2, p3 = _pool_matrix(ow1, c1), _pool_matrix(ow2, c2), _pool_matrix(ow3, c3)
    whr = jnp.transpose(raw["wh"].reshape(outputs, c3, oh3, ow3), (2, 3, 1, 0))
    whr = whr.reshape(oh3, ow3 * c3, outputs)
    return {
        "wr1": _row_conv_weight(raw["w1"], w,   ow1).astype(jnp.bfloat16),
        "wr2": _row_conv_weight(raw["w2"], ow1, ow2).astype(jnp.bfloat16),
        "wr3": _row_conv_weight(raw["w3"], ow2, ow3).astype(jnp.bfloat16),
        "g1": raw["g1"][None, :], "be1": raw["be1"][None, :],
        "g2": raw["g2"][None, :], "be2": raw["be2"][None, :],
        "g3": raw["g3"][None, :], "be3": raw["be3"][None, :],
        "p1": p1, "q1": p1.T, "p2": p2, "q2": p2.T, "p3": p3, "q3": p3.T,
        "whr": whr, "bh": raw["bh"][None, :],
    }


# ----------------------------------------------------------------------------- reference

def reference_forward(raw, x, eps=BN_EPS):
    """Pure-JAX reference mirroring the PyTorch module in training mode."""
    def layer(x, wgt, b, g, be):
        y = jax.lax.conv_general_dilated(
            x, wgt, window_strides=(STRIDE, STRIDE), padding="VALID",
            dimension_numbers=("NCHW", "OIHW", "NCHW"))
        y = y + b[None, :, None, None]
        mean = jnp.mean(y, axis=(0, 2, 3), keepdims=True)
        var = jnp.mean((y - mean) ** 2, axis=(0, 2, 3), keepdims=True)
        yhat = (y - mean) * jax.lax.rsqrt(var + eps)
        return jnp.maximum(yhat * g[None, :, None, None] + be[None, :, None, None], 0.0)

    x = layer(x, raw["w1"], raw["b1"], raw["g1"], raw["be1"])
    x = layer(x, raw["w2"], raw["b2"], raw["g2"], raw["be2"])
    x = layer(x, raw["w3"], raw["b3"], raw["g3"], raw["be3"])
    return x.reshape(x.shape[0], -1) @ raw["wh"].T + raw["bh"][None, :]


# ----------------------------------------------------------------------------- main

if __name__ == "__main__":
    # 40x40 is near the smallest spatial size that survives three VALID 5x5/s2 convs.
    batch, frame_size, h, w, outputs = 2, 4, 40, 40, 4

    key = jax.random.PRNGKey(0)
    pkey, xkey = jax.random.split(key)
    raw = init_raw_params(pkey, h, w, outputs, frame_size)
    params = prepare_params(raw, h, w)
    x = jax.random.normal(xkey, (batch, frame_size, h, w), jnp.float32)  # NCHW like PyTorch

    out = jax.block_until_ready(jax.jit(dqn_forward)(params, x))
    assert out.shape == (batch, outputs), out.shape

    ref = jax.jit(reference_forward)(raw, x)
    err = float(jnp.max(jnp.abs(out - ref)))
    assert err < 5e-2, f"kernel/reference mismatch: max abs err = {err}"

    print("KERNEL_OK")
</pallas_src>

<mosaic_0001>
module attributes {stable_mosaic.version = 11 : i64} {
  func.func @_dqn_fused_kernel(%arg0: i32, %arg1: memref<8x10x160xf32, #tpu.memory_space<vmem>>, %arg2: memref<5x160x288xbf16, #tpu.memory_space<vmem>>, %arg3: memref<1x16xf32, #tpu.memory_space<vmem>>, %arg4: memref<1x16xf32, #tpu.memory_space<vmem>>, %arg5: memref<288x16xf32, #tpu.memory_space<vmem>>, %arg6: memref<16x288xf32, #tpu.memory_space<vmem>>, %arg7: memref<5x288x224xbf16, #tpu.memory_space<vmem>>, %arg8: memref<1x32xf32, #tpu.memory_space<vmem>>, %arg9: memref<1x32xf32, #tpu.memory_space<vmem>>, %arg10: memref<224x32xf32, #tpu.memory_space<vmem>>, %arg11: memref<32x224xf32, #tpu.memory_space<vmem>>, %arg12: memref<5x224x64xbf16, #tpu.memory_space<vmem>>, %arg13: memref<1x32xf32, #tpu.memory_space<vmem>>, %arg14: memref<1x32xf32, #tpu.memory_space<vmem>>, %arg15: memref<64x32xf32, #tpu.memory_space<vmem>>, %arg16: memref<32x64xf32, #tpu.memory_space<vmem>>, %arg17: memref<2x64x4xf32, #tpu.memory_space<vmem>>, %arg18: memref<1x4xf32, #tpu.memory_space<vmem>>, %arg19: memref<2x4xf32, #tpu.memory_space<vmem>>, %arg20: memref<4x10x288xf32, #tpu.memory_space<vmem>>, %arg21: memref<2x8x224xf32, #tpu.memory_space<vmem>>, %arg22: memref<4x64xf32, #tpu.memory_space<vmem>>) attributes {dimension_semantics = [#tpu.dimension_semantics<arbitrary>], iteration_bounds = array<i64: 1>, scalar_prefetch = 0 : i64, scratch_operands = 3 : i64, tpu.core_type = #tpu.core_type<tc>, window_params = [{pipeline_mode = #tpu.pipeline_mode<synchronous>, transform_indices = @transform_0, window_bounds = array<i64: 8, 10, 160>}, {pipeline_mode = #tpu.pipeline_mode<synchronous>, transform_indices = @transform_1, window_bounds = array<i64: 5, 160, 288>}, {pipeline_mode = #tpu.pipeline_mode<synchronous>, transform_indices = @transform_2, window_bounds = array<i64: 1, 16>}, {pipeline_mode = #tpu.pipeline_mode<synchronous>, transform_indices = @transform_3, window_bounds = array<i64: 1, 16>}, {pipeline_mode = #tpu.pipeline_mode<synchronous>, transform_indices = @transform_4, window_bounds = array<i64: 288, 16>}, {pipeline_mode = #tpu.pipeline_mode<synchronous>, transform_indices = @transform_5, window_bounds = array<i64: 16, 288>}, {pipeline_mode = #tpu.pipeline_mode<synchronous>, transform_indices = @transform_6, window_bounds = array<i64: 5, 288, 224>}, {pipeline_mode = #tpu.pipeline_mode<synchronous>, transform_indices = @transform_7, window_bounds = array<i64: 1, 32>}, {pipeline_mode = #tpu.pipeline_mode<synchronous>, transform_indices = @transform_8, window_bounds = array<i64: 1, 32>}, {pipeline_mode = #tpu.pipeline_mode<synchronous>, transform_indices = @transform_9, window_bounds = array<i64: 224, 32>}, {pipeline_mode = #tpu.pipeline_mode<synchronous>, transform_indices = @transform_10, window_bounds = array<i64: 32, 224>}, {pipeline_mode = #tpu.pipeline_mode<synchronous>, transform_indices = @transform_11, window_bounds = array<i64: 5, 224, 64>}, {pipeline_mode = #tpu.pipeline_mode<synchronous>, transform_indices = @transform_12, window_bounds = array<i64: 1, 32>}, {pipeline_mode = #tpu.pipeline_mode<synchronous>, transform_indices = @transform_13, window_bounds = array<i64: 1, 32>}, {pipeline_mode = #tpu.pipeline_mode<synchronous>, transform_indices = @transform_14, window_bounds = array<i64: 64, 32>}, {pipeline_mode = #tpu.pipeline_mode<synchronous>, transform_indices = @transform_15, window_bounds = array<i64: 32, 64>}, {pipeline_mode = #tpu.pipeline_mode<synchronous>, transform_indices = @transform_16, window_bounds = array<i64: 2, 64, 4>}, {pipeline_mode = #tpu.pipeline_mode<synchronous>, transform_indices = @transform_17, window_bounds = array<i64: 1, 4>}, {pipeline_mode = #tpu.pipeline_mode<synchronous>, transform_indices = @transform_18, window_bounds = array<i64: 2, 4>}]} {
    %cst = arith.constant 0.000000e+00 : f32
    %0 = vector.broadcast %cst : f32 to vector<1x288xf32>
    %cst_0 = arith.constant 0.000000e+00 : f32
    %1 = vector.broadcast %cst_0 : f32 to vector<1x288xf32>
    %c0 = arith.constant 0 : index
    %c0_1 = arith.constant 0 : index
    %c0_2 = arith.constant 0 : index
    %2 = vector.load %arg1[%c0, %c0_1, %c0_2] : memref<8x10x160xf32, #tpu.memory_space<vmem>>, vector<1x10x160xf32>
    %3 = vector.shape_cast %2 : vector<1x10x160xf32> to vector<10x160xf32>
    %4 = arith.truncf %3 : vector<10x160xf32> to vector<10x160xbf16>
    %c0_3 = arith.constant 0 : index
    %c0_4 = arith.constant 0 : index
    %c0_5 = arith.constant 0 : index
    %5 = vector.load %arg2[%c0_3, %c0_4, %c0_5] : memref<5x160x288xbf16, #tpu.memory_space<vmem>>, vector<1x160x288xbf16>
    %6 = vector.shape_cast %5 : vector<1x160x288xbf16> to vector<160x288xbf16>
    %cst_6 = arith.constant dense<0.000000e+00> : vector<10x288xf32>
    %7 = tpu.matmul %4, %6, %cst_6 {dimension_numbers = #tpu.dot_dimension_numbers<[1], [0], [0], [1], [0, 0, 1, 1], [], []>} : vector<10x160xbf16>, vector<160x288xbf16>, vector<10x288xf32> -> vector<10x288xf32>
    %c1 = arith.constant 1 : index
    %c0_7 = arith.constant 0 : index
    %c0_8 = arith.constant 0 : index
    %8 = vector.load %arg1[%c1, %c0_7, %c0_8] : memref<8x10x160xf32, #tpu.memory_space<vmem>>, vector<1x10x160xf32>
    %9 = vector.shape_cast %8 : vector<1x10x160xf32> to vector<10x160xf32>
    %10 = arith.truncf %9 : vector<10x160xf32> to vector<10x160xbf16>
    %c1_9 = arith.constant 1 : index
    %c0_10 = arith.constant 0 : index
    %c0_11 = arith.constant 0 : index
    %11 = vector.load %arg2[%c1_9, %c0_10, %c0_11] : memref<5x160x288xbf16, #tpu.memory_space<vmem>>, vector<1x160x288xbf16>
    %12 = vector.shape_cast %11 : vector<1x160x288xbf16> to vector<160x288xbf16>
    %cst_12 = arith.constant dense<0.000000e+00> : vector<10x288xf32>
    %13 = tpu.matmul %10, %12, %cst_12 {dimension_numbers = #tpu.dot_dimension_numbers<[1], [0], [0], [1], [0, 0, 1, 1], [], []>} : vector<10x160xbf16>, vector<160x288xbf16>, vector<10x288xf32> -> vector<10x288xf32>
    %14 = arith.addf %7, %13 : vector<10x288xf32>
    %c2 = arith.constant 2 : index
    %c0_13 = arith.constant 0 : index
    %c0_14 = arith.constant 0 : index
    %15 = vector.load %arg1[%c2, %c0_13, %c0_14] : memref<8x10x160xf32, #tpu.memory_space<vmem>>, vector<1x10x160xf32>
    %16 = vector.shape_cast %15 : vector<1x10x160xf32> to vector<10x160xf32>
    %17 = arith.truncf %16 : vector<10x160xf32> to vector<10x160xbf16>
    %c2_15 = arith.constant 2 : index
    %c0_16 = arith.constant 0 : index
    %c0_17 = arith.constant 0 : index
    %18 = vector.load %arg2[%c2_15, %c0_16, %c0_17] : memref<5x160x288xbf16, #tpu.memory_space<vmem>>, vector<1x160x288xbf16>
    %19 = vector.shape_cast %18 : vector<1x160x288xbf16> to vector<160x288xbf16>
    %cst_18 = arith.constant dense<0.000000e+00> : vector<10x288xf32>
    %20 = tpu.matmul %17, %19, %cst_18 {dimension_numbers = #tpu.dot_dimension_numbers<[1], [0], [0], [1], [0, 0, 1, 1], [], []>} : vector<10x160xbf16>, vector<160x288xbf16>, vector<10x288xf32> -> vector<10x288xf32>
    %21 = arith.addf %14, %20 : vector<10x288xf32>
    %c3 = arith.constant 3 : index
    %c0_19 = arith.constant 0 : index
    %c0_20 = arith.constant 0 : index
    %22 = vector.load %arg1[%c3, %c0_19, %c0_20] : memref<8x10x160xf32, #tpu.memory_space<vmem>>, vector<1x10x160xf32>
    %23 = vector.shape_cast %22 : vector<1x10x160xf32> to vector<10x160xf32>
    %24 = arith.truncf %23 : vector<10x160xf32> to vector<10x160xbf16>
    %c3_21 = arith.constant 3 : index
    %c0_22 = arith.constant 0 : index
    %c0_23 = arith.constant 0 : index
    %25 = vector.load %arg2[%c3_21, %c0_22, %c0_23] : memref<5x160x288xbf16, #tpu.memory_space<vmem>>, vector<1x160x288xbf16>
    %26 = vector.shape_cast %25 : vector<1x160x288xbf16> to vector<160x288xbf16>
    %cst_24 = arith.constant dense<0.000000e+00> : vector<10x288xf32>
    %27 = tpu.matmul %24, %26, %cst_24 {dimension_numbers = #tpu.dot_dimension_numbers<[1], [0], [0], [1], [0, 0, 1, 1], [], []>} : vector<10x160xbf16>, vector<160x288xbf16>, vector<10x288xf32> -> vector<10x288xf32>
    %28 = arith.addf %21, %27 : vector<10x288xf32>
    %c4 = arith.constant 4 : index
    %c0_25 = arith.constant 0 : index
    %c0_26 = arith.constant 0 : index
    %29 = vector.load %arg1[%c4, %c0_25, %c0_26] : memref<8x10x160xf32, #tpu.memory_space<vmem>>, vector<1x10x160xf32>
    %30 = vector.shape_cast %29 : vector<1x10x160xf32> to vector<10x160xf32>
    %31 = arith.truncf %30 : vector<10x160xf32> to vector<10x160xbf16>
    %c4_27 = arith.constant 4 : index
    %c0_28 = arith.constant 0 : index
    %c0_29 = arith.constant 0 : index
    %32 = vector.load %arg2[%c4_27, %c0_28, %c0_29] : memref<5x160x288xbf16, #tpu.memory_space<vmem>>, vector<1x160x288xbf16>
    %33 = vector.shape_cast %32 : vector<1x160x288xbf16> to vector<160x288xbf16>
    %cst_30 = arith.constant dense<0.000000e+00> : vector<10x288xf32>
    %34 = tpu.matmul %31, %33, %cst_30 {dimension_numbers = #tpu.dot_dimension_numbers<[1], [0], [0], [1], [0, 0, 1, 1], [], []>} : vector<10x160xbf16>, vector<160x288xbf16>, vector<10x288xf32> -> vector<10x288xf32>
    %35 = arith.addf %28, %34 : vector<10x288xf32>
    %c0_31 = arith.constant 0 : index
    %c0_32 = arith.constant 0 : index
    %c0_33 = arith.constant 0 : index
    %36 = vector.load %arg20[%c0_31, %c0_32, %c0_33] : memref<4x10x288xf32, #tpu.memory_space<vmem>>, vector<1x10x288xf32>
    %37 = vector.shape_cast %36 : vector<1x10x288xf32> to vector<10x288xf32>
    %38 = vector.shape_cast %35 : vector<10x288xf32> to vector<1x10x288xf32>
    tpu.vector_store %arg20[%c0_31, %c0_32, %c0_33], %38 {strides = array<i32>} : memref<4x10x288xf32, #tpu.memory_space<vmem>>, vector<1x10x288xf32>,
    %cst_34 = arith.constant dense<0.000000e+00> : vector<288xf32>
    %39 = vector.multi_reduction <add>, %35, %cst_34 [0] : vector<10x288xf32> to vector<288xf32>
    %40 = vector.shape_cast %39 : vector<288xf32> to vector<1x288xf32>
    %41 = arith.addf %0, %40 : vector<1x288xf32>
    %42 = arith.mulf %35, %35 : vector<10x288xf32>
    %cst_35 = arith.constant dense<0.000000e+00> : vector<288xf32>
    %43 = vector.multi_reduction <add>, %42, %cst_35 [0] : vector<10x288xf32> to vector<288xf32>
    %44 = vector.shape_cast %43 : vector<288xf32> to vector<1x288xf32>
    %45 = arith.addf %1, %44 : vector<1x288xf32>
    %c2_36 = arith.constant 2 : index
    %c0_37 = arith.constant 0 : index
    %c0_38 = arith.constant 0 : index
    %46 = vector.load %arg1[%c2_36, %c0_37, %c0_38] : memref<8x10x160xf32, #tpu.memory_space<vmem>>, vector<1x10x160xf32>
    %47 = vector.shape_cast %46 : vector<1x10x160xf32> to vector<10x160xf32>
    %48 = arith.truncf %47 : vector<10x160xf32> to vector<10x160xbf16>
    %c0_39 = arith.constant 0 : index
    %c0_40 = arith.constant 0 : index
    %c0_41 = arith.constant 0 : index
    %49 = vector.load %arg2[%c0_39, %c0_40, %c0_41] : memref<5x160x288xbf16, #tpu.memory_space<vmem>>, vector<1x160x288xbf16>
    %50 = vector.shape_cast %49 : vector<1x160x288xbf16> to vector<160x288xbf16>
    %cst_42 = arith.constant dense<0.000000e+00> : vector<10x288xf32>
    %51 = tpu.matmul %48, %50, %cst_42 {dimension_numbers = #tpu.dot_dimension_numbers<[1], [0], [0], [1], [0, 0, 1, 1], [], []>} : vector<10x160xbf16>, vector<160x288xbf16>, vector<10x288xf32> -> vector<10x288xf32>
    %c3_43 = arith.constant 3 : index
    %c0_44 = arith.constant 0 : index
    %c0_45 = arith.constant 0 : index
    %52 = vector.load %arg1[%c3_43, %c0_44, %c0_45] : memref<8x10x160xf32, #tpu.memory_space<vmem>>, vector<1x10x160xf32>
    %53 = vector.shape_cast %52 : vector<1x10x160xf32> to vector<10x160xf32>
    %54 = arith.truncf %53 : vector<10x160xf32> to vector<10x160xbf16>
    %c1_46 = arith.constant 1 : index
    %c0_47 = arith.constant 0 : index
    %c0_48 = arith.constant 0 : index
    %55 = vector.load %arg2[%c1_46, %c0_47, %c0_48] : memref<5x160x288xbf16, #tpu.memory_space<vmem>>, vector<1x160x288xbf16>
    %56 = vector.shape_cast %55 : vector<1x160x288xbf16> to vector<160x288xbf16>
    %cst_49 = arith.constant dense<0.000000e+00> : vector<10x288xf32>
    %57 = tpu.matmul %54, %56, %cst_49 {dimension_numbers = #tpu.dot_dimension_numbers<[1], [0], [0], [1], [0, 0, 1, 1], [], []>} : vector<10x160xbf16>, vector<160x288xbf16>, vector<10x288xf32> -> vector<10x288xf32>
    %58 = arith.addf %51, %57 : vector<10x288xf32>
    %c4_50 = arith.constant 4 : index
    %c0_51 = arith.constant 0 : index
    %c0_52 = arith.constant 0 : index
    %59 = vector.load %arg1[%c4_50, %c0_51, %c0_52] : memref<8x10x160xf32, #tpu.memory_space<vmem>>, vector<1x10x160xf32>
    %60 = vector.shape_cast %59 : vector<1x10x160xf32> to vector<10x160xf32>
    %61 = arith.truncf %60 : vector<10x160xf32> to vector<10x160xbf16>
    %c2_53 = arith.constant 2 : index
    %c0_54 = arith.constant 0 : index
    %c0_55 = arith.constant 0 : index
    %62 = vector.load %arg2[%c2_53, %c0_54, %c0_55] : memref<5x160x288xbf16, #tpu.memory_space<vmem>>, vector<1x160x288xbf16>
    %63 = vector.shape_cast %62 : vector<1x160x288xbf16> to vector<160x288xbf16>
    %cst_56 = arith.constant dense<0.000000e+00> : vector<10x288xf32>
    %64 = tpu.matmul %61, %63, %cst_56 {dimension_numbers = #tpu.dot_dimension_numbers<[1], [0], [0], [1], [0, 0, 1, 1], [], []>} : vector<10x160xbf16>, vector<160x288xbf16>, vector<10x288xf32> -> vector<10x288xf32>
    %65 = arith.addf %58, %64 : vector<10x288xf32>
    %c5 = arith.constant 5 : index
    %c0_57 = arith.constant 0 : index
    %c0_58 = arith.constant 0 : index
    %66 = vector.load %arg1[%c5, %c0_57, %c0_58] : memref<8x10x160xf32, #tpu.memory_space<vmem>>, vector<1x10x160xf32>
    %67 = vector.shape_cast %66 : vector<1x10x160xf32> to vector<10x160xf32>
    %68 = arith.truncf %67 : vector<10x160xf32> to vector<10x160xbf16>
    %c3_59 = arith.constant 3 : index
    %c0_60 = arith.constant 0 : index
    %c0_61 = arith.constant 0 : index
    %69 = vector.load %arg2[%c3_59, %c0_60, %c0_61] : memref<5x160x288xbf16, #tpu.memory_space<vmem>>, vector<1x160x288xbf16>
    %70 = vector.shape_cast %69 : vector<1x160x288xbf16> to vector<160x288xbf16>
    %cst_62 = arith.constant dense<0.000000e+00> : vector<10x288xf32>
    %71 = tpu.matmul %68, %70, %cst_62 {dimension_numbers = #tpu.dot_dimension_numbers<[1], [0], [0], [1], [0, 0, 1, 1], [], []>} : vector<10x160xbf16>, vector<160x288xbf16>, vector<10x288xf32> -> vector<10x288xf32>
    %72 = arith.addf %65, %71 : vector<10x288xf32>
    %c6 = arith.constant 6 : index
    %c0_63 = arith.constant 0 : index
    %c0_64 = arith.constant 0 : index
    %73 = vector.load %arg1[%c6, %c0_63, %c0_64] : memref<8x10x160xf32, #tpu.memory_space<vmem>>, vector<1x10x160xf32>
    %74 = vector.shape_cast %73 : vector<1x10x160xf32> to vector<10x160xf32>
    %75 = arith.truncf %74 : vector<10x160xf32> to vector<10x160xbf16>
    %c4_65 = arith.constant 4 : index
    %c0_66 = arith.constant 0 : index
    %c0_67 = arith.constant 0 : index
    %76 = vector.load %arg2[%c4_65, %c0_66, %c0_67] : memref<5x160x288xbf16, #tpu.memory_space<vmem>>, vector<1x160x288xbf16>
    %77 = vector.shape_cast %76 : vector<1x160x288xbf16> to vector<160x288xbf16>
    %cst_68 = arith.constant dense<0.000000e+00> : vector<10x288xf32>
    %78 = tpu.matmul %75, %77, %cst_68 {dimension_numbers = #tpu.dot_dimension_numbers<[1], [0], [0], [1], [0, 0, 1, 1], [], []>} : vector<10x160xbf16>, vector<160x288xbf16>, vector<10x288xf32> -> vector<10x288xf32>
    %79 = arith.addf %72, %78 : vector<10x288xf32>
    %c1_69 = arith.constant 1 : index
    %c0_70 = arith.constant 0 : index
    %c0_71 = arith.constant 0 : index
    %80 = vector.load %arg20[%c1_69, %c0_70, %c0_71] : memref<4x10x288xf32, #tpu.memory_space<vmem>>, vector<1x10x288xf32>
    %81 = vector.shape_cast %80 : vector<1x10x288xf32> to vector<10x288xf32>
    %82 = vector.shape_cast %79 : vector<10x288xf32> to vector<1x10x288xf32>
    tpu.vector_store %arg20[%c1_69, %c0_70, %c0_71], %82 {strides = array<i32>} : memref<4x10x288xf32, #tpu.memory_space<vmem>>, vector<1x10x288xf32>,
    %cst_72 = arith.constant dense<0.000000e+00> : vector<288xf32>
    %83 = vector.multi_reduction <add>, %79, %cst_72 [0] : vector<10x288xf32> to vector<288xf32>
    %84 = vector.shape_cast %83 : vector<288xf32> to vector<1x288xf32>
    %85 = arith.addf %41, %84 : vector<1x288xf32>
    %86 = arith.mulf %79, %79 : vector<10x288xf32>
    %cst_73 = arith.constant dense<0.000000e+00> : vector<288xf32>
    %87 = vector.multi_reduction <add>, %86, %cst_73 [0] : vector<10x288xf32> to vector<288xf32>
    %88 = vector.shape_cast %87 : vector<288xf32> to vector<1x288xf32>
    %89 = arith.addf %45, %88 : vector<1x288xf32>
    %c4_74 = arith.constant 4 : index
    %c0_75 = arith.constant 0 : index
    %c0_76 = arith.constant 0 : index
    %90 = vector.load %arg1[%c4_74, %c0_75, %c0_76] : memref<8x10x160xf32, #tpu.memory_space<vmem>>, vector<1x8x160xf32>
    %91 = vector.shape_cast %90 : vector<1x8x160xf32> to vector<8x160xf32>
    %92 = arith.truncf %91 : vector<8x160xf32> to vector<8x160xbf16>
    %c0_77 = arith.constant 0 : index
    %c0_78 = arith.constant 0 : index
    %c0_79 = arith.constant 0 : index
    %93 = vector.load %arg2[%c0_77, %c0_78, %c0_79] : memref<5x160x288xbf16, #tpu.memory_space<vmem>>, vector<1x160x288xbf16>
    %94 = vector.shape_cast %93 : vector<1x160x288xbf16> to vector<160x288xbf16>
    %cst_80 = arith.constant dense<0.000000e+00> : vector<8x288xf32>
    %95 = tpu.matmul %92, %94, %cst_80 {dimension_numbers = #tpu.dot_dimension_numbers<[1], [0], [0], [1], [0, 0, 1, 1], [], []>} : vector<8x160xbf16>, vector<160x288xbf16>, vector<8x288xf32> -> vector<8x288xf32>
    %c5_81 = arith.constant 5 : index
    %c0_82 = arith.constant 0 : index
    %c0_83 = arith.constant 0 : index
    %96 = vector.load %arg1[%c5_81, %c0_82, %c0_83] : memref<8x10x160xf32, #tpu.memory_space<vmem>>, vector<1x8x160xf32>
    %97 = vector.shape_cast %96 : vector<1x8x160xf32> to vector<8x160xf32>
    %98 = arith.truncf %97 : vector<8x160xf32> to vector<8x160xbf16>
    %c1_84 = arith.constant 1 : index
    %c0_85 = arith.constant 0 : index
    %c0_86 = arith.constant 0 : index
    %99 = vector.load %arg2[%c1_84, %c0_85, %c0_86] : memref<5x160x288xbf16, #tpu.memory_space<vmem>>, vector<1x160x288xbf16>
    %100 = vector.shape_cast %99 : vector<1x160x288xbf16> to vector<160x288xbf16>
    %cst_87 = arith.constant dense<0.000000e+00> : vector<8x288xf32>
    %101 = tpu.matmul %98, %100, %cst_87 {dimension_numbers = #tpu.dot_dimension_numbers<[1], [0], [0], [1], [0, 0, 1, 1], [], []>} : vector<8x160xbf16>, vector<160x288xbf16>, vector<8x288xf32> -> vector<8x288xf32>
    %102 = arith.addf %95, %101 : vector<8x288xf32>
    %c6_88 = arith.constant 6 : index
    %c0_89 = arith.constant 0 : index
    %c0_90 = arith.constant 0 : index
    %103 = vector.load %arg1[%c6_88, %c0_89, %c0_90] : memref<8x10x160xf32, #tpu.memory_space<vmem>>, vector<1x8x160xf32>
    %104 = vector.shape_cast %103 : vector<1x8x160xf32> to vector<8x160xf32>
    %105 = arith.truncf %104 : vector<8x160xf32> to vector<8x160xbf16>
    %c2_91 = arith.constant 2 : index
    %c0_92 = arith.constant 0 : index
    %c0_93 = arith.constant 0 : index
    %106 = vector.load %arg2[%c2_91, %c0_92, %c0_93] : memref<5x160x288xbf16, #tpu.memory_space<vmem>>, vector<1x160x288xbf16>
    %107 = vector.shape_cast %106 : vector<1x160x288xbf16> to vector<160x288xbf16>
    %cst_94 = arith.constant dense<0.000000e+00> : vector<8x288xf32>
    %108 = tpu.matmul %105, %107, %cst_94 {dimension_numbers = #tpu.dot_dimension_numbers<[1], [0], [0], [1], [0, 0, 1, 1], [], []>} : vector<8x160xbf16>, vector<160x288xbf16>, vector<8x288xf32> -> vector<8x288xf32>
    %109 = arith.addf %102, %108 : vector<8x288xf32>
    %c7 = arith.constant 7 : index
    %c0_95 = arith.constant 0 : index
    %c0_96 = arith.constant 0 : index
    %110 = vector.load %arg1[%c7, %c0_95, %c0_96] : memref<8x10x160xf32, #tpu.memory_space<vmem>>, vector<1x8x160xf32>
    %111 = vector.shape_cast %110 : vector<1x8x160xf32> to vector<8x160xf32>
    %112 = arith.truncf %111 : vector<8x160xf32> to vector<8x160xbf16>
    %c3_97 = arith.constant 3 : index
    %c0_98 = arith.constant 0 : index
    %c0_99 = arith.constant 0 : index
    %113 = vector.load %arg2[%c3_97, %c0_98, %c0_99] : memref<5x160x288xbf16, #tpu.memory_space<vmem>>, vector<1x160x288xbf16>
    %114 = vector.shape_cast %113 : vector<1x160x288xbf16> to vector<160x288xbf16>
    %cst_100 = arith.constant dense<0.000000e+00> : vector<8x288xf32>
    %115 = tpu.matmul %112, %114, %cst_100 {dimension_numbers = #tpu.dot_dimension_numbers<[1], [0], [0], [1], [0, 0, 1, 1], [], []>} : vector<8x160xbf16>, vector<160x288xbf16>, vector<8x288xf32> -> vector<8x288xf32>
    %116 = arith.addf %109, %115 : vector<8x288xf32>
    %c0_101 = arith.constant 0 : index
    %c2_102 = arith.constant 2 : index
    %c0_103 = arith.constant 0 : index
    %117 = vector.load %arg1[%c0_101, %c2_102, %c0_103] : memref<8x10x160xf32, #tpu.memory_space<vmem>>, vector<1x8x160xf32>
    %118 = vector.shape_cast %117 : vector<1x8x160xf32> to vector<8x160xf32>
    %119 = arith.truncf %118 : vector<8x160xf32> to vector<8x160xbf16>
    %c4_104 = arith.constant 4 : index
    %c0_105 = arith.constant 0 : index
    %c0_106 = arith.constant 0 : index
    %120 = vector.load %arg2[%c4_104, %c0_105, %c0_106] : memref<5x160x288xbf16, #tpu.memory_space<vmem>>, vector<1x160x288xbf16>
    %121 = vector.shape_cast %120 : vector<1x160x288xbf16> to vector<160x288xbf16>
    %cst_107 = arith.constant dense<0.000000e+00> : vector<8x288xf32>
    %122 = tpu.matmul %119, %121, %cst_107 {dimension_numbers = #tpu.dot_dimension_numbers<[1], [0], [0], [1], [0, 0, 1, 1], [], []>} : vector<8x160xbf16>, vector<160x288xbf16>, vector<8x288xf32> -> vector<8x288xf32>
    %123 = arith.addf %116, %122 : vector<8x288xf32>
    %c2_108 = arith.constant 2 : index
    %c0_109 = arith.constant 0 : index
    %c0_110 = arith.constant 0 : index
    %124 = vector.load %arg20[%c2_108, %c0_109, %c0_110] : memref<4x10x288xf32, #tpu.memory_space<vmem>>, vector<1x8x288xf32>
    %125 = vector.shape_cast %124 : vector<1x8x288xf32> to vector<8x288xf32>
    %126 = vector.shape_cast %123 : vector<8x288xf32> to vector<1x8x288xf32>
    tpu.vector_store %arg20[%c2_108, %c0_109, %c0_110], %126 {strides = array<i32>} : memref<4x10x288xf32, #tpu.memory_space<vmem>>, vector<1x8x288xf32>,
    %cst_111 = arith.constant dense<0.000000e+00> : vector<288xf32>
    %127 = vector.multi_reduction <add>, %123, %cst_111 [0] : vector<8x288xf32> to vector<288xf32>
    %128 = vector.shape_cast %127 : vector<288xf32> to vector<1x288xf32>
    %129 = arith.addf %85, %128 : vector<1x288xf32>
    %130 = arith.mulf %123, %123 : vector<8x288xf32>
    %cst_112 = arith.constant dense<0.000000e+00> : vector<288xf32>
    %131 = vector.multi_reduction <add>, %130, %cst_112 [0] : vector<8x288xf32> to vector<288xf32>
    %132 = vector.shape_cast %131 : vector<288xf32> to vector<1x288xf32>
    %133 = arith.addf %89, %132 : vector<1x288xf32>
    %c6_113 = arith.constant 6 : index
    %c0_114 = arith.constant 0 : index
    %c0_115 = arith.constant 0 : index
    %134 = vector.load %arg1[%c6_113, %c0_114, %c0_115] : memref<8x10x160xf32, #tpu.memory_space<vmem>>, vector<1x8x160xf32>
    %135 = vector.shape_cast %134 : vector<1x8x160xf32> to vector<8x160xf32>
    %136 = arith.truncf %135 : vector<8x160xf32> to vector<8x160xbf16>
    %c0_116 = arith.constant 0 : index
    %c0_117 = arith.constant 0 : index
    %c0_118 = arith.constant 0 : index
    %137 = vector.load %arg2[%c0_116, %c0_117, %c0_118] : memref<5x160x288xbf16, #tpu.memory_space<vmem>>, vector<1x160x288xbf16>
    %138 = vector.shape_cast %137 : vector<1x160x288xbf16> to vector<160x288xbf16>
    %cst_119 = arith.constant dense<0.000000e+00> : vector<8x288xf32>
    %139 = tpu.matmul %136, %138, %cst_119 {dimension_numbers = #tpu.dot_dimension_numbers<[1], [0], [0], [1], [0, 0, 1, 1], [], []>} : vector<8x160xbf16>, vector<160x288xbf16>, vector<8x288xf32> -> vector<8x288xf32>
    %c7_120 = arith.constant 7 : index
    %c0_121 = arith.constant 0 : index
    %c0_122 = arith.constant 0 : index
    %140 = vector.load %arg1[%c7_120, %c0_121, %c0_122] : memref<8x10x160xf32, #tpu.memory_space<vmem>>, vector<1x8x160xf32>
    %141 = vector.shape_cast %140 : vector<1x8x160xf32> to vector<8x160xf32>
    %142 = arith.truncf %141 : vector<8x160xf32> to vector<8x160xbf16>
    %c1_123 = arith.constant 1 : index
    %c0_124 = arith.constant 0 : index
    %c0_125 = arith.constant 0 : index
    %143 = vector.load %arg2[%c1_123, %c0_124, %c0_125] : memref<5x160x288xbf16, #tpu.memory_space<vmem>>, vector<1x160x288xbf16>
    %144 = vector.shape_cast %143 : vector<1x160x288xbf16> to vector<160x288xbf16>
    %cst_126 = arith.constant dense<0.000000e+00> : vector<8x288xf32>
    %145 = tpu.matmul %142, %144, %cst_126 {dimension_numbers = #tpu.dot_dimension_numbers<[1], [0], [0], [1], [0, 0, 1, 1], [], []>} : vector<8x160xbf16>, vector<160x288xbf16>, vector<8x288xf32> -> vector<8x288xf32>
    %146 = arith.addf %139, %145 : vector<8x288xf32>
    %c0_127 = arith.constant 0 : index
    %c2_128 = arith.constant 2 : index
    %c0_129 = arith.constant 0 : index
    %147 = vector.load %arg1[%c0_127, %c2_128, %c0_129] : memref<8x10x160xf32, #tpu.memory_space<vmem>>, vector<1x8x160xf32>
    %148 = vector.shape_cast %147 : vector<1x8x160xf32> to vector<8x160xf32>
    %149 = arith.truncf %148 : vector<8x160xf32> to vector<8x160xbf16>
    %c2_130 = arith.constant 2 : index
    %c0_131 = arith.constant 0 : index
    %c0_132 = arith.constant 0 : index
    %150 = vector.load %arg2[%c2_130, %c0_131, %c0_132] : memref<5x160x288xbf16, #tpu.memory_space<vmem>>, vector<1x160x288xbf16>
    %151 = vector.shape_cast %150 : vector<1x160x288xbf16> to vector<160x288xbf16>
    %cst_133 = arith.constant dense<0.000000e+00> : vector<8x288xf32>
    %152 = tpu.matmul %149, %151, %cst_133 {dimension_numbers = #tpu.dot_dimension_numbers<[1], [0], [0], [1], [0, 0, 1, 1], [], []>} : vector<8x160xbf16>, vector<160x288xbf16>, vector<8x288xf32> -> vector<8x288xf32>
    %153 = arith.addf %146, %152 : vector<8x288xf32>
    %c1_134 = arith.constant 1 : index
    %c2_135 = arith.constant 2 : index
    %c0_136 = arith.constant 0 : index
    %154 = vector.load %arg1[%c1_134, %c2_135, %c0_136] : memref<8x10x160xf32, #tpu.memory_space<vmem>>, vector<1x8x160xf32>
    %155 = vector.shape_cast %154 : vector<1x8x160xf32> to vector<8x160xf32>
    %156 = arith.truncf %155 : vector<8x160xf32> to vector<8x160xbf16>
    %c3_137 = arith.constant 3 : index
    %c0_138 = arith.constant 0 : index
    %c0_139 = arith.constant 0 : index
    %157 = vector.load %arg2[%c3_137, %c0_138, %c0_139] : memref<5x160x288xbf16, #tpu.memory_space<vmem>>, vector<1x160x288xbf16>
    %158 = vector.shape_cast %157 : vector<1x160x288xbf16> to vector<160x288xbf16>
    %cst_140 = arith.constant dense<0.000000e+00> : vector<8x288xf32>
    %159 = tpu.matmul %156, %158, %cst_140 {dimension_numbers = #tpu.dot_dimension_numbers<[1], [0], [0], [1], [0, 0, 1, 1], [], []>} : vector<8x160xbf16>, vector<160x288xbf16>, vector<8x288xf32> -> vector<8x288xf32>
    %160 = arith.addf %153, %159 : vector<8x288xf32>
    %c2_141 = arith.constant 2 : index
    %c2_142 = arith.constant 2 : index
    %c0_143 = arith.constant 0 : index
    %161 = vector.load %arg1[%c2_141, %c2_142, %c0_143] : memref<8x10x160xf32, #tpu.memory_space<vmem>>, vector<1x8x160xf32>
    %162 = vector.shape_cast %161 : vector<1x8x160xf32> to vector<8x160xf32>
    %163 = arith.truncf %162 : vector<8x160xf32> to vector<8x160xbf16>
    %c4_144 = arith.constant 4 : index
    %c0_145 = arith.constant 0 : index
    %c0_146 = arith.constant 0 : index
    %164 = vector.load %arg2[%c4_144, %c0_145, %c0_146] : memref<5x160x288xbf16, #tpu.memory_space<vmem>>, vector<1x160x288xbf16>
    %165 = vector.shape_cast %164 : vector<1x160x288xbf16> to vector<160x288xbf16>
    %cst_147 = arith.constant dense<0.000000e+00> : vector<8x288xf32>
    %166 = tpu.matmul %163, %165, %cst_147 {dimension_numbers = #tpu.dot_dimension_numbers<[1], [0], [0], [1], [0, 0, 1, 1], [], []>} : vector<8x160xbf16>, vector<160x288xbf16>, vector<8x288xf32> -> vector<8x288xf32>
    %167 = arith.addf %160, %166 : vector<8x288xf32>
    %c3_148 = arith.constant 3 : index
    %c0_149 = arith.constant 0 : index
    %c0_150 = arith.constant 0 : index
    %168 = vector.load %arg20[%c3_148, %c0_149, %c0_150] : memref<4x10x288xf32, #tpu.memory_space<vmem>>, vector<1x8x288xf32>
    %169 = vector.shape_cast %168 : vector<1x8x288xf32> to vector<8x288xf32>
    %170 = vector.shape_cast %167 : vector<8x288xf32> to vector<1x8x288xf32>
    tpu.vector_store %arg20[%c3_148, %c0_149, %c0_150], %170 {strides = array<i32>} : memref<4x10x288xf32, #tpu.memory_space<vmem>>, vector<1x8x288xf32>,
    %cst_151 = arith.constant dense<0.000000e+00> : vector<288xf32>
    %171 = vector.multi_reduction <add>, %167, %cst_151 [0] : vector<8x288xf32> to vector<288xf32>
    %172 = vector.shape_cast %171 : vector<288xf32> to vector<1x288xf32>
    %173 = arith.addf %129, %172 : vector<1x288xf32>
    %174 = arith.mulf %167, %167 : vector<8x288xf32>
    %cst_152 = arith.constant dense<0.000000e+00> : vector<288xf32>
    %175 = vector.multi_reduction <add>, %174, %cst_152 [0] : vector<8x288xf32> to vector<288xf32>
    %176 = vector.shape_cast %175 : vector<288xf32> to vector<1x288xf32>
    %177 = arith.addf %133, %176 : vector<1x288xf32>
    %178 = tpu.concatenate %173, %177 in 0 : vector<1x288xf32>, vector<1x288xf32> -> vector<2x288xf32>
    %c0_153 = arith.constant 0 : index
    %c0_154 = arith.constant 0 : index
    %179 = vector.load %arg5[%c0_153, %c0_154] : memref<288x16xf32, #tpu.memory_space<vmem>>, vector<288x16xf32>
    %cst_155 = arith.constant dense<0.000000e+00> : vector<2x16xf32>
    %180 = tpu.matmul %178, %179, %cst_155 {dimension_numbers = #tpu.dot_dimension_numbers<[1], [0], [0], [1], [0, 0, 1, 1], [], []>} : vector<2x288xf32>, vector<288x16xf32>, vector<2x16xf32> -> vector<2x16xf32>
    %cst_156 = arith.constant 6.480000e+02 : f32
    %181 = vector.broadcast %cst_156 : f32 to vector<2x16xf32>
    %182 = arith.divf %180, %181 : vector<2x16xf32>
    %183 = vector.extract_strided_slice %182 {offsets = [0, 0], sizes = [1, 16], strides = [1, 1]} : vector<2x16xf32> to vector<1x16xf32>
    %184 = vector.extract_strided_slice %182 {offsets = [1, 0], sizes = [1, 16], strides = [1, 1]} : vector<2x16xf32> to vector<1x16xf32>
    %185 = arith.mulf %183, %183 : vector<1x16xf32>
    %186 = arith.subf %184, %185 : vector<1x16xf32>
    %cst_157 = arith.constant 0.000000e+00 : f32
    %187 = vector.broadcast %cst_157 : f32 to vector<1x16xf32>
    %188 = arith.maximumf %186, %187 : vector<1x16xf32>
    %c0_158 = arith.constant 0 : index
    %c0_159 = arith.constant 0 : index
    %189 = vector.load %arg3[%c0_158, %c0_159] : memref<1x16xf32, #tpu.memory_space<vmem>>, vector<1x16xf32>
    %cst_160 = arith.constant 9.99999974E-6 : f32
    %190 = vector.broadcast %cst_160 : f32 to vector<1x16xf32>
    %191 = arith.addf %188, %190 : vector<1x16xf32>
    %192 = math.rsqrt %191 : vector<1x16xf32>
    %193 = arith.mulf %189, %192 : vector<1x16xf32>
    %c0_161 = arith.constant 0 : index
    %c0_162 = arith.constant 0 : index
    %194 = vector.load %arg4[%c0_161, %c0_162] : memref<1x16xf32, #tpu.memory_space<vmem>>, vector<1x16xf32>
    %195 = arith.mulf %183, %193 : vector<1x16xf32>
    %196 = arith.subf %194, %195 : vector<1x16xf32>
    %197 = tpu.concatenate %193, %196 in 0 : vector<1x16xf32>, vector<1x16xf32> -> vector<2x16xf32>
    %c0_163 = arith.constant 0 : index
    %c0_164 = arith.constant 0 : index
    %198 = vector.load %arg6[%c0_163, %c0_164] : memref<16x288xf32, #tpu.memory_space<vmem>>, vector<16x288xf32>
    %cst_165 = arith.constant dense<0.000000e+00> : vector<2x288xf32>
    %199 = tpu.matmul %197, %198, %cst_165 {dimension_numbers = #tpu.dot_dimension_numbers<[1], [0], [0], [1], [0, 0, 1, 1], [], []>} : vector<2x16xf32>, vector<16x288xf32>, vector<2x288xf32> -> vector<2x288xf32>
    %200 = vector.extract_strided_slice %199 {offsets = [0, 0], sizes = [1, 288], strides = [1, 1]} : vector<2x288xf32> to vector<1x288xf32>
    %201 = vector.extract_strided_slice %199 {offsets = [1, 0], sizes = [1, 288], strides = [1, 1]} : vector<2x288xf32> to vector<1x288xf32>
    %c0_166 = arith.constant 0 : index
    %c0_167 = arith.constant 0 : index
    %c0_168 = arith.constant 0 : index
    %202 = vector.load %arg20[%c0_166, %c0_167, %c0_168] : memref<4x10x288xf32, #tpu.memory_space<vmem>>, vector<1x10x288xf32>
    %203 = vector.shape_cast %202 : vector<1x10x288xf32> to vector<10x288xf32>
    %204 = vector.broadcast %200 : vector<1x288xf32> to vector<10x288xf32>
    %205 = arith.mulf %203, %204 : vector<10x288xf32>
    %206 = vector.broadcast %201 : vector<1x288xf32> to vector<10x288xf32>
    %207 = arith.addf %205, %206 : vector<10x288xf32>
    %cst_169 = arith.constant 0.000000e+00 : f32
    %208 = vector.broadcast %cst_169 : f32 to vector<10x288xf32>
    %209 = arith.maximumf %207, %208 : vector<10x288xf32>
    %c0_170 = arith.constant 0 : index
    %c0_171 = arith.constant 0 : index
    %c0_172 = arith.constant 0 : index
    %210 = vector.load %arg20[%c0_170, %c0_171, %c0_172] : memref<4x10x288xf32, #tpu.memory_space<vmem>>, vector<1x10x288xf32>
    %211 = vector.shape_cast %210 : vector<1x10x288xf32> to vector<10x288xf32>
    %212 = vector.shape_cast %209 : vector<10x288xf32> to vector<1x10x288xf32>
    tpu.vector_store %arg20[%c0_170, %c0_171, %c0_172], %212 {strides = array<i32>} : memref<4x10x288xf32, #tpu.memory_space<vmem>>, vector<1x10x288xf32>,
    %c1_173 = arith.constant 1 : index
    %c0_174 = arith.constant 0 : index
    %c0_175 = arith.constant 0 : index
    %213 = vector.load %arg20[%c1_173, %c0_174, %c0_175] : memref<4x10x288xf32, #tpu.memory_space<vmem>>, vector<1x10x288xf32>
    %214 = vector.shape_cast %213 : vector<1x10x288xf32> to vector<10x288xf32>
    %215 = vector.broadcast %200 : vector<1x288xf32> to vector<10x288xf32>
    %216 = arith.mulf %214, %215 : vector<10x288xf32>
    %217 = vector.broadcast %201 : vector<1x288xf32> to vector<10x288xf32>
    %218 = arith.addf %216, %217 : vector<10x288xf32>
    %cst_176 = arith.constant 0.000000e+00 : f32
    %219 = vector.broadcast %cst_176 : f32 to vector<10x288xf32>
    %220 = arith.maximumf %218, %219 : vector<10x288xf32>
    %c1_177 = arith.constant 1 : index
    %c0_178 = arith.constant 0 : index
    %c0_179 = arith.constant 0 : index
    %221 = vector.load %arg20[%c1_177, %c0_178, %c0_179] : memref<4x10x288xf32, #tpu.memory_space<vmem>>, vector<1x10x288xf32>
    %222 = vector.shape_cast %221 : vector<1x10x288xf32> to vector<10x288xf32>
    %223 = vector.shape_cast %220 : vector<10x288xf32> to vector<1x10x288xf32>
    tpu.vector_store %arg20[%c1_177, %c0_178, %c0_179], %223 {strides = array<i32>} : memref<4x10x288xf32, #tpu.memory_space<vmem>>, vector<1x10x288xf32>,
    %c2_180 = arith.constant 2 : index
    %c0_181 = arith.constant 0 : index
    %c0_182 = arith.constant 0 : index
    %224 = vector.load %arg20[%c2_180, %c0_181, %c0_182] : memref<4x10x288xf32, #tpu.memory_space<vmem>>, vector<1x8x288xf32>
    %225 = vector.shape_cast %224 : vector<1x8x288xf32> to vector<8x288xf32>
    %226 = vector.broadcast %200 : vector<1x288xf32> to vector<8x288xf32>
    %227 = arith.mulf %225, %226 : vector<8x288xf32>
    %228 = vector.broadcast %201 : vector<1x288xf32> to vector<8x288xf32>
    %229 = arith.addf %227, %228 : vector<8x288xf32>
    %cst_183 = arith.constant 0.000000e+00 : f32
    %230 = vector.broadcast %cst_183 : f32 to vector<8x288xf32>
    %231 = arith.maximumf %229, %230 : vector<8x288xf32>
    %c2_184 = arith.constant 2 : index
    %c0_185 = arith.constant 0 : index
    %c0_186 = arith.constant 0 : index
    %232 = vector.load %arg20[%c2_184, %c0_185, %c0_186] : memref<4x10x288xf32, #tpu.memory_space<vmem>>, vector<1x8x288xf32>
    %233 = vector.shape_cast %232 : vector<1x8x288xf32> to vector<8x288xf32>
    %234 = vector.shape_cast %231 : vector<8x288xf32> to vector<1x8x288xf32>
    tpu.vector_store %arg20[%c2_184, %c0_185, %c0_186], %234 {strides = array<i32>} : memref<4x10x288xf32, #tpu.memory_space<vmem>>, vector<1x8x288xf32>,
    %c3_187 = arith.constant 3 : index
    %c0_188 = arith.constant 0 : index
    %c0_189 = arith.constant 0 : index
    %235 = vector.load %arg20[%c3_187, %c0_188, %c0_189] : memref<4x10x288xf32, #tpu.memory_space<vmem>>, vector<1x8x288xf32>
    %236 = vector.shape_cast %235 : vector<1x8x288xf32> to vector<8x288xf32>
    %237 = vector.broadcast %200 : vector<1x288xf32> to vector<8x288xf32>
    %238 = arith.mulf %236, %237 : vector<8x288xf32>
    %239 = vector.broadcast %201 : vector<1x288xf32> to vector<8x288xf32>
    %240 = arith.addf %238, %239 : vector<8x288xf32>
    %cst_190 = arith.constant 0.000000e+00 : f32
    %241 = vector.broadcast %cst_190 : f32 to vector<8x288xf32>
    %242 = arith.maximumf %240, %241 : vector<8x288xf32>
    %c3_191 = arith.constant 3 : index
    %c0_192 = arith.constant 0 : index
    %c0_193 = arith.constant 0 : index
    %243 = vector.load %arg20[%c3_191, %c0_192, %c0_193] : memref<4x10x288xf32, #tpu.memory_space<vmem>>, vector<1x8x288xf32>
    %244 = vector.shape_cast %243 : vector<1x8x288xf32> to vector<8x288xf32>
    %245 = vector.shape_cast %242 : vector<8x288xf32> to vector<1x8x288xf32>
    tpu.vector_store %arg20[%c3_191, %c0_192, %c0_193], %245 {strides = array<i32>} : memref<4x10x288xf32, #tpu.memory_space<vmem>>, vector<1x8x288xf32>,
    %cst_194 = arith.constant 0.000000e+00 : f32
    %246 = vector.broadcast %cst_194 : f32 to vector<1x224xf32>
    %cst_195 = arith.constant 0.000000e+00 : f32
    %247 = vector.broadcast %cst_195 : f32 to vector<1x224xf32>
    %c0_196 = arith.constant 0 : index
    %c0_197 = arith.constant 0 : index
    %c0_198 = arith.constant 0 : index
    %248 = vector.load %arg20[%c0_196, %c0_197, %c0_198] : memref<4x10x288xf32, #tpu.memory_space<vmem>>, vector<1x8x288xf32>
    %249 = vector.shape_cast %248 : vector<1x8x288xf32> to vector<8x288xf32>
    %250 = arith.truncf %249 : vector<8x288xf32> to vector<8x288xbf16>
    %c0_199 = arith.constant 0 : index
    %c0_200 = arith.constant 0 : index
    %c0_201 = arith.constant 0 : index
    %251 = vector.load %arg7[%c0_199, %c0_200, %c0_201] : memref<5x288x224xbf16, #tpu.memory_space<vmem>>, vector<1x288x224xbf16>
    %252 = vector.shape_cast %251 : vector<1x288x224xbf16> to vector<288x224xbf16>
    %cst_202 = arith.constant dense<0.000000e+00> : vector<8x224xf32>
    %253 = tpu.matmul %250, %252, %cst_202 {dimension_numbers = #tpu.dot_dimension_numbers<[1], [0], [0], [1], [0, 0, 1, 1], [], []>} : vector<8x288xbf16>, vector<288x224xbf16>, vector<8x224xf32> -> vector<8x224xf32>
    %c1_203 = arith.constant 1 : index
    %c0_204 = arith.constant 0 : index
    %c0_205 = arith.constant 0 : index
    %254 = vector.load %arg20[%c1_203, %c0_204, %c0_205] : memref<4x10x288xf32, #tpu.memory_space<vmem>>, vector<1x8x288xf32>
    %255 = vector.shape_cast %254 : vector<1x8x288xf32> to vector<8x288xf32>
    %256 = arith.truncf %255 : vector<8x288xf32> to vector<8x288xbf16>
    %c1_206 = arith.constant 1 : index
    %c0_207 = arith.constant 0 : index
    %c0_208 = arith.constant 0 : index
    %257 = vector.load %arg7[%c1_206, %c0_207, %c0_208] : memref<5x288x224xbf16, #tpu.memory_space<vmem>>, vector<1x288x224xbf16>
    %258 = vector.shape_cast %257 : vector<1x288x224xbf16> to vector<288x224xbf16>
    %cst_209 = arith.constant dense<0.000000e+00> : vector<8x224xf32>
    %259 = tpu.matmul %256, %258, %cst_209 {dimension_numbers = #tpu.dot_dimension_numbers<[1], [0], [0], [1], [0, 0, 1, 1], [], []>} : vector<8x288xbf16>, vector<288x224xbf16>, vector<8x224xf32> -> vector<8x224xf32>
    %260 = arith.addf %253, %259 : vector<8x224xf32>
    %c2_210 = arith.constant 2 : index
    %c0_211 = arith.constant 0 : index
    %c0_212 = arith.constant 0 : index
    %261 = vector.load %arg20[%c2_210, %c0_211, %c0_212] : memref<4x10x288xf32, #tpu.memory_space<vmem>>, vector<1x8x288xf32>
    %262 = vector.shape_cast %261 : vector<1x8x288xf32> to vector<8x288xf32>
    %263 = arith.truncf %262 : vector<8x288xf32> to vector<8x288xbf16>
    %c2_213 = arith.constant 2 : index
    %c0_214 = arith.constant 0 : index
    %c0_215 = arith.constant 0 : index
    %264 = vector.load %arg7[%c2_213, %c0_214, %c0_215] : memref<5x288x224xbf16, #tpu.memory_space<vmem>>, vector<1x288x224xbf16>
    %265 = vector.shape_cast %264 : vector<1x288x224xbf16> to vector<288x224xbf16>
    %cst_216 = arith.constant dense<0.000000e+00> : vector<8x224xf32>
    %266 = tpu.matmul %263, %265, %cst_216 {dimension_numbers = #tpu.dot_dimension_numbers<[1], [0], [0], [1], [0, 0, 1, 1], [], []>} : vector<8x288xbf16>, vector<288x224xbf16>, vector<8x224xf32> -> vector<8x224xf32>
    %267 = arith.addf %260, %266 : vector<8x224xf32>
    %c3_217 = arith.constant 3 : index
    %c0_218 = arith.constant 0 : index
    %c0_219 = arith.constant 0 : index
    %268 = vector.load %arg20[%c3_217, %c0_218, %c0_219] : memref<4x10x288xf32, #tpu.memory_space<vmem>>, vector<1x8x288xf32>
    %269 = vector.shape_cast %268 : vector<1x8x288xf32> to vector<8x288xf32>
    %270 = arith.truncf %269 : vector<8x288xf32> to vector<8x288xbf16>
    %c3_220 = arith.constant 3 : index
    %c0_221 = arith.constant 0 : index
    %c0_222 = arith.constant 0 : index
    %271 = vector.load %arg7[%c3_220, %c0_221, %c0_222] : memref<5x288x224xbf16, #tpu.memory_space<vmem>>, vector<1x288x224xbf16>
    %272 = vector.shape_cast %271 : vector<1x288x224xbf16> to vector<288x224xbf16>
    %cst_223 = arith.constant dense<0.000000e+00> : vector<8x224xf32>
    %273 = tpu.matmul %270, %272, %cst_223 {dimension_numbers = #tpu.dot_dimension_numbers<[1], [0], [0], [1], [0, 0, 1, 1], [], []>} : vector<8x288xbf16>, vector<288x224xbf16>, vector<8x224xf32> -> vector<8x224xf32>
    %274 = arith.addf %267, %273 : vector<8x224xf32>
    %c0_224 = arith.constant 0 : index
    %c2_225 = arith.constant 2 : index
    %c0_226 = arith.constant 0 : index
    %275 = vector.load %arg20[%c0_224, %c2_225, %c0_226] : memref<4x10x288xf32, #tpu.memory_space<vmem>>, vector<1x8x288xf32>
    %276 = vector.shape_cast %275 : vector<1x8x288xf32> to vector<8x288xf32>
    %277 = arith.truncf %276 : vector<8x288xf32> to vector<8x288xbf16>
    %c4_227 = arith.constant 4 : index
    %c0_228 = arith.constant 0 : index
    %c0_229 = arith.constant 0 : index
    %278 = vector.load %arg7[%c4_227, %c0_228, %c0_229] : memref<5x288x224xbf16, #tpu.memory_space<vmem>>, vector<1x288x224xbf16>
    %279 = vector.shape_cast %278 : vector<1x288x224xbf16> to vector<288x224xbf16>
    %cst_230 = arith.constant dense<0.000000e+00> : vector<8x224xf32>
    %280 = tpu.matmul %277, %279, %cst_230 {dimension_numbers = #tpu.dot_dimension_numbers<[1], [0], [0], [1], [0, 0, 1, 1], [], []>} : vector<8x288xbf16>, vector<288x224xbf16>, vector<8x224xf32> -> vector<8x224xf32>
    %281 = arith.addf %274, %280 : vector<8x224xf32>
    %c0_231 = arith.constant 0 : index
    %c0_232 = arith.constant 0 : index
    %c0_233 = arith.constant 0 : index
    %282 = vector.load %arg21[%c0_231, %c0_232, %c0_233] : memref<2x8x224xf32, #tpu.memory_space<vmem>>, vector<1x8x224xf32>
    %283 = vector.shape_cast %282 : vector<1x8x224xf32> to vector<8x224xf32>
    %284 = vector.shape_cast %281 : vector<8x224xf32> to vector<1x8x224xf32>
    tpu.vector_store %arg21[%c0_231, %c0_232, %c0_233], %284 {strides = array<i32>} : memref<2x8x224xf32, #tpu.memory_space<vmem>>, vector<1x8x224xf32>,
    %cst_234 = arith.constant dense<0.000000e+00> : vector<224xf32>
    %285 = vector.multi_reduction <add>, %281, %cst_234 [0] : vector<8x224xf32> to vector<224xf32>
    %286 = vector.shape_cast %285 : vector<224xf32> to vector<1x224xf32>
    %287 = arith.addf %246, %286 : vector<1x224xf32>
    %288 = arith.mulf %281, %281 : vector<8x224xf32>
    %cst_235 = arith.constant dense<0.000000e+00> : vector<224xf32>
    %289 = vector.multi_reduction <add>, %288, %cst_235 [0] : vector<8x224xf32> to vector<224xf32>
    %290 = vector.shape_cast %289 : vector<224xf32> to vector<1x224xf32>
    %291 = arith.addf %247, %290 : vector<1x224xf32>
    %c2_236 = arith.constant 2 : index
    %c0_237 = arith.constant 0 : index
    %c0_238 = arith.constant 0 : index
    %292 = vector.load %arg20[%c2_236, %c0_237, %c0_238] : memref<4x10x288xf32, #tpu.memory_space<vmem>>, vector<1x6x288xf32>
    %293 = vector.shape_cast %292 : vector<1x6x288xf32> to vector<6x288xf32>
    %294 = arith.truncf %293 : vector<6x288xf32> to vector<6x288xbf16>
    %c0_239 = arith.constant 0 : index
    %c0_240 = arith.constant 0 : index
    %c0_241 = arith.constant 0 : index
    %295 = vector.load %arg7[%c0_239, %c0_240, %c0_241] : memref<5x288x224xbf16, #tpu.memory_space<vmem>>, vector<1x288x224xbf16>
    %296 = vector.shape_cast %295 : vector<1x288x224xbf16> to vector<288x224xbf16>
    %cst_242 = arith.constant dense<0.000000e+00> : vector<6x224xf32>
    %297 = tpu.matmul %294, %296, %cst_242 {dimension_numbers = #tpu.dot_dimension_numbers<[1], [0], [0], [1], [0, 0, 1, 1], [], []>} : vector<6x288xbf16>, vector<288x224xbf16>, vector<6x224xf32> -> vector<6x224xf32>
    %c3_243 = arith.constant 3 : index
    %c0_244 = arith.constant 0 : index
    %c0_245 = arith.constant 0 : index
    %298 = vector.load %arg20[%c3_243, %c0_244, %c0_245] : memref<4x10x288xf32, #tpu.memory_space<vmem>>, vector<1x6x288xf32>
    %299 = vector.shape_cast %298 : vector<1x6x288xf32> to vector<6x288xf32>
    %300 = arith.truncf %299 : vector<6x288xf32> to vector<6x288xbf16>
    %c1_246 = arith.constant 1 : index
    %c0_247 = arith.constant 0 : index
    %c0_248 = arith.constant 0 : index
    %301 = vector.load %arg7[%c1_246, %c0_247, %c0_248] : memref<5x288x224xbf16, #tpu.memory_space<vmem>>, vector<1x288x224xbf16>
    %302 = vector.shape_cast %301 : vector<1x288x224xbf16> to vector<288x224xbf16>
    %cst_249 = arith.constant dense<0.000000e+00> : vector<6x224xf32>
    %303 = tpu.matmul %300, %302, %cst_249 {dimension_numbers = #tpu.dot_dimension_numbers<[1], [0], [0], [1], [0, 0, 1, 1], [], []>} : vector<6x288xbf16>, vector<288x224xbf16>, vector<6x224xf32> -> vector<6x224xf32>
    %304 = arith.addf %297, %303 : vector<6x224xf32>
    %c0_250 = arith.constant 0 : index
    %c2_251 = arith.constant 2 : index
    %c0_252 = arith.constant 0 : index
    %305 = vector.load %arg20[%c0_250, %c2_251, %c0_252] : memref<4x10x288xf32, #tpu.memory_space<vmem>>, vector<1x6x288xf32>
    %306 = vector.shape_cast %305 : vector<1x6x288xf32> to vector<6x288xf32>
    %307 = arith.truncf %306 : vector<6x288xf32> to vector<6x288xbf16>
    %c2_253 = arith.constant 2 : index
    %c0_254 = arith.constant 0 : index
    %c0_255 = arith.constant 0 : index
    %308 = vector.load %arg7[%c2_253, %c0_254, %c0_255] : memref<5x288x224xbf16, #tpu.memory_space<vmem>>, vector<1x288x224xbf16>
    %309 = vector.shape_cast %308 : vector<1x288x224xbf16> to vector<288x224xbf16>
    %cst_256 = arith.constant dense<0.000000e+00> : vector<6x224xf32>
    %310 = tpu.matmul %307, %309, %cst_256 {dimension_numbers = #tpu.dot_dimension_numbers<[1], [0], [0], [1], [0, 0, 1, 1], [], []>} : vector<6x288xbf16>, vector<288x224xbf16>, vector<6x224xf32> -> vector<6x224xf32>
    %311 = arith.addf %304, %310 : vector<6x224xf32>
    %c1_257 = arith.constant 1 : index
    %c2_258 = arith.constant 2 : index
    %c0_259 = arith.constant 0 : index
    %312 = vector.load %arg20[%c1_257, %c2_258, %c0_259] : memref<4x10x288xf32, #tpu.memory_space<vmem>>, vector<1x6x288xf32>
    %313 = vector.shape_cast %312 : vector<1x6x288xf32> to vector<6x288xf32>
    %314 = arith.truncf %313 : vector<6x288xf32> to vector<6x288xbf16>
    %c3_260 = arith.constant 3 : index
    %c0_261 = arith.constant 0 : index
    %c0_262 = arith.constant 0 : index
    %315 = vector.load %arg7[%c3_260, %c0_261, %c0_262] : memref<5x288x224xbf16, #tpu.memory_space<vmem>>, vector<1x288x224xbf16>
    %316 = vector.shape_cast %315 : vector<1x288x224xbf16> to vector<288x224xbf16>
    %cst_263 = arith.constant dense<0.000000e+00> : vector<6x224xf32>
    %317 = tpu.matmul %314, %316, %cst_263 {dimension_numbers = #tpu.dot_dimension_numbers<[1], [0], [0], [1], [0, 0, 1, 1], [], []>} : vector<6x288xbf16>, vector<288x224xbf16>, vector<6x224xf32> -> vector<6x224xf32>
    %318 = arith.addf %311, %317 : vector<6x224xf32>
    %c2_264 = arith.constant 2 : index
    %c2_265 = arith.constant 2 : index
    %c0_266 = arith.constant 0 : index
    %319 = vector.load %arg20[%c2_264, %c2_265, %c0_266] : memref<4x10x288xf32, #tpu.memory_space<vmem>>, vector<1x6x288xf32>
    %320 = vector.shape_cast %319 : vector<1x6x288xf32> to vector<6x288xf32>
    %321 = arith.truncf %320 : vector<6x288xf32> to vector<6x288xbf16>
    %c4_267 = arith.constant 4 : index
    %c0_268 = arith.constant 0 : index
    %c0_269 = arith.constant 0 : index
    %322 = vector.load %arg7[%c4_267, %c0_268, %c0_269] : memref<5x288x224xbf16, #tpu.memory_space<vmem>>, vector<1x288x224xbf16>
    %323 = vector.shape_cast %322 : vector<1x288x224xbf16> to vector<288x224xbf16>
    %cst_270 = arith.constant dense<0.000000e+00> : vector<6x224xf32>
    %324 = tpu.matmul %321, %323, %cst_270 {dimension_numbers = #tpu.dot_dimension_numbers<[1], [0], [0], [1], [0, 0, 1, 1], [], []>} : vector<6x288xbf16>, vector<288x224xbf16>, vector<6x224xf32> -> vector<6x224xf32>
    %325 = arith.addf %318, %324 : vector<6x224xf32>
    %c1_271 = arith.constant 1 : index
    %c0_272 = arith.constant 0 : index
    %c0_273 = arith.constant 0 : index
    %326 = vector.load %arg21[%c1_271, %c0_272, %c0_273] : memref<2x8x224xf32, #tpu.memory_space<vmem>>, vector<1x6x224xf32>
    %327 = vector.shape_cast %326 : vector<1x6x224xf32> to vector<6x224xf32>
    %328 = vector.shape_cast %325 : vector<6x224xf32> to vector<1x6x224xf32>
    tpu.vector_store %arg21[%c1_271, %c0_272, %c0_273], %328 {strides = array<i32>} : memref<2x8x224xf32, #tpu.memory_space<vmem>>, vector<1x6x224xf32>,
    %cst_274 = arith.constant dense<0.000000e+00> : vector<224xf32>
    %329 = vector.multi_reduction <add>, %325, %cst_274 [0] : vector<6x224xf32> to vector<224xf32>
    %330 = vector.shape_cast %329 : vector<224xf32> to vector<1x224xf32>
    %331 = arith.addf %287, %330 : vector<1x224xf32>
    %332 = arith.mulf %325, %325 : vector<6x224xf32>
    %cst_275 = arith.constant dense<0.000000e+00> : vector<224xf32>
    %333 = vector.multi_reduction <add>, %332, %cst_275 [0] : vector<6x224xf32> to vector<224xf32>
    %334 = vector.shape_cast %333 : vector<224xf32> to vector<1x224xf32>
    %335 = arith.addf %291, %334 : vector<1x224xf32>
    %336 = tpu.concatenate %331, %335 in 0 : vector<1x224xf32>, vector<1x224xf32> -> vector<2x224xf32>
    %c0_276 = arith.constant 0 : index
    %c0_277 = arith.constant 0 : index
    %337 = vector.load %arg10[%c0_276, %c0_277] : memref<224x32xf32, #tpu.memory_space<vmem>>, vector<224x32xf32>
    %cst_278 = arith.constant dense<0.000000e+00> : vector<2x32xf32>
    %338 = tpu.matmul %336, %337, %cst_278 {dimension_numbers = #tpu.dot_dimension_numbers<[1], [0], [0], [1], [0, 0, 1, 1], [], []>} : vector<2x224xf32>, vector<224x32xf32>, vector<2x32xf32> -> vector<2x32xf32>
    %cst_279 = arith.constant 9.800000e+01 : f32
    %339 = vector.broadcast %cst_279 : f32 to vector<2x32xf32>
    %340 = arith.divf %338, %339 : vector<2x32xf32>
    %341 = vector.extract_strided_slice %340 {offsets = [0, 0], sizes = [1, 32], strides = [1, 1]} : vector<2x32xf32> to vector<1x32xf32>
    %342 = vector.extract_strided_slice %340 {offsets = [1, 0], sizes = [1, 32], strides = [1, 1]} : vector<2x32xf32> to vector<1x32xf32>
    %343 = arith.mulf %341, %341 : vector<1x32xf32>
    %344 = arith.subf %342, %343 : vector<1x32xf32>
    %cst_280 = arith.constant 0.000000e+00 : f32
    %345 = vector.broadcast %cst_280 : f32 to vector<1x32xf32>
    %346 = arith.maximumf %344, %345 : vector<1x32xf32>
    %c0_281 = arith.constant 0 : index
    %c0_282 = arith.constant 0 : index
    %347 = vector.load %arg8[%c0_281, %c0_282] : memref<1x32xf32, #tpu.memory_space<vmem>>, vector<1x32xf32>
    %cst_283 = arith.constant 9.99999974E-6 : f32
    %348 = vector.broadcast %cst_283 : f32 to vector<1x32xf32>
    %349 = arith.addf %346, %348 : vector<1x32xf32>
    %350 = math.rsqrt %349 : vector<1x32xf32>
    %351 = arith.mulf %347, %350 : vector<1x32xf32>
    %c0_284 = arith.constant 0 : index
    %c0_285 = arith.constant 0 : index
    %352 = vector.load %arg9[%c0_284, %c0_285] : memref<1x32xf32, #tpu.memory_space<vmem>>, vector<1x32xf32>
    %353 = arith.mulf %341, %351 : vector<1x32xf32>
    %354 = arith.subf %352, %353 : vector<1x32xf32>
    %355 = tpu.concatenate %351, %354 in 0 : vector<1x32xf32>, vector<1x32xf32> -> vector<2x32xf32>
    %c0_286 = arith.constant 0 : index
    %c0_287 = arith.constant 0 : index
    %356 = vector.load %arg11[%c0_286, %c0_287] : memref<32x224xf32, #tpu.memory_space<vmem>>, vector<32x224xf32>
    %cst_288 = arith.constant dense<0.000000e+00> : vector<2x224xf32>
    %357 = tpu.matmul %355, %356, %cst_288 {dimension_numbers = #tpu.dot_dimension_numbers<[1], [0], [0], [1], [0, 0, 1, 1], [], []>} : vector<2x32xf32>, vector<32x224xf32>, vector<2x224xf32> -> vector<2x224xf32>
    %358 = vector.extract_strided_slice %357 {offsets = [0, 0], sizes = [1, 224], strides = [1, 1]} : vector<2x224xf32> to vector<1x224xf32>
    %359 = vector.extract_strided_slice %357 {offsets = [1, 0], sizes = [1, 224], strides = [1, 1]} : vector<2x224xf32> to vector<1x224xf32>
    %c0_289 = arith.constant 0 : index
    %c0_290 = arith.constant 0 : index
    %c0_291 = arith.constant 0 : index
    %360 = vector.load %arg21[%c0_289, %c0_290, %c0_291] : memref<2x8x224xf32, #tpu.memory_space<vmem>>, vector<1x8x224xf32>
    %361 = vector.shape_cast %360 : vector<1x8x224xf32> to vector<8x224xf32>
    %362 = vector.broadcast %358 : vector<1x224xf32> to vector<8x224xf32>
    %363 = arith.mulf %361, %362 : vector<8x224xf32>
    %364 = vector.broadcast %359 : vector<1x224xf32> to vector<8x224xf32>
    %365 = arith.addf %363, %364 : vector<8x224xf32>
    %cst_292 = arith.constant 0.000000e+00 : f32
    %366 = vector.broadcast %cst_292 : f32 to vector<8x224xf32>
    %367 = arith.maximumf %365, %366 : vector<8x224xf32>
    %c0_293 = arith.constant 0 : index
    %c0_294 = arith.constant 0 : index
    %c0_295 = arith.constant 0 : index
    %368 = vector.load %arg21[%c0_293, %c0_294, %c0_295] : memref<2x8x224xf32, #tpu.memory_space<vmem>>, vector<1x8x224xf32>
    %369 = vector.shape_cast %368 : vector<1x8x224xf32> to vector<8x224xf32>
    %370 = vector.shape_cast %367 : vector<8x224xf32> to vector<1x8x224xf32>
    tpu.vector_store %arg21[%c0_293, %c0_294, %c0_295], %370 {strides = array<i32>} : memref<2x8x224xf32, #tpu.memory_space<vmem>>, vector<1x8x224xf32>,
    %c1_296 = arith.constant 1 : index
    %c0_297 = arith.constant 0 : index
    %c0_298 = arith.constant 0 : index
    %371 = vector.load %arg21[%c1_296, %c0_297, %c0_298] : memref<2x8x224xf32, #tpu.memory_space<vmem>>, vector<1x6x224xf32>
    %372 = vector.shape_cast %371 : vector<1x6x224xf32> to vector<6x224xf32>
    %373 = vector.broadcast %358 : vector<1x224xf32> to vector<6x224xf32>
    %374 = arith.mulf %372, %373 : vector<6x224xf32>
    %375 = vector.broadcast %359 : vector<1x224xf32> to vector<6x224xf32>
    %376 = arith.addf %374, %375 : vector<6x224xf32>
    %cst_299 = arith.constant 0.000000e+00 : f32
    %377 = vector.broadcast %cst_299 : f32 to vector<6x224xf32>
    %378 = arith.maximumf %376, %377 : vector<6x224xf32>
    %c1_300 = arith.constant 1 : index
    %c0_301 = arith.constant 0 : index
    %c0_302 = arith.constant 0 : index
    %379 = vector.load %arg21[%c1_300, %c0_301, %c0_302] : memref<2x8x224xf32, #tpu.memory_space<vmem>>, vector<1x6x224xf32>
    %380 = vector.shape_cast %379 : vector<1x6x224xf32> to vector<6x224xf32>
    %381 = vector.shape_cast %378 : vector<6x224xf32> to vector<1x6x224xf32>
    tpu.vector_store %arg21[%c1_300, %c0_301, %c0_302], %381 {strides = array<i32>} : memref<2x8x224xf32, #tpu.memory_space<vmem>>, vector<1x6x224xf32>,
    %cst_303 = arith.constant 0.000000e+00 : f32
    %382 = vector.broadcast %cst_303 : f32 to vector<1x64xf32>
    %cst_304 = arith.constant 0.000000e+00 : f32
    %383 = vector.broadcast %cst_304 : f32 to vector<1x64xf32>
    %c0_305 = arith.constant 0 : index
    %c0_306 = arith.constant 0 : index
    %c0_307 = arith.constant 0 : index
    %384 = vector.load %arg21[%c0_305, %c0_306, %c0_307] : memref<2x8x224xf32, #tpu.memory_space<vmem>>, vector<1x4x224xf32>
    %385 = vector.shape_cast %384 : vector<1x4x224xf32> to vector<4x224xf32>
    %386 = arith.truncf %385 : vector<4x224xf32> to vector<4x224xbf16>
    %c0_308 = arith.constant 0 : index
    %c0_309 = arith.constant 0 : index
    %c0_310 = arith.constant 0 : index
    %387 = vector.load %arg12[%c0_308, %c0_309, %c0_310] : memref<5x224x64xbf16, #tpu.memory_space<vmem>>, vector<1x224x64xbf16>
    %388 = vector.shape_cast %387 : vector<1x224x64xbf16> to vector<224x64xbf16>
    %cst_311 = arith.constant dense<0.000000e+00> : vector<4x64xf32>
    %389 = tpu.matmul %386, %388, %cst_311 {dimension_numbers = #tpu.dot_dimension_numbers<[1], [0], [0], [1], [0, 0, 1, 1], [], []>} : vector<4x224xbf16>, vector<224x64xbf16>, vector<4x64xf32> -> vector<4x64xf32>
    %c1_312 = arith.constant 1 : index
    %c0_313 = arith.constant 0 : index
    %c0_314 = arith.constant 0 : index
    %390 = vector.load %arg21[%c1_312, %c0_313, %c0_314] : memref<2x8x224xf32, #tpu.memory_space<vmem>>, vector<1x4x224xf32>
    %391 = vector.shape_cast %390 : vector<1x4x224xf32> to vector<4x224xf32>
    %392 = arith.truncf %391 : vector<4x224xf32> to vector<4x224xbf16>
    %c1_315 = arith.constant 1 : index
    %c0_316 = arith.constant 0 : index
    %c0_317 = arith.constant 0 : index
    %393 = vector.load %arg12[%c1_315, %c0_316, %c0_317] : memref<5x224x64xbf16, #tpu.memory_space<vmem>>, vector<1x224x64xbf16>
    %394 = vector.shape_cast %393 : vector<1x224x64xbf16> to vector<224x64xbf16>
    %cst_318 = arith.constant dense<0.000000e+00> : vector<4x64xf32>
    %395 = tpu.matmul %392, %394, %cst_318 {dimension_numbers = #tpu.dot_dimension_numbers<[1], [0], [0], [1], [0, 0, 1, 1], [], []>} : vector<4x224xbf16>, vector<224x64xbf16>, vector<4x64xf32> -> vector<4x64xf32>
    %396 = arith.addf %389, %395 : vector<4x64xf32>
    %c0_319 = arith.constant 0 : index
    %c2_320 = arith.constant 2 : index
    %c0_321 = arith.constant 0 : index
    %397 = vector.load %arg21[%c0_319, %c2_320, %c0_321] : memref<2x8x224xf32, #tpu.memory_space<vmem>>, vector<1x4x224xf32>
    %398 = vector.shape_cast %397 : vector<1x4x224xf32> to vector<4x224xf32>
    %399 = arith.truncf %398 : vector<4x224xf32> to vector<4x224xbf16>
    %c2_322 = arith.constant 2 : index
    %c0_323 = arith.constant 0 : index
    %c0_324 = arith.constant 0 : index
    %400 = vector.load %arg12[%c2_322, %c0_323, %c0_324] : memref<5x224x64xbf16, #tpu.memory_space<vmem>>, vector<1x224x64xbf16>
    %401 = vector.shape_cast %400 : vector<1x224x64xbf16> to vector<224x64xbf16>
    %cst_325 = arith.constant dense<0.000000e+00> : vector<4x64xf32>
    %402 = tpu.matmul %399, %401, %cst_325 {dimension_numbers = #tpu.dot_dimension_numbers<[1], [0], [0], [1], [0, 0, 1, 1], [], []>} : vector<4x224xbf16>, vector<224x64xbf16>, vector<4x64xf32> -> vector<4x64xf32>
    %403 = arith.addf %396, %402 : vector<4x64xf32>
    %c1_326 = arith.constant 1 : index
    %c2_327 = arith.constant 2 : index
    %c0_328 = arith.constant 0 : index
    %404 = vector.load %arg21[%c1_326, %c2_327, %c0_328] : memref<2x8x224xf32, #tpu.memory_space<vmem>>, vector<1x4x224xf32>
    %405 = vector.shape_cast %404 : vector<1x4x224xf32> to vector<4x224xf32>
    %406 = arith.truncf %405 : vector<4x224xf32> to vector<4x224xbf16>
    %c3_329 = arith.constant 3 : index
    %c0_330 = arith.constant 0 : index
    %c0_331 = arith.constant 0 : index
    %407 = vector.load %arg12[%c3_329, %c0_330, %c0_331] : memref<5x224x64xbf16, #tpu.memory_space<vmem>>, vector<1x224x64xbf16>
    %408 = vector.shape_cast %407 : vector<1x224x64xbf16> to vector<224x64xbf16>
    %cst_332 = arith.constant dense<0.000000e+00> : vector<4x64xf32>
    %409 = tpu.matmul %406, %408, %cst_332 {dimension_numbers = #tpu.dot_dimension_numbers<[1], [0], [0], [1], [0, 0, 1, 1], [], []>} : vector<4x224xbf16>, vector<224x64xbf16>, vector<4x64xf32> -> vector<4x64xf32>
    %410 = arith.addf %403, %409 : vector<4x64xf32>
    %c0_333 = arith.constant 0 : index
    %c4_334 = arith.constant 4 : index
    %c0_335 = arith.constant 0 : index
    %411 = vector.load %arg21[%c0_333, %c4_334, %c0_335] : memref<2x8x224xf32, #tpu.memory_space<vmem>>, vector<1x4x224xf32>
    %412 = vector.shape_cast %411 : vector<1x4x224xf32> to vector<4x224xf32>
    %413 = arith.truncf %412 : vector<4x224xf32> to vector<4x224xbf16>
    %c4_336 = arith.constant 4 : index
    %c0_337 = arith.constant 0 : index
    %c0_338 = arith.constant 0 : index
    %414 = vector.load %arg12[%c4_336, %c0_337, %c0_338] : memref<5x224x64xbf16, #tpu.memory_space<vmem>>, vector<1x224x64xbf16>
    %415 = vector.shape_cast %414 : vector<1x224x64xbf16> to vector<224x64xbf16>
    %cst_339 = arith.constant dense<0.000000e+00> : vector<4x64xf32>
    %416 = tpu.matmul %413, %415, %cst_339 {dimension_numbers = #tpu.dot_dimension_numbers<[1], [0], [0], [1], [0, 0, 1, 1], [], []>} : vector<4x224xbf16>, vector<224x64xbf16>, vector<4x64xf32> -> vector<4x64xf32>
    %417 = arith.addf %410, %416 : vector<4x64xf32>
    %c0_340 = arith.constant 0 : index
    %c0_341 = arith.constant 0 : index
    %418 = vector.load %arg22[%c0_340, %c0_341] : memref<4x64xf32, #tpu.memory_space<vmem>>, vector<4x64xf32>
    tpu.vector_store %arg22[%c0_340, %c0_341], %417 {strides = array<i32>} : memref<4x64xf32, #tpu.memory_space<vmem>>, vector<4x64xf32>,
    %cst_342 = arith.constant dense<0.000000e+00> : vector<64xf32>
    %419 = vector.multi_reduction <add>, %417, %cst_342 [0] : vector<4x64xf32> to vector<64xf32>
    %420 = vector.shape_cast %419 : vector<64xf32> to vector<1x64xf32>
    %421 = arith.addf %382, %420 : vector<1x64xf32>
    %422 = arith.mulf %417, %417 : vector<4x64xf32>
    %cst_343 = arith.constant dense<0.000000e+00> : vector<64xf32>
    %423 = vector.multi_reduction <add>, %422, %cst_343 [0] : vector<4x64xf32> to vector<64xf32>
    %424 = vector.shape_cast %423 : vector<64xf32> to vector<1x64xf32>
    %425 = arith.addf %383, %424 : vector<1x64xf32>
    %426 = tpu.concatenate %421, %425 in 0 : vector<1x64xf32>, vector<1x64xf32> -> vector<2x64xf32>
    %c0_344 = arith.constant 0 : index
    %c0_345 = arith.constant 0 : index
    %427 = vector.load %arg15[%c0_344, %c0_345] : memref<64x32xf32, #tpu.memory_space<vmem>>, vector<64x32xf32>
    %cst_346 = arith.constant dense<0.000000e+00> : vector<2x32xf32>
    %428 = tpu.matmul %426, %427, %cst_346 {dimension_numbers = #tpu.dot_dimension_numbers<[1], [0], [0], [1], [0, 0, 1, 1], [], []>} : vector<2x64xf32>, vector<64x32xf32>, vector<2x32xf32> -> vector<2x32xf32>
    %cst_347 = arith.constant 8.000000e+00 : f32
    %429 = vector.broadcast %cst_347 : f32 to vector<2x32xf32>
    %430 = arith.divf %428, %429 : vector<2x32xf32>
    %431 = vector.extract_strided_slice %430 {offsets = [0, 0], sizes = [1, 32], strides = [1, 1]} : vector<2x32xf32> to vector<1x32xf32>
    %432 = vector.extract_strided_slice %430 {offsets = [1, 0], sizes = [1, 32], strides = [1, 1]} : vector<2x32xf32> to vector<1x32xf32>
    %433 = arith.mulf %431, %431 : vector<1x32xf32>
    %434 = arith.subf %432, %433 : vector<1x32xf32>
    %cst_348 = arith.constant 0.000000e+00 : f32
    %435 = vector.broadcast %cst_348 : f32 to vector<1x32xf32>
    %436 = arith.maximumf %434, %435 : vector<1x32xf32>
    %c0_349 = arith.constant 0 : index
    %c0_350 = arith.constant 0 : index
    %437 = vector.load %arg13[%c0_349, %c0_350] : memref<1x32xf32, #tpu.memory_space<vmem>>, vector<1x32xf32>
    %cst_351 = arith.constant 9.99999974E-6 : f32
    %438 = vector.broadcast %cst_351 : f32 to vector<1x32xf32>
    %439 = arith.addf %436, %438 : vector<1x32xf32>
    %440 = math.rsqrt %439 : vector<1x32xf32>
    %441 = arith.mulf %437, %440 : vector<1x32xf32>
    %c0_352 = arith.constant 0 : index
    %c0_353 = arith.constant 0 : index
    %442 = vector.load %arg14[%c0_352, %c0_353] : memref<1x32xf32, #tpu.memory_space<vmem>>, vector<1x32xf32>
    %443 = arith.mulf %431, %441 : vector<1x32xf32>
    %444 = arith.subf %442, %443 : vector<1x32xf32>
    %445 = tpu.concatenate %441, %444 in 0 : vector<1x32xf32>, vector<1x32xf32> -> vector<2x32xf32>
    %c0_354 = arith.constant 0 : index
    %c0_355 = arith.constant 0 : index
    %446 = vector.load %arg16[%c0_354, %c0_355] : memref<32x64xf32, #tpu.memory_space<vmem>>, vector<32x64xf32>
    %cst_356 = arith.constant dense<0.000000e+00> : vector<2x64xf32>
    %447 = tpu.matmul %445, %446, %cst_356 {dimension_numbers = #tpu.dot_dimension_numbers<[1], [0], [0], [1], [0, 0, 1, 1], [], []>} : vector<2x32xf32>, vector<32x64xf32>, vector<2x64xf32> -> vector<2x64xf32>
    %448 = vector.extract_strided_slice %447 {offsets = [0, 0], sizes = [1, 64], strides = [1, 1]} : vector<2x64xf32> to vector<1x64xf32>
    %449 = vector.extract_strided_slice %447 {offsets = [1, 0], sizes = [1, 64], strides = [1, 1]} : vector<2x64xf32> to vector<1x64xf32>
    %c0_357 = arith.constant 0 : index
    %c0_358 = arith.constant 0 : index
    %450 = vector.load %arg22[%c0_357, %c0_358] : memref<4x64xf32, #tpu.memory_space<vmem>>, vector<4x64xf32>
    %451 = vector.broadcast %448 : vector<1x64xf32> to vector<4x64xf32>
    %452 = arith.mulf %450, %451 : vector<4x64xf32>
    %453 = vector.broadcast %449 : vector<1x64xf32> to vector<4x64xf32>
    %454 = arith.addf %452, %453 : vector<4x64xf32>
    %cst_359 = arith.constant 0.000000e+00 : f32
    %455 = vector.broadcast %cst_359 : f32 to vector<4x64xf32>
    %456 = arith.maximumf %454, %455 : vector<4x64xf32>
    %c0_360 = arith.constant 0 : index
    %c0_361 = arith.constant 0 : index
    %457 = vector.load %arg22[%c0_360, %c0_361] : memref<4x64xf32, #tpu.memory_space<vmem>>, vector<4x64xf32>
    tpu.vector_store %arg22[%c0_360, %c0_361], %456 {strides = array<i32>} : memref<4x64xf32, #tpu.memory_space<vmem>>, vector<4x64xf32>,
    %c0_362 = arith.constant 0 : index
    %c0_363 = arith.constant 0 : index
    %458 = vector.load %arg22[%c0_362, %c0_363] : memref<4x64xf32, #tpu.memory_space<vmem>>, vector<2x64xf32>
    %c0_364 = arith.constant 0 : index
    %c0_365 = arith.constant 0 : index
    %c0_366 = arith.constant 0 : index
    %459 = vector.load %arg17[%c0_364, %c0_365, %c0_366] : memref<2x64x4xf32, #tpu.memory_space<vmem>>, vector<1x64x4xf32>
    %460 = vector.shape_cast %459 : vector<1x64x4xf32> to vector<64x4xf32>
    %cst_367 = arith.constant dense<0.000000e+00> : vector<2x4xf32>
    %461 = tpu.matmul %458, %460, %cst_367 {dimension_numbers = #tpu.dot_dimension_numbers<[1], [0], [0], [1], [0, 0, 1, 1], [], []>} : vector<2x64xf32>, vector<64x4xf32>, vector<2x4xf32> -> vector<2x4xf32>
    %c2_368 = arith.constant 2 : index
    %c0_369 = arith.constant 0 : index
    %462 = vector.load %arg22[%c2_368, %c0_369] : memref<4x64xf32, #tpu.memory_space<vmem>>, vector<2x64xf32>
    %c1_370 = arith.constant 1 : index
    %c0_371 = arith.constant 0 : index
    %c0_372 = arith.constant 0 : index
    %463 = vector.load %arg17[%c1_370, %c0_371, %c0_372] : memref<2x64x4xf32, #tpu.memory_space<vmem>>, vector<1x64x4xf32>
    %464 = vector.shape_cast %463 : vector<1x64x4xf32> to vector<64x4xf32>
    %cst_373 = arith.constant dense<0.000000e+00> : vector<2x4xf32>
    %465 = tpu.matmul %462, %464, %cst_373 {dimension_numbers = #tpu.dot_dimension_numbers<[1], [0], [0], [1], [0, 0, 1, 1], [], []>} : vector<2x64xf32>, vector<64x4xf32>, vector<2x4xf32> -> vector<2x4xf32>
    %466 = arith.addf %461, %465 : vector<2x4xf32>
    %c0_374 = arith.constant 0 : index
    %c0_375 = arith.constant 0 : index
    %467 = vector.load %arg18[%c0_374, %c0_375] : memref<1x4xf32, #tpu.memory_space<vmem>>, vector<1x4xf32>
    %468 = vector.broadcast %467 : vector<1x4xf32> to vector<2x4xf32>
    %469 = arith.addf %466, %468 : vector<2x4xf32>
    %c0_376 = arith.constant 0 : index
    %c0_377 = arith.constant 0 : index
    %470 = vector.load %arg19[%c0_376, %c0_377] : memref<2x4xf32, #tpu.memory_space<vmem>>, vector<2x4xf32>
    tpu.vector_store %arg19[%c0_376, %c0_377], %469 {strides = array<i32>} : memref<2x4xf32, #tpu.memory_space<vmem>>, vector<2x4xf32>,
    return
  }
  func.func @transform_0(%arg0: i32) -> (i32, i32, i32) {
    %c0_i32 = arith.constant 0 : i32
    %c0_i32_0 = arith.constant 0 : i32
    %c0_i32_1 = arith.constant 0 : i32
    %c0_i32_2 = arith.constant 0 : i32
    return %c0_i32, %c0_i32_0, %c0_i32_1 : i32, i32, i32
  }
  func.func @transform_1(%arg0: i32) -> (i32, i32, i32) {
    %c0_i32 = arith.constant 0 : i32
    %c0_i32_0 = arith.constant 0 : i32
    %c0_i32_1 = arith.constant 0 : i32
    %c0_i32_2 = arith.constant 0 : i32
    return %c0_i32, %c0_i32_0, %c0_i32_1 : i32, i32, i32
  }
  func.func @transform_2(%arg0: i32) -> (i32, i32) {
    %c0_i32 = arith.constant 0 : i32
    %c0_i32_0 = arith.constant 0 : i32
    %c0_i32_1 = arith.constant 0 : i32
    return %c0_i32, %c0_i32_0 : i32, i32
  }
  func.func @transform_3(%arg0: i32) -> (i32, i32) {
    %c0_i32 = arith.constant 0 : i32
    %c0_i32_0 = arith.constant 0 : i32
    %c0_i32_1 = arith.constant 0 : i32
    return %c0_i32, %c0_i32_0 : i32, i32
  }
  func.func @transform_4(%arg0: i32) -> (i32, i32) {
    %c0_i32 = arith.constant 0 : i32
    %c0_i32_0 = arith.constant 0 : i32
    %c0_i32_1 = arith.constant 0 : i32
    return %c0_i32, %c0_i32_0 : i32, i32
  }
  func.func @transform_5(%arg0: i32) -> (i32, i32) {
    %c0_i32 = arith.constant 0 : i32
    %c0_i32_0 = arith.constant 0 : i32
    %c0_i32_1 = arith.constant 0 : i32
    return %c0_i32, %c0_i32_0 : i32, i32
  }
  func.func @transform_6(%arg0: i32) -> (i32, i32, i32) {
    %c0_i32 = arith.constant 0 : i32
    %c0_i32_0 = arith.constant 0 : i32
    %c0_i32_1 = arith.constant 0 : i32
    %c0_i32_2 = arith.constant 0 : i32
    return %c0_i32, %c0_i32_0, %c0_i32_1 : i32, i32, i32
  }
  func.func @transform_7(%arg0: i32) -> (i32, i32) {
    %c0_i32 = arith.constant 0 : i32
    %c0_i32_0 = arith.constant 0 : i32
    %c0_i32_1 = arith.constant 0 : i32
    return %c0_i32, %c0_i32_0 : i32, i32
  }
  func.func @transform_8(%arg0: i32) -> (i32, i32) {
    %c0_i32 = arith.constant 0 : i32
    %c0_i32_0 = arith.constant 0 : i32
    %c0_i32_1 = arith.constant 0 : i32
    return %c0_i32, %c0_i32_0 : i32, i32
  }
  func.func @transform_9(%arg0: i32) -> (i32, i32) {
    %c0_i32 = arith.constant 0 : i32
    %c0_i32_0 = arith.constant 0 : i32
    %c0_i32_1 = arith.constant 0 : i32
    return %c0_i32, %c0_i32_0 : i32, i32
  }
  func.func @transform_10(%arg0: i32) -> (i32, i32) {
    %c0_i32 = arith.constant 0 : i32
    %c0_i32_0 = arith.constant 0 : i32
    %c0_i32_1 = arith.constant 0 : i32
    return %c0_i32, %c0_i32_0 : i32, i32
  }
  func.func @transform_11(%arg0: i32) -> (i32, i32, i32) {
    %c0_i32 = arith.constant 0 : i32
    %c0_i32_0 = arith.constant 0 : i32
    %c0_i32_1 = arith.constant 0 : i32
    %c0_i32_2 = arith.constant 0 : i32
    return %c0_i32, %c0_i32_0, %c0_i32_1 : i32, i32, i32
  }
  func.func @transform_12(%arg0: i32) -> (i32, i32) {
    %c0_i32 = arith.constant 0 : i32
    %c0_i32_0 = arith.constant 0 : i32
    %c0_i32_1 = arith.constant 0 : i32
    return %c0_i32, %c0_i32_0 : i32, i32
  }
  func.func @transform_13(%arg0: i32) -> (i32, i32) {
    %c0_i32 = arith.constant 0 : i32
    %c0_i32_0 = arith.constant 0 : i32
    %c0_i32_1 = arith.constant 0 : i32
    return %c0_i32, %c0_i32_0 : i32, i32
  }
  func.func @transform_14(%arg0: i32) -> (i32, i32) {
    %c0_i32 = arith.constant 0 : i32
    %c0_i32_0 = arith.constant 0 : i32
    %c0_i32_1 = arith.constant 0 : i32
    return %c0_i32, %c0_i32_0 : i32, i32
  }
  func.func @transform_15(%arg0: i32) -> (i32, i32) {
    %c0_i32 = arith.constant 0 : i32
    %c0_i32_0 = arith.constant 0 : i32
    %c0_i32_1 = arith.constant 0 : i32
    return %c0_i32, %c0_i32_0 : i32, i32
  }
  func.func @transform_16(%arg0: i32) -> (i32, i32, i32) {
    %c0_i32 = arith.constant 0 : i32
    %c0_i32_0 = arith.constant 0 : i32
    %c0_i32_1 = arith.constant 0 : i32
    %c0_i32_2 = arith.constant 0 : i32
    return %c0_i32, %c0_i32_0, %c0_i32_1 : i32, i32, i32
  }
  func.func @transform_17(%arg0: i32) -> (i32, i32) {
    %c0_i32 = arith.constant 0 : i32
    %c0_i32_0 = arith.constant 0 : i32
    %c0_i32_1 = arith.constant 0 : i32
    return %c0_i32, %c0_i32_0 : i32, i32
  }
  func.func @transform_18(%arg0: i32) -> (i32, i32) {
    %c0_i32 = arith.constant 0 : i32
    %c0_i32_0 = arith.constant 0 : i32
    %c0_i32_1 = arith.constant 0 : i32
    return %c0_i32, %c0_i32_0 : i32, i32
  }
}

</mosaic_0001>

<llo_original>
// kernel: dqn_forward.1
$region0: #{dqn_forward.1}
  #allocation0 [shape = 'u32[]', space=smem, size = 0x4, offset = 0x4, fixed_abs, tag = 'smem constant byte address 0x4 - core index']
  #allocation1 [shape = 'u32[144,128]{1,0:T(1,128)}', space=vmem, size = 0x12000, scoped, tag = 'internal scratch']
  #allocation2 [shape = 'f32[4,10,288]{2,1,0:T(8,128)}', space=vmem, size = 0x18000, scoped, tag = 'scratch operand']
  #allocation3 [shape = 'f32[2,8,224]{2,1,0:T(8,128)}', space=vmem, size = 0x4000, scoped, tag = 'scratch operand']
  #allocation4 [shape = 'f32[4,64]{1,0:T(4,128)}', space=vmem, size = 0x800, scoped, tag = 'scratch operand']
  %s0 = inlined_call_operand.vmem [shape: f32[8,10,160], index: 0, kind: input, shape index: {}]
  %s1 = inlined_call_operand.vmem [shape: bf16[5,160,288], index: 1, kind: input, shape index: {}]
  %s2 = inlined_call_operand.vmem [shape: f32[1,16], index: 2, kind: input, shape index: {}]
  %s3 = inlined_call_operand.vmem [shape: f32[1,16], index: 3, kind: input, shape index: {}]
  %s4 = inlined_call_operand.vmem [shape: f32[288,16], index: 4, kind: input, shape index: {}]
  %s5 = inlined_call_operand.vmem [shape: f32[16,288], index: 5, kind: input, shape index: {}]
  %s6 = inlined_call_operand.vmem [shape: bf16[5,288,224], index: 6, kind: input, shape index: {}]
  %s7 = inlined_call_operand.vmem [shape: f32[1,32], index: 7, kind: input, shape index: {}]
  %s8 = inlined_call_operand.vmem [shape: f32[1,32], index: 8, kind: input, shape index: {}]
  %s9 = inlined_call_operand.vmem [shape: f32[224,32], index: 9, kind: input, shape index: {}]
  %s10 = inlined_call_operand.vmem [shape: f32[32,224], index: 10, kind: input, shape index: {}]
  %s11 = inlined_call_operand.vmem [shape: bf16[5,224,64], index: 11, kind: input, shape index: {}]
  %s12 = inlined_call_operand.vmem [shape: f32[1,32], index: 12, kind: input, shape index: {}]
  %s13 = inlined_call_operand.vmem [shape: f32[1,32], index: 13, kind: input, shape index: {}]
  %s14 = inlined_call_operand.vmem [shape: f32[64,32], index: 14, kind: input, shape index: {}]
  %s15 = inlined_call_operand.vmem [shape: f32[32,64], index: 15, kind: input, shape index: {}]
  %s16 = inlined_call_operand.vmem [shape: f32[2,64,4], index: 16, kind: input, shape index: {}]
  %s17 = inlined_call_operand.vmem [shape: f32[1,4], index: 17, kind: input, shape index: {}]
  %s18 = inlined_call_operand.hbm [shape: f32[2,4], index: 18, kind: output, shape index: {}]
  %s19 = sld [smem:[#allocation0]]
  $region82: #{dqn_forward.1} parent=0
    _
  %s21 = ssub.s32 1, %s19
  %s22 = scalar_select 0, %s21, %s19
  $region1: #{dqn_forward.1} parent=0
    #allocation5 [shape = 'u8[1024]{0}', space=vmem, size = 0x400, scoped, tag = 'output window, operand 0, single buffered']
    #allocation6 [shape = 's32[1]{0}', space=sflag, size = 0x4, scoped, tag = 'scoped memory for dqn_forward.1']
    %23 = vsyncpa [#allocation6], 0
    // Predicated region
    $region2: #{dqn_forward.1} parent=1 // pred_check
      _
    $region3: #{dqn_forward.1} parent=1 // pred_check_branch
      %25 = sbr.rel (0) target = $region5
    $region4: #{dqn_forward.1} parent=1 // pred_region
      _
    $region5: #{dqn_forward.1} parent=1 // pred_fallthru
      _
    // Predicated region
    $region6: #{dqn_forward.1} parent=1 // pred_check
      _
    $region7: #{dqn_forward.1} parent=1 // pred_check_branch
      %27 = sbr.rel (0) target = $region9
    $region8: #{dqn_forward.1} parent=1 // pred_region
      _
    $region9: #{dqn_forward.1} parent=1 // pred_fallthru
      _
    // Predicated region
    $region10: #{dqn_forward.1} parent=1 // pred_check
      _
    $region11: #{dqn_forward.1} parent=1 // pred_check_branch
      %29 = sbr.rel (0) target = $region13
    $region12: #{dqn_forward.1} parent=1 // pred_region
      _
    $region13: #{dqn_forward.1} parent=1 // pred_fallthru
      _
    // Predicated region
    $region14: #{dqn_forward.1} parent=1 // pred_check
      _
    $region15: #{dqn_forward.1} parent=1 // pred_check_branch
      %31 = sbr.rel (0) target = $region17
    $region16: #{dqn_forward.1} parent=1 // pred_region
      _
    $region17: #{dqn_forward.1} parent=1 // pred_fallthru
      _
    // Predicated region
    $region18: #{dqn_forward.1} parent=1 // pred_check
      _
    $region19: #{dqn_forward.1} parent=1 // pred_check_branch
      %33 = sbr.rel (0) target = $region21
    $region20: #{dqn_forward.1} parent=1 // pred_region
      _
    $region21: #{dqn_forward.1} parent=1 // pred_fallthru
      _
    // Predicated region
    $region22: #{dqn_forward.1} parent=1 // pred_check
      _
    $region23: #{dqn_forward.1} parent=1 // pred_check_branch
      %35 = sbr.rel (0) target = $region25
    $region24: #{dqn_forward.1} parent=1 // pred_region
      _
    $region25: #{dqn_forward.1} parent=1 // pred_fallthru
      _
    // Predicated region
    $region26: #{dqn_forward.1} parent=1 // pred_check
      _
    $region27: #{dqn_forward.1} parent=1 // pred_check_branch
      %37 = sbr.rel (0) target = $region29
    $region28: #{dqn_forward.1} parent=1 // pred_region
      _
    $region29: #{dqn_forward.1} parent=1 // pred_fallthru
      _
    // Predicated region
    $region30: #{dqn_forward.1} parent=1 // pred_check
      _
    $region31: #{dqn_forward.1} parent=1 // pred_check_branch
      %39 = sbr.rel (0) target = $region33
    $region32: #{dqn_forward.1} parent=1 // pred_region
      _
    $region33: #{dqn_forward.1} parent=1 // pred_fallthru
      _
    // Predicated region
    $region34: #{dqn_forward.1} parent=1 // pred_check
      _
    $region35: #{dqn_forward.1} parent=1 // pred_check_branch
      %41 = sbr.rel (0) target = $region37
    $region36: #{dqn_forward.1} parent=1 // pred_region
      _
    $region37: #{dqn_forward.1} parent=1 // pred_fallthru
      _
    // Predicated region
    $region38: #{dqn_forward.1} parent=1 // pred_check
      _
    $region39: #{dqn_forward.1} parent=1 // pred_check_branch
      %43 = sbr.rel (0) target = $region41
    $region40: #{dqn_forward.1} parent=1 // pred_region
      _
    $region41: #{dqn_forward.1} parent=1 // pred_fallthru
      _
    // Predicated region
    $region42: #{dqn_forward.1} parent=1 // pred_check
      _
    $region43: #{dqn_forward.1} parent=1 // pred_check_branch
      %45 = sbr.rel (0) target = $region45
    $region44: #{dqn_forward.1} parent=1 // pred_region
      _
    $region45: #{dqn_forward.1} parent=1 // pred_fallthru
      _
    // Predicated region
    $region46: #{dqn_forward.1} parent=1 // pred_check
      _
    $region47: #{dqn_forward.1} parent=1 // pred_check_branch
      %47 = sbr.rel (0) target = $region49
    $region48: #{dqn_forward.1} parent=1 // pred_region
      _
    $region49: #{dqn_forward.1} parent=1 // pred_fallthru
      _
    // Predicated region
    $region50: #{dqn_forward.1} parent=1 // pred_check
      _
    $region51: #{dqn_forward.1} parent=1 // pred_check_branch
      %49 = sbr.rel (0) target = $region53
    $region52: #{dqn_forward.1} parent=1 // pred_region
      _
    $region53: #{dqn_forward.1} parent=1 // pred_fallthru
      _
    // Predicated region
    $region54: #{dqn_forward.1} parent=1 // pred_check
      _
    $region55: #{dqn_forward.1} parent=1 // pred_check_branch
      %51 = sbr.rel (0) target = $region57
    $region56: #{dqn_forward.1} parent=1 // pred_region
      _
    $region57: #{dqn_forward.1} parent=1 // pred_fallthru
      _
    // Predicated region
    $region58: #{dqn_forward.1} parent=1 // pred_check
      _
    $region59: #{dqn_forward.1} parent=1 // pred_check_branch
      %53 = sbr.rel (0) target = $region61
    $region60: #{dqn_forward.1} parent=1 // pred_region
      _
    $region61: #{dqn_forward.1} parent=1 // pred_fallthru
      _
    // Predicated region
    $region62: #{dqn_forward.1} parent=1 // pred_check
      _
    $region63: #{dqn_forward.1} parent=1 // pred_check_branch
      %55 = sbr.rel (0) target = $region65
    $region64: #{dqn_forward.1} parent=1 // pred_region
      _
    $region65: #{dqn_forward.1} parent=1 // pred_fallthru
      _
    // Predicated region
    $region66: #{dqn_forward.1} parent=1 // pred_check
      _
    $region67: #{dqn_forward.1} parent=1 // pred_check_branch
      %57 = sbr.rel (0) target = $region69
    $region68: #{dqn_forward.1} parent=1 // pred_region
      _
    $region69: #{dqn_forward.1} parent=1 // pred_fallthru
      _
    // Predicated region
    $region70: #{dqn_forward.1} parent=1 // pred_check
      _
    $region71: #{dqn_forward.1} parent=1 // pred_check_branch
      %59 = sbr.rel (0) target = $region73
    $region72: #{dqn_forward.1} parent=1 // pred_region
      _
    $region73: #{dqn_forward.1} parent=1 // pred_fallthru
      _
    %v61 = vld [vmem:[%s0] sm:$0xff]
    %v62 = vld [vmem:[%s0 + $0x8] sm:$0xff]
    %v63 = vld [vmem:[%s0 + $0x10] sm:$0x3]
    %v64 = vld [vmem:[%s0 + $0x18] sm:$0x3]
    %v65 = vpack.c.bf16 %v63, %v61
    %v66 = vpack.c.bf16 %v64, %v62
    %v67 = vld [vmem:[%s1] sm:$0xff]
    %v68 = vld [vmem:[%s1 + $0x8] sm:$0xf]
    %v69 = vld [vmem:[%s1 + $0xc] sm:$0xff]
    %v70 = vld [vmem:[%s1 + $0x14] sm:$0xf]
    %v71 = vld [vmem:[%s1 + $0x18] sm:$0xff]
    %v72 = vld [vmem:[%s1 + $0x20] sm:$0xf]
    %v73 = vld [vmem:[%s1 + $0x24] sm:$0xff]
    %v74 = vld [vmem:[%s1 + $0x2c] sm:$0xf]
    %v75 = vld [vmem:[%s1 + $0x30] sm:$0xff]
    %v76 = vld [vmem:[%s1 + $0x38] sm:$0xf]
    %v77 = vld [vmem:[%s1 + $0x3c] sm:$0xff]
    %v78 = vld [vmem:[%s1 + $0x44] sm:$0xf]
    %v79 = vld [vmem:[%s1 + $0x48] sm:$0xff]
    %v80 = vld [vmem:[%s1 + $0x50] sm:$0xf]
    %v81 = vld [vmem:[%s1 + $0x54] sm:$0xff]
    %v82 = vld [vmem:[%s1 + $0x5c] sm:$0xf]
    %v83 = vld [vmem:[%s1 + $0x60] sm:$0xff]
    %v84 = vld [vmem:[%s1 + $0x68] sm:$0xf]
    %v85 = vld [vmem:[%s1 + $0x6c] sm:$0xff]
    %v86 = vld [vmem:[%s1 + $0x74] sm:$0xf]
    %v87 = vld [vmem:[%s1 + $0x78] sm:$0xff]
    %v88 = vld [vmem:[%s1 + $0x80] sm:$0xf]
    %v89 = vld [vmem:[%s1 + $0x84] sm:$0xff]
    %v90 = vld [vmem:[%s1 + $0x8c] sm:$0xf]
    %v91 = vld [vmem:[%s1 + $0x90] sm:$0xff]
    %v92 = vld [vmem:[%s1 + $0x98] sm:$0xf]
    %v93 = vld [vmem:[%s1 + $0x9c] sm:$0xff]
    %v94 = vld [vmem:[%s1 + $0xa4] sm:$0xf]
    %v95 = vld [vmem:[%s1 + $0xa8] sm:$0xff]
    %v96 = vld [vmem:[%s1 + $0xb0] sm:$0xf]
    %v97 = vld [vmem:[%s1 + $0xb4] sm:$0xff]
    %v98 = vld [vmem:[%s1 + $0xbc] sm:$0xf]
    %v99 = vld [vmem:[%s1 + $0xc0] sm:$0xff]
    %v100 = vld [vmem:[%s1 + $0xc8] sm:$0xf]
    %v101 = vld [vmem:[%s1 + $0xcc] sm:$0xff]
    %v102 = vld [vmem:[%s1 + $0xd4] sm:$0xf]
    %v103 = vld [vmem:[%s1 + $0xd8] sm:$0xff]
    %v104 = vld [vmem:[%s1 + $0xe0] sm:$0xf]
    %v105 = vld [vmem:[%s1 + $0xe4] sm:$0xff]
    %v106 = vld [vmem:[%s1 + $0xec] sm:$0xf]
    %s107 = scalar_lea.vmem %s0, 32
    %v108 = vld [vmem:[%s107] sm:$0xff]
    %v109 = vld [vmem:[%s107 + $0x8] sm:$0xff]
    %v110 = vld [vmem:[%s107 + $0x10] sm:$0x3]
    %v111 = vld [vmem:[%s107 + $0x18] sm:$0x3]
    %v112 = vpack.c.bf16 %v110, %v108
    %v113 = vpack.c.bf16 %v111, %v109
    %s114 = scalar_lea.vmem %s1, 240
    %v115 = vld [vmem:[%s114] sm:$0xff]
    %v116 = vld [vmem:[%s114 + $0x8] sm:$0xf]
    %v117 = vld [vmem:[%s114 + $0xc] sm:$0xff]
    %v118 = vld [vmem:[%s114 + $0x14] sm:$0xf]
    %v119 = vld [vmem:[%s114 + $0x18] sm:$0xff]
    %v120 = vld [vmem:[%s114 + $0x20] sm:$0xf]
    %v121 = vld [vmem:[%s114 + $0x24] sm:$0xff]
    %v122 = vld [vmem:[%s114 + $0x2c] sm:$0xf]
    %v123 = vld [vmem:[%s114 + $0x30] sm:$0xff]
    %v124 = vld [vmem:[%s114 + $0x38] sm:$0xf]
    %v125 = vld [vmem:[%s114 + $0x3c] sm:$0xff]
    %v126 = vld [vmem:[%s114 + $0x44] sm:$0xf]
    %v127 = vld [vmem:[%s114 + $0x48] sm:$0xff]
    %v128 = vld [vmem:[%s114 + $0x50] sm:$0xf]
    %v129 = vld [vmem:[%s114 + $0x54] sm:$0xff]
    %v130 = vld [vmem:[%s114 + $0x5c] sm:$0xf]
    %v131 = vld [vmem:[%s114 + $0x60] sm:$0xff]
    %v132 = vld [vmem:[%s114 + $0x68] sm:$0xf]
    %v133 = vld [vmem:[%s114 + $0x6c] sm:$0xff]
    %v134 = vld [vmem:[%s114 + $0x74] sm:$0xf]
    %v135 = vld [vmem:[%s114 + $0x78] sm:$0xff]
    %v136 = vld [vmem:[%s114 + $0x80] sm:$0xf]
    %v137 = vld [vmem:[%s114 + $0x84] sm:$0xff]
    %v138 = vld [vmem:[%s114 + $0x8c] sm:$0xf]
    %v139 = vld [vmem:[%s114 + $0x90] sm:$0xff]
    %v140 = vld [vmem:[%s114 + $0x98] sm:$0xf]
    %v141 = vld [vmem:[%s114 + $0x9c] sm:$0xff]
    %v142 = vld [vmem:[%s114 + $0xa4] sm:$0xf]
    %v143 = vld [vmem:[%s114 + $0xa8] sm:$0xff]
    %v144 = vld [vmem:[%s114 + $0xb0] sm:$0xf]
    %v145 = vld [vmem:[%s114 + $0xb4] sm:$0xff]
    %v146 = vld [vmem:[%s114 + $0xbc] sm:$0xf]
    %v147 = vld [vmem:[%s114 + $0xc0] sm:$0xff]
    %v148 = vld [vmem:[%s114 + $0xc8] sm:$0xf]
    %v149 = vld [vmem:[%s114 + $0xcc] sm:$0xff]
    %v150 = vld [vmem:[%s114 + $0xd4] sm:$0xf]
    %v151 = vld [vmem:[%s114 + $0xd8] sm:$0xff]
    %v152 = vld [vmem:[%s114 + $0xe0] sm:$0xf]
    %v153 = vld [vmem:[%s114 + $0xe4] sm:$0xff]
    %v154 = vld [vmem:[%s114 + $0xec] sm:$0xf]
    %v195 = vunpack.c.l.b16 %v115
    %v196 = vunpack.c.h.b16 %v115
    %v197 = vunpack.c.l.b16 %v116
    %v198 = vunpack.c.l.b16 %v117
    %v199 = vunpack.c.h.b16 %v117
    %v200 = vunpack.c.l.b16 %v118
    %v201 = vunpack.c.l.b16 %v119
    %v202 = vunpack.c.h.b16 %v119
    %v203 = vunpack.c.l.b16 %v120
    %v204 = vunpack.c.l.b16 %v121
    %v205 = vunpack.c.h.b16 %v121
    %v206 = vunpack.c.l.b16 %v122
    %v207 = vunpack.c.l.b16 %v123
    %v208 = vunpack.c.h.b16 %v123
    %v209 = vunpack.c.l.b16 %v124
    %v210 = vunpack.c.l.b16 %v125
    %v211 = vunpack.c.h.b16 %v125
    %v212 = vunpack.c.l.b16 %v126
    %v213 = vunpack.c.l.b16 %v127
    %v214 = vunpack.c.h.b16 %v127
    %v215 = vunpack.c.l.b16 %v128
    %v216 = vunpack.c.l.b16 %v129
    %v217 = vunpack.c.h.b16 %v129
    %v218 = vunpack.c.l.b16 %v130
    %v219 = vunpack.c.l.b16 %v131
    %v220 = vunpack.c.h.b16 %v131
    %v221 = vunpack.c.l.b16 %v132
    %v222 = vunpack.c.l.b16 %v133
    %v223 = vunpack.c.h.b16 %v133
    %v224 = vunpack.c.l.b16 %v134
    %v225 = vunpack.c.l.b16 %v135
    %v226 = vunpack.c.h.b16 %v135
    %v227 = vunpack.c.l.b16 %v136
    %v228 = vunpack.c.l.b16 %v137
    %v229 = vunpack.c.h.b16 %v137
    %v230 = vunpack.c.l.b16 %v138
    %v231 = vunpack.c.l.b16 %v139
    %v232 = vunpack.c.h.b16 %v139
    %v233 = vunpack.c.l.b16 %v140
    %v234 = vunpack.c.l.b16 %v141
    %v235 = vunpack.c.h.b16 %v141
    %v236 = vunpack.c.l.b16 %v142
    %v237 = vunpack.c.l.b16 %v143
    %v238 = vunpack.c.h.b16 %v143
    %v239 = vunpack.c.l.b16 %v144
    %v240 = vunpack.c.l.b16 %v145
    %v241 = vunpack.c.h.b16 %v145
    %v242 = vunpack.c.l.b16 %v146
    %v243 = vunpack.c.l.b16 %v147
    %v244 = vunpack.c.h.b16 %v147
    %v245 = vunpack.c.l.b16 %v148
    %v246 = vunpack.c.l.b16 %v149
    %v247 = vunpack.c.h.b16 %v149
    %v248 = vunpack.c.l.b16 %v150
    %v249 = vunpack.c.l.b16 %v151
    %v250 = vunpack.c.h.b16 %v151
    %v251 = vunpack.c.l.b16 %v152
    %v252 = vunpack.c.l.b16 %v153
    %v253 = vunpack.c.h.b16 %v153
    %v254 = vunpack.c.l.b16 %v154
    %v255 = vpack.c.b16 %v198, %v195
    %v256 = vpack.c.b16 %v199, %v196
    %v257 = vpack.c.b16 %v200, %v197
    %v258 = vpack.c.b16 %v204, %v201
    %v259 = vpack.c.b16 %v205, %v202
    %v260 = vpack.c.b16 %v206, %v203
    %v261 = vpack.c.b16 %v210, %v207
    %v262 = vpack.c.b16 %v211, %v208
    %v263 = vpack.c.b16 %v212, %v209
    %v264 = vpack.c.b16 %v216, %v213
    %v265 = vpack.c.b16 %v217, %v214
    %v266 = vpack.c.b16 %v218, %v215
    %v267 = vpack.c.b16 %v222, %v219
    %v268 = vpack.c.b16 %v223, %v220
    %v269 = vpack.c.b16 %v224, %v221
    %v270 = vpack.c.b16 %v228, %v225
    %v271 = vpack.c.b16 %v229, %v226
    %v272 = vpack.c.b16 %v230, %v227
    %v273 = vpack.c.b16 %v234, %v231
    %v274 = vpack.c.b16 %v235, %v232
    %v275 = vpack.c.b16 %v236, %v233
    %v276 = vpack.c.b16 %v240, %v237
    %v277 = vpack.c.b16 %v241, %v238
    %v278 = vpack.c.b16 %v242, %v239
    %v279 = vpack.c.b16 %v246, %v243
    %v280 = vpack.c.b16 %v247, %v244
    %v281 = vpack.c.b16 %v248, %v245
    %v282 = vpack.c.b16 %v252, %v249
    %v283 = vpack.c.b16 %v253, %v250
    %v284 = vpack.c.b16 %v254, %v251
    %vm315 = vcmask 261120
    %v317 = vsel %vm315, %v113, 0
    %319 = vmatprep.subr.bf16.mxu0 %v256
    %320 = vmatpush1.bf16.msra.mxu0 %v255
    %321 = vmatprep.subr.bf16.mxu0 %v259
    %322 = vmatpush1.bf16.msra.mxu0 %v258
    %323 = vmatprep.subr.bf16.mxu0 %v262
    %324 = vmatpush1.bf16.msra.mxu0 %v261
    %325 = vmatprep.subr.bf16.mxu0 %v265
    %326 = vmatpush1.bf16.msra.mxu0 %v264
    %327 = vmatprep.subr.bf16.mxu0 %v268
    %328 = vmatpush1.bf16.msra.mxu0 %v267
    %329 = vmatprep.subr.bf16.mxu0 %v271
    %330 = vmatpush1.bf16.msra.mxu0 %v270
    %331 = vmatprep.subr.bf16.mxu0 %v274
    %332 = vmatpush1.bf16.msra.mxu0 %v273
    %333 = vmatprep.subr.bf16.mxu0 %v277
    %334 = vmatpush1.bf16.msra.mxu0 %v276
    %335 = vmatprep.subr.bf16.mxu0 %v280
    %336 = vmatpush1.bf16.msra.mxu0 %v279
    %337 = vmatprep.subr.bf16.mxu0 %v283
    %338 = vmatpush1.bf16.msra.mxu0 %v282
    %339 = vmatprep.subr.bf16.mxu0 0
    %340 = vmatpush1.bf16.msra.mxu0 0
    %341 = vmatprep.subr.bf16.mxu0 0
    %342 = vmatpush1.bf16.msra.mxu0 0
    %343 = vmatprep.subr.bf16.mxu0 0
    %344 = vmatpush1.bf16.msra.mxu0 0
    %345 = vmatprep.subr.bf16.mxu0 0
    %346 = vmatpush1.bf16.msra.mxu0 0
    %347 = vmatprep.subr.bf16.mxu0 0
    %348 = vmatpush1.bf16.msra.mxu0 0
    %349 = vmatprep.subr.bf16.mxu0 0
    %350 = vmatpush1.bf16.msra.mxu0 0
    %351 = vmatprep.mubr.bf16.mxu0 %v317
    %352 = vmatmul.mubr.bf16.gmra.mrb[0].mxu0 %v112
    %v353 = vpop.f32.mrb[0].mxu0
    %v354 = vadd.f32 0.0, %v353
    %v355 = vpop.f32.mrb[0].mxu0
    %v356 = vadd.f32 0.0, %v355
    %v357 = vpop.f32.mrb[0].mxu0
    %v358 = vadd.f32 0.0, %v357
    %v359 = vpop.f32.mrb[0].mxu0
    %v360 = vadd.f32 0.0, %v359
    %361 = vdwg.mxu0
    %362 = vmatprep.subr.bf16.mxu0 0
    %363 = vmatpush1.bf16.msra.mxu0 %v257
    %364 = vmatprep.subr.bf16.mxu0 0
    %365 = vmatpush1.bf16.msra.mxu0 %v260
    %366 = vmatprep.subr.bf16.mxu0 0
    %367 = vmatpush1.bf16.msra.mxu0 %v263
    %368 = vmatprep.subr.bf16.mxu0 0
    %369 = vmatpush1.bf16.msra.mxu0 %v266
    %370 = vmatprep.subr.bf16.mxu0 0
    %371 = vmatpush1.bf16.msra.mxu0 %v269
    %372 = vmatprep.subr.bf16.mxu0 0
    %373 = vmatpush1.bf16.msra.mxu0 %v272
    %374 = vmatprep.subr.bf16.mxu0 0
    %375 = vmatpush1.bf16.msra.mxu0 %v275
    %376 = vmatprep.subr.bf16.mxu0 0
    %377 = vmatpush1.bf16.msra.mxu0 %v278
    %378 = vmatprep.subr.bf16.mxu0 0
    %379 = vmatpush1.bf16.msra.mxu0 %v281
    %380 = vmatprep.subr.bf16.mxu0 0
    %381 = vmatpush1.bf16.msra.mxu0 %v284
    %382 = vmatprep.subr.bf16.mxu0 0
    %383 = vmatpush1.bf16.msra.mxu0 0
    %384 = vmatprep.subr.bf16.mxu0 0
    %385 = vmatpush1.bf16.msra.mxu0 0
    %386 = vmatprep.subr.bf16.mxu0 0
    %387 = vmatpush1.bf16.msra.mxu0 0
    %388 = vmatprep.subr.bf16.mxu0 0
    %389 = vmatpush1.bf16.msra.mxu0 0
    %390 = vmatprep.subr.bf16.mxu0 0
    %391 = vmatpush1.bf16.msra.mxu0 0
    %392 = vmatprep.subr.bf16.mxu0 0
    %393 = vmatpush1.bf16.msra.mxu0 0
    %394 = vmatprep.mubr.bf16.mxu0 %v317
    %395 = vmatmul.mubr.bf16.gmra.mrb[0].mxu0 %v112
    %v396 = vpop.f32.mrb[0].mxu0
    %v397 = vadd.f32 0.0, %v396
    %v398 = vpop.f32.mrb[0].mxu0
    %v399 = vpop.f32.mrb[0].mxu0
    %v400 = vadd.f32 0.0, %v399
    %v401 = vpop.f32.mrb[0].mxu0
    %402 = vdwg.mxu0
    %v443 = vunpack.c.l.b16 %v67
    %v444 = vunpack.c.h.b16 %v67
    %v445 = vunpack.c.l.b16 %v68
    %v446 = vunpack.c.l.b16 %v69
    %v447 = vunpack.c.h.b16 %v69
    %v448 = vunpack.c.l.b16 %v70
    %v449 = vunpack.c.l.b16 %v71
    %v450 = vunpack.c.h.b16 %v71
    %v451 = vunpack.c.l.b16 %v72
    %v452 = vunpack.c.l.b16 %v73
    %v453 = vunpack.c.h.b16 %v73
    %v454 = vunpack.c.l.b16 %v74
    %v455 = vunpack.c.l.b16 %v75
    %v456 = vunpack.c.h.b16 %v75
    %v457 = vunpack.c.l.b16 %v76
    %v458 = vunpack.c.l.b16 %v77
    %v459 = vunpack.c.h.b16 %v77
    %v460 = vunpack.c.l.b16 %v78
    %v461 = vunpack.c.l.b16 %v79
    %v462 = vunpack.c.h.b16 %v79
    %v463 = vunpack.c.l.b16 %v80
    %v464 = vunpack.c.l.b16 %v81
    %v465 = vunpack.c.h.b16 %v81
    %v466 = vunpack.c.l.b16 %v82
    %v467 = vunpack.c.l.b16 %v83
    %v468 = vunpack.c.h.b16 %v83
    %v469 = vunpack.c.l.b16 %v84
    %v470 = vunpack.c.l.b16 %v85
    %v471 = vunpack.c.h.b16 %v85
    %v472 = vunpack.c.l.b16 %v86
    %v473 = vunpack.c.l.b16 %v87
    %v474 = vunpack.c.h.b16 %v87
    %v475 = vunpack.c.l.b16 %v88
    %v476 = vunpack.c.l.b16 %v89
    %v477 = vunpack.c.h.b16 %v89
    %v478 = vunpack.c.l.b16 %v90
    %v479 = vunpack.c.l.b16 %v91
    %v480 = vunpack.c.h.b16 %v91
    %v481 = vunpack.c.l.b16 %v92
    %v482 = vunpack.c.l.b16 %v93
    %v483 = vunpack.c.h.b16 %v93
    %v484 = vunpack.c.l.b16 %v94
    %v485 = vunpack.c.l.b16 %v95
    %v486 = vunpack.c.h.b16 %v95
    %v487 = vunpack.c.l.b16 %v96
    %v488 = vunpack.c.l.b16 %v97
    %v489 = vunpack.c.h.b16 %v97
    %v490 = vunpack.c.l.b16 %v98
    %v491 = vunpack.c.l.b16 %v99
    %v492 = vunpack.c.h.b16 %v99
    %v493 = vunpack.c.l.b16 %v100
    %v494 = vunpack.c.l.b16 %v101
    %v495 = vunpack.c.h.b16 %v101
    %v496 = vunpack.c.l.b16 %v102
    %v497 = vunpack.c.l.b16 %v103
    %v498 = vunpack.c.h.b16 %v103
    %v499 = vunpack.c.l.b16 %v104
    %v500 = vunpack.c.l.b16 %v105
    %v501 = vunpack.c.h.b16 %v105
    %v502 = vunpack.c.l.b16 %v106
    %v503 = vpack.c.b16 %v446, %v443
    %v504 = vpack.c.b16 %v447, %v444
    %v505 = vpack.c.b16 %v448, %v445
    %v506 = vpack.c.b16 %v452, %v449
    %v507 = vpack.c.b16 %v453, %v450
    %v508 = vpack.c.b16 %v454, %v451
    %v509 = vpack.c.b16 %v458, %v455
    %v510 = vpack.c.b16 %v459, %v456
    %v511 = vpack.c.b16 %v460, %v457
    %v512 = vpack.c.b16 %v464, %v461
    %v513 = vpack.c.b16 %v465, %v462
    %v514 = vpack.c.b16 %v466, %v463
    %v515 = vpack.c.b16 %v470, %v467
    %v516 = vpack.c.b16 %v471, %v468
    %v517 = vpack.c.b16 %v472, %v469
    %v518 = vpack.c.b16 %v476, %v473
    %v519 = vpack.c.b16 %v477, %v474
    %v520 = vpack.c.b16 %v478, %v475
    %v521 = vpack.c.b16 %v482, %v479
    %v522 = vpack.c.b16 %v483, %v480
    %v523 = vpack.c.b16 %v484, %v481
    %v524 = vpack.c.b16 %v488, %v485
    %v525 = vpack.c.b16 %v489, %v486
    %v526 = vpack.c.b16 %v490, %v487
    %v527 = vpack.c.b16 %v494, %v491
    %v528 = vpack.c.b16 %v495, %v492
    %v529 = vpack.c.b16 %v496, %v493
    %v530 = vpack.c.b16 %v500, %v497
    %v531 = vpack.c.b16 %v501, %v498
    %v532 = vpack.c.b16 %v502, %v499
    %v564 = vsel %vm315, %v66, 0
    %566 = vmatprep.subr.bf16.mxu0 %v504
    %567 = vmatpush1.bf16.msra.mxu0 %v503
    %568 = vmatprep.subr.bf16.mxu0 %v507
    %569 = vmatpush1.bf16.msra.mxu0 %v506
    %570 = vmatprep.subr.bf16.mxu0 %v510
    %571 = vmatpush1.bf16.msra.mxu0 %v509
    %572 = vmatprep.subr.bf16.mxu0 %v513
    %573 = vmatpush1.bf16.msra.mxu0 %v512
    %574 = vmatprep.subr.bf16.mxu0 %v516
    %575 = vmatpush1.bf16.msra.mxu0 %v515
    %576 = vmatprep.subr.bf16.mxu0 %v519
    %577 = vmatpush1.bf16.msra.mxu0 %v518
    %578 = vmatprep.subr.bf16.mxu0 %v522
    %579 = vmatpush1.bf16.msra.mxu0 %v521
    %580 = vmatprep.subr.bf16.mxu0 %v525
    %581 = vmatpush1.bf16.msra.mxu0 %v524
    %582 = vmatprep.subr.bf16.mxu0 %v528
    %583 = vmatpush1.bf16.msra.mxu0 %v527
    %584 = vmatprep.subr.bf16.mxu0 %v531
    %585 = vmatpush1.bf16.msra.mxu0 %v530
    %586 = vmatprep.subr.bf16.mxu0 0
    %587 = vmatpush1.bf16.msra.mxu0 0
    %588 = vmatprep.subr.bf16.mxu0 0
    %589 = vmatpush1.bf16.msra.mxu0 0
    %590 = vmatprep.subr.bf16.mxu0 0
    %591 = vmatpush1.bf16.msra.mxu0 0
    %592 = vmatprep.subr.bf16.mxu0 0
    %593 = vmatpush1.bf16.msra.mxu0 0
    %594 = vmatprep.subr.bf16.mxu0 0
    %595 = vmatpush1.bf16.msra.mxu0 0
    %596 = vmatprep.subr.bf16.mxu0 0
    %597 = vmatpush1.bf16.msra.mxu0 0
    %598 = vmatprep.mubr.bf16.mxu0 %v564
    %599 = vmatmul.mubr.bf16.gmra.mrb[0].mxu0 %v65
    %v600 = vpop.f32.mrb[0].mxu0
    %v601 = vadd.f32 %v354, %v600
    %v602 = vpop.f32.mrb[0].mxu0
    %v603 = vadd.f32 %v356, %v602
    %v604 = vpop.f32.mrb[0].mxu0
    %v605 = vadd.f32 %v358, %v604
    %v606 = vpop.f32.mrb[0].mxu0
    %v607 = vadd.f32 %v360, %v606
    %608 = vdwg.mxu0
    %609 = vmatprep.subr.bf16.mxu0 0
    %610 = vmatpush1.bf16.msra.mxu0 %v505
    %611 = vmatprep.subr.bf16.mxu0 0
    %612 = vmatpush1.bf16.msra.mxu0 %v508
    %613 = vmatprep.subr.bf16.mxu0 0
    %614 = vmatpush1.bf16.msra.mxu0 %v511
    %615 = vmatprep.subr.bf16.mxu0 0
    %616 = vmatpush1.bf16.msra.mxu0 %v514
    %617 = vmatprep.subr.bf16.mxu0 0
    %618 = vmatpush1.bf16.msra.mxu0 %v517
    %619 = vmatprep.subr.bf16.mxu0 0
    %620 = vmatpush1.bf16.msra.mxu0 %v520
    %621 = vmatprep.subr.bf16.mxu0 0
    %622 = vmatpush1.bf16.msra.mxu0 %v523
    %623 = vmatprep.subr.bf16.mxu0 0
    %624 = vmatpush1.bf16.msra.mxu0 %v526
    %625 = vmatprep.subr.bf16.mxu0 0
    %626 = vmatpush1.bf16.msra.mxu0 %v529
    %627 = vmatprep.subr.bf16.mxu0 0
    %628 = vmatpush1.bf16.msra.mxu0 %v532
    %629 = vmatprep.subr.bf16.mxu0 0
    %630 = vmatpush1.bf16.msra.mxu0 0
    %631 = vmatprep.subr.bf16.mxu0 0
    %632 = vmatpush1.bf16.msra.mxu0 0
    %633 = vmatprep.subr.bf16.mxu0 0
    %634 = vmatpush1.bf16.msra.mxu0 0
    %635 = vmatprep.subr.bf16.mxu0 0
    %636 = vmatpush1.bf16.msra.mxu0 0
    %637 = vmatprep.subr.bf16.mxu0 0
    %638 = vmatpush1.bf16.msra.mxu0 0
    %639 = vmatprep.subr.bf16.mxu0 0
    %640 = vmatpush1.bf16.msra.mxu0 0
    %641 = vmatprep.mubr.bf16.mxu0 %v564
    %642 = vmatmul.mubr.bf16.gmra.mrb[0].mxu0 %v65
    %v643 = vpop.f32.mrb[0].mxu0
    %v644 = vadd.f32 %v397, %v643
    %v645 = vpop.f32.mrb[0].mxu0
    %v646 = vpop.f32.mrb[0].mxu0
    %v647 = vadd.f32 %v400, %v646
    %v648 = vpop.f32.mrb[0].mxu0
    %649 = vdwg.mxu0
    %s650 = scalar_lea.vmem %s0, 64
    %v651 = vld [vmem:[%s650] sm:$0xff]
    %v652 = vld [vmem:[%s650 + $0x8] sm:$0xff]
    %v653 = vld [vmem:[%s650 + $0x10] sm:$0x3]
    %v654 = vld [vmem:[%s650 + $0x18] sm:$0x3]
    %v655 = vpack.c.bf16 %v653, %v651
    %v656 = vpack.c.bf16 %v654, %v652
    %s657 = scalar_lea.vmem %s1, 480
    %v658 = vld [vmem:[%s657] sm:$0xff]
    %v659 = vld [vmem:[%s657 + $0x8] sm:$0xf]
    %v660 = vld [vmem:[%s657 + $0xc] sm:$0xff]
    %v661 = vld [vmem:[%s657 + $0x14] sm:$0xf]
    %v662 = vld [vmem:[%s657 + $0x18] sm:$0xff]
    %v663 = vld [vmem:[%s657 + $0x20] sm:$0xf]
    %v664 = vld [vmem:[%s657 + $0x24] sm:$0xff]
    %v665 = vld [vmem:[%s657 + $0x2c] sm:$0xf]
    %v666 = vld [vmem:[%s657 + $0x30] sm:$0xff]
    %v667 = vld [vmem:[%s657 + $0x38] sm:$0xf]
    %v668 = vld [vmem:[%s657 + $0x3c] sm:$0xff]
    %v669 = vld [vmem:[%s657 + $0x44] sm:$0xf]
    %v670 = vld [vmem:[%s657 + $0x48] sm:$0xff]
    %v671 = vld [vmem:[%s657 + $0x50] sm:$0xf]
    %v672 = vld [vmem:[%s657 + $0x54] sm:$0xff]
    %v673 = vld [vmem:[%s657 + $0x5c] sm:$0xf]
    %v674 = vld [vmem:[%s657 + $0x60] sm:$0xff]
    %v675 = vld [vmem:[%s657 + $0x68] sm:$0xf]
    %v676 = vld [vmem:[%s657 + $0x6c] sm:$0xff]
    %v677 = vld [vmem:[%s657 + $0x74] sm:$0xf]
    %v678 = vld [vmem:[%s657 + $0x78] sm:$0xff]
    %v679 = vld [vmem:[%s657 + $0x80] sm:$0xf]
    %v680 = vld [vmem:[%s657 + $0x84] sm:$0xff]
    %v681 = vld [vmem:[%s657 + $0x8c] sm:$0xf]
    %v682 = vld [vmem:[%s657 + $0x90] sm:$0xff]
    %v683 = vld [vmem:[%s657 + $0x98] sm:$0xf]
    %v684 = vld [vmem:[%s657 + $0x9c] sm:$0xff]
    %v685 = vld [vmem:[%s657 + $0xa4] sm:$0xf]
    %v686 = vld [vmem:[%s657 + $0xa8] sm:$0xff]
    %v687 = vld [vmem:[%s657 + $0xb0] sm:$0xf]
    %v688 = vld [vmem:[%s657 + $0xb4] sm:$0xff]
    %v689 = vld [vmem:[%s657 + $0xbc] sm:$0xf]
    %v690 = vld [vmem:[%s657 + $0xc0] sm:$0xff]
    %v691 = vld [vmem:[%s657 + $0xc8] sm:$0xf]
    %v692 = vld [vmem:[%s657 + $0xcc] sm:$0xff]
    %v693 = vld [vmem:[%s657 + $0xd4] sm:$0xf]
    %v694 = vld [vmem:[%s657 + $0xd8] sm:$0xff]
    %v695 = vld [vmem:[%s657 + $0xe0] sm:$0xf]
    %v696 = vld [vmem:[%s657 + $0xe4] sm:$0xff]
    %v697 = vld [vmem:[%s657 + $0xec] sm:$0xf]
    %v738 = vunpack.c.l.b16 %v658
    %v739 = vunpack.c.h.b16 %v658
    %v740 = vunpack.c.l.b16 %v659
    %v741 = vunpack.c.l.b16 %v660
    %v742 = vunpack.c.h.b16 %v660
    %v743 = vunpack.c.l.b16 %v661
    %v744 = vunpack.c.l.b16 %v662
    %v745 = vunpack.c.h.b16 %v662
    %v746 = vunpack.c.l.b16 %v663
    %v747 = vunpack.c.l.b16 %v664
    %v748 = vunpack.c.h.b16 %v664
    %v749 = vunpack.c.l.b16 %v665
    %v750 = vunpack.c.l.b16 %v666
    %v751 = vunpack.c.h.b16 %v666
    %v752 = vunpack.c.l.b16 %v667
    %v753 = vunpack.c.l.b16 %v668
    %v754 = vunpack.c.h.b16 %v668
    %v755 = vunpack.c.l.b16 %v669
    %v756 = vunpack.c.l.b16 %v670
    %v757 = vunpack.c.h.b16 %v670
    %v758 = vunpack.c.l.b16 %v671
    %v759 = vunpack.c.l.b16 %v672
    %v760 = vunpack.c.h.b16 %v672
    %v761 = vunpack.c.l.b16 %v673
    %v762 = vunpack.c.l.b16 %v674
    %v763 = vunpack.c.h.b16 %v674
    %v764 = vunpack.c.l.b16 %v675
    %v765 = vunpack.c.l.b16 %v676
    %v766 = vunpack.c.h.b16 %v676
    %v767 = vunpack.c.l.b16 %v677
    %v768 = vunpack.c.l.b16 %v678
    %v769 = vunpack.c.h.b16 %v678
    %v770 = vunpack.c.l.b16 %v679
    %v771 = vunpack.c.l.b16 %v680
    %v772 = vunpack.c.h.b16 %v680
    %v773 = vunpack.c.l.b16 %v681
    %v774 = vunpack.c.l.b16 %v682
    %v775 = vunpack.c.h.b16 %v682
    %v776 = vunpack.c.l.b16 %v683
    %v777 = vunpack.c.l.b16 %v684
    %v778 = vunpack.c.h.b16 %v684
    %v779 = vunpack.c.l.b16 %v685
    %v780 = vunpack.c.l.b16 %v686
    %v781 = vunpack.c.h.b16 %v686
    %v782 = vunpack.c.l.b16 %v687
    %v783 = vunpack.c.l.b16 %v688
    %v784 = vunpack.c.h.b16 %v688
    %v785 = vunpack.c.l.b16 %v689
    %v786 = vunpack.c.l.b16 %v690
    %v787 = vunpack.c.h.b16 %v690
    %v788 = vunpack.c.l.b16 %v691
    %v789 = vunpack.c.l.b16 %v692
    %v790 = vunpack.c.h.b16 %v692
    %v791 = vunpack.c.l.b16 %v693
    %v792 = vunpack.c.l.b16 %v694
    %v793 = vunpack.c.h.b16 %v694
    %v794 = vunpack.c.l.b16 %v695
    %v795 = vunpack.c.l.b16 %v696
    %v796 = vunpack.c.h.b16 %v696
    %v797 = vunpack.c.l.b16 %v697
    %v798 = vpack.c.b16 %v741, %v738
    %v799 = vpack.c.b16 %v742, %v739
    %v800 = vpack.c.b16 %v743, %v740
    %v801 = vpack.c.b16 %v747, %v744
    %v802 = vpack.c.b16 %v748, %v745
    %v803 = vpack.c.b16 %v749, %v746
    %v804 = vpack.c.b16 %v753, %v750
    %v805 = vpack.c.b16 %v754, %v751
    %v806 = vpack.c.b16 %v755, %v752
    %v807 = vpack.c.b16 %v759, %v756
    %v808 = vpack.c.b16 %v760, %v757
    %v809 = vpack.c.b16 %v761, %v758
    %v810 = vpack.c.b16 %v765, %v762
    %v811 = vpack.c.b16 %v766, %v763
    %v812 = vpack.c.b16 %v767, %v764
    %v813 = vpack.c.b16 %v771, %v768
    %v814 = vpack.c.b16 %v772, %v769
    %v815 = vpack.c.b16 %v773, %v770
    %v816 = vpack.c.b16 %v777, %v774
    %v817 = vpack.c.b16 %v778, %v775
    %v818 = vpack.c.b16 %v779, %v776
    %v819 = vpack.c.b16 %v783, %v780
    %v820 = vpack.c.b16 %v784, %v781
    %v821 = vpack.c.b16 %v785, %v782
    %v822 = vpack.c.b16 %v789, %v786
    %v823 = vpack.c.b16 %v790, %v787
    %v824 = vpack.c.b16 %v791, %v788
    %v825 = vpack.c.b16 %v795, %v792
    %v826 = vpack.c.b16 %v796, %v793
    %v827 = vpack.c.b16 %v797, %v794
    %v859 = vsel %vm315, %v656, 0
    %861 = vmatprep.subr.bf16.mxu0 %v799
    %862 = vmatpush1.bf16.msra.mxu0 %v798
    %863 = vmatprep.subr.bf16.mxu0 %v802
    %864 = vmatpush1.bf16.msra.mxu0 %v801
    %865 = vmatprep.subr.bf16.mxu0 %v805
    %866 = vmatpush1.bf16.msra.mxu0 %v804
    %867 = vmatprep.subr.bf16.mxu0 %v808
    %868 = vmatpush1.bf16.msra.mxu0 %v807
    %869 = vmatprep.subr.bf16.mxu0 %v811
    %870 = vmatpush1.bf16.msra.mxu0 %v810
    %871 = vmatprep.subr.bf16.mxu0 %v814
    %872 = vmatpush1.bf16.msra.mxu0 %v813
    %873 = vmatprep.subr.bf16.mxu0 %v817
    %874 = vmatpush1.bf16.msra.mxu0 %v816
    %875 = vmatprep.subr.bf16.mxu0 %v820
    %876 = vmatpush1.bf16.msra.mxu0 %v819
    %877 = vmatprep.subr.bf16.mxu0 %v823
    %878 = vmatpush1.bf16.msra.mxu0 %v822
    %879 = vmatprep.subr.bf16.mxu0 %v826
    %880 = vmatpush1.bf16.msra.mxu0 %v825
    %881 = vmatprep.subr.bf16.mxu0 0
    %882 = vmatpush1.bf16.msra.mxu0 0
    %883 = vmatprep.subr.bf16.mxu0 0
    %884 = vmatpush1.bf16.msra.mxu0 0
    %885 = vmatprep.subr.bf16.mxu0 0
    %886 = vmatpush1.bf16.msra.mxu0 0
    %887 = vmatprep.subr.bf16.mxu0 0
    %888 = vmatpush1.bf16.msra.mxu0 0
    %889 = vmatprep.subr.bf16.mxu0 0
    %890 = vmatpush1.bf16.msra.mxu0 0
    %891 = vmatprep.subr.bf16.mxu0 0
    %892 = vmatpush1.bf16.msra.mxu0 0
    %893 = vmatprep.mubr.bf16.mxu0 %v859
    %894 = vmatmul.mubr.bf16.gmra.mrb[0].mxu0 %v655
    %v895 = vpop.f32.mrb[0].mxu0
    %v896 = vadd.f32 0.0, %v895
    %v897 = vpop.f32.mrb[0].mxu0
    %v898 = vadd.f32 0.0, %v897
    %v899 = vpop.f32.mrb[0].mxu0
    %v900 = vadd.f32 0.0, %v899
    %v901 = vpop.f32.mrb[0].mxu0
    %v902 = vadd.f32 0.0, %v901
    %903 = vdwg.mxu0
    %904 = vmatprep.subr.bf16.mxu0 0
    %905 = vmatpush1.bf16.msra.mxu0 %v800
    %906 = vmatprep.subr.bf16.mxu0 0
    %907 = vmatpush1.bf16.msra.mxu0 %v803
    %908 = vmatprep.subr.bf16.mxu0 0
    %909 = vmatpush1.bf16.msra.mxu0 %v806
    %910 = vmatprep.subr.bf16.mxu0 0
    %911 = vmatpush1.bf16.msra.mxu0 %v809
    %912 = vmatprep.subr.bf16.mxu0 0
    %913 = vmatpush1.bf16.msra.mxu0 %v812
    %914 = vmatprep.subr.bf16.mxu0 0
    %915 = vmatpush1.bf16.msra.mxu0 %v815
    %916 = vmatprep.subr.bf16.mxu0 0
    %917 = vmatpush1.bf16.msra.mxu0 %v818
    %918 = vmatprep.subr.bf16.mxu0 0
    %919 = vmatpush1.bf16.msra.mxu0 %v821
    %920 = vmatprep.subr.bf16.mxu0 0
    %921 = vmatpush1.bf16.msra.mxu0 %v824
    %922 = vmatprep.subr.bf16.mxu0 0
    %923 = vmatpush1.bf16.msra.mxu0 %v827
    %924 = vmatprep.subr.bf16.mxu0 0
    %925 = vmatpush1.bf16.msra.mxu0 0
    %926 = vmatprep.subr.bf16.mxu0 0
    %927 = vmatpush1.bf16.msra.mxu0 0
    %928 = vmatprep.subr.bf16.mxu0 0
    %929 = vmatpush1.bf16.msra.mxu0 0
    %930 = vmatprep.subr.bf16.mxu0 0
    %931 = vmatpush1.bf16.msra.mxu0 0
    %932 = vmatprep.subr.bf16.mxu0 0
    %933 = vmatpush1.bf16.msra.mxu0 0
    %934 = vmatprep.subr.bf16.mxu0 0
    %935 = vmatpush1.bf16.msra.mxu0 0
    %936 = vmatprep.mubr.bf16.mxu0 %v859
    %937 = vmatmul.mubr.bf16.gmra.mrb[0].mxu0 %v655
    %v938 = vpop.f32.mrb[0].mxu0
    %v939 = vadd.f32 0.0, %v938
    %v940 = vpop.f32.mrb[0].mxu0
    %v941 = vpop.f32.mrb[0].mxu0
    %v942 = vadd.f32 0.0, %v941
    %v943 = vpop.f32.mrb[0].mxu0
    %944 = vdwg.mxu0
    %v945 = vadd.f32 %v601, %v896
    %v946 = vadd.f32 %v603, %v898
    %v947 = vadd.f32 %v644, %v939
    %v948 = vadd.f32 %v605, %v900
    %v949 = vadd.f32 %v607, %v902
    %v950 = vadd.f32 %v647, %v942
    %s951 = scalar_lea.vmem %s0, 96
    %v952 = vld [vmem:[%s951] sm:$0xff]
    %v953 = vld [vmem:[%s951 + $0x8] sm:$0xff]
    %v954 = vld [vmem:[%s951 + $0x10] sm:$0x3]
    %v955 = vld [vmem:[%s951 + $0x18] sm:$0x3]
    %v956 = vpack.c.bf16 %v954, %v952
    %v957 = vpack.c.bf16 %v955, %v953
    %s958 = scalar_lea.vmem %s1, 720
    %v959 = vld [vmem:[%s958] sm:$0xff]
    %v960 = vld [vmem:[%s958 + $0x8] sm:$0xf]
    %v961 = vld [vmem:[%s958 + $0xc] sm:$0xff]
    %v962 = vld [vmem:[%s958 + $0x14] sm:$0xf]
    %v963 = vld [vmem:[%s958 + $0x18] sm:$0xff]
    %v964 = vld [vmem:[%s958 + $0x20] sm:$0xf]
    %v965 = vld [vmem:[%s958 + $0x24] sm:$0xff]
    %v966 = vld [vmem:[%s958 + $0x2c] sm:$0xf]
    %v967 = vld [vmem:[%s958 + $0x30] sm:$0xff]
    %v968 = vld [vmem:[%s958 + $0x38] sm:$0xf]
    %v969 = vld [vmem:[%s958 + $0x3c] sm:$0xff]
    %v970 = vld [vmem:[%s958 + $0x44] sm:$0xf]
    %v971 = vld [vmem:[%s958 + $0x48] sm:$0xff]
    %v972 = vld [vmem:[%s958 + $0x50] sm:$0xf]
    %v973 = vld [vmem:[%s958 + $0x54] sm:$0xff]
    %v974 = vld [vmem:[%s958 + $0x5c] sm:$0xf]
    %v975 = vld [vmem:[%s958 + $0x60] sm:$0xff]
    %v976 = vld [vmem:[%s958 + $0x68] sm:$0xf]
    %v977 = vld [vmem:[%s958 + $0x6c] sm:$0xff]
    %v978 = vld [vmem:[%s958 + $0x74] sm:$0xf]
    %v979 = vld [vmem:[%s958 + $0x78] sm:$0xff]
    %v980 = vld [vmem:[%s958 + $0x80] sm:$0xf]
    %v981 = vld [vmem:[%s958 + $0x84] sm:$0xff]
    %v982 = vld [vmem:[%s958 + $0x8c] sm:$0xf]
    %v983 = vld [vmem:[%s958 + $0x90] sm:$0xff]
    %v984 = vld [vmem:[%s958 + $0x98] sm:$0xf]
    %v985 = vld [vmem:[%s958 + $0x9c] sm:$0xff]
    %v986 = vld [vmem:[%s958 + $0xa4] sm:$0xf]
    %v987 = vld [vmem:[%s958 + $0xa8] sm:$0xff]
    %v988 = vld [vmem:[%s958 + $0xb0] sm:$0xf]
    %v989 = vld [vmem:[%s958 + $0xb4] sm:$0xff]
    %v990 = vld [vmem:[%s958 + $0xbc] sm:$0xf]
    %v991 = vld [vmem:[%s958 + $0xc0] sm:$0xff]
    %v992 = vld [vmem:[%s958 + $0xc8] sm:$0xf]
    %v993 = vld [vmem:[%s958 + $0xcc] sm:$0xff]
    %v994 = vld [vmem:[%s958 + $0xd4] sm:$0xf]
    %v995 = vld [vmem:[%s958 + $0xd8] sm:$0xff]
    %v996 = vld [vmem:[%s958 + $0xe0] sm:$0xf]
    %v997 = vld [vmem:[%s958 + $0xe4] sm:$0xff]
    %v998 = vld [vmem:[%s958 + $0xec] sm:$0xf]
    %v1039 = vunpack.c.l.b16 %v959
    %v1040 = vunpack.c.h.b16 %v959
    %v1041 = vunpack.c.l.b16 %v960
    %v1042 = vunpack.c.l.b16 %v961
    %v1043 = vunpack.c.h.b16 %v961
    %v1044 = vunpack.c.l.b16 %v962
    %v1045 = vunpack.c.l.b16 %v963
    %v1046 = vunpack.c.h.b16 %v963
    %v1047 = vunpack.c.l.b16 %v964
    %v1048 = vunpack.c.l.b16 %v965
    %v1049 = vunpack.c.h.b16 %v965
    %v1050 = vunpack.c.l.b16 %v966
    %v1051 = vunpack.c.l.b16 %v967
    %v1052 = vunpack.c.h.b16 %v967
    %v1053 = vunpack.c.l.b16 %v968
    %v1054 = vunpack.c.l.b16 %v969
    %v1055 = vunpack.c.h.b16 %v969
    %v1056 = vunpack.c.l.b16 %v970
    %v1057 = vunpack.c.l.b16 %v971
    %v1058 = vunpack.c.h.b16 %v971
    %v1059 = vunpack.c.l.b16 %v972
    %v1060 = vunpack.c.l.b16 %v973
    %v1061 = vunpack.c.h.b16 %v973
    %v1062 = vunpack.c.l.b16 %v974
    %v1063 = vunpack.c.l.b16 %v975
    %v1064 = vunpack.c.h.b16 %v975
    %v1065 = vunpack.c.l.b16 %v976
    %v1066 = vunpack.c.l.b16 %v977
    %v1067 = vunpack.c.h.b16 %v977
    %v1068 = vunpack.c.l.b16 %v978
    %v1069 = vunpack.c.l.b16 %v979
    %v1070 = vunpack.c.h.b16 %v979
    %v1071 = vunpack.c.l.b16 %v980
    %v1072 = vunpack.c.l.b16 %v981
    %v1073 = vunpack.c.h.b16 %v981
    %v1074 = vunpack.c.l.b16 %v982
    %v1075 = vunpack.c.l.b16 %v983
    %v1076 = vunpack.c.h.b16 %v983
    %v1077 = vunpack.c.l.b16 %v984
    %v1078 = vunpack.c.l.b16 %v985
    %v1079 = vunpack.c.h.b16 %v985
    %v1080 = vunpack.c.l.b16 %v986
    %v1081 = vunpack.c.l.b16 %v987
    %v1082 = vunpack.c.h.b16 %v987
    %v1083 = vunpack.c.l.b16 %v988
    %v1084 = vunpack.c.l.b16 %v989
    %v1085 = vunpack.c.h.b16 %v989
    %v1086 = vunpack.c.l.b16 %v990
    %v1087 = vunpack.c.l.b16 %v991
    %v1088 = vunpack.c.h.b16 %v991
    %v1089 = vunpack.c.l.b16 %v992
    %v1090 = vunpack.c.l.b16 %v993
    %v1091 = vunpack.c.h.b16 %v993
    %v1092 = vunpack.c.l.b16 %v994
    %v1093 = vunpack.c.l.b16 %v995
    %v1094 = vunpack.c.h.b16 %v995
    %v1095 = vunpack.c.l.b16 %v996
    %v1096 = vunpack.c.l.b16 %v997
    %v1097 = vunpack.c.h.b16 %v997
    %v1098 = vunpack.c.l.b16 %v998
    %v1099 = vpack.c.b16 %v1042, %v1039
    %v1100 = vpack.c.b16 %v1043, %v1040
    %v1101 = vpack.c.b16 %v1044, %v1041
    %v1102 = vpack.c.b16 %v1048, %v1045
    %v1103 = vpack.c.b16 %v1049, %v1046
    %v1104 = vpack.c.b16 %v1050, %v1047
    %v1105 = vpack.c.b16 %v1054, %v1051
    %v1106 = vpack.c.b16 %v1055, %v1052
    %v1107 = vpack.c.b16 %v1056, %v1053
    %v1108 = vpack.c.b16 %v1060, %v1057
    %v1109 = vpack.c.b16 %v1061, %v1058
    %v1110 = vpack.c.b16 %v1062, %v1059
    %v1111 = vpack.c.b16 %v1066, %v1063
    %v1112 = vpack.c.b16 %v1067, %v1064
    %v1113 = vpack.c.b16 %v1068, %v1065
    %v1114 = vpack.c.b16 %v1072, %v1069
    %v1115 = vpack.c.b16 %v1073, %v1070
    %v1116 = vpack.c.b16 %v1074, %v1071
    %v1117 = vpack.c.b16 %v1078, %v1075
    %v1118 = vpack.c.b16 %v1079, %v1076
    %v1119 = vpack.c.b16 %v1080, %v1077
    %v1120 = vpack.c.b16 %v1084, %v1081
    %v1121 = vpack.c.b16 %v1085, %v1082
    %v1122 = vpack.c.b16 %v1086, %v1083
    %v1123 = vpack.c.b16 %v1090, %v1087
    %v1124 = vpack.c.b16 %v1091, %v1088
    %v1125 = vpack.c.b16 %v1092, %v1089
    %v1126 = vpack.c.b16 %v1096, %v1093
    %v1127 = vpack.c.b16 %v1097, %v1094
    %v1128 = vpack.c.b16 %v1098, %v1095
    %v1160 = vsel %vm315, %v957, 0
    %1162 = vmatprep.subr.bf16.mxu0 %v1100
    %1163 = vmatpush1.bf16.msra.mxu0 %v1099
    %1164 = vmatprep.subr.bf16.mxu0 %v1103
    %1165 = vmatpush1.bf16.msra.mxu0 %v1102
    %1166 = vmatprep.subr.bf16.mxu0 %v1106
    %1167 = vmatpush1.bf16.msra.mxu0 %v1105
    %1168 = vmatprep.subr.bf16.mxu0 %v1109
    %1169 = vmatpush1.bf16.msra.mxu0 %v1108
    %1170 = vmatprep.subr.bf16.mxu0 %v1112
    %1171 = vmatpush1.bf16.msra.mxu0 %v1111
    %1172 = vmatprep.subr.bf16.mxu0 %v1115
    %1173 = vmatpush1.bf16.msra.mxu0 %v1114
    %1174 = vmatprep.subr.bf16.mxu0 %v1118
    %1175 = vmatpush1.bf16.msra.mxu0 %v1117
    %1176 = vmatprep.subr.bf16.mxu0 %v1121
    %1177 = vmatpush1.bf16.msra.mxu0 %v1120
    %1178 = vmatprep.subr.bf16.mxu0 %v1124
    %1179 = vmatpush1.bf16.msra.mxu0 %v1123
    %1180 = vmatprep.subr.bf16.mxu0 %v1127
    %1181 = vmatpush1.bf16.msra.mxu0 %v1126
    %1182 = vmatprep.subr.bf16.mxu0 0
    %1183 = vmatpush1.bf16.msra.mxu0 0
    %1184 = vmatprep.subr.bf16.mxu0 0
    %1185 = vmatpush1.bf16.msra.mxu0 0
    %1186 = vmatprep.subr.bf16.mxu0 0
    %1187 = vmatpush1.bf16.msra.mxu0 0
    %1188 = vmatprep.subr.bf16.mxu0 0
    %1189 = vmatpush1.bf16.msra.mxu0 0
    %1190 = vmatprep.subr.bf16.mxu0 0
    %1191 = vmatpush1.bf16.msra.mxu0 0
    %1192 = vmatprep.subr.bf16.mxu0 0
    %1193 = vmatpush1.bf16.msra.mxu0 0
    %1194 = vmatprep.mubr.bf16.mxu0 %v1160
    %1195 = vmatmul.mubr.bf16.gmra.mrb[0].mxu0 %v956
    %v1196 = vpop.f32.mrb[0].mxu0
    %v1197 = vadd.f32 0.0, %v1196
    %v1198 = vpop.f32.mrb[0].mxu0
    %v1199 = vadd.f32 0.0, %v1198
    %v1200 = vpop.f32.mrb[0].mxu0
    %v1201 = vadd.f32 0.0, %v1200
    %v1202 = vpop.f32.mrb[0].mxu0
    %v1203 = vadd.f32 0.0, %v1202
    %1204 = vdwg.mxu0
    %1205 = vmatprep.subr.bf16.mxu0 0
    %1206 = vmatpush1.bf16.msra.mxu0 %v1101
    %1207 = vmatprep.subr.bf16.mxu0 0
    %1208 = vmatpush1.bf16.msra.mxu0 %v1104
    %1209 = vmatprep.subr.bf16.mxu0 0
    %1210 = vmatpush1.bf16.msra.mxu0 %v1107
    %1211 = vmatprep.subr.bf16.mxu0 0
    %1212 = vmatpush1.bf16.msra.mxu0 %v1110
    %1213 = vmatprep.subr.bf16.mxu0 0
    %1214 = vmatpush1.bf16.msra.mxu0 %v1113
    %1215 = vmatprep.subr.bf16.mxu0 0
    %1216 = vmatpush1.bf16.msra.mxu0 %v1116
    %1217 = vmatprep.subr.bf16.mxu0 0
    %1218 = vmatpush1.bf16.msra.mxu0 %v1119
    %1219 = vmatprep.subr.bf16.mxu0 0
    %1220 = vmatpush1.bf16.msra.mxu0 %v1122
    %1221 = vmatprep.subr.bf16.mxu0 0
    %1222 = vmatpush1.bf16.msra.mxu0 %v1125
    %1223 = vmatprep.subr.bf16.mxu0 0
    %1224 = vmatpush1.bf16.msra.mxu0 %v1128
    %1225 = vmatprep.subr.bf16.mxu0 0
    %1226 = vmatpush1.bf16.msra.mxu0 0
    %1227 = vmatprep.subr.bf16.mxu0 0
    %1228 = vmatpush1.bf16.msra.mxu0 0
    %1229 = vmatprep.subr.bf16.mxu0 0
    %1230 = vmatpush1.bf16.msra.mxu0 0
    %1231 = vmatprep.subr.bf16.mxu0 0
    %1232 = vmatpush1.bf16.msra.mxu0 0
    %1233 = vmatprep.subr.bf16.mxu0 0
    %1234 = vmatpush1.bf16.msra.mxu0 0
    %1235 = vmatprep.subr.bf16.mxu0 0
    %1236 = vmatpush1.bf16.msra.mxu0 0
    %1237 = vmatprep.mubr.bf16.mxu0 %v1160
    %1238 = vmatmul.mubr.bf16.gmra.mrb[0].mxu0 %v956
    %v1239 = vpop.f32.mrb[0].mxu0
    %v1240 = vadd.f32 0.0, %v1239
    %v1241 = vpop.f32.mrb[0].mxu0
    %v1242 = vpop.f32.mrb[0].mxu0
    %v1243 = vadd.f32 0.0, %v1242
    %v1244 = vpop.f32.mrb[0].mxu0
    %1245 = vdwg.mxu0
    %v1246 = vadd.f32 %v945, %v1197
    %v1247 = vadd.f32 %v946, %v1199
    %v1248 = vadd.f32 %v947, %v1240
    %v1249 = vadd.f32 %v948, %v1201
    %v1250 = vadd.f32 %v949, %v1203
    %v1251 = vadd.f32 %v950, %v1243
    %s1252 = scalar_lea.vmem %s0, 128
    %v1253 = vld [vmem:[%s1252] sm:$0xff]
    %v1254 = vld [vmem:[%s1252 + $0x8] sm:$0xff]
    %v1255 = vld [vmem:[%s1252 + $0x10] sm:$0x3]
    %v1256 = vld [vmem:[%s1252 + $0x18] sm:$0x3]
    %v1257 = vpack.c.bf16 %v1255, %v1253
    %v1258 = vpack.c.bf16 %v1256, %v1254
    %s1259 = scalar_lea.vmem %s1, 960
    %v1260 = vld [vmem:[%s1259] sm:$0xff]
    %v1261 = vld [vmem:[%s1259 + $0x8] sm:$0xf]
    %v1262 = vld [vmem:[%s1259 + $0xc] sm:$0xff]
    %v1263 = vld [vmem:[%s1259 + $0x14] sm:$0xf]
    %v1264 = vld [vmem:[%s1259 + $0x18] sm:$0xff]
    %v1265 = vld [vmem:[%s1259 + $0x20] sm:$0xf]
    %v1266 = vld [vmem:[%s1259 + $0x24] sm:$0xff]
    %v1267 = vld [vmem:[%s1259 + $0x2c] sm:$0xf]
    %v1268 = vld [vmem:[%s1259 + $0x30] sm:$0xff]
    %v1269 = vld [vmem:[%s1259 + $0x38] sm:$0xf]
    %v1270 = vld [vmem:[%s1259 + $0x3c] sm:$0xff]
    %v1271 = vld [vmem:[%s1259 + $0x44] sm:$0xf]
    %v1272 = vld [vmem:[%s1259 + $0x48] sm:$0xff]
    %v1273 = vld [vmem:[%s1259 + $0x50] sm:$0xf]
    %v1274 = vld [vmem:[%s1259 + $0x54] sm:$0xff]
    %v1275 = vld [vmem:[%s1259 + $0x5c] sm:$0xf]
    %v1276 = vld [vmem:[%s1259 + $0x60] sm:$0xff]
    %v1277 = vld [vmem:[%s1259 + $0x68] sm:$0xf]
    %v1278 = vld [vmem:[%s1259 + $0x6c] sm:$0xff]
    %v1279 = vld [vmem:[%s1259 + $0x74] sm:$0xf]
    %v1280 = vld [vmem:[%s1259 + $0x78] sm:$0xff]
    %v1281 = vld [vmem:[%s1259 + $0x80] sm:$0xf]
    %v1282 = vld [vmem:[%s1259 + $0x84] sm:$0xff]
    %v1283 = vld [vmem:[%s1259 + $0x8c] sm:$0xf]
    %v1284 = vld [vmem:[%s1259 + $0x90] sm:$0xff]
    %v1285 = vld [vmem:[%s1259 + $0x98] sm:$0xf]
    %v1286 = vld [vmem:[%s1259 + $0x9c] sm:$0xff]
    %v1287 = vld [vmem:[%s1259 + $0xa4] sm:$0xf]
    %v1288 = vld [vmem:[%s1259 + $0xa8] sm:$0xff]
    %v1289 = vld [vmem:[%s1259 + $0xb0] sm:$0xf]
    %v1290 = vld [vmem:[%s1259 + $0xb4] sm:$0xff]
    %v1291 = vld [vmem:[%s1259 + $0xbc] sm:$0xf]
    %v1292 = vld [vmem:[%s1259 + $0xc0] sm:$0xff]
    %v1293 = vld [vmem:[%s1259 + $0xc8] sm:$0xf]
    %v1294 = vld [vmem:[%s1259 + $0xcc] sm:$0xff]
    %v1295 = vld [vmem:[%s1259 + $0xd4] sm:$0xf]
    %v1296 = vld [vmem:[%s1259 + $0xd8] sm:$0xff]
    %v1297 = vld [vmem:[%s1259 + $0xe0] sm:$0xf]
    %v1298 = vld [vmem:[%s1259 + $0xe4] sm:$0xff]
    %v1299 = vld [vmem:[%s1259 + $0xec] sm:$0xf]
    %v1340 = vunpack.c.l.b16 %v1260
    %v1341 = vunpack.c.h.b16 %v1260
    %v1342 = vunpack.c.l.b16 %v1261
    %v1343 = vunpack.c.l.b16 %v1262
    %v1344 = vunpack.c.h.b16 %v1262
    %v1345 = vunpack.c.l.b16 %v1263
    %v1346 = vunpack.c.l.b16 %v1264
    %v1347 = vunpack.c.h.b16 %v1264
    %v1348 = vunpack.c.l.b16 %v1265
    %v1349 = vunpack.c.l.b16 %v1266
    %v1350 = vunpack.c.h.b16 %v1266
    %v1351 = vunpack.c.l.b16 %v1267
    %v1352 = vunpack.c.l.b16 %v1268
    %v1353 = vunpack.c.h.b16 %v1268
    %v1354 = vunpack.c.l.b16 %v1269
    %v1355 = vunpack.c.l.b16 %v1270
    %v1356 = vunpack.c.h.b16 %v1270
    %v1357 = vunpack.c.l.b16 %v1271
    %v1358 = vunpack.c.l.b16 %v1272
    %v1359 = vunpack.c.h.b16 %v1272
    %v1360 = vunpack.c.l.b16 %v1273
    %v1361 = vunpack.c.l.b16 %v1274
    %v1362 = vunpack.c.h.b16 %v1274
    %v1363 = vunpack.c.l.b16 %v1275
    %v1364 = vunpack.c.l.b16 %v1276
    %v1365 = vunpack.c.h.b16 %v1276
    %v1366 = vunpack.c.l.b16 %v1277
    %v1367 = vunpack.c.l.b16 %v1278
    %v1368 = vunpack.c.h.b16 %v1278
    %v1369 = vunpack.c.l.b16 %v1279
    %v1370 = vunpack.c.l.b16 %v1280
    %v1371 = vunpack.c.h.b16 %v1280
    %v1372 = vunpack.c.l.b16 %v1281
    %v1373 = vunpack.c.l.b16 %v1282
    %v1374 = vunpack.c.h.b16 %v1282
    %v1375 = vunpack.c.l.b16 %v1283
    %v1376 = vunpack.c.l.b16 %v1284
    %v1377 = vunpack.c.h.b16 %v1284
    %v1378 = vunpack.c.l.b16 %v1285
    %v1379 = vunpack.c.l.b16 %v1286
    %v1380 = vunpack.c.h.b16 %v1286
    %v1381 = vunpack.c.l.b16 %v1287
    %v1382 = vunpack.c.l.b16 %v1288
    %v1383 = vunpack.c.h.b16 %v1288
    %v1384 = vunpack.c.l.b16 %v1289
    %v1385 = vunpack.c.l.b16 %v1290
    %v1386 = vunpack.c.h.b16 %v1290
    %v1387 = vunpack.c.l.b16 %v1291
    %v1388 = vunpack.c.l.b16 %v1292
    %v1389 = vunpack.c.h.b16 %v1292
    %v1390 = vunpack.c.l.b16 %v1293
    %v1391 = vunpack.c.l.b16 %v1294
    %v1392 = vunpack.c.h.b16 %v1294
    %v1393 = vunpack.c.l.b16 %v1295
    %v1394 = vunpack.c.l.b16 %v1296
    %v1395 = vunpack.c.h.b16 %v1296
    %v1396 = vunpack.c.l.b16 %v1297
    %v1397 = vunpack.c.l.b16 %v1298
    %v1398 = vunpack.c.h.b16 %v1298
    %v1399 = vunpack.c.l.b16 %v1299
    %v1400 = vpack.c.b16 %v1343, %v1340
    %v1401 = vpack.c.b16 %v1344, %v1341
    %v1402 = vpack.c.b16 %v1345, %v1342
    %v1403 = vpack.c.b16 %v1349, %v1346
    %v1404 = vpack.c.b16 %v1350, %v1347
    %v1405 = vpack.c.b16 %v1351, %v1348
    %v1406 = vpack.c.b16 %v1355, %v1352
    %v1407 = vpack.c.b16 %v1356, %v1353
    %v1408 = vpack.c.b16 %v1357, %v1354
    %v1409 = vpack.c.b16 %v1361, %v1358
    %v1410 = vpack.c.b16 %v1362, %v1359
    %v1411 = vpack.c.b16 %v1363, %v1360
    %v1412 = vpack.c.b16 %v1367, %v1364
    %v1413 = vpack.c.b16 %v1368, %v1365
    %v1414 = vpack.c.b16 %v1369, %v1366
    %v1415 = vpack.c.b16 %v1373, %v1370
    %v1416 = vpack.c.b16 %v1374, %v1371
    %v1417 = vpack.c.b16 %v1375, %v1372
    %v1418 = vpack.c.b16 %v1379, %v1376
    %v1419 = vpack.c.b16 %v1380, %v1377
    %v1420 = vpack.c.b16 %v1381, %v1378
    %v1421 = vpack.c.b16 %v1385, %v1382
    %v1422 = vpack.c.b16 %v1386, %v1383
    %v1423 = vpack.c.b16 %v1387, %v1384
    %v1424 = vpack.c.b16 %v1391, %v1388
    %v1425 = vpack.c.b16 %v1392, %v1389
    %v1426 = vpack.c.b16 %v1393, %v1390
    %v1427 = vpack.c.b16 %v1397, %v1394
    %v1428 = vpack.c.b16 %v1398, %v1395
    %v1429 = vpack.c.b16 %v1399, %v1396
    %v1461 = vsel %vm315, %v1258, 0
    %1463 = vmatprep.subr.bf16.mxu0 %v1401
    %1464 = vmatpush1.bf16.msra.mxu0 %v1400
    %1465 = vmatprep.subr.bf16.mxu0 %v1404
    %1466 = vmatpush1.bf16.msra.mxu0 %v1403
    %1467 = vmatprep.subr.bf16.mxu0 %v1407
    %1468 = vmatpush1.bf16.msra.mxu0 %v1406
    %1469 = vmatprep.subr.bf16.mxu0 %v1410
    %1470 = vmatpush1.bf16.msra.mxu0 %v1409
    %1471 = vmatprep.subr.bf16.mxu0 %v1413
    %1472 = vmatpush1.bf16.msra.mxu0 %v1412
    %1473 = vmatprep.subr.bf16.mxu0 %v1416
    %1474 = vmatpush1.bf16.msra.mxu0 %v1415
    %1475 = vmatprep.subr.bf16.mxu0 %v1419
    %1476 = vmatpush1.bf16.msra.mxu0 %v1418
    %1477 = vmatprep.subr.bf16.mxu0 %v1422
    %1478 = vmatpush1.bf16.msra.mxu0 %v1421
    %1479 = vmatprep.subr.bf16.mxu0 %v1425
    %1480 = vmatpush1.bf16.msra.mxu0 %v1424
    %1481 = vmatprep.subr.bf16.mxu0 %v1428
    %1482 = vmatpush1.bf16.msra.mxu0 %v1427
    %1483 = vmatprep.subr.bf16.mxu0 0
    %1484 = vmatpush1.bf16.msra.mxu0 0
    %1485 = vmatprep.subr.bf16.mxu0 0
    %1486 = vmatpush1.bf16.msra.mxu0 0
    %1487 = vmatprep.subr.bf16.mxu0 0
    %1488 = vmatpush1.bf16.msra.mxu0 0
    %1489 = vmatprep.subr.bf16.mxu0 0
    %1490 = vmatpush1.bf16.msra.mxu0 0
    %1491 = vmatprep.subr.bf16.mxu0 0
    %1492 = vmatpush1.bf16.msra.mxu0 0
    %1493 = vmatprep.subr.bf16.mxu0 0
    %1494 = vmatpush1.bf16.msra.mxu0 0
    %1495 = vmatprep.mubr.bf16.mxu0 %v1461
    %1496 = vmatmul.mubr.bf16.gmra.mrb[0].mxu0 %v1257
    %v1497 = vpop.f32.mrb[0].mxu0
    %v1498 = vadd.f32 0.0, %v1497
    %v1499 = vpop.f32.mrb[0].mxu0
    %v1500 = vadd.f32 0.0, %v1499
    %v1501 = vpop.f32.mrb[0].mxu0
    %v1502 = vadd.f32 0.0, %v1501
    %v1503 = vpop.f32.mrb[0].mxu0
    %v1504 = vadd.f32 0.0, %v1503
    %1505 = vdwg.mxu0
    %1506 = vmatprep.subr.bf16.mxu0 0
    %1507 = vmatpush1.bf16.msra.mxu0 %v1402
    %1508 = vmatprep.subr.bf16.mxu0 0
    %1509 = vmatpush1.bf16.msra.mxu0 %v1405
    %1510 = vmatprep.subr.bf16.mxu0 0
    %1511 = vmatpush1.bf16.msra.mxu0 %v1408
    %1512 = vmatprep.subr.bf16.mxu0 0
    %1513 = vmatpush1.bf16.msra.mxu0 %v1411
    %1514 = vmatprep.subr.bf16.mxu0 0
    %1515 = vmatpush1.bf16.msra.mxu0 %v1414
    %1516 = vmatprep.subr.bf16.mxu0 0
    %1517 = vmatpush1.bf16.msra.mxu0 %v1417
    %1518 = vmatprep.subr.bf16.mxu0 0
    %1519 = vmatpush1.bf16.msra.mxu0 %v1420
    %1520 = vmatprep.subr.bf16.mxu0 0
    %1521 = vmatpush1.bf16.msra.mxu0 %v1423
    %1522 = vmatprep.subr.bf16.mxu0 0
    %1523 = vmatpush1.bf16.msra.mxu0 %v1426
    %1524 = vmatprep.subr.bf16.mxu0 0
    %1525 = vmatpush1.bf16.msra.mxu0 %v1429
    %1526 = vmatprep.subr.bf16.mxu0 0
    %1527 = vmatpush1.bf16.msra.mxu0 0
    %1528 = vmatprep.subr.bf16.mxu0 0
    %1529 = vmatpush1.bf16.msra.mxu0 0
    %1530 = vmatprep.subr.bf16.mxu0 0
    %1531 = vmatpush1.bf16.msra.mxu0 0
    %1532 = vmatprep.subr.bf16.mxu0 0
    %1533 = vmatpush1.bf16.msra.mxu0 0
    %1534 = vmatprep.subr.bf16.mxu0 0
    %1535 = vmatpush1.bf16.msra.mxu0 0
    %1536 = vmatprep.subr.bf16.mxu0 0
    %1537 = vmatpush1.bf16.msra.mxu0 0
    %1538 = vmatprep.mubr.bf16.mxu0 %v1461
    %1539 = vmatmul.mubr.bf16.gmra.mrb[0].mxu0 %v1257
    %v1540 = vpop.f32.mrb[0].mxu0
    %v1541 = vadd.f32 0.0, %v1540
    %v1542 = vpop.f32.mrb[0].mxu0
    %v1543 = vpop.f32.mrb[0].mxu0
    %v1544 = vadd.f32 0.0, %v1543
    %v1545 = vpop.f32.mrb[0].mxu0
    %1546 = vdwg.mxu0
    %v1547 = vadd.f32 %v1246, %v1498
    %v1548 = vadd.f32 %v1247, %v1500
    %v1549 = vadd.f32 %v1248, %v1541
    %v1550 = vadd.f32 %v1249, %v1502
    %v1551 = vadd.f32 %v1250, %v1504
    %v1552 = vadd.f32 %v1251, %v1544
    %1553 = vst [vmem:[#allocation2] sm:$0xff] %v1547
    %1554 = vst [vmem:[#allocation2 + $0x8] sm:$0xff] %v1548
    %1555 = vst.msk [vmem:[#allocation2 + $0x10] sm:$0xff] %vm315, %v1549
    %1556 = vst [vmem:[#allocation2 + $0x18] sm:$0x3] %v1550
    %1557 = vst [vmem:[#allocation2 + $0x20] sm:$0x3] %v1551
    %vm1558 = vcmask 254976
    %1559 = vst.msk [vmem:[#allocation2 + $0x28] sm:$0x3] %vm1558, %v1552
    %vm1560 = vcmask 1041408
    %v1561 = vsel %vm1560, %v1550, 0.0
    %v1562 = vadd.f32 %v1547, %v1561
    %v1563 = vrot.slane %v1562, 4
    %v1564 = vadd.f32 %v1562, %v1563
    %v1565 = vrot.slane %v1564, 2
    %v1566 = vadd.f32 %v1564, %v1565
    %v1567 = vrot.slane %v1566, 1
    %v1568 = vadd.f32 %v1566, %v1567
    %v1569 = vsel %vm1560, %v1551, 0.0
    %v1570 = vadd.f32 %v1548, %v1569
    %v1571 = vrot.slane %v1570, 4
    %v1572 = vadd.f32 %v1570, %v1571
    %v1573 = vrot.slane %v1572, 2
    %v1574 = vadd.f32 %v1572, %v1573
    %v1575 = vrot.slane %v1574, 1
    %v1576 = vadd.f32 %v1574, %v1575
    %v1577 = vsel %vm315, %v1549, 0.0
    %v1578 = vsel %vm1558, %v1552, 0.0
    %v1579 = vadd.f32 %v1577, %v1578
    %v1580 = vrot.slane %v1579, 4
    %v1581 = vadd.f32 %v1579, %v1580
    %v1582 = vrot.slane %v1581, 2
    %v1583 = vadd.f32 %v1581, %v1582
    %v1584 = vrot.slane %v1583, 1
    %v1585 = vadd.f32 %v1583, %v1584
    %v1586 = vadd.f32 %v1568, 0.0
    %v1587 = vadd.f32 %v1576, 0.0
    %v1588 = vadd.f32 %v1585, 0.0
    %v1589 = vmul.f32 %v1547, %v1547
    %v1590 = vmul.f32 %v1548, %v1548
    %v1591 = vmul.f32 %v1549, %v1549
    %v1592 = vmul.f32 %v1550, %v1550
    %v1593 = vmul.f32 %v1551, %v1551
    %v1594 = vmul.f32 %v1552, %v1552
    %v1595 = vsel %vm1560, %v1592, 0.0
    %v1596 = vadd.f32 %v1589, %v1595
    %v1597 = vrot.slane %v1596, 4
    %v1598 = vadd.f32 %v1596, %v1597
    %v1599 = vrot.slane %v1598, 2
    %v1600 = vadd.f32 %v1598, %v1599
    %v1601 = vrot.slane %v1600, 1
    %v1602 = vadd.f32 %v1600, %v1601
    %v1603 = vsel %vm1560, %v1593, 0.0
    %v1604 = vadd.f32 %v1590, %v1603
    %v1605 = vrot.slane %v1604, 4
    %v1606 = vadd.f32 %v1604, %v1605
    %v1607 = vrot.slane %v1606, 2
    %v1608 = vadd.f32 %v1606, %v1607
    %v1609 = vrot.slane %v1608, 1
    %v1610 = vadd.f32 %v1608, %v1609
    %v1611 = vsel %vm315, %v1591, 0.0
    %v1612 = vsel %vm1558, %v1594, 0.0
    %v1613 = vadd.f32 %v1611, %v1612
    %v1614 = vrot.slane %v1613, 4
    %v1615 = vadd.f32 %v1613, %v1614
    %v1616 = vrot.slane %v1615, 2
    %v1617 = vadd.f32 %v1615, %v1616
    %v1618 = vrot.slane %v1617, 1
    %v1619 = vadd.f32 %v1617, %v1618
    %v1620 = vadd.f32 %v1602, 0.0
    %v1621 = vadd.f32 %v1610, 0.0
    %v1622 = vadd.f32 %v1619, 0.0
    %v1623 = vld [vmem:[%s650] sm:$0xff]
    %v1624 = vld [vmem:[%s650 + $0x8] sm:$0xff]
    %v1625 = vld [vmem:[%s650 + $0x10] sm:$0x3]
    %v1626 = vld [vmem:[%s650 + $0x18] sm:$0x3]
    %v1627 = vpack.c.bf16 %v1625, %v1623
    %v1628 = vpack.c.bf16 %v1626, %v1624
    %v1629 = vld [vmem:[%s1] sm:$0xff]
    %v1630 = vld [vmem:[%s1 + $0x8] sm:$0xf]
    %v1631 = vld [vmem:[%s1 + $0xc] sm:$0xff]
    %v1632 = vld [vmem:[%s1 + $0x14] sm:$0xf]
    %v1633 = vld [vmem:[%s1 + $0x18] sm:$0xff]
    %v1634 = vld [vmem:[%s1 + $0x20] sm:$0xf]
    %v1635 = vld [vmem:[%s1 + $0x24] sm:$0xff]
    %v1636 = vld [vmem:[%s1 + $0x2c] sm:$0xf]
    %v1637 = vld [vmem:[%s1 + $0x30] sm:$0xff]
    %v1638 = vld [vmem:[%s1 + $0x38] sm:$0xf]
    %v1639 = vld [vmem:[%s1 + $0x3c] sm:$0xff]
    %v1640 = vld [vmem:[%s1 + $0x44] sm:$0xf]
    %v1641 = vld [vmem:[%s1 + $0x48] sm:$0xff]
    %v1642 = vld [vmem:[%s1 + $0x50] sm:$0xf]
    %v1643 = vld [vmem:[%s1 + $0x54] sm:$0xff]
    %v1644 = vld [vmem:[%s1 + $0x5c] sm:$0xf]
    %v1645 = vld [vmem:[%s1 + $0x60] sm:$0xff]
    %v1646 = vld [vmem:[%s1 + $0x68] sm:$0xf]
    %v1647 = vld [vmem:[%s1 + $0x6c] sm:$0xff]
    %v1648 = vld [vmem:[%s1 + $0x74] sm:$0xf]
    %v1649 = vld [vmem:[%s1 + $0x78] sm:$0xff]
    %v1650 = vld [vmem:[%s1 + $0x80] sm:$0xf]
    %v1651 = vld [vmem:[%s1 + $0x84] sm:$0xff]
    %v1652 = vld [vmem:[%s1 + $0x8c] sm:$0xf]
    %v1653 = vld [vmem:[%s1 + $0x90] sm:$0xff]
    %v1654 = vld [vmem:[%s1 + $0x98] sm:$0xf]
    %v1655 = vld [vmem:[%s1 + $0x9c] sm:$0xff]
    %v1656 = vld [vmem:[%s1 + $0xa4] sm:$0xf]
    %v1657 = vld [vmem:[%s1 + $0xa8] sm:$0xff]
    %v1658 = vld [vmem:[%s1 + $0xb0] sm:$0xf]
    %v1659 = vld [vmem:[%s1 + $0xb4] sm:$0xff]
    %v1660 = vld [vmem:[%s1 + $0xbc] sm:$0xf]
    %v1661 = vld [vmem:[%s1 + $0xc0] sm:$0xff]
    %v1662 = vld [vmem:[%s1 + $0xc8] sm:$0xf]
    %v1663 = vld [vmem:[%s1 + $0xcc] sm:$0xff]
    %v1664 = vld [vmem:[%s1 + $0xd4] sm:$0xf]
    %v1665 = vld [vmem:[%s1 + $0xd8] sm:$0xff]
    %v1666 = vld [vmem:[%s1 + $0xe0] sm:$0xf]
    %v1667 = vld [vmem:[%s1 + $0xe4] sm:$0xff]
    %v1668 = vld [vmem:[%s1 + $0xec] sm:$0xf]
    %v1669 = vld [vmem:[%s951] sm:$0xff]
    %v1670 = vld [vmem:[%s951 + $0x8] sm:$0xff]
    %v1671 = vld [vmem:[%s951 + $0x10] sm:$0x3]
    %v1672 = vld [vmem:[%s951 + $0x18] sm:$0x3]
    %v1673 = vpack.c.bf16 %v1671, %v1669
    %v1674 = vpack.c.bf16 %v1672, %v1670
    %v1675 = vld [vmem:[%s114] sm:$0xff]
    %v1676 = vld [vmem:[%s114 + $0x8] sm:$0xf]
    %v1677 = vld [vmem:[%s114 + $0xc] sm:$0xff]
    %v1678 = vld [vmem:[%s114 + $0x14] sm:$0xf]
    %v1679 = vld [vmem:[%s114 + $0x18] sm:$0xff]
    %v1680 = vld [vmem:[%s114 + $0x20] sm:$0xf]
    %v1681 = vld [vmem:[%s114 + $0x24] sm:$0xff]
    %v1682 = vld [vmem:[%s114 + $0x2c] sm:$0xf]
    %v1683 = vld [vmem:[%s114 + $0x30] sm:$0xff]
    %v1684 = vld [vmem:[%s114 + $0x38] sm:$0xf]
    %v1685 = vld [vmem:[%s114 + $0x3c] sm:$0xff]
    %v1686 = vld [vmem:[%s114 + $0x44] sm:$0xf]
    %v1687 = vld [vmem:[%s114 + $0x48] sm:$0xff]
    %v1688 = vld [vmem:[%s114 + $0x50] sm:$0xf]
    %v1689 = vld [vmem:[%s114 + $0x54] sm:$0xff]
    %v1690 = vld [vmem:[%s114 + $0x5c] sm:$0xf]
    %v1691 = vld [vmem:[%s114 + $0x60] sm:$0xff]
    %v1692 = vld [vmem:[%s114 + $0x68] sm:$0xf]
    %v1693 = vld [vmem:[%s114 + $0x6c] sm:$0xff]
    %v1694 = vld [vmem:[%s114 + $0x74] sm:$0xf]
    %v1695 = vld [vmem:[%s114 + $0x78] sm:$0xff]
    %v1696 = vld [vmem:[%s114 + $0x80] sm:$0xf]
    %v1697 = vld [vmem:[%s114 + $0x84] sm:$0xff]
    %v1698 = vld [vmem:[%s114 + $0x8c] sm:$0xf]
    %v1699 = vld [vmem:[%s114 + $0x90] sm:$0xff]
    %v1700 = vld [vmem:[%s114 + $0x98] sm:$0xf]
    %v1701 = vld [vmem:[%s114 + $0x9c] sm:$0xff]
    %v1702 = vld [vmem:[%s114 + $0xa4] sm:$0xf]
    %v1703 = vld [vmem:[%s114 + $0xa8] sm:$0xff]
    %v1704 = vld [vmem:[%s114 + $0xb0] sm:$0xf]
    %v1705 = vld [vmem:[%s114 + $0xb4] sm:$0xff]
    %v1706 = vld [vmem:[%s114 + $0xbc] sm:$0xf]
    %v1707 = vld [vmem:[%s114 + $0xc0] sm:$0xff]
    %v1708 = vld [vmem:[%s114 + $0xc8] sm:$0xf]
    %v1709 = vld [vmem:[%s114 + $0xcc] sm:$0xff]
    %v1710 = vld [vmem:[%s114 + $0xd4] sm:$0xf]
    %v1711 = vld [vmem:[%s114 + $0xd8] sm:$0xff]
    %v1712 = vld [vmem:[%s114 + $0xe0] sm:$0xf]
    %v1713 = vld [vmem:[%s114 + $0xe4] sm:$0xff]
    %v1714 = vld [vmem:[%s114 + $0xec] sm:$0xf]
    %v1755 = vunpack.c.l.b16 %v1675
    %v1756 = vunpack.c.h.b16 %v1675
    %v1757 = vunpack.c.l.b16 %v1676
    %v1758 = vunpack.c.l.b16 %v1677
    %v1759 = vunpack.c.h.b16 %v1677
    %v1760 = vunpack.c.l.b16 %v1678
    %v1761 = vunpack.c.l.b16 %v1679
    %v1762 = vunpack.c.h.b16 %v1679
    %v1763 = vunpack.c.l.b16 %v1680
    %v1764 = vunpack.c.l.b16 %v1681
    %v1765 = vunpack.c.h.b16 %v1681
    %v1766 = vunpack.c.l.b16 %v1682
    %v1767 = vunpack.c.l.b16 %v1683
    %v1768 = vunpack.c.h.b16 %v1683
    %v1769 = vunpack.c.l.b16 %v1684
    %v1770 = vunpack.c.l.b16 %v1685
    %v1771 = vunpack.c.h.b16 %v1685
    %v1772 = vunpack.c.l.b16 %v1686
    %v1773 = vunpack.c.l.b16 %v1687
    %v1774 = vunpack.c.h.b16 %v1687
    %v1775 = vunpack.c.l.b16 %v1688
    %v1776 = vunpack.c.l.b16 %v1689
    %v1777 = vunpack.c.h.b16 %v1689
    %v1778 = vunpack.c.l.b16 %v1690
    %v1779 = vunpack.c.l.b16 %v1691
    %v1780 = vunpack.c.h.b16 %v1691
    %v1781 = vunpack.c.l.b16 %v1692
    %v1782 = vunpack.c.l.b16 %v1693
    %v1783 = vunpack.c.h.b16 %v1693
    %v1784 = vunpack.c.l.b16 %v1694
    %v1785 = vunpack.c.l.b16 %v1695
    %v1786 = vunpack.c.h.b16 %v1695
    %v1787 = vunpack.c.l.b16 %v1696
    %v1788 = vunpack.c.l.b16 %v1697
    %v1789 = vunpack.c.h.b16 %v1697
    %v1790 = vunpack.c.l.b16 %v1698
    %v1791 = vunpack.c.l.b16 %v1699
    %v1792 = vunpack.c.h.b16 %v1699
    %v1793 = vunpack.c.l.b16 %v1700
    %v1794 = vunpack.c.l.b16 %v1701
    %v1795 = vunpack.c.h.b16 %v1701
    %v1796 = vunpack.c.l.b16 %v1702
    %v1797 = vunpack.c.l.b16 %v1703
    %v1798 = vunpack.c.h.b16 %v1703
    %v1799 = vunpack.c.l.b16 %v1704
    %v1800 = vunpack.c.l.b16 %v1705
    %v1801 = vunpack.c.h.b16 %v1705
    %v1802 = vunpack.c.l.b16 %v1706
    %v1803 = vunpack.c.l.b16 %v1707
    %v1804 = vunpack.c.h.b16 %v1707
    %v1805 = vunpack.c.l.b16 %v1708
    %v1806 = vunpack.c.l.b16 %v1709
    %v1807 = vunpack.c.h.b16 %v1709
    %v1808 = vunpack.c.l.b16 %v1710
    %v1809 = vunpack.c.l.b16 %v1711
    %v1810 = vunpack.c.h.b16 %v1711
    %v1811 = vunpack.c.l.b16 %v1712
    %v1812 = vunpack.c.l.b16 %v1713
    %v1813 = vunpack.c.h.b16 %v1713
    %v1814 = vunpack.c.l.b16 %v1714
    %v1815 = vpack.c.b16 %v1758, %v1755
    %v1816 = vpack.c.b16 %v1759, %v1756
    %v1817 = vpack.c.b16 %v1760, %v1757
    %v1818 = vpack.c.b16 %v1764, %v1761
    %v1819 = vpack.c.b16 %v1765, %v1762
    %v1820 = vpack.c.b16 %v1766, %v1763
    %v1821 = vpack.c.b16 %v1770, %v1767
    %v1822 = vpack.c.b16 %v1771, %v1768
    %v1823 = vpack.c.b16 %v1772, %v1769
    %v1824 = vpack.c.b16 %v1776, %v1773
    %v1825 = vpack.c.b16 %v1777, %v1774
    %v1826 = vpack.c.b16 %v1778, %v1775
    %v1827 = vpack.c.b16 %v1782, %v1779
    %v1828 = vpack.c.b16 %v1783, %v1780
    %v1829 = vpack.c.b16 %v1784, %v1781
    %v1830 = vpack.c.b16 %v1788, %v1785
    %v1831 = vpack.c.b16 %v1789, %v1786
    %v1832 = vpack.c.b16 %v1790, %v1787
    %v1833 = vpack.c.b16 %v1794, %v1791
    %v1834 = vpack.c.b16 %v1795, %v1792
    %v1835 = vpack.c.b16 %v1796, %v1793
    %v1836 = vpack.c.b16 %v1800, %v1797
    %v1837 = vpack.c.b16 %v1801, %v1798
    %v1838 = vpack.c.b16 %v1802, %v1799
    %v1839 = vpack.c.b16 %v1806, %v1803
    %v1840 = vpack.c.b16 %v1807, %v1804
    %v1841 = vpack.c.b16 %v1808, %v1805
    %v1842 = vpack.c.b16 %v1812, %v1809
    %v1843 = vpack.c.b16 %v1813, %v1810
    %v1844 = vpack.c.b16 %v1814, %v1811
    %v1876 = vsel %vm315, %v1674, 0
    %1878 = vmatprep.subr.bf16.mxu0 %v1816
    %1879 = vmatpush1.bf16.msra.mxu0 %v1815
    %1880 = vmatprep.subr.bf16.mxu0 %v1819
    %1881 = vmatpush1.bf16.msra.mxu0 %v1818
    %1882 = vmatprep.subr.bf16.mxu0 %v1822
    %1883 = vmatpush1.bf16.msra.mxu0 %v1821
    %1884 = vmatprep.subr.bf16.mxu0 %v1825
    %1885 = vmatpush1.bf16.msra.mxu0 %v1824
    %1886 = vmatprep.subr.bf16.mxu0 %v1828
    %1887 = vmatpush1.bf16.msra.mxu0 %v1827
    %1888 = vmatprep.subr.bf16.mxu0 %v1831
    %1889 = vmatpush1.bf16.msra.mxu0 %v1830
    %1890 = vmatprep.subr.bf16.mxu0 %v1834
    %1891 = vmatpush1.bf16.msra.mxu0 %v1833
    %1892 = vmatprep.subr.bf16.mxu0 %v1837
    %1893 = vmatpush1.bf16.msra.mxu0 %v1836
    %1894 = vmatprep.subr.bf16.mxu0 %v1840
    %1895 = vmatpush1.bf16.msra.mxu0 %v1839
    %1896 = vmatprep.subr.bf16.mxu0 %v1843
    %1897 = vmatpush1.bf16.msra.mxu0 %v1842
    %1898 = vmatprep.subr.bf16.mxu0 0
    %1899 = vmatpush1.bf16.msra.mxu0 0
    %1900 = vmatprep.subr.bf16.mxu0 0
    %1901 = vmatpush1.bf16.msra.mxu0 0
    %1902 = vmatprep.subr.bf16.mxu0 0
    %1903 = vmatpush1.bf16.msra.mxu0 0
    %1904 = vmatprep.subr.bf16.mxu0 0
    %1905 = vmatpush1.bf16.msra.mxu0 0
    %1906 = vmatprep.subr.bf16.mxu0 0
    %1907 = vmatpush1.bf16.msra.mxu0 0
    %1908 = vmatprep.subr.bf16.mxu0 0
    %1909 = vmatpush1.bf16.msra.mxu0 0
    %1910 = vmatprep.mubr.bf16.mxu0 %v1876
    %1911 = vmatmul.mubr.bf16.gmra.mrb[0].mxu0 %v1673
    %v1912 = vpop.f32.mrb[0].mxu0
    %v1913 = vadd.f32 0.0, %v1912
    %v1914 = vpop.f32.mrb[0].mxu0
    %v1915 = vadd.f32 0.0, %v1914
    %v1916 = vpop.f32.mrb[0].mxu0
    %v1917 = vadd.f32 0.0, %v1916
    %v1918 = vpop.f32.mrb[0].mxu0
    %v1919 = vadd.f32 0.0, %v1918
    %1920 = vdwg.mxu0
    %1921 = vmatprep.subr.bf16.mxu0 0
    %1922 = vmatpush1.bf16.msra.mxu0 %v1817
    %1923 = vmatprep.subr.bf16.mxu0 0
    %1924 = vmatpush1.bf16.msra.mxu0 %v1820
    %1925 = vmatprep.subr.bf16.mxu0 0
    %1926 = vmatpush1.bf16.msra.mxu0 %v1823
    %1927 = vmatprep.subr.bf16.mxu0 0
    %1928 = vmatpush1.bf16.msra.mxu0 %v1826
    %1929 = vmatprep.subr.bf16.mxu0 0
    %1930 = vmatpush1.bf16.msra.mxu0 %v1829
    %1931 = vmatprep.subr.bf16.mxu0 0
    %1932 = vmatpush1.bf16.msra.mxu0 %v1832
    %1933 = vmatprep.subr.bf16.mxu0 0
    %1934 = vmatpush1.bf16.msra.mxu0 %v1835
    %1935 = vmatprep.subr.bf16.mxu0 0
    %1936 = vmatpush1.bf16.msra.mxu0 %v1838
    %1937 = vmatprep.subr.bf16.mxu0 0
    %1938 = vmatpush1.bf16.msra.mxu0 %v1841
    %1939 = vmatprep.subr.bf16.mxu0 0
    %1940 = vmatpush1.bf16.msra.mxu0 %v1844
    %1941 = vmatprep.subr.bf16.mxu0 0
    %1942 = vmatpush1.bf16.msra.mxu0 0
    %1943 = vmatprep.subr.bf16.mxu0 0
    %1944 = vmatpush1.bf16.msra.mxu0 0
    %1945 = vmatprep.subr.bf16.mxu0 0
    %1946 = vmatpush1.bf16.msra.mxu0 0
    %1947 = vmatprep.subr.bf16.mxu0 0
    %1948 = vmatpush1.bf16.msra.mxu0 0
    %1949 = vmatprep.subr.bf16.mxu0 0
    %1950 = vmatpush1.bf16.msra.mxu0 0
    %1951 = vmatprep.subr.bf16.mxu0 0
    %1952 = vmatpush1.bf16.msra.mxu0 0
    %1953 = vmatprep.mubr.bf16.mxu0 %v1876
    %1954 = vmatmul.mubr.bf16.gmra.mrb[0].mxu0 %v1673
    %v1955 = vpop.f32.mrb[0].mxu0
    %v1956 = vadd.f32 0.0, %v1955
    %v1957 = vpop.f32.mrb[0].mxu0
    %v1958 = vpop.f32.mrb[0].mxu0
    %v1959 = vadd.f32 0.0, %v1958
    %v1960 = vpop.f32.mrb[0].mxu0
    %1961 = vdwg.mxu0
    %v2002 = vunpack.c.l.b16 %v1629
    %v2003 = vunpack.c.h.b16 %v1629
    %v2004 = vunpack.c.l.b16 %v1630
    %v2005 = vunpack.c.l.b16 %v1631
    %v2006 = vunpack.c.h.b16 %v1631
    %v2007 = vunpack.c.l.b16 %v1632
    %v2008 = vunpack.c.l.b16 %v1633
    %v2009 = vunpack.c.h.b16 %v1633
    %v2010 = vunpack.c.l.b16 %v1634
    %v2011 = vunpack.c.l.b16 %v1635
    %v2012 = vunpack.c.h.b16 %v1635
    %v2013 = vunpack.c.l.b16 %v1636
    %v2014 = vunpack.c.l.b16 %v1637
    %v2015 = vunpack.c.h.b16 %v1637
    %v2016 = vunpack.c.l.b16 %v1638
    %v2017 = vunpack.c.l.b16 %v1639
    %v2018 = vunpack.c.h.b16 %v1639
    %v2019 = vunpack.c.l.b16 %v1640
    %v2020 = vunpack.c.l.b16 %v1641
    %v2021 = vunpack.c.h.b16 %v1641
    %v2022 = vunpack.c.l.b16 %v1642
    %v2023 = vunpack.c.l.b16 %v1643
    %v2024 = vunpack.c.h.b16 %v1643
    %v2025 = vunpack.c.l.b16 %v1644
    %v2026 = vunpack.c.l.b16 %v1645
    %v2027 = vunpack.c.h.b16 %v1645
    %v2028 = vunpack.c.l.b16 %v1646
    %v2029 = vunpack.c.l.b16 %v1647
    %v2030 = vunpack.c.h.b16 %v1647
    %v2031 = vunpack.c.l.b16 %v1648
    %v2032 = vunpack.c.l.b16 %v1649
    %v2033 = vunpack.c.h.b16 %v1649
    %v2034 = vunpack.c.l.b16 %v1650
    %v2035 = vunpack.c.l.b16 %v1651
    %v2036 = vunpack.c.h.b16 %v1651
    %v2037 = vunpack.c.l.b16 %v1652
    %v2038 = vunpack.c.l.b16 %v1653
    %v2039 = vunpack.c.h.b16 %v1653
    %v2040 = vunpack.c.l.b16 %v1654
    %v2041 = vunpack.c.l.b16 %v1655
    %v2042 = vunpack.c.h.b16 %v1655
    %v2043 = vunpack.c.l.b16 %v1656
    %v2044 = vunpack.c.l.b16 %v1657
    %v2045 = vunpack.c.h.b16 %v1657
    %v2046 = vunpack.c.l.b16 %v1658
    %v2047 = vunpack.c.l.b16 %v1659
    %v2048 = vunpack.c.h.b16 %v1659
    %v2049 = vunpack.c.l.b16 %v1660
    %v2050 = vunpack.c.l.b16 %v1661
    %v2051 = vunpack.c.h.b16 %v1661
    %v2052 = vunpack.c.l.b16 %v1662
    %v2053 = vunpack.c.l.b16 %v1663
    %v2054 = vunpack.c.h.b16 %v1663
    %v2055 = vunpack.c.l.b16 %v1664
    %v2056 = vunpack.c.l.b16 %v1665
    %v2057 = vunpack.c.h.b16 %v1665
    %v2058 = vunpack.c.l.b16 %v1666
    %v2059 = vunpack.c.l.b16 %v1667
    %v2060 = vunpack.c.h.b16 %v1667
    %v2061 = vunpack.c.l.b16 %v1668
    %v2062 = vpack.c.b16 %v2005, %v2002
    %v2063 = vpack.c.b16 %v2006, %v2003
    %v2064 = vpack.c.b16 %v2007, %v2004
    %v2065 = vpack.c.b16 %v2011, %v2008
    %v2066 = vpack.c.b16 %v2012, %v2009
    %v2067 = vpack.c.b16 %v2013, %v2010
    %v2068 = vpack.c.b16 %v2017, %v2014
    %v2069 = vpack.c.b16 %v2018, %v2015
    %v2070 = vpack.c.b16 %v2019, %v2016
    %v2071 = vpack.c.b16 %v2023, %v2020
    %v2072 = vpack.c.b16 %v2024, %v2021
    %v2073 = vpack.c.b16 %v2025, %v2022
    %v2074 = vpack.c.b16 %v2029, %v2026
    %v2075 = vpack.c.b16 %v2030, %v2027
    %v2076 = vpack.c.b16 %v2031, %v2028
    %v2077 = vpack.c.b16 %v2035, %v2032
    %v2078 = vpack.c.b16 %v2036, %v2033
    %v2079 = vpack.c.b16 %v2037, %v2034
    %v2080 = vpack.c.b16 %v2041, %v2038
    %v2081 = vpack.c.b16 %v2042, %v2039
    %v2082 = vpack.c.b16 %v2043, %v2040
    %v2083 = vpack.c.b16 %v2047, %v2044
    %v2084 = vpack.c.b16 %v2048, %v2045
    %v2085 = vpack.c.b16 %v2049, %v2046
    %v2086 = vpack.c.b16 %v2053, %v2050
    %v2087 = vpack.c.b16 %v2054, %v2051
    %v2088 = vpack.c.b16 %v2055, %v2052
    %v2089 = vpack.c.b16 %v2059, %v2056
    %v2090 = vpack.c.b16 %v2060, %v2057
    %v2091 = vpack.c.b16 %v2061, %v2058
    %v2123 = vsel %vm315, %v1628, 0
    %2125 = vmatprep.subr.bf16.mxu0 %v2063
    %2126 = vmatpush1.bf16.msra.mxu0 %v2062
    %2127 = vmatprep.subr.bf16.mxu0 %v2066
    %2128 = vmatpush1.bf16.msra.mxu0 %v2065
    %2129 = vmatprep.subr.bf16.mxu0 %v2069
    %2130 = vmatpush1.bf16.msra.mxu0 %v2068
    %2131 = vmatprep.subr.bf16.mxu0 %v2072
    %2132 = vmatpush1.bf16.msra.mxu0 %v2071
    %2133 = vmatprep.subr.bf16.mxu0 %v2075
    %2134 = vmatpush1.bf16.msra.mxu0 %v2074
    %2135 = vmatprep.subr.bf16.mxu0 %v2078
    %2136 = vmatpush1.bf16.msra.mxu0 %v2077
    %2137 = vmatprep.subr.bf16.mxu0 %v2081
    %2138 = vmatpush1.bf16.msra.mxu0 %v2080
    %2139 = vmatprep.subr.bf16.mxu0 %v2084
    %2140 = vmatpush1.bf16.msra.mxu0 %v2083
    %2141 = vmatprep.subr.bf16.mxu0 %v2087
    %2142 = vmatpush1.bf16.msra.mxu0 %v2086
    %2143 = vmatprep.subr.bf16.mxu0 %v2090
    %2144 = vmatpush1.bf16.msra.mxu0 %v2089
    %2145 = vmatprep.subr.bf16.mxu0 0
    %2146 = vmatpush1.bf16.msra.mxu0 0
    %2147 = vmatprep.subr.bf16.mxu0 0
    %2148 = vmatpush1.bf16.msra.mxu0 0
    %2149 = vmatprep.subr.bf16.mxu0 0
    %2150 = vmatpush1.bf16.msra.mxu0 0
    %2151 = vmatprep.subr.bf16.mxu0 0
    %2152 = vmatpush1.bf16.msra.mxu0 0
    %2153 = vmatprep.subr.bf16.mxu0 0
    %2154 = vmatpush1.bf16.msra.mxu0 0
    %2155 = vmatprep.subr.bf16.mxu0 0
    %2156 = vmatpush1.bf16.msra.mxu0 0
    %2157 = vmatprep.mubr.bf16.mxu0 %v2123
    %2158 = vmatmul.mubr.bf16.gmra.mrb[0].mxu0 %v1627
    %v2159 = vpop.f32.mrb[0].mxu0
    %v2160 = vadd.f32 %v1913, %v2159
    %v2161 = vpop.f32.mrb[0].mxu0
    %v2162 = vadd.f32 %v1915, %v2161
    %v2163 = vpop.f32.mrb[0].mxu0
    %v2164 = vadd.f32 %v1917, %v2163
    %v2165 = vpop.f32.mrb[0].mxu0
    %v2166 = vadd.f32 %v1919, %v2165
    %2167 = vdwg.mxu0
    %2168 = vmatprep.subr.bf16.mxu0 0
    %2169 = vmatpush1.bf16.msra.mxu0 %v2064
    %2170 = vmatprep.subr.bf16.mxu0 0
    %2171 = vmatpush1.bf16.msra.mxu0 %v2067
    %2172 = vmatprep.subr.bf16.mxu0 0
    %2173 = vmatpush1.bf16.msra.mxu0 %v2070
    %2174 = vmatprep.subr.bf16.mxu0 0
    %2175 = vmatpush1.bf16.msra.mxu0 %v2073
    %2176 = vmatprep.subr.bf16.mxu0 0
    %2177 = vmatpush1.bf16.msra.mxu0 %v2076
    %2178 = vmatprep.subr.bf16.mxu0 0
    %2179 = vmatpush1.bf16.msra.mxu0 %v2079
    %2180 = vmatprep.subr.bf16.mxu0 0
    %2181 = vmatpush1.bf16.msra.mxu0 %v2082
    %2182 = vmatprep.subr.bf16.mxu0 0
    %2183 = vmatpush1.bf16.msra.mxu0 %v2085
    %2184 = vmatprep.subr.bf16.mxu0 0
    %2185 = vmatpush1.bf16.msra.mxu0 %v2088
    %2186 = vmatprep.subr.bf16.mxu0 0
    %2187 = vmatpush1.bf16.msra.mxu0 %v2091
    %2188 = vmatprep.subr.bf16.mxu0 0
    %2189 = vmatpush1.bf16.msra.mxu0 0
    %2190 = vmatprep.subr.bf16.mxu0 0
    %2191 = vmatpush1.bf16.msra.mxu0 0
    %2192 = vmatprep.subr.bf16.mxu0 0
    %2193 = vmatpush1.bf16.msra.mxu0 0
    %2194 = vmatprep.subr.bf16.mxu0 0
    %2195 = vmatpush1.bf16.msra.mxu0 0
    %2196 = vmatprep.subr.bf16.mxu0 0
    %2197 = vmatpush1.bf16.msra.mxu0 0
    %2198 = vmatprep.subr.bf16.mxu0 0
    %2199 = vmatpush1.bf16.msra.mxu0 0
    %2200 = vmatprep.mubr.bf16.mxu0 %v2123
    %2201 = vmatmul.mubr.bf16.gmra.mrb[0].mxu0 %v1627
    %v2202 = vpop.f32.mrb[0].mxu0
    %v2203 = vadd.f32 %v1956, %v2202
    %v2204 = vpop.f32.mrb[0].mxu0
    %v2205 = vpop.f32.mrb[0].mxu0
    %v2206 = vadd.f32 %v1959, %v2205
    %v2207 = vpop.f32.mrb[0].mxu0
    %2208 = vdwg.mxu0
    %v2209 = vld [vmem:[%s1252] sm:$0xff]
    %v2210 = vld [vmem:[%s1252 + $0x8] sm:$0xff]
    %v2211 = vld [vmem:[%s1252 + $0x10] sm:$0x3]
    %v2212 = vld [vmem:[%s1252 + $0x18] sm:$0x3]
    %v2213 = vpack.c.bf16 %v2211, %v2209
    %v2214 = vpack.c.bf16 %v2212, %v2210
    %v2215 = vld [vmem:[%s657] sm:$0xff]
    %v2216 = vld [vmem:[%s657 + $0x8] sm:$0xf]
    %v2217 = vld [vmem:[%s657 + $0xc] sm:$0xff]
    %v2218 = vld [vmem:[%s657 + $0x14] sm:$0xf]
    %v2219 = vld [vmem:[%s657 + $0x18] sm:$0xff]
    %v2220 = vld [vmem:[%s657 + $0x20] sm:$0xf]
    %v2221 = vld [vmem:[%s657 + $0x24] sm:$0xff]
    %v2222 = vld [vmem:[%s657 + $0x2c] sm:$0xf]
    %v2223 = vld [vmem:[%s657 + $0x30] sm:$0xff]
    %v2224 = vld [vmem:[%s657 + $0x38] sm:$0xf]
    %v2225 = vld [vmem:[%s657 + $0x3c] sm:$0xff]
    %v2226 = vld [vmem:[%s657 + $0x44] sm:$0xf]
    %v2227 = vld [vmem:[%s657 + $0x48] sm:$0xff]
    %v2228 = vld [vmem:[%s657 + $0x50] sm:$0xf]
    %v2229 = vld [vmem:[%s657 + $0x54] sm:$0xff]
    %v2230 = vld [vmem:[%s657 + $0x5c] sm:$0xf]
    %v2231 = vld [vmem:[%s657 + $0x60] sm:$0xff]
    %v2232 = vld [vmem:[%s657 + $0x68] sm:$0xf]
    %v2233 = vld [vmem:[%s657 + $0x6c] sm:$0xff]
    %v2234 = vld [vmem:[%s657 + $0x74] sm:$0xf]
    %v2235 = vld [vmem:[%s657 + $0x78] sm:$0xff]
    %v2236 = vld [vmem:[%s657 + $0x80] sm:$0xf]
    %v2237 = vld [vmem:[%s657 + $0x84] sm:$0xff]
    %v2238 = vld [vmem:[%s657 + $0x8c] sm:$0xf]
    %v2239 = vld [vmem:[%s657 + $0x90] sm:$0xff]
    %v2240 = vld [vmem:[%s657 + $0x98] sm:$0xf]
    %v2241 = vld [vmem:[%s657 + $0x9c] sm:$0xff]
    %v2242 = vld [vmem:[%s657 + $0xa4] sm:$0xf]
    %v2243 = vld [vmem:[%s657 + $0xa8] sm:$0xff]
    %v2244 = vld [vmem:[%s657 + $0xb0] sm:$0xf]
    %v2245 = vld [vmem:[%s657 + $0xb4] sm:$0xff]
    %v2246 = vld [vmem:[%s657 + $0xbc] sm:$0xf]
    %v2247 = vld [vmem:[%s657 + $0xc0] sm:$0xff]
    %v2248 = vld [vmem:[%s657 + $0xc8] sm:$0xf]
    %v2249 = vld [vmem:[%s657 + $0xcc] sm:$0xff]
    %v2250 = vld [vmem:[%s657 + $0xd4] sm:$0xf]
    %v2251 = vld [vmem:[%s657 + $0xd8] sm:$0xff]
    %v2252 = vld [vmem:[%s657 + $0xe0] sm:$0xf]
    %v2253 = vld [vmem:[%s657 + $0xe4] sm:$0xff]
    %v2254 = vld [vmem:[%s657 + $0xec] sm:$0xf]
    %v2295 = vunpack.c.l.b16 %v2215
    %v2296 = vunpack.c.h.b16 %v2215
    %v2297 = vunpack.c.l.b16 %v2216
    %v2298 = vunpack.c.l.b16 %v2217
    %v2299 = vunpack.c.h.b16 %v2217
    %v2300 = vunpack.c.l.b16 %v2218
    %v2301 = vunpack.c.l.b16 %v2219
    %v2302 = vunpack.c.h.b16 %v2219
    %v2303 = vunpack.c.l.b16 %v2220
    %v2304 = vunpack.c.l.b16 %v2221
    %v2305 = vunpack.c.h.b16 %v2221
    %v2306 = vunpack.c.l.b16 %v2222
    %v2307 = vunpack.c.l.b16 %v2223
    %v2308 = vunpack.c.h.b16 %v2223
    %v2309 = vunpack.c.l.b16 %v2224
    %v2310 = vunpack.c.l.b16 %v2225
    %v2311 = vunpack.c.h.b16 %v2225
    %v2312 = vunpack.c.l.b16 %v2226
    %v2313 = vunpack.c.l.b16 %v2227
    %v2314 = vunpack.c.h.b16 %v2227
    %v2315 = vunpack.c.l.b16 %v2228
    %v2316 = vunpack.c.l.b16 %v2229
    %v2317 = vunpack.c.h.b16 %v2229
    %v2318 = vunpack.c.l.b16 %v2230
    %v2319 = vunpack.c.l.b16 %v2231
    %v2320 = vunpack.c.h.b16 %v2231
    %v2321 = vunpack.c.l.b16 %v2232
    %v2322 = vunpack.c.l.b16 %v2233
    %v2323 = vunpack.c.h.b16 %v2233
    %v2324 = vunpack.c.l.b16 %v2234
    %v2325 = vunpack.c.l.b16 %v2235
    %v2326 = vunpack.c.h.b16 %v2235
    %v2327 = vunpack.c.l.b16 %v2236
    %v2328 = vunpack.c.l.b16 %v2237
    %v2329 = vunpack.c.h.b16 %v2237
    %v2330 = vunpack.c.l.b16 %v2238
    %v2331 = vunpack.c.l.b16 %v2239
    %v2332 = vunpack.c.h.b16 %v2239
    %v2333 = vunpack.c.l.b16 %v2240
    %v2334 = vunpack.c.l.b16 %v2241
    %v2335 = vunpack.c.h.b16 %v2241
    %v2336 = vunpack.c.l.b16 %v2242
    %v2337 = vunpack.c.l.b16 %v2243
    %v2338 = vunpack.c.h.b16 %v2243
    %v2339 = vunpack.c.l.b16 %v2244
    %v2340 = vunpack.c.l.b16 %v2245
    %v2341 = vunpack.c.h.b16 %v2245
    %v2342 = vunpack.c.l.b16 %v2246
    %v2343 = vunpack.c.l.b16 %v2247
    %v2344 = vunpack.c.h.b16 %v2247
    %v2345 = vunpack.c.l.b16 %v2248
    %v2346 = vunpack.c.l.b16 %v2249
    %v2347 = vunpack.c.h.b16 %v2249
    %v2348 = vunpack.c.l.b16 %v2250
    %v2349 = vunpack.c.l.b16 %v2251
    %v2350 = vunpack.c.h.b16 %v2251
    %v2351 = vunpack.c.l.b16 %v2252
    %v2352 = vunpack.c.l.b16 %v2253
    %v2353 = vunpack.c.h.b16 %v2253
    %v2354 = vunpack.c.l.b16 %v2254
    %v2355 = vpack.c.b16 %v2298, %v2295
    %v2356 = vpack.c.b16 %v2299, %v2296
    %v2357 = vpack.c.b16 %v2300, %v2297
    %v2358 = vpack.c.b16 %v2304, %v2301
    %v2359 = vpack.c.b16 %v2305, %v2302
    %v2360 = vpack.c.b16 %v2306, %v2303
    %v2361 = vpack.c.b16 %v2310, %v2307
    %v2362 = vpack.c.b16 %v2311, %v2308
    %v2363 = vpack.c.b16 %v2312, %v2309
    %v2364 = vpack.c.b16 %v2316, %v2313
    %v2365 = vpack.c.b16 %v2317, %v2314
    %v2366 = vpack.c.b16 %v2318, %v2315
    %v2367 = vpack.c.b16 %v2322, %v2319
    %v2368 = vpack.c.b16 %v2323, %v2320
    %v2369 = vpack.c.b16 %v2324, %v2321
    %v2370 = vpack.c.b16 %v2328, %v2325
    %v2371 = vpack.c.b16 %v2329, %v2326
    %v2372 = vpack.c.b16 %v2330, %v2327
    %v2373 = vpack.c.b16 %v2334, %v2331
    %v2374 = vpack.c.b16 %v2335, %v2332
    %v2375 = vpack.c.b16 %v2336, %v2333
    %v2376 = vpack.c.b16 %v2340, %v2337
    %v2377 = vpack.c.b16 %v2341, %v2338
    %v2378 = vpack.c.b16 %v2342, %v2339
    %v2379 = vpack.c.b16 %v2346, %v2343
    %v2380 = vpack.c.b16 %v2347, %v2344
    %v2381 = vpack.c.b16 %v2348, %v2345
    %v2382 = vpack.c.b16 %v2352, %v2349
    %v2383 = vpack.c.b16 %v2353, %v2350
    %v2384 = vpack.c.b16 %v2354, %v2351
    %v2416 = vsel %vm315, %v2214, 0
    %2418 = vmatprep.subr.bf16.mxu0 %v2356
    %2419 = vmatpush1.bf16.msra.mxu0 %v2355
    %2420 = vmatprep.subr.bf16.mxu0 %v2359
    %2421 = vmatpush1.bf16.msra.mxu0 %v2358
    %2422 = vmatprep.subr.bf16.mxu0 %v2362
    %2423 = vmatpush1.bf16.msra.mxu0 %v2361
    %2424 = vmatprep.subr.bf16.mxu0 %v2365
    %2425 = vmatpush1.bf16.msra.mxu0 %v2364
    %2426 = vmatprep.subr.bf16.mxu0 %v2368
    %2427 = vmatpush1.bf16.msra.mxu0 %v2367
    %2428 = vmatprep.subr.bf16.mxu0 %v2371
    %2429 = vmatpush1.bf16.msra.mxu0 %v2370
    %2430 = vmatprep.subr.bf16.mxu0 %v2374
    %2431 = vmatpush1.bf16.msra.mxu0 %v2373
    %2432 = vmatprep.subr.bf16.mxu0 %v2377
    %2433 = vmatpush1.bf16.msra.mxu0 %v2376
    %2434 = vmatprep.subr.bf16.mxu0 %v2380
    %2435 = vmatpush1.bf16.msra.mxu0 %v2379
    %2436 = vmatprep.subr.bf16.mxu0 %v2383
    %2437 = vmatpush1.bf16.msra.mxu0 %v2382
    %2438 = vmatprep.subr.bf16.mxu0 0
    %2439 = vmatpush1.bf16.msra.mxu0 0
    %2440 = vmatprep.subr.bf16.mxu0 0
    %2441 = vmatpush1.bf16.msra.mxu0 0
    %2442 = vmatprep.subr.bf16.mxu0 0
    %2443 = vmatpush1.bf16.msra.mxu0 0
    %2444 = vmatprep.subr.bf16.mxu0 0
    %2445 = vmatpush1.bf16.msra.mxu0 0
    %2446 = vmatprep.subr.bf16.mxu0 0
    %2447 = vmatpush1.bf16.msra.mxu0 0
    %2448 = vmatprep.subr.bf16.mxu0 0
    %2449 = vmatpush1.bf16.msra.mxu0 0
    %2450 = vmatprep.mubr.bf16.mxu0 %v2416
    %2451 = vmatmul.mubr.bf16.gmra.mrb[0].mxu0 %v2213
    %v2452 = vpop.f32.mrb[0].mxu0
    %v2453 = vadd.f32 0.0, %v2452
    %v2454 = vpop.f32.mrb[0].mxu0
    %v2455 = vadd.f32 0.0, %v2454
    %v2456 = vpop.f32.mrb[0].mxu0
    %v2457 = vadd.f32 0.0, %v2456
    %v2458 = vpop.f32.mrb[0].mxu0
    %v2459 = vadd.f32 0.0, %v2458
    %2460 = vdwg.mxu0
    %2461 = vmatprep.subr.bf16.mxu0 0
    %2462 = vmatpush1.bf16.msra.mxu0 %v2357
    %2463 = vmatprep.subr.bf16.mxu0 0
    %2464 = vmatpush1.bf16.msra.mxu0 %v2360
    %2465 = vmatprep.subr.bf16.mxu0 0
    %2466 = vmatpush1.bf16.msra.mxu0 %v2363
    %2467 = vmatprep.subr.bf16.mxu0 0
    %2468 = vmatpush1.bf16.msra.mxu0 %v2366
    %2469 = vmatprep.subr.bf16.mxu0 0
    %2470 = vmatpush1.bf16.msra.mxu0 %v2369
    %2471 = vmatprep.subr.bf16.mxu0 0
    %2472 = vmatpush1.bf16.msra.mxu0 %v2372
    %2473 = vmatprep.subr.bf16.mxu0 0
    %2474 = vmatpush1.bf16.msra.mxu0 %v2375
    %2475 = vmatprep.subr.bf16.mxu0 0
    %2476 = vmatpush1.bf16.msra.mxu0 %v2378
    %2477 = vmatprep.subr.bf16.mxu0 0
    %2478 = vmatpush1.bf16.msra.mxu0 %v2381
    %2479 = vmatprep.subr.bf16.mxu0 0
    %2480 = vmatpush1.bf16.msra.mxu0 %v2384
    %2481 = vmatprep.subr.bf16.mxu0 0
    %2482 = vmatpush1.bf16.msra.mxu0 0
    %2483 = vmatprep.subr.bf16.mxu0 0
    %2484 = vmatpush1.bf16.msra.mxu0 0
    %2485 = vmatprep.subr.bf16.mxu0 0
    %2486 = vmatpush1.bf16.msra.mxu0 0
    %2487 = vmatprep.subr.bf16.mxu0 0
    %2488 = vmatpush1.bf16.msra.mxu0 0
    %2489 = vmatprep.subr.bf16.mxu0 0
    %2490 = vmatpush1.bf16.msra.mxu0 0
    %2491 = vmatprep.subr.bf16.mxu0 0
    %2492 = vmatpush1.bf16.msra.mxu0 0
    %2493 = vmatprep.mubr.bf16.mxu0 %v2416
    %2494 = vmatmul.mubr.bf16.gmra.mrb[0].mxu0 %v2213
    %v2495 = vpop.f32.mrb[0].mxu0
    %v2496 = vadd.f32 0.0, %v2495
    %v2497 = vpop.f32.mrb[0].mxu0
    %v2498 = vpop.f32.mrb[0].mxu0
    %v2499 = vadd.f32 0.0, %v2498
    %v2500 = vpop.f32.mrb[0].mxu0
    %2501 = vdwg.mxu0
    %v2502 = vadd.f32 %v2160, %v2453
    %v2503 = vadd.f32 %v2162, %v2455
    %v2504 = vadd.f32 %v2203, %v2496
    %v2505 = vadd.f32 %v2164, %v2457
    %v2506 = vadd.f32 %v2166, %v2459
    %v2507 = vadd.f32 %v2206, %v2499
    %s2508 = scalar_lea.vmem %s0, 160
    %v2509 = vld [vmem:[%s2508] sm:$0xff]
    %v2510 = vld [vmem:[%s2508 + $0x8] sm:$0xff]
    %v2511 = vld [vmem:[%s2508 + $0x10] sm:$0x3]
    %v2512 = vld [vmem:[%s2508 + $0x18] sm:$0x3]
    %v2513 = vpack.c.bf16 %v2511, %v2509
    %v2514 = vpack.c.bf16 %v2512, %v2510
    %v2515 = vld [vmem:[%s958] sm:$0xff]
    %v2516 = vld [vmem:[%s958 + $0x8] sm:$0xf]
    %v2517 = vld [vmem:[%s958 + $0xc] sm:$0xff]
    %v2518 = vld [vmem:[%s958 + $0x14] sm:$0xf]
    %v2519 = vld [vmem:[%s958 + $0x18] sm:$0xff]
    %v2520 = vld [vmem:[%s958 + $0x20] sm:$0xf]
    %v2521 = vld [vmem:[%s958 + $0x24] sm:$0xff]
    %v2522 = vld [vmem:[%s958 + $0x2c] sm:$0xf]
    %v2523 = vld [vmem:[%s958 + $0x30] sm:$0xff]
    %v2524 = vld [vmem:[%s958 + $0x38] sm:$0xf]
    %v2525 = vld [vmem:[%s958 + $0x3c] sm:$0xff]
    %v2526 = vld [vmem:[%s958 + $0x44] sm:$0xf]
    %v2527 = vld [vmem:[%s958 + $0x48] sm:$0xff]
    %v2528 = vld [vmem:[%s958 + $0x50] sm:$0xf]
    %v2529 = vld [vmem:[%s958 + $0x54] sm:$0xff]
    %v2530 = vld [vmem:[%s958 + $0x5c] sm:$0xf]
    %v2531 = vld [vmem:[%s958 + $0x60] sm:$0xff]
    %v2532 = vld [vmem:[%s958 + $0x68] sm:$0xf]
    %v2533 = vld [vmem:[%s958 + $0x6c] sm:$0xff]
    %v2534 = vld [vmem:[%s958 + $0x74] sm:$0xf]
    %v2535 = vld [vmem:[%s958 + $0x78] sm:$0xff]
    %v2536 = vld [vmem:[%s958 + $0x80] sm:$0xf]
    %v2537 = vld [vmem:[%s958 + $0x84] sm:$0xff]
    %v2538 = vld [vmem:[%s958 + $0x8c] sm:$0xf]
    %v2539 = vld [vmem:[%s958 + $0x90] sm:$0xff]
    %v2540 = vld [vmem:[%s958 + $0x98] sm:$0xf]
    %v2541 = vld [vmem:[%s958 + $0x9c] sm:$0xff]
    %v2542 = vld [vmem:[%s958 + $0xa4] sm:$0xf]
    %v2543 = vld [vmem:[%s958 + $0xa8] sm:$0xff]
    %v2544 = vld [vmem:[%s958 + $0xb0] sm:$0xf]
    %v2545 = vld [vmem:[%s958 + $0xb4] sm:$0xff]
    %v2546 = vld [vmem:[%s958 + $0xbc] sm:$0xf]
    %v2547 = vld [vmem:[%s958 + $0xc0] sm:$0xff]
    %v2548 = vld [vmem:[%s958 + $0xc8] sm:$0xf]
    %v2549 = vld [vmem:[%s958 + $0xcc] sm:$0xff]
    %v2550 = vld [vmem:[%s958 + $0xd4] sm:$0xf]
    %v2551 = vld [vmem:[%s958 + $0xd8] sm:$0xff]
    %v2552 = vld [vmem:[%s958 + $0xe0] sm:$0xf]
    %v2553 = vld [vmem:[%s958 + $0xe4] sm:$0xff]
    %v2554 = vld [vmem:[%s958 + $0xec] sm:$0xf]
    %v2595 = vunpack.c.l.b16 %v2515
    %v2596 = vunpack.c.h.b16 %v2515
    %v2597 = vunpack.c.l.b16 %v2516
    %v2598 = vunpack.c.l.b16 %v2517
    %v2599 = vunpack.c.h.b16 %v2517
    %v2600 = vunpack.c.l.b16 %v2518
    %v2601 = vunpack.c.l.b16 %v2519
    %v2602 = vunpack.c.h.b16 %v2519
    %v2603 = vunpack.c.l.b16 %v2520
    %v2604 = vunpack.c.l.b16 %v2521
    %v2605 = vunpack.c.h.b16 %v2521
    %v2606 = vunpack.c.l.b16 %v2522
    %v2607 = vunpack.c.l.b16 %v2523
    %v2608 = vunpack.c.h.b16 %v2523
    %v2609 = vunpack.c.l.b16 %v2524
    %v2610 = vunpack.c.l.b16 %v2525
    %v2611 = vunpack.c.h.b16 %v2525
    %v2612 = vunpack.c.l.b16 %v2526
    %v2613 = vunpack.c.l.b16 %v2527
    %v2614 = vunpack.c.h.b16 %v2527
    %v2615 = vunpack.c.l.b16 %v2528
    %v2616 = vunpack.c.l.b16 %v2529
    %v2617 = vunpack.c.h.b16 %v2529
    %v2618 = vunpack.c.l.b16 %v2530
    %v2619 = vunpack.c.l.b16 %v2531
    %v2620 = vunpack.c.h.b16 %v2531
    %v2621 = vunpack.c.l.b16 %v2532
    %v2622 = vunpack.c.l.b16 %v2533
    %v2623 = vunpack.c.h.b16 %v2533
    %v2624 = vunpack.c.l.b16 %v2534
    %v2625 = vunpack.c.l.b16 %v2535
    %v2626 = vunpack.c.h.b16 %v2535
    %v2627 = vunpack.c.l.b16 %v2536
    %v2628 = vunpack.c.l.b16 %v2537
    %v2629 = vunpack.c.h.b16 %v2537
    %v2630 = vunpack.c.l.b16 %v2538
    %v2631 = vunpack.c.l.b16 %v2539
    %v2632 = vunpack.c.h.b16 %v2539
    %v2633 = vunpack.c.l.b16 %v2540
    %v2634 = vunpack.c.l.b16 %v2541
    %v2635 = vunpack.c.h.b16 %v2541
    %v2636 = vunpack.c.l.b16 %v2542
    %v2637 = vunpack.c.l.b16 %v2543
    %v2638 = vunpack.c.h.b16 %v2543
    %v2639 = vunpack.c.l.b16 %v2544
    %v2640 = vunpack.c.l.b16 %v2545
    %v2641 = vunpack.c.h.b16 %v2545
    %v2642 = vunpack.c.l.b16 %v2546
    %v2643 = vunpack.c.l.b16 %v2547
    %v2644 = vunpack.c.h.b16 %v2547
    %v2645 = vunpack.c.l.b16 %v2548
    %v2646 = vunpack.c.l.b16 %v2549
    %v2647 = vunpack.c.h.b16 %v2549
    %v2648 = vunpack.c.l.b16 %v2550
    %v2649 = vunpack.c.l.b16 %v2551
    %v2650 = vunpack.c.h.b16 %v2551
    %v2651 = vunpack.c.l.b16 %v2552
    %v2652 = vunpack.c.l.b16 %v2553
    %v2653 = vunpack.c.h.b16 %v2553
    %v2654 = vunpack.c.l.b16 %v2554
    %v2655 = vpack.c.b16 %v2598, %v2595
    %v2656 = vpack.c.b16 %v2599, %v2596
    %v2657 = vpack.c.b16 %v2600, %v2597
    %v2658 = vpack.c.b16 %v2604, %v2601
    %v2659 = vpack.c.b16 %v2605, %v2602
    %v2660 = vpack.c.b16 %v2606, %v2603
    %v2661 = vpack.c.b16 %v2610, %v2607
    %v2662 = vpack.c.b16 %v2611, %v2608
    %v2663 = vpack.c.b16 %v2612, %v2609
    %v2664 = vpack.c.b16 %v2616, %v2613
    %v2665 = vpack.c.b16 %v2617, %v2614
    %v2666 = vpack.c.b16 %v2618, %v2615
    %v2667 = vpack.c.b16 %v2622, %v2619
    %v2668 = vpack.c.b16 %v2623, %v2620
    %v2669 = vpack.c.b16 %v2624, %v2621
    %v2670 = vpack.c.b16 %v2628, %v2625
    %v2671 = vpack.c.b16 %v2629, %v2626
    %v2672 = vpack.c.b16 %v2630, %v2627
    %v2673 = vpack.c.b16 %v2634, %v2631
    %v2674 = vpack.c.b16 %v2635, %v2632
    %v2675 = vpack.c.b16 %v2636, %v2633
    %v2676 = vpack.c.b16 %v2640, %v2637
    %v2677 = vpack.c.b16 %v2641, %v2638
    %v2678 = vpack.c.b16 %v2642, %v2639
    %v2679 = vpack.c.b16 %v2646, %v2643
    %v2680 = vpack.c.b16 %v2647, %v2644
    %v2681 = vpack.c.b16 %v2648, %v2645
    %v2682 = vpack.c.b16 %v2652, %v2649
    %v2683 = vpack.c.b16 %v2653, %v2650
    %v2684 = vpack.c.b16 %v2654, %v2651
    %v2716 = vsel %vm315, %v2514, 0
    %2718 = vmatprep.subr.bf16.mxu0 %v2656
    %2719 = vmatpush1.bf16.msra.mxu0 %v2655
    %2720 = vmatprep.subr.bf16.mxu0 %v2659
    %2721 = vmatpush1.bf16.msra.mxu0 %v2658
    %2722 = vmatprep.subr.bf16.mxu0 %v2662
    %2723 = vmatpush1.bf16.msra.mxu0 %v2661
    %2724 = vmatprep.subr.bf16.mxu0 %v2665
    %2725 = vmatpush1.bf16.msra.mxu0 %v2664
    %2726 = vmatprep.subr.bf16.mxu0 %v2668
    %2727 = vmatpush1.bf16.msra.mxu0 %v2667
    %2728 = vmatprep.subr.bf16.mxu0 %v2671
    %2729 = vmatpush1.bf16.msra.mxu0 %v2670
    %2730 = vmatprep.subr.bf16.mxu0 %v2674
    %2731 = vmatpush1.bf16.msra.mxu0 %v2673
    %2732 = vmatprep.subr.bf16.mxu0 %v2677
    %2733 = vmatpush1.bf16.msra.mxu0 %v2676
    %2734 = vmatprep.subr.bf16.mxu0 %v2680
    %2735 = vmatpush1.bf16.msra.mxu0 %v2679
    %2736 = vmatprep.subr.bf16.mxu0 %v2683
    %2737 = vmatpush1.bf16.msra.mxu0 %v2682
    %2738 = vmatprep.subr.bf16.mxu0 0
    %2739 = vmatpush1.bf16.msra.mxu0 0
    %2740 = vmatprep.subr.bf16.mxu0 0
    %2741 = vmatpush1.bf16.msra.mxu0 0
    %2742 = vmatprep.subr.bf16.mxu0 0
    %2743 = vmatpush1.bf16.msra.mxu0 0
    %2744 = vmatprep.subr.bf16.mxu0 0
    %2745 = vmatpush1.bf16.msra.mxu0 0
    %2746 = vmatprep.subr.bf16.mxu0 0
    %2747 = vmatpush1.bf16.msra.mxu0 0
    %2748 = vmatprep.subr.bf16.mxu0 0
    %2749 = vmatpush1.bf16.msra.mxu0 0
    %2750 = vmatprep.mubr.bf16.mxu0 %v2716
    %2751 = vmatmul.mubr.bf16.gmra.mrb[0].mxu0 %v2513
    %v2752 = vpop.f32.mrb[0].mxu0
    %v2753 = vadd.f32 0.0, %v2752
    %v2754 = vpop.f32.mrb[0].mxu0
    %v2755 = vadd.f32 0.0, %v2754
    %v2756 = vpop.f32.mrb[0].mxu0
    %v2757 = vadd.f32 0.0, %v2756
    %v2758 = vpop.f32.mrb[0].mxu0
    %v2759 = vadd.f32 0.0, %v2758
    %2760 = vdwg.mxu0
    %2761 = vmatprep.subr.bf16.mxu0 0
    %2762 = vmatpush1.bf16.msra.mxu0 %v2657
    %2763 = vmatprep.subr.bf16.mxu0 0
    %2764 = vmatpush1.bf16.msra.mxu0 %v2660
    %2765 = vmatprep.subr.bf16.mxu0 0
    %2766 = vmatpush1.bf16.msra.mxu0 %v2663
    %2767 = vmatprep.subr.bf16.mxu0 0
    %2768 = vmatpush1.bf16.msra.mxu0 %v2666
    %2769 = vmatprep.subr.bf16.mxu0 0
    %2770 = vmatpush1.bf16.msra.mxu0 %v2669
    %2771 = vmatprep.subr.bf16.mxu0 0
    %2772 = vmatpush1.bf16.msra.mxu0 %v2672
    %2773 = vmatprep.subr.bf16.mxu0 0
    %2774 = vmatpush1.bf16.msra.mxu0 %v2675
    %2775 = vmatprep.subr.bf16.mxu0 0
    %2776 = vmatpush1.bf16.msra.mxu0 %v2678
    %2777 = vmatprep.subr.bf16.mxu0 0
    %2778 = vmatpush1.bf16.msra.mxu0 %v2681
    %2779 = vmatprep.subr.bf16.mxu0 0
    %2780 = vmatpush1.bf16.msra.mxu0 %v2684
    %2781 = vmatprep.subr.bf16.mxu0 0
    %2782 = vmatpush1.bf16.msra.mxu0 0
    %2783 = vmatprep.subr.bf16.mxu0 0
    %2784 = vmatpush1.bf16.msra.mxu0 0
    %2785 = vmatprep.subr.bf16.mxu0 0
    %2786 = vmatpush1.bf16.msra.mxu0 0
    %2787 = vmatprep.subr.bf16.mxu0 0
    %2788 = vmatpush1.bf16.msra.mxu0 0
    %2789 = vmatprep.subr.bf16.mxu0 0
    %2790 = vmatpush1.bf16.msra.mxu0 0
    %2791 = vmatprep.subr.bf16.mxu0 0
    %2792 = vmatpush1.bf16.msra.mxu0 0
    %2793 = vmatprep.mubr.bf16.mxu0 %v2716
    %2794 = vmatmul.mubr.bf16.gmra.mrb[0].mxu0 %v2513
    %v2795 = vpop.f32.mrb[0].mxu0
    %v2796 = vadd.f32 0.0, %v2795
    %v2797 = vpop.f32.mrb[0].mxu0
    %v2798 = vpop.f32.mrb[0].mxu0
    %v2799 = vadd.f32 0.0, %v2798
    %v2800 = vpop.f32.mrb[0].mxu0
    %2801 = vdwg.mxu0
    %v2802 = vadd.f32 %v2502, %v2753
    %v2803 = vadd.f32 %v2503, %v2755
    %v2804 = vadd.f32 %v2504, %v2796
    %v2805 = vadd.f32 %v2505, %v2757
    %v2806 = vadd.f32 %v2506, %v2759
    %v2807 = vadd.f32 %v2507, %v2799
    %s2808 = scalar_lea.vmem %s0, 192
    %v2809 = vld [vmem:[%s2808] sm:$0xff]
    %v2810 = vld [vmem:[%s2808 + $0x8] sm:$0xff]
    %v2811 = vld [vmem:[%s2808 + $0x10] sm:$0x3]
    %v2812 = vld [vmem:[%s2808 + $0x18] sm:$0x3]
    %v2813 = vpack.c.bf16 %v2811, %v2809
    %v2814 = vpack.c.bf16 %v2812, %v2810
    %v2815 = vld [vmem:[%s1259] sm:$0xff]
    %v2816 = vld [vmem:[%s1259 + $0x8] sm:$0xf]
    %v2817 = vld [vmem:[%s1259 + $0xc] sm:$0xff]
    %v2818 = vld [vmem:[%s1259 + $0x14] sm:$0xf]
    %v2819 = vld [vmem:[%s1259 + $0x18] sm:$0xff]
    %v2820 = vld [vmem:[%s1259 + $0x20] sm:$0xf]
    %v2821 = vld [vmem:[%s1259 + $0x24] sm:$0xff]
    %v2822 = vld [vmem:[%s1259 + $0x2c] sm:$0xf]
    %v2823 = vld [vmem:[%s1259 + $0x30] sm:$0xff]
    %v2824 = vld [vmem:[%s1259 + $0x38] sm:$0xf]
    %v2825 = vld [vmem:[%s1259 + $0x3c] sm:$0xff]
    %v2826 = vld [vmem:[%s1259 + $0x44] sm:$0xf]
    %v2827 = vld [vmem:[%s1259 + $0x48] sm:$0xff]
    %v2828 = vld [vmem:[%s1259 + $0x50] sm:$0xf]
    %v2829 = vld [vmem:[%s1259 + $0x54] sm:$0xff]
    %v2830 = vld [vmem:[%s1259 + $0x5c] sm:$0xf]
    %v2831 = vld [vmem:[%s1259 + $0x60] sm:$0xff]
    %v2832 = vld [vmem:[%s1259 + $0x68] sm:$0xf]
    %v2833 = vld [vmem:[%s1259 + $0x6c] sm:$0xff]
    %v2834 = vld [vmem:[%s1259 + $0x74] sm:$0xf]
    %v2835 = vld [vmem:[%s1259 + $0x78] sm:$0xff]
    %v2836 = vld [vmem:[%s1259 + $0x80] sm:$0xf]
    %v2837 = vld [vmem:[%s1259 + $0x84] sm:$0xff]
    %v2838 = vld [vmem:[%s1259 + $0x8c] sm:$0xf]
    %v2839 = vld [vmem:[%s1259 + $0x90] sm:$0xff]
    %v2840 = vld [vmem:[%s1259 + $0x98] sm:$0xf]
    %v2841 = vld [vmem:[%s1259 + $0x9c] sm:$0xff]
    %v2842 = vld [vmem:[%s1259 + $0xa4] sm:$0xf]
    %v2843 = vld [vmem:[%s1259 + $0xa8] sm:$0xff]
    %v2844 = vld [vmem:[%s1259 + $0xb0] sm:$0xf]
    %v2845 = vld [vmem:[%s1259 + $0xb4] sm:$0xff]
    %v2846 = vld [vmem:[%s1259 + $0xbc] sm:$0xf]
    %v2847 = vld [vmem:[%s1259 + $0xc0] sm:$0xff]
    %v2848 = vld [vmem:[%s1259 + $0xc8] sm:$0xf]
    %v2849 = vld [vmem:[%s1259 + $0xcc] sm:$0xff]
    %v2850 = vld [vmem:[%s1259 + $0xd4] sm:$0xf]
    %v2851 = vld [vmem:[%s1259 + $0xd8] sm:$0xff]
    %v2852 = vld [vmem:[%s1259 + $0xe0] sm:$0xf]
    %v2853 = vld [vmem:[%s1259 + $0xe4] sm:$0xff]
    %v2854 = vld [vmem:[%s1259 + $0xec] sm:$0xf]
    %v2895 = vunpack.c.l.b16 %v2815
    %v2896 = vunpack.c.h.b16 %v2815
    %v2897 = vunpack.c.l.b16 %v2816
    %v2898 = vunpack.c.l.b16 %v2817
    %v2899 = vunpack.c.h.b16 %v2817
    %v2900 = vunpack.c.l.b16 %v2818
    %v2901 = vunpack.c.l.b16 %v2819
    %v2902 = vunpack.c.h.b16 %v2819
    %v2903 = vunpack.c.l.b16 %v2820
    %v2904 = vunpack.c.l.b16 %v2821
    %v2905 = vunpack.c.h.b16 %v2821
    %v2906 = vunpack.c.l.b16 %v2822
    %v2907 = vunpack.c.l.b16 %v2823
    %v2908 = vunpack.c.h.b16 %v2823
    %v2909 = vunpack.c.l.b16 %v2824
    %v2910 = vunpack.c.l.b16 %v2825
    %v2911 = vunpack.c.h.b16 %v2825
    %v2912 = vunpack.c.l.b16 %v2826
    %v2913 = vunpack.c.l.b16 %v2827
    %v2914 = vunpack.c.h.b16 %v2827
    %v2915 = vunpack.c.l.b16 %v2828
    %v2916 = vunpack.c.l.b16 %v2829
    %v2917 = vunpack.c.h.b16 %v2829
    %v2918 = vunpack.c.l.b16 %v2830
    %v2919 = vunpack.c.l.b16 %v2831
    %v2920 = vunpack.c.h.b16 %v2831
    %v2921 = vunpack.c.l.b16 %v2832
    %v2922 = vunpack.c.l.b16 %v2833
    %v2923 = vunpack.c.h.b16 %v2833
    %v2924 = vunpack.c.l.b16 %v2834
    %v2925 = vunpack.c.l.b16 %v2835
    %v2926 = vunpack.c.h.b16 %v2835
    %v2927 = vunpack.c.l.b16 %v2836
    %v2928 = vunpack.c.l.b16 %v2837
    %v2929 = vunpack.c.h.b16 %v2837
    %v2930 = vunpack.c.l.b16 %v2838
    %v2931 = vunpack.c.l.b16 %v2839
    %v2932 = vunpack.c.h.b16 %v2839
    %v2933 = vunpack.c.l.b16 %v2840
    %v2934 = vunpack.c.l.b16 %v2841
    %v2935 = vunpack.c.h.b16 %v2841
    %v2936 = vunpack.c.l.b16 %v2842
    %v2937 = vunpack.c.l.b16 %v2843
    %v2938 = vunpack.c.h.b16 %v2843
    %v2939 = vunpack.c.l.b16 %v2844
    %v2940 = vunpack.c.l.b16 %v2845
    %v2941 = vunpack.c.h.b16 %v2845
    %v2942 = vunpack.c.l.b16 %v2846
    %v2943 = vunpack.c.l.b16 %v2847
    %v2944 = vunpack.c.h.b16 %v2847
    %v2945 = vunpack.c.l.b16 %v2848
    %v2946 = vunpack.c.l.b16 %v2849
    %v2947 = vunpack.c.h.b16 %v2849
    %v2948 = vunpack.c.l.b16 %v2850
    %v2949 = vunpack.c.l.b16 %v2851
    %v2950 = vunpack.c.h.b16 %v2851
    %v2951 = vunpack.c.l.b16 %v2852
    %v2952 = vunpack.c.l.b16 %v2853
    %v2953 = vunpack.c.h.b16 %v2853
    %v2954 = vunpack.c.l.b16 %v2854
    %v2955 = vpack.c.b16 %v2898, %v2895
    %v2956 = vpack.c.b16 %v2899, %v2896
    %v2957 = vpack.c.b16 %v2900, %v2897
    %v2958 = vpack.c.b16 %v2904, %v2901
    %v2959 = vpack.c.b16 %v2905, %v2902
    %v2960 = vpack.c.b16 %v2906, %v2903
    %v2961 = vpack.c.b16 %v2910, %v2907
    %v2962 = vpack.c.b16 %v2911, %v2908
    %v2963 = vpack.c.b16 %v2912, %v2909
    %v2964 = vpack.c.b16 %v2916, %v2913
    %v2965 = vpack.c.b16 %v2917, %v2914
    %v2966 = vpack.c.b16 %v2918, %v2915
    %v2967 = vpack.c.b16 %v2922, %v2919
    %v2968 = vpack.c.b16 %v2923, %v2920
    %v2969 = vpack.c.b16 %v2924, %v2921
    %v2970 = vpack.c.b16 %v2928, %v2925
    %v2971 = vpack.c.b16 %v2929, %v2926
    %v2972 = vpack.c.b16 %v2930, %v2927
    %v2973 = vpack.c.b16 %v2934, %v2931
    %v2974 = vpack.c.b16 %v2935, %v2932
    %v2975 = vpack.c.b16 %v2936, %v2933
    %v2976 = vpack.c.b16 %v2940, %v2937
    %v2977 = vpack.c.b16 %v2941, %v2938
    %v2978 = vpack.c.b16 %v2942, %v2939
    %v2979 = vpack.c.b16 %v2946, %v2943
    %v2980 = vpack.c.b16 %v2947, %v2944
    %v2981 = vpack.c.b16 %v2948, %v2945
    %v2982 = vpack.c.b16 %v2952, %v2949
    %v2983 = vpack.c.b16 %v2953, %v2950
    %v2984 = vpack.c.b16 %v2954, %v2951
    %v3016 = vsel %vm315, %v2814, 0
    %3018 = vmatprep.subr.bf16.mxu0 %v2956
    %3019 = vmatpush1.bf16.msra.mxu0 %v2955
    %3020 = vmatprep.subr.bf16.mxu0 %v2959
    %3021 = vmatpush1.bf16.msra.mxu0 %v2958
    %3022 = vmatprep.subr.bf16.mxu0 %v2962
    %3023 = vmatpush1.bf16.msra.mxu0 %v2961
    %3024 = vmatprep.subr.bf16.mxu0 %v2965
    %3025 = vmatpush1.bf16.msra.mxu0 %v2964
    %3026 = vmatprep.subr.bf16.mxu0 %v2968
    %3027 = vmatpush1.bf16.msra.mxu0 %v2967
    %3028 = vmatprep.subr.bf16.mxu0 %v2971
    %3029 = vmatpush1.bf16.msra.mxu0 %v2970
    %3030 = vmatprep.subr.bf16.mxu0 %v2974
    %3031 = vmatpush1.bf16.msra.mxu0 %v2973
    %3032 = vmatprep.subr.bf16.mxu0 %v2977
    %3033 = vmatpush1.bf16.msra.mxu0 %v2976
    %3034 = vmatprep.subr.bf16.mxu0 %v2980
    %3035 = vmatpush1.bf16.msra.mxu0 %v2979
    %3036 = vmatprep.subr.bf16.mxu0 %v2983
    %3037 = vmatpush1.bf16.msra.mxu0 %v2982
    %3038 = vmatprep.subr.bf16.mxu0 0
    %3039 = vmatpush1.bf16.msra.mxu0 0
    %3040 = vmatprep.subr.bf16.mxu0 0
    %3041 = vmatpush1.bf16.msra.mxu0 0
    %3042 = vmatprep.subr.bf16.mxu0 0
    %3043 = vmatpush1.bf16.msra.mxu0 0
    %3044 = vmatprep.subr.bf16.mxu0 0
    %3045 = vmatpush1.bf16.msra.mxu0 0
    %3046 = vmatprep.subr.bf16.mxu0 0
    %3047 = vmatpush1.bf16.msra.mxu0 0
    %3048 = vmatprep.subr.bf16.mxu0 0
    %3049 = vmatpush1.bf16.msra.mxu0 0
    %3050 = vmatprep.mubr.bf16.mxu0 %v3016
    %3051 = vmatmul.mubr.bf16.gmra.mrb[0].mxu0 %v2813
    %v3052 = vpop.f32.mrb[0].mxu0
    %v3053 = vadd.f32 0.0, %v3052
    %v3054 = vpop.f32.mrb[0].mxu0
    %v3055 = vadd.f32 0.0, %v3054
    %v3056 = vpop.f32.mrb[0].mxu0
    %v3057 = vadd.f32 0.0, %v3056
    %v3058 = vpop.f32.mrb[0].mxu0
    %v3059 = vadd.f32 0.0, %v3058
    %3060 = vdwg.mxu0
    %3061 = vmatprep.subr.bf16.mxu0 0
    %3062 = vmatpush1.bf16.msra.mxu0 %v2957
    %3063 = vmatprep.subr.bf16.mxu0 0
    %3064 = vmatpush1.bf16.msra.mxu0 %v2960
    %3065 = vmatprep.subr.bf16.mxu0 0
    %3066 = vmatpush1.bf16.msra.mxu0 %v2963
    %3067 = vmatprep.subr.bf16.mxu0 0
    %3068 = vmatpush1.bf16.msra.mxu0 %v2966
    %3069 = vmatprep.subr.bf16.mxu0 0
    %3070 = vmatpush1.bf16.msra.mxu0 %v2969
    %3071 = vmatprep.subr.bf16.mxu0 0
    %3072 = vmatpush1.bf16.msra.mxu0 %v2972
    %3073 = vmatprep.subr.bf16.mxu0 0
    %3074 = vmatpush1.bf16.msra.mxu0 %v2975
    %3075 = vmatprep.subr.bf16.mxu0 0
    %3076 = vmatpush1.bf16.msra.mxu0 %v2978
    %3077 = vmatprep.subr.bf16.mxu0 0
    %3078 = vmatpush1.bf16.msra.mxu0 %v2981
    %3079 = vmatprep.subr.bf16.mxu0 0
    %3080 = vmatpush1.bf16.msra.mxu0 %v2984
    %3081 = vmatprep.subr.bf16.mxu0 0
    %3082 = vmatpush1.bf16.msra.mxu0 0
    %3083 = vmatprep.subr.bf16.mxu0 0
    %3084 = vmatpush1.bf16.msra.mxu0 0
    %3085 = vmatprep.subr.bf16.mxu0 0
    %3086 = vmatpush1.bf16.msra.mxu0 0
    %3087 = vmatprep.subr.bf16.mxu0 0
    %3088 = vmatpush1.bf16.msra.mxu0 0
    %3089 = vmatprep.subr.bf16.mxu0 0
    %3090 = vmatpush1.bf16.msra.mxu0 0
    %3091 = vmatprep.subr.bf16.mxu0 0
    %3092 = vmatpush1.bf16.msra.mxu0 0
    %3093 = vmatprep.mubr.bf16.mxu0 %v3016
    %3094 = vmatmul.mubr.bf16.gmra.mrb[0].mxu0 %v2813
    %v3095 = vpop.f32.mrb[0].mxu0
    %v3096 = vadd.f32 0.0, %v3095
    %v3097 = vpop.f32.mrb[0].mxu0
    %v3098 = vpop.f32.mrb[0].mxu0
    %v3099 = vadd.f32 0.0, %v3098
    %v3100 = vpop.f32.mrb[0].mxu0
    %3101 = vdwg.mxu0
    %v3102 = vadd.f32 %v2802, %v3053
    %v3103 = vadd.f32 %v2803, %v3055
    %v3104 = vadd.f32 %v2804, %v3096
    %v3105 = vadd.f32 %v2805, %v3057
    %v3106 = vadd.f32 %v2806, %v3059
    %v3107 = vadd.f32 %v2807, %v3099
    %s3108 = scalar_lea.vmem [#allocation2], 48
    %3109 = vst [vmem:[%s3108] sm:$0xff] %v3102
    %3110 = vst [vmem:[%s3108 + $0x8] sm:$0xff] %v3103
    %3111 = vst.msk [vmem:[%s3108 + $0x10] sm:$0xff] %vm315, %v3104
    %3112 = vst [vmem:[%s3108 + $0x18] sm:$0x3] %v3105
    %3113 = vst [vmem:[%s3108 + $0x20] sm:$0x3] %v3106
    %3114 = vst.msk [vmem:[%s3108 + $0x28] sm:$0x3] %vm1558, %v3107
    %v3115 = vsel %vm1560, %v3105, 0.0
    %v3116 = vadd.f32 %v3102, %v3115
    %v3117 = vrot.slane %v3116, 4
    %v3118 = vadd.f32 %v3116, %v3117
    %v3119 = vrot.slane %v3118, 2
    %v3120 = vadd.f32 %v3118, %v3119
    %v3121 = vrot.slane %v3120, 1
    %v3122 = vadd.f32 %v3120, %v3121
    %v3123 = vsel %vm1560, %v3106, 0.0
    %v3124 = vadd.f32 %v3103, %v3123
    %v3125 = vrot.slane %v3124, 4
    %v3126 = vadd.f32 %v3124, %v3125
    %v3127 = vrot.slane %v3126, 2
    %v3128 = vadd.f32 %v3126, %v3127
    %v3129 = vrot.slane %v3128, 1
    %v3130 = vadd.f32 %v3128, %v3129
    %v3131 = vsel %vm315, %v3104, 0.0
    %v3132 = vsel %vm1558, %v3107, 0.0
    %v3133 = vadd.f32 %v3131, %v3132
    %v3134 = vrot.slane %v3133, 4
    %v3135 = vadd.f32 %v3133, %v3134
    %v3136 = vrot.slane %v3135, 2
    %v3137 = vadd.f32 %v3135, %v3136
    %v3138 = vrot.slane %v3137, 1
    %v3139 = vadd.f32 %v3137, %v3138
    %v3140 = vadd.f32 %v1586, %v3122
    %v3141 = vadd.f32 %v1587, %v3130
    %v3142 = vadd.f32 %v1588, %v3139
    %v3143 = vmul.f32 %v3102, %v3102
    %v3144 = vmul.f32 %v3103, %v3103
    %v3145 = vmul.f32 %v3104, %v3104
    %v3146 = vmul.f32 %v3105, %v3105
    %v3147 = vmul.f32 %v3106, %v3106
    %v3148 = vmul.f32 %v3107, %v3107
    %v3149 = vsel %vm1560, %v3146, 0.0
    %v3150 = vadd.f32 %v3143, %v3149
    %v3151 = vrot.slane %v3150, 4
    %v3152 = vadd.f32 %v3150, %v3151
    %v3153 = vrot.slane %v3152, 2
    %v3154 = vadd.f32 %v3152, %v3153
    %v3155 = vrot.slane %v3154, 1
    %v3156 = vadd.f32 %v3154, %v3155
    %v3157 = vsel %vm1560, %v3147, 0.0
    %v3158 = vadd.f32 %v3144, %v3157
    %v3159 = vrot.slane %v3158, 4
    %v3160 = vadd.f32 %v3158, %v3159
    %v3161 = vrot.slane %v3160, 2
    %v3162 = vadd.f32 %v3160, %v3161
    %v3163 = vrot.slane %v3162, 1
    %v3164 = vadd.f32 %v3162, %v3163
    %v3165 = vsel %vm315, %v3145, 0.0
    %v3166 = vsel %vm1558, %v3148, 0.0
    %v3167 = vadd.f32 %v3165, %v3166
    %v3168 = vrot.slane %v3167, 4
    %v3169 = vadd.f32 %v3167, %v3168
    %v3170 = vrot.slane %v3169, 2
    %v3171 = vadd.f32 %v3169, %v3170
    %v3172 = vrot.slane %v3171, 1
    %v3173 = vadd.f32 %v3171, %v3172
    %v3174 = vadd.f32 %v1620, %v3156
    %v3175 = vadd.f32 %v1621, %v3164
    %v3176 = vadd.f32 %v1622, %v3173
    %v3177 = vld [vmem:[%s1252] sm:$0xff]
    %v3178 = vld [vmem:[%s1252 + $0x8] sm:$0xff]
    %v3179 = vpack.c.bf16 %v3177, %v3177
    %v3180 = vpack.c.bf16 %v3178, %v3178
    %v3181 = vld [vmem:[%s1] sm:$0xff]
    %v3182 = vld [vmem:[%s1 + $0x8] sm:$0xf]
    %v3183 = vld [vmem:[%s1 + $0xc] sm:$0xff]
    %v3184 = vld [vmem:[%s1 + $0x14] sm:$0xf]
    %v3185 = vld [vmem:[%s1 + $0x18] sm:$0xff]
    %v3186 = vld [vmem:[%s1 + $0x20] sm:$0xf]
    %v3187 = vld [vmem:[%s1 + $0x24] sm:$0xff]
    %v3188 = vld [vmem:[%s1 + $0x2c] sm:$0xf]
    %v3189 = vld [vmem:[%s1 + $0x30] sm:$0xff]
    %v3190 = vld [vmem:[%s1 + $0x38] sm:$0xf]
    %v3191 = vld [vmem:[%s1 + $0x3c] sm:$0xff]
    %v3192 = vld [vmem:[%s1 + $0x44] sm:$0xf]
    %v3193 = vld [vmem:[%s1 + $0x48] sm:$0xff]
    %v3194 = vld [vmem:[%s1 + $0x50] sm:$0xf]
    %v3195 = vld [vmem:[%s1 + $0x54] sm:$0xff]
    %v3196 = vld [vmem:[%s1 + $0x5c] sm:$0xf]
    %v3197 = vld [vmem:[%s1 + $0x60] sm:$0xff]
    %v3198 = vld [vmem:[%s1 + $0x68] sm:$0xf]
    %v3199 = vld [vmem:[%s1 + $0x6c] sm:$0xff]
    %v3200 = vld [vmem:[%s1 + $0x74] sm:$0xf]
    %v3201 = vld [vmem:[%s1 + $0x78] sm:$0xff]
    %v3202 = vld [vmem:[%s1 + $0x80] sm:$0xf]
    %v3203 = vld [vmem:[%s1 + $0x84] sm:$0xff]
    %v3204 = vld [vmem:[%s1 + $0x8c] sm:$0xf]
    %v3205 = vld [vmem:[%s1 + $0x90] sm:$0xff]
    %v3206 = vld [vmem:[%s1 + $0x98] sm:$0xf]
    %v3207 = vld [vmem:[%s1 + $0x9c] sm:$0xff]
    %v3208 = vld [vmem:[%s1 + $0xa4] sm:$0xf]
    %v3209 = vld [vmem:[%s1 + $0xa8] sm:$0xff]
    %v3210 = vld [vmem:[%s1 + $0xb0] sm:$0xf]
    %v3211 = vld [vmem:[%s1 + $0xb4] sm:$0xff]
    %v3212 = vld [vmem:[%s1 + $0xbc] sm:$0xf]
    %v3213 = vld [vmem:[%s1 + $0xc0] sm:$0xff]
    %v3214 = vld [vmem:[%s1 + $0xc8] sm:$0xf]
    %v3215 = vld [vmem:[%s1 + $0xcc] sm:$0xff]
    %v3216 = vld [vmem:[%s1 + $0xd4] sm:$0xf]
    %v3217 = vld [vmem:[%s1 + $0xd8] sm:$0xff]
    %v3218 = vld [vmem:[%s1 + $0xe0] sm:$0xf]
    %v3219 = vld [vmem:[%s1 + $0xe4] sm:$0xff]
    %v3220 = vld [vmem:[%s1 + $0xec] sm:$0xf]
    %v3221 = vld [vmem:[%s2508] sm:$0xff]
    %v3222 = vld [vmem:[%s2508 + $0x8] sm:$0xff]
    %v3223 = vpack.c.bf16 %v3221, %v3221
    %v3224 = vpack.c.bf16 %v3222, %v3222
    %v3225 = vld [vmem:[%s114] sm:$0xff]
    %v3226 = vld [vmem:[%s114 + $0x8] sm:$0xf]
    %v3227 = vld [vmem:[%s114 + $0xc] sm:$0xff]
    %v3228 = vld [vmem:[%s114 + $0x14] sm:$0xf]
    %v3229 = vld [vmem:[%s114 + $0x18] sm:$0xff]
    %v3230 = vld [vmem:[%s114 + $0x20] sm:$0xf]
    %v3231 = vld [vmem:[%s114 + $0x24] sm:$0xff]
    %v3232 = vld [vmem:[%s114 + $0x2c] sm:$0xf]
    %v3233 = vld [vmem:[%s114 + $0x30] sm:$0xff]
    %v3234 = vld [vmem:[%s114 + $0x38] sm:$0xf]
    %v3235 = vld [vmem:[%s114 + $0x3c] sm:$0xff]
    %v3236 = vld [vmem:[%s114 + $0x44] sm:$0xf]
    %v3237 = vld [vmem:[%s114 + $0x48] sm:$0xff]
    %v3238 = vld [vmem:[%s114 + $0x50] sm:$0xf]
    %v3239 = vld [vmem:[%s114 + $0x54] sm:$0xff]
    %v3240 = vld [vmem:[%s114 + $0x5c] sm:$0xf]
    %v3241 = vld [vmem:[%s114 + $0x60] sm:$0xff]
    %v3242 = vld [vmem:[%s114 + $0x68] sm:$0xf]
    %v3243 = vld [vmem:[%s114 + $0x6c] sm:$0xff]
    %v3244 = vld [vmem:[%s114 + $0x74] sm:$0xf]
    %v3245 = vld [vmem:[%s114 + $0x78] sm:$0xff]
    %v3246 = vld [vmem:[%s114 + $0x80] sm:$0xf]
    %v3247 = vld [vmem:[%s114 + $0x84] sm:$0xff]
    %v3248 = vld [vmem:[%s114 + $0x8c] sm:$0xf]
    %v3249 = vld [vmem:[%s114 + $0x90] sm:$0xff]
    %v3250 = vld [vmem:[%s114 + $0x98] sm:$0xf]
    %v3251 = vld [vmem:[%s114 + $0x9c] sm:$0xff]
    %v3252 = vld [vmem:[%s114 + $0xa4] sm:$0xf]
    %v3253 = vld [vmem:[%s114 + $0xa8] sm:$0xff]
    %v3254 = vld [vmem:[%s114 + $0xb0] sm:$0xf]
    %v3255 = vld [vmem:[%s114 + $0xb4] sm:$0xff]
    %v3256 = vld [vmem:[%s114 + $0xbc] sm:$0xf]
    %v3257 = vld [vmem:[%s114 + $0xc0] sm:$0xff]
    %v3258 = vld [vmem:[%s114 + $0xc8] sm:$0xf]
    %v3259 = vld [vmem:[%s114 + $0xcc] sm:$0xff]
    %v3260 = vld [vmem:[%s114 + $0xd4] sm:$0xf]
    %v3261 = vld [vmem:[%s114 + $0xd8] sm:$0xff]
    %v3262 = vld [vmem:[%s114 + $0xe0] sm:$0xf]
    %v3263 = vld [vmem:[%s114 + $0xe4] sm:$0xff]
    %v3264 = vld [vmem:[%s114 + $0xec] sm:$0xf]
    %v3305 = vunpack.c.l.b16 %v3225
    %v3306 = vunpack.c.h.b16 %v3225
    %v3307 = vunpack.c.l.b16 %v3226
    %v3308 = vunpack.c.l.b16 %v3227
    %v3309 = vunpack.c.h.b16 %v3227
    %v3310 = vunpack.c.l.b16 %v3228
    %v3311 = vunpack.c.l.b16 %v3229
    %v3312 = vunpack.c.h.b16 %v3229
    %v3313 = vunpack.c.l.b16 %v3230
    %v3314 = vunpack.c.l.b16 %v3231
    %v3315 = vunpack.c.h.b16 %v3231
    %v3316 = vunpack.c.l.b16 %v3232
    %v3317 = vunpack.c.l.b16 %v3233
    %v3318 = vunpack.c.h.b16 %v3233
    %v3319 = vunpack.c.l.b16 %v3234
    %v3320 = vunpack.c.l.b16 %v3235
    %v3321 = vunpack.c.h.b16 %v3235
    %v3322 = vunpack.c.l.b16 %v3236
    %v3323 = vunpack.c.l.b16 %v3237
    %v3324 = vunpack.c.h.b16 %v3237
    %v3325 = vunpack.c.l.b16 %v3238
    %v3326 = vunpack.c.l.b16 %v3239
    %v3327 = vunpack.c.h.b16 %v3239
    %v3328 = vunpack.c.l.b16 %v3240
    %v3329 = vunpack.c.l.b16 %v3241
    %v3330 = vunpack.c.h.b16 %v3241
    %v3331 = vunpack.c.l.b16 %v3242
    %v3332 = vunpack.c.l.b16 %v3243
    %v3333 = vunpack.c.h.b16 %v3243
    %v3334 = vunpack.c.l.b16 %v3244
    %v3335 = vunpack.c.l.b16 %v3245
    %v3336 = vunpack.c.h.b16 %v3245
    %v3337 = vunpack.c.l.b16 %v3246
    %v3338 = vunpack.c.l.b16 %v3247
    %v3339 = vunpack.c.h.b16 %v3247
    %v3340 = vunpack.c.l.b16 %v3248
    %v3341 = vunpack.c.l.b16 %v3249
    %v3342 = vunpack.c.h.b16 %v3249
    %v3343 = vunpack.c.l.b16 %v3250
    %v3344 = vunpack.c.l.b16 %v3251
    %v3345 = vunpack.c.h.b16 %v3251
    %v3346 = vunpack.c.l.b16 %v3252
    %v3347 = vunpack.c.l.b16 %v3253
    %v3348 = vunpack.c.h.b16 %v3253
    %v3349 = vunpack.c.l.b16 %v3254
    %v3350 = vunpack.c.l.b16 %v3255
    %v3351 = vunpack.c.h.b16 %v3255
    %v3352 = vunpack.c.l.b16 %v3256
    %v3353 = vunpack.c.l.b16 %v3257
    %v3354 = vunpack.c.h.b16 %v3257
    %v3355 = vunpack.c.l.b16 %v3258
    %v3356 = vunpack.c.l.b16 %v3259
    %v3357 = vunpack.c.h.b16 %v3259
    %v3358 = vunpack.c.l.b16 %v3260
    %v3359 = vunpack.c.l.b16 %v3261
    %v3360 = vunpack.c.h.b16 %v3261
    %v3361 = vunpack.c.l.b16 %v3262
    %v3362 = vunpack.c.l.b16 %v3263
    %v3363 = vunpack.c.h.b16 %v3263
    %v3364 = vunpack.c.l.b16 %v3264
    %v3365 = vpack.c.b16 %v3308, %v3305
    %v3366 = vpack.c.b16 %v3309, %v3306
    %v3367 = vpack.c.b16 %v3310, %v3307
    %v3368 = vpack.c.b16 %v3314, %v3311
    %v3369 = vpack.c.b16 %v3315, %v3312
    %v3370 = vpack.c.b16 %v3316, %v3313
    %v3371 = vpack.c.b16 %v3320, %v3317
    %v3372 = vpack.c.b16 %v3321, %v3318
    %v3373 = vpack.c.b16 %v3322, %v3319
    %v3374 = vpack.c.b16 %v3326, %v3323
    %v3375 = vpack.c.b16 %v3327, %v3324
    %v3376 = vpack.c.b16 %v3328, %v3325
    %v3377 = vpack.c.b16 %v3332, %v3329
    %v3378 = vpack.c.b16 %v3333, %v3330
    %v3379 = vpack.c.b16 %v3334, %v3331
    %v3380 = vpack.c.b16 %v3338, %v3335
    %v3381 = vpack.c.b16 %v3339, %v3336
    %v3382 = vpack.c.b16 %v3340, %v3337
    %v3383 = vpack.c.b16 %v3344, %v3341
    %v3384 = vpack.c.b16 %v3345, %v3342
    %v3385 = vpack.c.b16 %v3346, %v3343
    %v3386 = vpack.c.b16 %v3350, %v3347
    %v3387 = vpack.c.b16 %v3351, %v3348
    %v3388 = vpack.c.b16 %v3352, %v3349
    %v3389 = vpack.c.b16 %v3356, %v3353
    %v3390 = vpack.c.b16 %v3357, %v3354
    %v3391 = vpack.c.b16 %v3358, %v3355
    %v3392 = vpack.c.b16 %v3362, %v3359
    %v3393 = vpack.c.b16 %v3363, %v3360
    %v3394 = vpack.c.b16 %v3364, %v3361
    %v3426 = vsel %vm315, %v3224, 0
    %3428 = vmatprep.subr.bf16.mxu0 %v3366
    %3429 = vmatpush1.bf16.msra.mxu0 %v3365
    %3430 = vmatprep.subr.bf16.mxu0 %v3369
    %3431 = vmatpush1.bf16.msra.mxu0 %v3368
    %3432 = vmatprep.subr.bf16.mxu0 %v3372
    %3433 = vmatpush1.bf16.msra.mxu0 %v3371
    %3434 = vmatprep.subr.bf16.mxu0 %v3375
    %3435 = vmatpush1.bf16.msra.mxu0 %v3374
    %3436 = vmatprep.subr.bf16.mxu0 %v3378
    %3437 = vmatpush1.bf16.msra.mxu0 %v3377
    %3438 = vmatprep.subr.bf16.mxu0 %v3381
    %3439 = vmatpush1.bf16.msra.mxu0 %v3380
    %3440 = vmatprep.subr.bf16.mxu0 %v3384
    %3441 = vmatpush1.bf16.msra.mxu0 %v3383
    %3442 = vmatprep.subr.bf16.mxu0 %v3387
    %3443 = vmatpush1.bf16.msra.mxu0 %v3386
    %3444 = vmatprep.subr.bf16.mxu0 %v3390
    %3445 = vmatpush1.bf16.msra.mxu0 %v3389
    %3446 = vmatprep.subr.bf16.mxu0 %v3393
    %3447 = vmatpush1.bf16.msra.mxu0 %v3392
    %3448 = vmatprep.subr.bf16.mxu0 0
    %3449 = vmatpush1.bf16.msra.mxu0 0
    %3450 = vmatprep.subr.bf16.mxu0 0
    %3451 = vmatpush1.bf16.msra.mxu0 0
    %3452 = vmatprep.subr.bf16.mxu0 0
    %3453 = vmatpush1.bf16.msra.mxu0 0
    %3454 = vmatprep.subr.bf16.mxu0 0
    %3455 = vmatpush1.bf16.msra.mxu0 0
    %3456 = vmatprep.subr.bf16.mxu0 0
    %3457 = vmatpush1.bf16.msra.mxu0 0
    %3458 = vmatprep.subr.bf16.mxu0 0
    %3459 = vmatpush1.bf16.msra.mxu0 0
    %3460 = vmatprep.mubr.bf16.mxu0 %v3426
    %3461 = vmatmul.mubr.bf16.gmra.mrb[0].mxu0 %v3223
    %v3462 = vpop.f32.mrb[0].mxu0
    %v3463 = vadd.f32 0.0, %v3462
    %v3464 = vpop.f32.mrb[0].mxu0
    %v3465 = vadd.f32 0.0, %v3464
    %v3466 = vpop.f32.mrb[0].mxu0
    %v3467 = vpop.f32.mrb[0].mxu0
    %3468 = vdwg.mxu0
    %3469 = vmatprep.subr.bf16.mxu0 0
    %3470 = vmatpush1.bf16.msra.mxu0 %v3367
    %3471 = vmatprep.subr.bf16.mxu0 0
    %3472 = vmatpush1.bf16.msra.mxu0 %v3370
    %3473 = vmatprep.subr.bf16.mxu0 0
    %3474 = vmatpush1.bf16.msra.mxu0 %v3373
    %3475 = vmatprep.subr.bf16.mxu0 0
    %3476 = vmatpush1.bf16.msra.mxu0 %v3376
    %3477 = vmatprep.subr.bf16.mxu0 0
    %3478 = vmatpush1.bf16.msra.mxu0 %v3379
    %3479 = vmatprep.subr.bf16.mxu0 0
    %3480 = vmatpush1.bf16.msra.mxu0 %v3382
    %3481 = vmatprep.subr.bf16.mxu0 0
    %3482 = vmatpush1.bf16.msra.mxu0 %v3385
    %3483 = vmatprep.subr.bf16.mxu0 0
    %3484 = vmatpush1.bf16.msra.mxu0 %v3388
    %3485 = vmatprep.subr.bf16.mxu0 0
    %3486 = vmatpush1.bf16.msra.mxu0 %v3391
    %3487 = vmatprep.subr.bf16.mxu0 0
    %3488 = vmatpush1.bf16.msra.mxu0 %v3394
    %3489 = vmatprep.subr.bf16.mxu0 0
    %3490 = vmatpush1.bf16.msra.mxu0 0
    %3491 = vmatprep.subr.bf16.mxu0 0
    %3492 = vmatpush1.bf16.msra.mxu0 0
    %3493 = vmatprep.subr.bf16.mxu0 0
    %3494 = vmatpush1.bf16.msra.mxu0 0
    %3495 = vmatprep.subr.bf16.mxu0 0
    %3496 = vmatpush1.bf16.msra.mxu0 0
    %3497 = vmatprep.subr.bf16.mxu0 0
    %3498 = vmatpush1.bf16.msra.mxu0 0
    %3499 = vmatprep.subr.bf16.mxu0 0
    %3500 = vmatpush1.bf16.msra.mxu0 0
    %3501 = vmatprep.mubr.bf16.mxu0 %v3426
    %3502 = vmatmul.mubr.bf16.gmra.mrb[0].mxu0 %v3223
    %v3503 = vpop.f32.mrb[0].mxu0
    %v3504 = vadd.f32 0.0, %v3503
    %v3505 = vpop.f32.mrb[0].mxu0
    %v3506 = vpop.f32.mrb[0].mxu0
    %v3507 = vpop.f32.mrb[0].mxu0
    %3508 = vdwg.mxu0
    %v3549 = vunpack.c.l.b16 %v3181
    %v3550 = vunpack.c.h.b16 %v3181
    %v3551 = vunpack.c.l.b16 %v3182
    %v3552 = vunpack.c.l.b16 %v3183
    %v3553 = vunpack.c.h.b16 %v3183
    %v3554 = vunpack.c.l.b16 %v3184
    %v3555 = vunpack.c.l.b16 %v3185
    %v3556 = vunpack.c.h.b16 %v3185
    %v3557 = vunpack.c.l.b16 %v3186
    %v3558 = vunpack.c.l.b16 %v3187
    %v3559 = vunpack.c.h.b16 %v3187
    %v3560 = vunpack.c.l.b16 %v3188
    %v3561 = vunpack.c.l.b16 %v3189
    %v3562 = vunpack.c.h.b16 %v3189
    %v3563 = vunpack.c.l.b16 %v3190
    %v3564 = vunpack.c.l.b16 %v3191
    %v3565 = vunpack.c.h.b16 %v3191
    %v3566 = vunpack.c.l.b16 %v3192
    %v3567 = vunpack.c.l.b16 %v3193
    %v3568 = vunpack.c.h.b16 %v3193
    %v3569 = vunpack.c.l.b16 %v3194
    %v3570 = vunpack.c.l.b16 %v3195
    %v3571 = vunpack.c.h.b16 %v3195
    %v3572 = vunpack.c.l.b16 %v3196
    %v3573 = vunpack.c.l.b16 %v3197
    %v3574 = vunpack.c.h.b16 %v3197
    %v3575 = vunpack.c.l.b16 %v3198
    %v3576 = vunpack.c.l.b16 %v3199
    %v3577 = vunpack.c.h.b16 %v3199
    %v3578 = vunpack.c.l.b16 %v3200
    %v3579 = vunpack.c.l.b16 %v3201
    %v3580 = vunpack.c.h.b16 %v3201
    %v3581 = vunpack.c.l.b16 %v3202
    %v3582 = vunpack.c.l.b16 %v3203
    %v3583 = vunpack.c.h.b16 %v3203
    %v3584 = vunpack.c.l.b16 %v3204
    %v3585 = vunpack.c.l.b16 %v3205
    %v3586 = vunpack.c.h.b16 %v3205
    %v3587 = vunpack.c.l.b16 %v3206
    %v3588 = vunpack.c.l.b16 %v3207
    %v3589 = vunpack.c.h.b16 %v3207
    %v3590 = vunpack.c.l.b16 %v3208
    %v3591 = vunpack.c.l.b16 %v3209
    %v3592 = vunpack.c.h.b16 %v3209
    %v3593 = vunpack.c.l.b16 %v3210
    %v3594 = vunpack.c.l.b16 %v3211
    %v3595 = vunpack.c.h.b16 %v3211
    %v3596 = vunpack.c.l.b16 %v3212
    %v3597 = vunpack.c.l.b16 %v3213
    %v3598 = vunpack.c.h.b16 %v3213
    %v3599 = vunpack.c.l.b16 %v3214
    %v3600 = vunpack.c.l.b16 %v3215
    %v3601 = vunpack.c.h.b16 %v3215
    %v3602 = vunpack.c.l.b16 %v3216
    %v3603 = vunpack.c.l.b16 %v3217
    %v3604 = vunpack.c.h.b16 %v3217
    %v3605 = vunpack.c.l.b16 %v3218
    %v3606 = vunpack.c.l.b16 %v3219
    %v3607 = vunpack.c.h.b16 %v3219
    %v3608 = vunpack.c.l.b16 %v3220
    %v3609 = vpack.c.b16 %v3552, %v3549
    %v3610 = vpack.c.b16 %v3553, %v3550
    %v3611 = vpack.c.b16 %v3554, %v3551
    %v3612 = vpack.c.b16 %v3558, %v3555
    %v3613 = vpack.c.b16 %v3559, %v3556
    %v3614 = vpack.c.b16 %v3560, %v3557
    %v3615 = vpack.c.b16 %v3564, %v3561
    %v3616 = vpack.c.b16 %v3565, %v3562
    %v3617 = vpack.c.b16 %v3566, %v3563
    %v3618 = vpack.c.b16 %v3570, %v3567
    %v3619 = vpack.c.b16 %v3571, %v3568
    %v3620 = vpack.c.b16 %v3572, %v3569
    %v3621 = vpack.c.b16 %v3576, %v3573
    %v3622 = vpack.c.b16 %v3577, %v3574
    %v3623 = vpack.c.b16 %v3578, %v3575
    %v3624 = vpack.c.b16 %v3582, %v3579
    %v3625 = vpack.c.b16 %v3583, %v3580
    %v3626 = vpack.c.b16 %v3584, %v3581
    %v3627 = vpack.c.b16 %v3588, %v3585
    %v3628 = vpack.c.b16 %v3589, %v3586
    %v3629 = vpack.c.b16 %v3590, %v3587
    %v3630 = vpack.c.b16 %v3594, %v3591
    %v3631 = vpack.c.b16 %v3595, %v3592
    %v3632 = vpack.c.b16 %v3596, %v3593
    %v3633 = vpack.c.b16 %v3600, %v3597
    %v3634 = vpack.c.b16 %v3601, %v3598
    %v3635 = vpack.c.b16 %v3602, %v3599
    %v3636 = vpack.c.b16 %v3606, %v3603
    %v3637 = vpack.c.b16 %v3607, %v3604
    %v3638 = vpack.c.b16 %v3608, %v3605
    %v3670 = vsel %vm315, %v3180, 0
    %3672 = vmatprep.subr.bf16.mxu0 %v3610
    %3673 = vmatpush1.bf16.msra.mxu0 %v3609
    %3674 = vmatprep.subr.bf16.mxu0 %v3613
    %3675 = vmatpush1.bf16.msra.mxu0 %v3612
    %3676 = vmatprep.subr.bf16.mxu0 %v3616
    %3677 = vmatpush1.bf16.msra.mxu0 %v3615
    %3678 = vmatprep.subr.bf16.mxu0 %v3619
    %3679 = vmatpush1.bf16.msra.mxu0 %v3618
    %3680 = vmatprep.subr.bf16.mxu0 %v3622
    %3681 = vmatpush1.bf16.msra.mxu0 %v3621
    %3682 = vmatprep.subr.bf16.mxu0 %v3625
    %3683 = vmatpush1.bf16.msra.mxu0 %v3624
    %3684 = vmatprep.subr.bf16.mxu0 %v3628
    %3685 = vmatpush1.bf16.msra.mxu0 %v3627
    %3686 = vmatprep.subr.bf16.mxu0 %v3631
    %3687 = vmatpush1.bf16.msra.mxu0 %v3630
    %3688 = vmatprep.subr.bf16.mxu0 %v3634
    %3689 = vmatpush1.bf16.msra.mxu0 %v3633
    %3690 = vmatprep.subr.bf16.mxu0 %v3637
    %3691 = vmatpush1.bf16.msra.mxu0 %v3636
    %3692 = vmatprep.subr.bf16.mxu0 0
    %3693 = vmatpush1.bf16.msra.mxu0 0
    %3694 = vmatprep.subr.bf16.mxu0 0
    %3695 = vmatpush1.bf16.msra.mxu0 0
    %3696 = vmatprep.subr.bf16.mxu0 0
    %3697 = vmatpush1.bf16.msra.mxu0 0
    %3698 = vmatprep.subr.bf16.mxu0 0
    %3699 = vmatpush1.bf16.msra.mxu0 0
    %3700 = vmatprep.subr.bf16.mxu0 0
    %3701 = vmatpush1.bf16.msra.mxu0 0
    %3702 = vmatprep.subr.bf16.mxu0 0
    %3703 = vmatpush1.bf16.msra.mxu0 0
    %3704 = vmatprep.mubr.bf16.mxu0 %v3670
    %3705 = vmatmul.mubr.bf16.gmra.mrb[0].mxu0 %v3179
    %v3706 = vpop.f32.mrb[0].mxu0
    %v3707 = vadd.f32 %v3463, %v3706
    %v3708 = vpop.f32.mrb[0].mxu0
    %v3709 = vadd.f32 %v3465, %v3708
    %v3710 = vpop.f32.mrb[0].mxu0
    %v3711 = vpop.f32.mrb[0].mxu0
    %3712 = vdwg.mxu0
    %3713 = vmatprep.subr.bf16.mxu0 0
    %3714 = vmatpush1.bf16.msra.mxu0 %v3611
    %3715 = vmatprep.subr.bf16.mxu0 0
    %3716 = vmatpush1.bf16.msra.mxu0 %v3614
    %3717 = vmatprep.subr.bf16.mxu0 0
    %3718 = vmatpush1.bf16.msra.mxu0 %v3617
    %3719 = vmatprep.subr.bf16.mxu0 0
    %3720 = vmatpush1.bf16.msra.mxu0 %v3620
    %3721 = vmatprep.subr.bf16.mxu0 0
    %3722 = vmatpush1.bf16.msra.mxu0 %v3623
    %3723 = vmatprep.subr.bf16.mxu0 0
    %3724 = vmatpush1.bf16.msra.mxu0 %v3626
    %3725 = vmatprep.subr.bf16.mxu0 0
    %3726 = vmatpush1.bf16.msra.mxu0 %v3629
    %3727 = vmatprep.subr.bf16.mxu0 0
    %3728 = vmatpush1.bf16.msra.mxu0 %v3632
    %3729 = vmatprep.subr.bf16.mxu0 0
    %3730 = vmatpush1.bf16.msra.mxu0 %v3635
    %3731 = vmatprep.subr.bf16.mxu0 0
    %3732 = vmatpush1.bf16.msra.mxu0 %v3638
    %3733 = vmatprep.subr.bf16.mxu0 0
    %3734 = vmatpush1.bf16.msra.mxu0 0
    %3735 = vmatprep.subr.bf16.mxu0 0
    %3736 = vmatpush1.bf16.msra.mxu0 0
    %3737 = vmatprep.subr.bf16.mxu0 0
    %3738 = vmatpush1.bf16.msra.mxu0 0
    %3739 = vmatprep.subr.bf16.mxu0 0
    %3740 = vmatpush1.bf16.msra.mxu0 0
    %3741 = vmatprep.subr.bf16.mxu0 0
    %3742 = vmatpush1.bf16.msra.mxu0 0
    %3743 = vmatprep.subr.bf16.mxu0 0
    %3744 = vmatpush1.bf16.msra.mxu0 0
    %3745 = vmatprep.mubr.bf16.mxu0 %v3670
    %3746 = vmatmul.mubr.bf16.gmra.mrb[0].mxu0 %v3179
    %v3747 = vpop.f32.mrb[0].mxu0
    %v3748 = vadd.f32 %v3504, %v3747
    %v3749 = vpop.f32.mrb[0].mxu0
    %v3750 = vpop.f32.mrb[0].mxu0
    %v3751 = vpop.f32.mrb[0].mxu0
    %3752 = vdwg.mxu0
    %v3753 = vld [vmem:[%s2808] sm:$0xff]
    %v3754 = vld [vmem:[%s2808 + $0x8] sm:$0xff]
    %v3755 = vpack.c.bf16 %v3753, %v3753
    %v3756 = vpack.c.bf16 %v3754, %v3754
    %v3757 = vld [vmem:[%s657] sm:$0xff]
    %v3758 = vld [vmem:[%s657 + $0x8] sm:$0xf]
    %v3759 = vld [vmem:[%s657 + $0xc] sm:$0xff]
    %v3760 = vld [vmem:[%s657 + $0x14] sm:$0xf]
    %v3761 = vld [vmem:[%s657 + $0x18] sm:$0xff]
    %v3762 = vld [vmem:[%s657 + $0x20] sm:$0xf]
    %v3763 = vld [vmem:[%s657 + $0x24] sm:$0xff]
    %v3764 = vld [vmem:[%s657 + $0x2c] sm:$0xf]
    %v3765 = vld [vmem:[%s657 + $0x30] sm:$0xff]
    %v3766 = vld [vmem:[%s657 + $0x38] sm:$0xf]
    %v3767 = vld [vmem:[%s657 + $0x3c] sm:$0xff]
    %v3768 = vld [vmem:[%s657 + $0x44] sm:$0xf]
    %v3769 = vld [vmem:[%s657 + $0x48] sm:$0xff]
    %v3770 = vld [vmem:[%s657 + $0x50] sm:$0xf]
    %v3771 = vld [vmem:[%s657 + $0x54] sm:$0xff]
    %v3772 = vld [vmem:[%s657 + $0x5c] sm:$0xf]
    %v3773 = vld [vmem:[%s657 + $0x60] sm:$0xff]
    %v3774 = vld [vmem:[%s657 + $0x68] sm:$0xf]
    %v3775 = vld [vmem:[%s657 + $0x6c] sm:$0xff]
    %v3776 = vld [vmem:[%s657 + $0x74] sm:$0xf]
    %v3777 = vld [vmem:[%s657 + $0x78] sm:$0xff]
    %v3778 = vld [vmem:[%s657 + $0x80] sm:$0xf]
    %v3779 = vld [vmem:[%s657 + $0x84] sm:$0xff]
    %v3780 = vld [vmem:[%s657 + $0x8c] sm:$0xf]
    %v3781 = vld [vmem:[%s657 + $0x90] sm:$0xff]
    %v3782 = vld [vmem:[%s657 + $0x98] sm:$0xf]
    %v3783 = vld [vmem:[%s657 + $0x9c] sm:$0xff]
    %v3784 = vld [vmem:[%s657 + $0xa4] sm:$0xf]
    %v3785 = vld [vmem:[%s657 + $0xa8] sm:$0xff]
    %v3786 = vld [vmem:[%s657 + $0xb0] sm:$0xf]
    %v3787 = vld [vmem:[%s657 + $0xb4] sm:$0xff]
    %v3788 = vld [vmem:[%s657 + $0xbc] sm:$0xf]
    %v3789 = vld [vmem:[%s657 + $0xc0] sm:$0xff]
    %v3790 = vld [vmem:[%s657 + $0xc8] sm:$0xf]
    %v3791 = vld [vmem:[%s657 + $0xcc] sm:$0xff]
    %v3792 = vld [vmem:[%s657 + $0xd4] sm:$0xf]
    %v3793 = vld [vmem:[%s657 + $0xd8] sm:$0xff]
    %v3794 = vld [vmem:[%s657 + $0xe0] sm:$0xf]
    %v3795 = vld [vmem:[%s657 + $0xe4] sm:$0xff]
    %v3796 = vld [vmem:[%s657 + $0xec] sm:$0xf]
    %v3837 = vunpack.c.l.b16 %v3757
    %v3838 = vunpack.c.h.b16 %v3757
    %v3839 = vunpack.c.l.b16 %v3758
    %v3840 = vunpack.c.l.b16 %v3759
    %v3841 = vunpack.c.h.b16 %v3759
    %v3842 = vunpack.c.l.b16 %v3760
    %v3843 = vunpack.c.l.b16 %v3761
    %v3844 = vunpack.c.h.b16 %v3761
    %v3845 = vunpack.c.l.b16 %v3762
    %v3846 = vunpack.c.l.b16 %v3763
    %v3847 = vunpack.c.h.b16 %v3763
    %v3848 = vunpack.c.l.b16 %v3764
    %v3849 = vunpack.c.l.b16 %v3765
    %v3850 = vunpack.c.h.b16 %v3765
    %v3851 = vunpack.c.l.b16 %v3766
    %v3852 = vunpack.c.l.b16 %v3767
    %v3853 = vunpack.c.h.b16 %v3767
    %v3854 = vunpack.c.l.b16 %v3768
    %v3855 = vunpack.c.l.b16 %v3769
    %v3856 = vunpack.c.h.b16 %v3769
    %v3857 = vunpack.c.l.b16 %v3770
    %v3858 = vunpack.c.l.b16 %v3771
    %v3859 = vunpack.c.h.b16 %v3771
    %v3860 = vunpack.c.l.b16 %v3772
    %v3861 = vunpack.c.l.b16 %v3773
    %v3862 = vunpack.c.h.b16 %v3773
    %v3863 = vunpack.c.l.b16 %v3774
    %v3864 = vunpack.c.l.b16 %v3775
    %v3865 = vunpack.c.h.b16 %v3775
    %v3866 = vunpack.c.l.b16 %v3776
    %v3867 = vunpack.c.l.b16 %v3777
    %v3868 = vunpack.c.h.b16 %v3777
    %v3869 = vunpack.c.l.b16 %v3778
    %v3870 = vunpack.c.l.b16 %v3779
    %v3871 = vunpack.c.h.b16 %v3779
    %v3872 = vunpack.c.l.b16 %v3780
    %v3873 = vunpack.c.l.b16 %v3781
    %v3874 = vunpack.c.h.b16 %v3781
    %v3875 = vunpack.c.l.b16 %v3782
    %v3876 = vunpack.c.l.b16 %v3783
    %v3877 = vunpack.c.h.b16 %v3783
    %v3878 = vunpack.c.l.b16 %v3784
    %v3879 = vunpack.c.l.b16 %v3785
    %v3880 = vunpack.c.h.b16 %v3785
    %v3881 = vunpack.c.l.b16 %v3786
    %v3882 = vunpack.c.l.b16 %v3787
    %v3883 = vunpack.c.h.b16 %v3787
    %v3884 = vunpack.c.l.b16 %v3788
    %v3885 = vunpack.c.l.b16 %v3789
    %v3886 = vunpack.c.h.b16 %v3789
    %v3887 = vunpack.c.l.b16 %v3790
    %v3888 = vunpack.c.l.b16 %v3791
    %v3889 = vunpack.c.h.b16 %v3791
    %v3890 = vunpack.c.l.b16 %v3792
    %v3891 = vunpack.c.l.b16 %v3793
    %v3892 = vunpack.c.h.b16 %v3793
    %v3893 = vunpack.c.l.b16 %v3794
    %v3894 = vunpack.c.l.b16 %v3795
    %v3895 = vunpack.c.h.b16 %v3795
    %v3896 = vunpack.c.l.b16 %v3796
    %v3897 = vpack.c.b16 %v3840, %v3837
    %v3898 = vpack.c.b16 %v3841, %v3838
    %v3899 = vpack.c.b16 %v3842, %v3839
    %v3900 = vpack.c.b16 %v3846, %v3843
    %v3901 = vpack.c.b16 %v3847, %v3844
    %v3902 = vpack.c.b16 %v3848, %v3845
    %v3903 = vpack.c.b16 %v3852, %v3849
    %v3904 = vpack.c.b16 %v3853, %v3850
    %v3905 = vpack.c.b16 %v3854, %v3851
    %v3906 = vpack.c.b16 %v3858, %v3855
    %v3907 = vpack.c.b16 %v3859, %v3856
    %v3908 = vpack.c.b16 %v3860, %v3857
    %v3909 = vpack.c.b16 %v3864, %v3861
    %v3910 = vpack.c.b16 %v3865, %v3862
    %v3911 = vpack.c.b16 %v3866, %v3863
    %v3912 = vpack.c.b16 %v3870, %v3867
    %v3913 = vpack.c.b16 %v3871, %v3868
    %v3914 = vpack.c.b16 %v3872, %v3869
    %v3915 = vpack.c.b16 %v3876, %v3873
    %v3916 = vpack.c.b16 %v3877, %v3874
    %v3917 = vpack.c.b16 %v3878, %v3875
    %v3918 = vpack.c.b16 %v3882, %v3879
    %v3919 = vpack.c.b16 %v3883, %v3880
    %v3920 = vpack.c.b16 %v3884, %v3881
    %v3921 = vpack.c.b16 %v3888, %v3885
    %v3922 = vpack.c.b16 %v3889, %v3886
    %v3923 = vpack.c.b16 %v3890, %v3887
    %v3924 = vpack.c.b16 %v3894, %v3891
    %v3925 = vpack.c.b16 %v3895, %v3892
    %v3926 = vpack.c.b16 %v3896, %v3893
    %v3958 = vsel %vm315, %v3756, 0
    %3960 = vmatprep.subr.bf16.mxu0 %v3898
    %3961 = vmatpush1.bf16.msra.mxu0 %v3897
    %3962 = vmatprep.subr.bf16.mxu0 %v3901
    %3963 = vmatpush1.bf16.msra.mxu0 %v3900
    %3964 = vmatprep.subr.bf16.mxu0 %v3904
    %3965 = vmatpush1.bf16.msra.mxu0 %v3903
    %3966 = vmatprep.subr.bf16.mxu0 %v3907
    %3967 = vmatpush1.bf16.msra.mxu0 %v3906
    %3968 = vmatprep.subr.bf16.mxu0 %v3910
    %3969 = vmatpush1.bf16.msra.mxu0 %v3909
    %3970 = vmatprep.subr.bf16.mxu0 %v3913
    %3971 = vmatpush1.bf16.msra.mxu0 %v3912
    %3972 = vmatprep.subr.bf16.mxu0 %v3916
    %3973 = vmatpush1.bf16.msra.mxu0 %v3915
    %3974 = vmatprep.subr.bf16.mxu0 %v3919
    %3975 = vmatpush1.bf16.msra.mxu0 %v3918
    %3976 = vmatprep.subr.bf16.mxu0 %v3922
    %3977 = vmatpush1.bf16.msra.mxu0 %v3921
    %3978 = vmatprep.subr.bf16.mxu0 %v3925
    %3979 = vmatpush1.bf16.msra.mxu0 %v3924
    %3980 = vmatprep.subr.bf16.mxu0 0
    %3981 = vmatpush1.bf16.msra.mxu0 0
    %3982 = vmatprep.subr.bf16.mxu0 0
    %3983 = vmatpush1.bf16.msra.mxu0 0
    %3984 = vmatprep.subr.bf16.mxu0 0
    %3985 = vmatpush1.bf16.msra.mxu0 0
    %3986 = vmatprep.subr.bf16.mxu0 0
    %3987 = vmatpush1.bf16.msra.mxu0 0
    %3988 = vmatprep.subr.bf16.mxu0 0
    %3989 = vmatpush1.bf16.msra.mxu0 0
    %3990 = vmatprep.subr.bf16.mxu0 0
    %3991 = vmatpush1.bf16.msra.mxu0 0
    %3992 = vmatprep.mubr.bf16.mxu0 %v3958
    %3993 = vmatmul.mubr.bf16.gmra.mrb[0].mxu0 %v3755
    %v3994 = vpop.f32.mrb[0].mxu0
    %v3995 = vadd.f32 0.0, %v3994
    %v3996 = vpop.f32.mrb[0].mxu0
    %v3997 = vadd.f32 0.0, %v3996
    %v3998 = vpop.f32.mrb[0].mxu0
    %v3999 = vpop.f32.mrb[0].mxu0
    %4000 = vdwg.mxu0
    %4001 = vmatprep.subr.bf16.mxu0 0
    %4002 = vmatpush1.bf16.msra.mxu0 %v3899
    %4003 = vmatprep.subr.bf16.mxu0 0
    %4004 = vmatpush1.bf16.msra.mxu0 %v3902
    %4005 = vmatprep.subr.bf16.mxu0 0
    %4006 = vmatpush1.bf16.msra.mxu0 %v3905
    %4007 = vmatprep.subr.bf16.mxu0 0
    %4008 = vmatpush1.bf16.msra.mxu0 %v3908
    %4009 = vmatprep.subr.bf16.mxu0 0
    %4010 = vmatpush1.bf16.msra.mxu0 %v3911
    %4011 = vmatprep.subr.bf16.mxu0 0
    %4012 = vmatpush1.bf16.msra.mxu0 %v3914
    %4013 = vmatprep.subr.bf16.mxu0 0
    %4014 = vmatpush1.bf16.msra.mxu0 %v3917
    %4015 = vmatprep.subr.bf16.mxu0 0
    %4016 = vmatpush1.bf16.msra.mxu0 %v3920
    %4017 = vmatprep.subr.bf16.mxu0 0
    %4018 = vmatpush1.bf16.msra.mxu0 %v3923
    %4019 = vmatprep.subr.bf16.mxu0 0
    %4020 = vmatpush1.bf16.msra.mxu0 %v3926
    %4021 = vmatprep.subr.bf16.mxu0 0
    %4022 = vmatpush1.bf16.msra.mxu0 0
    %4023 = vmatprep.subr.bf16.mxu0 0
    %4024 = vmatpush1.bf16.msra.mxu0 0
    %4025 = vmatprep.subr.bf16.mxu0 0
    %4026 = vmatpush1.bf16.msra.mxu0 0
    %4027 = vmatprep.subr.bf16.mxu0 0
    %4028 = vmatpush1.bf16.msra.mxu0 0
    %4029 = vmatprep.subr.bf16.mxu0 0
    %4030 = vmatpush1.bf16.msra.mxu0 0
    %4031 = vmatprep.subr.bf16.mxu0 0
    %4032 = vmatpush1.bf16.msra.mxu0 0
    %4033 = vmatprep.mubr.bf16.mxu0 %v3958
    %4034 = vmatmul.mubr.bf16.gmra.mrb[0].mxu0 %v3755
    %v4035 = vpop.f32.mrb[0].mxu0
    %v4036 = vadd.f32 0.0, %v4035
    %v4037 = vpop.f32.mrb[0].mxu0
    %v4038 = vpop.f32.mrb[0].mxu0
    %v4039 = vpop.f32.mrb[0].mxu0
    %4040 = vdwg.mxu0
    %v4041 = vadd.f32 %v3707, %v3995
    %v4042 = vadd.f32 %v3709, %v3997
    %v4043 = vadd.f32 %v3748, %v4036
    %s4044 = scalar_lea.vmem %s0, 224
    %v4045 = vld [vmem:[%s4044] sm:$0xff]
    %v4046 = vld [vmem:[%s4044 + $0x8] sm:$0xff]
    %v4047 = vpack.c.bf16 %v4045, %v4045
    %v4048 = vpack.c.bf16 %v4046, %v4046
    %v4049 = vld [vmem:[%s958] sm:$0xff]
    %v4050 = vld [vmem:[%s958 + $0x8] sm:$0xf]
    %v4051 = vld [vmem:[%s958 + $0xc] sm:$0xff]
    %v4052 = vld [vmem:[%s958 + $0x14] sm:$0xf]
    %v4053 = vld [vmem:[%s958 + $0x18] sm:$0xff]
    %v4054 = vld [vmem:[%s958 + $0x20] sm:$0xf]
    %v4055 = vld [vmem:[%s958 + $0x24] sm:$0xff]
    %v4056 = vld [vmem:[%s958 + $0x2c] sm:$0xf]
    %v4057 = vld [vmem:[%s958 + $0x30] sm:$0xff]
    %v4058 = vld [vmem:[%s958 + $0x38] sm:$0xf]
    %v4059 = vld [vmem:[%s958 + $0x3c] sm:$0xff]
    %v4060 = vld [vmem:[%s958 + $0x44] sm:$0xf]
    %v4061 = vld [vmem:[%s958 + $0x48] sm:$0xff]
    %v4062 = vld [vmem:[%s958 + $0x50] sm:$0xf]
    %v4063 = vld [vmem:[%s958 + $0x54] sm:$0xff]
    %v4064 = vld [vmem:[%s958 + $0x5c] sm:$0xf]
    %v4065 = vld [vmem:[%s958 + $0x60] sm:$0xff]
    %v4066 = vld [vmem:[%s958 + $0x68] sm:$0xf]
    %v4067 = vld [vmem:[%s958 + $0x6c] sm:$0xff]
    %v4068 = vld [vmem:[%s958 + $0x74] sm:$0xf]
    %v4069 = vld [vmem:[%s958 + $0x78] sm:$0xff]
    %v4070 = vld [vmem:[%s958 + $0x80] sm:$0xf]
    %v4071 = vld [vmem:[%s958 + $0x84] sm:$0xff]
    %v4072 = vld [vmem:[%s958 + $0x8c] sm:$0xf]
    %v4073 = vld [vmem:[%s958 + $0x90] sm:$0xff]
    %v4074 = vld [vmem:[%s958 + $0x98] sm:$0xf]
    %v4075 = vld [vmem:[%s958 + $0x9c] sm:$0xff]
    %v4076 = vld [vmem:[%s958 + $0xa4] sm:$0xf]
    %v4077 = vld [vmem:[%s958 + $0xa8] sm:$0xff]
    %v4078 = vld [vmem:[%s958 + $0xb0] sm:$0xf]
    %v4079 = vld [vmem:[%s958 + $0xb4] sm:$0xff]
    %v4080 = vld [vmem:[%s958 + $0xbc] sm:$0xf]
    %v4081 = vld [vmem:[%s958 + $0xc0] sm:$0xff]
    %v4082 = vld [vmem:[%s958 + $0xc8] sm:$0xf]
    %v4083 = vld [vmem:[%s958 + $0xcc] sm:$0xff]
    %v4084 = vld [vmem:[%s958 + $0xd4] sm:$0xf]
    %v4085 = vld [vmem:[%s958 + $0xd8] sm:$0xff]
    %v4086 = vld [vmem:[%s958 + $0xe0] sm:$0xf]
    %v4087 = vld [vmem:[%s958 + $0xe4] sm:$0xff]
    %v4088 = vld [vmem:[%s958 + $0xec] sm:$0xf]
    %v4129 = vunpack.c.l.b16 %v4049
    %v4130 = vunpack.c.h.b16 %v4049
    %v4131 = vunpack.c.l.b16 %v4050
    %v4132 = vunpack.c.l.b16 %v4051
    %v4133 = vunpack.c.h.b16 %v4051
    %v4134 = vunpack.c.l.b16 %v4052
    %v4135 = vunpack.c.l.b16 %v4053
    %v4136 = vunpack.c.h.b16 %v4053
    %v4137 = vunpack.c.l.b16 %v4054
    %v4138 = vunpack.c.l.b16 %v4055
    %v4139 = vunpack.c.h.b16 %v4055
    %v4140 = vunpack.c.l.b16 %v4056
    %v4141 = vunpack.c.l.b16 %v4057
    %v4142 = vunpack.c.h.b16 %v4057
    %v4143 = vunpack.c.l.b16 %v4058
    %v4144 = vunpack.c.l.b16 %v4059
    %v4145 = vunpack.c.h.b16 %v4059
    %v4146 = vunpack.c.l.b16 %v4060
    %v4147 = vunpack.c.l.b16 %v4061
    %v4148 = vunpack.c.h.b16 %v4061
    %v4149 = vunpack.c.l.b16 %v4062
    %v4150 = vunpack.c.l.b16 %v4063
    %v4151 = vunpack.c.h.b16 %v4063
    %v4152 = vunpack.c.l.b16 %v4064
    %v4153 = vunpack.c.l.b16 %v4065
    %v4154 = vunpack.c.h.b16 %v4065
    %v4155 = vunpack.c.l.b16 %v4066
    %v4156 = vunpack.c.l.b16 %v4067
    %v4157 = vunpack.c.h.b16 %v4067
    %v4158 = vunpack.c.l.b16 %v4068
    %v4159 = vunpack.c.l.b16 %v4069
    %v4160 = vunpack.c.h.b16 %v4069
    %v4161 = vunpack.c.l.b16 %v4070
    %v4162 = vunpack.c.l.b16 %v4071
    %v4163 = vunpack.c.h.b16 %v4071
    %v4164 = vunpack.c.l.b16 %v4072
    %v4165 = vunpack.c.l.b16 %v4073
    %v4166 = vunpack.c.h.b16 %v4073
    %v4167 = vunpack.c.l.b16 %v4074
    %v4168 = vunpack.c.l.b16 %v4075
    %v4169 = vunpack.c.h.b16 %v4075
    %v4170 = vunpack.c.l.b16 %v4076
    %v4171 = vunpack.c.l.b16 %v4077
    %v4172 = vunpack.c.h.b16 %v4077
    %v4173 = vunpack.c.l.b16 %v4078
    %v4174 = vunpack.c.l.b16 %v4079
    %v4175 = vunpack.c.h.b16 %v4079
    %v4176 = vunpack.c.l.b16 %v4080
    %v4177 = vunpack.c.l.b16 %v4081
    %v4178 = vunpack.c.h.b16 %v4081
    %v4179 = vunpack.c.l.b16 %v4082
    %v4180 = vunpack.c.l.b16 %v4083
    %v4181 = vunpack.c.h.b16 %v4083
    %v4182 = vunpack.c.l.b16 %v4084
    %v4183 = vunpack.c.l.b16 %v4085
    %v4184 = vunpack.c.h.b16 %v4085
    %v4185 = vunpack.c.l.b16 %v4086
    %v4186 = vunpack.c.l.b16 %v4087
    %v4187 = vunpack.c.h.b16 %v4087
    %v4188 = vunpack.c.l.b16 %v4088
    %v4189 = vpack.c.b16 %v4132, %v4129
    %v4190 = vpack.c.b16 %v4133, %v4130
    %v4191 = vpack.c.b16 %v4134, %v4131
    %v4192 = vpack.c.b16 %v4138, %v4135
    %v4193 = vpack.c.b16 %v4139, %v4136
    %v4194 = vpack.c.b16 %v4140, %v4137
    %v4195 = vpack.c.b16 %v4144, %v4141
    %v4196 = vpack.c.b16 %v4145, %v4142
    %v4197 = vpack.c.b16 %v4146, %v4143
    %v4198 = vpack.c.b16 %v4150, %v4147
    %v4199 = vpack.c.b16 %v4151, %v4148
    %v4200 = vpack.c.b16 %v4152, %v4149
    %v4201 = vpack.c.b16 %v4156, %v4153
    %v4202 = vpack.c.b16 %v4157, %v4154
    %v4203 = vpack.c.b16 %v4158, %v4155
    %v4204 = vpack.c.b16 %v4162, %v4159
    %v4205 = vpack.c.b16 %v4163, %v4160
    %v4206 = vpack.c.b16 %v4164, %v4161
    %v4207 = vpack.c.b16 %v4168, %v4165
    %v4208 = vpack.c.b16 %v4169, %v4166
    %v4209 = vpack.c.b16 %v4170, %v4167
    %v4210 = vpack.c.b16 %v4174, %v4171
    %v4211 = vpack.c.b16 %v4175, %v4172
    %v4212 = vpack.c.b16 %v4176, %v4173
    %v4213 = vpack.c.b16 %v4180, %v4177
    %v4214 = vpack.c.b16 %v4181, %v4178
    %v4215 = vpack.c.b16 %v4182, %v4179
    %v4216 = vpack.c.b16 %v4186, %v4183
    %v4217 = vpack.c.b16 %v4187, %v4184
    %v4218 = vpack.c.b16 %v4188, %v4185
    %v4250 = vsel %vm315, %v4048, 0
    %4252 = vmatprep.subr.bf16.mxu0 %v4190
    %4253 = vmatpush1.bf16.msra.mxu0 %v4189
    %4254 = vmatprep.subr.bf16.mxu0 %v4193
    %4255 = vmatpush1.bf16.msra.mxu0 %v4192
    %4256 = vmatprep.subr.bf16.mxu0 %v4196
    %4257 = vmatpush1.bf16.msra.mxu0 %v4195
    %4258 = vmatprep.subr.bf16.mxu0 %v4199
    %4259 = vmatpush1.bf16.msra.mxu0 %v4198
    %4260 = vmatprep.subr.bf16.mxu0 %v4202
    %4261 = vmatpush1.bf16.msra.mxu0 %v4201
    %4262 = vmatprep.subr.bf16.mxu0 %v4205
    %4263 = vmatpush1.bf16.msra.mxu0 %v4204
    %4264 = vmatprep.subr.bf16.mxu0 %v4208
    %4265 = vmatpush1.bf16.msra.mxu0 %v4207
    %4266 = vmatprep.subr.bf16.mxu0 %v4211
    %4267 = vmatpush1.bf16.msra.mxu0 %v4210
    %4268 = vmatprep.subr.bf16.mxu0 %v4214
    %4269 = vmatpush1.bf16.msra.mxu0 %v4213
    %4270 = vmatprep.subr.bf16.mxu0 %v4217
    %4271 = vmatpush1.bf16.msra.mxu0 %v4216
    %4272 = vmatprep.subr.bf16.mxu0 0
    %4273 = vmatpush1.bf16.msra.mxu0 0
    %4274 = vmatprep.subr.bf16.mxu0 0
    %4275 = vmatpush1.bf16.msra.mxu0 0
    %4276 = vmatprep.subr.bf16.mxu0 0
    %4277 = vmatpush1.bf16.msra.mxu0 0
    %4278 = vmatprep.subr.bf16.mxu0 0
    %4279 = vmatpush1.bf16.msra.mxu0 0
    %4280 = vmatprep.subr.bf16.mxu0 0
    %4281 = vmatpush1.bf16.msra.mxu0 0
    %4282 = vmatprep.subr.bf16.mxu0 0
    %4283 = vmatpush1.bf16.msra.mxu0 0
    %4284 = vmatprep.mubr.bf16.mxu0 %v4250
    %4285 = vmatmul.mubr.bf16.gmra.mrb[0].mxu0 %v4047
    %v4286 = vpop.f32.mrb[0].mxu0
    %v4287 = vadd.f32 0.0, %v4286
    %v4288 = vpop.f32.mrb[0].mxu0
    %v4289 = vadd.f32 0.0, %v4288
    %v4290 = vpop.f32.mrb[0].mxu0
    %v4291 = vpop.f32.mrb[0].mxu0
    %4292 = vdwg.mxu0
    %4293 = vmatprep.subr.bf16.mxu0 0
    %4294 = vmatpush1.bf16.msra.mxu0 %v4191
    %4295 = vmatprep.subr.bf16.mxu0 0
    %4296 = vmatpush1.bf16.msra.mxu0 %v4194
    %4297 = vmatprep.subr.bf16.mxu0 0
    %4298 = vmatpush1.bf16.msra.mxu0 %v4197
    %4299 = vmatprep.subr.bf16.mxu0 0
    %4300 = vmatpush1.bf16.msra.mxu0 %v4200
    %4301 = vmatprep.subr.bf16.mxu0 0
    %4302 = vmatpush1.bf16.msra.mxu0 %v4203
    %4303 = vmatprep.subr.bf16.mxu0 0
    %4304 = vmatpush1.bf16.msra.mxu0 %v4206
    %4305 = vmatprep.subr.bf16.mxu0 0
    %4306 = vmatpush1.bf16.msra.mxu0 %v4209
    %4307 = vmatprep.subr.bf16.mxu0 0
    %4308 = vmatpush1.bf16.msra.mxu0 %v4212
    %4309 = vmatprep.subr.bf16.mxu0 0
    %4310 = vmatpush1.bf16.msra.mxu0 %v4215
    %4311 = vmatprep.subr.bf16.mxu0 0
    %4312 = vmatpush1.bf16.msra.mxu0 %v4218
    %4313 = vmatprep.subr.bf16.mxu0 0
    %4314 = vmatpush1.bf16.msra.mxu0 0
    %4315 = vmatprep.subr.bf16.mxu0 0
    %4316 = vmatpush1.bf16.msra.mxu0 0
    %4317 = vmatprep.subr.bf16.mxu0 0
    %4318 = vmatpush1.bf16.msra.mxu0 0
    %4319 = vmatprep.subr.bf16.mxu0 0
    %4320 = vmatpush1.bf16.msra.mxu0 0
    %4321 = vmatprep.subr.bf16.mxu0 0
    %4322 = vmatpush1.bf16.msra.mxu0 0
    %4323 = vmatprep.subr.bf16.mxu0 0
    %4324 = vmatpush1.bf16.msra.mxu0 0
    %4325 = vmatprep.mubr.bf16.mxu0 %v4250
    %4326 = vmatmul.mubr.bf16.gmra.mrb[0].mxu0 %v4047
    %v4327 = vpop.f32.mrb[0].mxu0
    %v4328 = vadd.f32 0.0, %v4327
    %v4329 = vpop.f32.mrb[0].mxu0
    %v4330 = vpop.f32.mrb[0].mxu0
    %v4331 = vpop.f32.mrb[0].mxu0
    %4332 = vdwg.mxu0
    %v4333 = vadd.f32 %v4041, %v4287
    %v4334 = vadd.f32 %v4042, %v4289
    %v4335 = vadd.f32 %v4043, %v4328
    %v4336 = vld [vmem:[%s0] sm:$0xfc]
    %v4337 = vld [vmem:[%s0 + $0x8] sm:$0xfc]
    %v4338 = vld [vmem:[%s0 + $0x10] sm:$0x3]
    %v4339 = vld [vmem:[%s0 + $0x18] sm:$0x3]
    %v4340 = vpack.c.bf16 %v4338, %v4336
    %v4341 = vpack.c.bf16 %v4339, %v4337
    %v4342 = vld [vmem:[%s1259] sm:$0xff]
    %v4343 = vld [vmem:[%s1259 + $0x8] sm:$0xf]
    %v4344 = vld [vmem:[%s1259 + $0xc] sm:$0xff]
    %v4345 = vld [vmem:[%s1259 + $0x14] sm:$0xf]
    %v4346 = vld [vmem:[%s1259 + $0x18] sm:$0xff]
    %v4347 = vld [vmem:[%s1259 + $0x20] sm:$0xf]
    %v4348 = vld [vmem:[%s1259 + $0x24] sm:$0xff]
    %v4349 = vld [vmem:[%s1259 + $0x2c] sm:$0xf]
    %v4350 = vld [vmem:[%s1259 + $0x30] sm:$0xff]
    %v4351 = vld [vmem:[%s1259 + $0x38] sm:$0xf]
    %v4352 = vld [vmem:[%s1259 + $0x3c] sm:$0xff]
    %v4353 = vld [vmem:[%s1259 + $0x44] sm:$0xf]
    %v4354 = vld [vmem:[%s1259 + $0x48] sm:$0xff]
    %v4355 = vld [vmem:[%s1259 + $0x50] sm:$0xf]
    %v4356 = vld [vmem:[%s1259 + $0x54] sm:$0xff]
    %v4357 = vld [vmem:[%s1259 + $0x5c] sm:$0xf]
    %v4358 = vld [vmem:[%s1259 + $0x60] sm:$0xff]
    %v4359 = vld [vmem:[%s1259 + $0x68] sm:$0xf]
    %v4360 = vld [vmem:[%s1259 + $0x6c] sm:$0xff]
    %v4361 = vld [vmem:[%s1259 + $0x74] sm:$0xf]
    %v4362 = vld [vmem:[%s1259 + $0x78] sm:$0xff]
    %v4363 = vld [vmem:[%s1259 + $0x80] sm:$0xf]
    %v4364 = vld [vmem:[%s1259 + $0x84] sm:$0xff]
    %v4365 = vld [vmem:[%s1259 + $0x8c] sm:$0xf]
    %v4366 = vld [vmem:[%s1259 + $0x90] sm:$0xff]
    %v4367 = vld [vmem:[%s1259 + $0x98] sm:$0xf]
    %v4368 = vld [vmem:[%s1259 + $0x9c] sm:$0xff]
    %v4369 = vld [vmem:[%s1259 + $0xa4] sm:$0xf]
    %v4370 = vld [vmem:[%s1259 + $0xa8] sm:$0xff]
    %v4371 = vld [vmem:[%s1259 + $0xb0] sm:$0xf]
    %v4372 = vld [vmem:[%s1259 + $0xb4] sm:$0xff]
    %v4373 = vld [vmem:[%s1259 + $0xbc] sm:$0xf]
    %v4374 = vld [vmem:[%s1259 + $0xc0] sm:$0xff]
    %v4375 = vld [vmem:[%s1259 + $0xc8] sm:$0xf]
    %v4376 = vld [vmem:[%s1259 + $0xcc] sm:$0xff]
    %v4377 = vld [vmem:[%s1259 + $0xd4] sm:$0xf]
    %v4378 = vld [vmem:[%s1259 + $0xd8] sm:$0xff]
    %v4379 = vld [vmem:[%s1259 + $0xe0] sm:$0xf]
    %v4380 = vld [vmem:[%s1259 + $0xe4] sm:$0xff]
    %v4381 = vld [vmem:[%s1259 + $0xec] sm:$0xf]
    %v4384 = vrot.slane %v4340, 1
    %v4385 = vrot.slane %v4341, 1
    %v4427 = vunpack.c.l.b16 %v4342
    %v4428 = vunpack.c.h.b16 %v4342
    %v4429 = vunpack.c.l.b16 %v4343
    %v4430 = vunpack.c.l.b16 %v4344
    %v4431 = vunpack.c.h.b16 %v4344
    %v4432 = vunpack.c.l.b16 %v4345
    %v4433 = vunpack.c.l.b16 %v4346
    %v4434 = vunpack.c.h.b16 %v4346
    %v4435 = vunpack.c.l.b16 %v4347
    %v4436 = vunpack.c.l.b16 %v4348
    %v4437 = vunpack.c.h.b16 %v4348
    %v4438 = vunpack.c.l.b16 %v4349
    %v4439 = vunpack.c.l.b16 %v4350
    %v4440 = vunpack.c.h.b16 %v4350
    %v4441 = vunpack.c.l.b16 %v4351
    %v4442 = vunpack.c.l.b16 %v4352
    %v4443 = vunpack.c.h.b16 %v4352
    %v4444 = vunpack.c.l.b16 %v4353
    %v4445 = vunpack.c.l.b16 %v4354
    %v4446 = vunpack.c.h.b16 %v4354
    %v4447 = vunpack.c.l.b16 %v4355
    %v4448 = vunpack.c.l.b16 %v4356
    %v4449 = vunpack.c.h.b16 %v4356
    %v4450 = vunpack.c.l.b16 %v4357
    %v4451 = vunpack.c.l.b16 %v4358
    %v4452 = vunpack.c.h.b16 %v4358
    %v4453 = vunpack.c.l.b16 %v4359
    %v4454 = vunpack.c.l.b16 %v4360
    %v4455 = vunpack.c.h.b16 %v4360
    %v4456 = vunpack.c.l.b16 %v4361
    %v4457 = vunpack.c.l.b16 %v4362
    %v4458 = vunpack.c.h.b16 %v4362
    %v4459 = vunpack.c.l.b16 %v4363
    %v4460 = vunpack.c.l.b16 %v4364
    %v4461 = vunpack.c.h.b16 %v4364
    %v4462 = vunpack.c.l.b16 %v4365
    %v4463 = vunpack.c.l.b16 %v4366
    %v4464 = vunpack.c.h.b16 %v4366
    %v4465 = vunpack.c.l.b16 %v4367
    %v4466 = vunpack.c.l.b16 %v4368
    %v4467 = vunpack.c.h.b16 %v4368
    %v4468 = vunpack.c.l.b16 %v4369
    %v4469 = vunpack.c.l.b16 %v4370
    %v4470 = vunpack.c.h.b16 %v4370
    %v4471 = vunpack.c.l.b16 %v4371
    %v4472 = vunpack.c.l.b16 %v4372
    %v4473 = vunpack.c.h.b16 %v4372
    %v4474 = vunpack.c.l.b16 %v4373
    %v4475 = vunpack.c.l.b16 %v4374
    %v4476 = vunpack.c.h.b16 %v4374
    %v4477 = vunpack.c.l.b16 %v4375
    %v4478 = vunpack.c.l.b16 %v4376
    %v4479 = vunpack.c.h.b16 %v4376
    %v4480 = vunpack.c.l.b16 %v4377
    %v4481 = vunpack.c.l.b16 %v4378
    %v4482 = vunpack.c.h.b16 %v4378
    %v4483 = vunpack.c.l.b16 %v4379
    %v4484 = vunpack.c.l.b16 %v4380
    %v4485 = vunpack.c.h.b16 %v4380
    %v4486 = vunpack.c.l.b16 %v4381
    %v4487 = vpack.c.b16 %v4430, %v4427
    %v4488 = vpack.c.b16 %v4431, %v4428
    %v4489 = vpack.c.b16 %v4432, %v4429
    %v4490 = vpack.c.b16 %v4436, %v4433
    %v4491 = vpack.c.b16 %v4437, %v4434
    %v4492 = vpack.c.b16 %v4438, %v4435
    %v4493 = vpack.c.b16 %v4442, %v4439
    %v4494 = vpack.c.b16 %v4443, %v4440
    %v4495 = vpack.c.b16 %v4444, %v4441
    %v4496 = vpack.c.b16 %v4448, %v4445
    %v4497 = vpack.c.b16 %v4449, %v4446
    %v4498 = vpack.c.b16 %v4450, %v4447
    %v4499 = vpack.c.b16 %v4454, %v4451
    %v4500 = vpack.c.b16 %v4455, %v4452
    %v4501 = vpack.c.b16 %v4456, %v4453
    %v4502 = vpack.c.b16 %v4460, %v4457
    %v4503 = vpack.c.b16 %v4461, %v4458
    %v4504 = vpack.c.b16 %v4462, %v4459
    %v4505 = vpack.c.b16 %v4466, %v4463
    %v4506 = vpack.c.b16 %v4467, %v4464
    %v4507 = vpack.c.b16 %v4468, %v4465
    %v4508 = vpack.c.b16 %v4472, %v4469
    %v4509 = vpack.c.b16 %v4473, %v4470
    %v4510 = vpack.c.b16 %v4474, %v4471
    %v4511 = vpack.c.b16 %v4478, %v4475
    %v4512 = vpack.c.b16 %v4479, %v4476
    %v4513 = vpack.c.b16 %v4480, %v4477
    %v4514 = vpack.c.b16 %v4484, %v4481
    %v4515 = vpack.c.b16 %v4485, %v4482
    %v4516 = vpack.c.b16 %v4486, %v4483
    %v4548 = vsel %vm315, %v4385, 0
    %4550 = vmatprep.subr.bf16.mxu0 %v4488
    %4551 = vmatpush1.bf16.msra.mxu0 %v4487
    %4552 = vmatprep.subr.bf16.mxu0 %v4491
    %4553 = vmatpush1.bf16.msra.mxu0 %v4490
    %4554 = vmatprep.subr.bf16.mxu0 %v4494
    %4555 = vmatpush1.bf16.msra.mxu0 %v4493
    %4556 = vmatprep.subr.bf16.mxu0 %v4497
    %4557 = vmatpush1.bf16.msra.mxu0 %v4496
    %4558 = vmatprep.subr.bf16.mxu0 %v4500
    %4559 = vmatpush1.bf16.msra.mxu0 %v4499
    %4560 = vmatprep.subr.bf16.mxu0 %v4503
    %4561 = vmatpush1.bf16.msra.mxu0 %v4502
    %4562 = vmatprep.subr.bf16.mxu0 %v4506
    %4563 = vmatpush1.bf16.msra.mxu0 %v4505
    %4564 = vmatprep.subr.bf16.mxu0 %v4509
    %4565 = vmatpush1.bf16.msra.mxu0 %v4508
    %4566 = vmatprep.subr.bf16.mxu0 %v4512
    %4567 = vmatpush1.bf16.msra.mxu0 %v4511
    %4568 = vmatprep.subr.bf16.mxu0 %v4515
    %4569 = vmatpush1.bf16.msra.mxu0 %v4514
    %4570 = vmatprep.subr.bf16.mxu0 0
    %4571 = vmatpush1.bf16.msra.mxu0 0
    %4572 = vmatprep.subr.bf16.mxu0 0
    %4573 = vmatpush1.bf16.msra.mxu0 0
    %4574 = vmatprep.subr.bf16.mxu0 0
    %4575 = vmatpush1.bf16.msra.mxu0 0
    %4576 = vmatprep.subr.bf16.mxu0 0
    %4577 = vmatpush1.bf16.msra.mxu0 0
    %4578 = vmatprep.subr.bf16.mxu0 0
    %4579 = vmatpush1.bf16.msra.mxu0 0
    %4580 = vmatprep.subr.bf16.mxu0 0
    %4581 = vmatpush1.bf16.msra.mxu0 0
    %4582 = vmatprep.mubr.bf16.mxu0 %v4548
    %4583 = vmatmul.mubr.bf16.gmra.mrb[0].mxu0 %v4384
    %v4584 = vpop.f32.mrb[0].mxu0
    %v4585 = vadd.f32 0.0, %v4584
    %v4586 = vpop.f32.mrb[0].mxu0
    %v4587 = vadd.f32 0.0, %v4586
    %v4588 = vpop.f32.mrb[0].mxu0
    %v4589 = vpop.f32.mrb[0].mxu0
    %4590 = vdwg.mxu0
    %4591 = vmatprep.subr.bf16.mxu0 0
    %4592 = vmatpush1.bf16.msra.mxu0 %v4489
    %4593 = vmatprep.subr.bf16.mxu0 0
    %4594 = vmatpush1.bf16.msra.mxu0 %v4492
    %4595 = vmatprep.subr.bf16.mxu0 0
    %4596 = vmatpush1.bf16.msra.mxu0 %v4495
    %4597 = vmatprep.subr.bf16.mxu0 0
    %4598 = vmatpush1.bf16.msra.mxu0 %v4498
    %4599 = vmatprep.subr.bf16.mxu0 0
    %4600 = vmatpush1.bf16.msra.mxu0 %v4501
    %4601 = vmatprep.subr.bf16.mxu0 0
    %4602 = vmatpush1.bf16.msra.mxu0 %v4504
    %4603 = vmatprep.subr.bf16.mxu0 0
    %4604 = vmatpush1.bf16.msra.mxu0 %v4507
    %4605 = vmatprep.subr.bf16.mxu0 0
    %4606 = vmatpush1.bf16.msra.mxu0 %v4510
    %4607 = vmatprep.subr.bf16.mxu0 0
    %4608 = vmatpush1.bf16.msra.mxu0 %v4513
    %4609 = vmatprep.subr.bf16.mxu0 0
    %4610 = vmatpush1.bf16.msra.mxu0 %v4516
    %4611 = vmatprep.subr.bf16.mxu0 0
    %4612 = vmatpush1.bf16.msra.mxu0 0
    %4613 = vmatprep.subr.bf16.mxu0 0
    %4614 = vmatpush1.bf16.msra.mxu0 0
    %4615 = vmatprep.subr.bf16.mxu0 0
    %4616 = vmatpush1.bf16.msra.mxu0 0
    %4617 = vmatprep.subr.bf16.mxu0 0
    %4618 = vmatpush1.bf16.msra.mxu0 0
    %4619 = vmatprep.subr.bf16.mxu0 0
    %4620 = vmatpush1.bf16.msra.mxu0 0
    %4621 = vmatprep.subr.bf16.mxu0 0
    %4622 = vmatpush1.bf16.msra.mxu0 0
    %4623 = vmatprep.mubr.bf16.mxu0 %v4548
    %4624 = vmatmul.mubr.bf16.gmra.mrb[0].mxu0 %v4384
    %v4625 = vpop.f32.mrb[0].mxu0
    %v4626 = vadd.f32 0.0, %v4625
    %v4627 = vpop.f32.mrb[0].mxu0
    %v4628 = vpop.f32.mrb[0].mxu0
    %v4629 = vpop.f32.mrb[0].mxu0
    %4630 = vdwg.mxu0
    %v4631 = vadd.f32 %v4333, %v4585
    %v4632 = vadd.f32 %v4334, %v4587
    %v4633 = vadd.f32 %v4335, %v4626
    %s4634 = scalar_lea.vmem [#allocation2], 96
    %4635 = vst [vmem:[%s4634] sm:$0xff] %v4631
    %4636 = vst [vmem:[%s4634 + $0x8] sm:$0xff] %v4632
    %4637 = vst.msk [vmem:[%s4634 + $0x10] sm:$0xff] %vm315, %v4633
    %v4638 = vrot.slane %v4631, 4
    %v4639 = vadd.f32 %v4631, %v4638
    %v4640 = vrot.slane %v4639, 2
    %v4641 = vadd.f32 %v4639, %v4640
    %v4642 = vrot.slane %v4641, 1
    %v4643 = vadd.f32 %v4641, %v4642
    %v4644 = vrot.slane %v4632, 4
    %v4645 = vadd.f32 %v4632, %v4644
    %v4646 = vrot.slane %v4645, 2
    %v4647 = vadd.f32 %v4645, %v4646
    %v4648 = vrot.slane %v4647, 1
    %v4649 = vadd.f32 %v4647, %v4648
    %v4650 = vsel %vm315, %v4633, 0.0
    %v4651 = vrot.slane %v4650, 4
    %v4652 = vadd.f32 %v4650, %v4651
    %v4653 = vrot.slane %v4652, 2
    %v4654 = vadd.f32 %v4652, %v4653
    %v4655 = vrot.slane %v4654, 1
    %v4656 = vadd.f32 %v4654, %v4655
    %v4657 = vadd.f32 %v3140, %v4643
    %v4658 = vadd.f32 %v3141, %v4649
    %v4659 = vadd.f32 %v3142, %v4656
    %v4660 = vmul.f32 %v4631, %v4631
    %v4661 = vmul.f32 %v4632, %v4632
    %v4662 = vmul.f32 %v4633, %v4633
    %v4663 = vrot.slane %v4660, 4
    %v4664 = vadd.f32 %v4660, %v4663
    %v4665 = vrot.slane %v4664, 2
    %v4666 = vadd.f32 %v4664, %v4665
    %v4667 = vrot.slane %v4666, 1
    %v4668 = vadd.f32 %v4666, %v4667
    %v4669 = vrot.slane %v4661, 4
    %v4670 = vadd.f32 %v4661, %v4669
    %v4671 = vrot.slane %v4670, 2
    %v4672 = vadd.f32 %v4670, %v4671
    %v4673 = vrot.slane %v4672, 1
    %v4674 = vadd.f32 %v4672, %v4673
    %v4675 = vsel %vm315, %v4662, 0.0
    %v4676 = vrot.slane %v4675, 4
    %v4677 = vadd.f32 %v4675, %v4676
    %v4678 = vrot.slane %v4677, 2
    %v4679 = vadd.f32 %v4677, %v4678
    %v4680 = vrot.slane %v4679, 1
    %v4681 = vadd.f32 %v4679, %v4680
    %v4682 = vadd.f32 %v3174, %v4668
    %v4683 = vadd.f32 %v3175, %v4674
    %v4684 = vadd.f32 %v3176, %v4681
    %v4685 = vld [vmem:[%s2808] sm:$0xff]
    %v4686 = vld [vmem:[%s2808 + $0x8] sm:$0xff]
    %v4687 = vpack.c.bf16 %v4685, %v4685
    %v4688 = vpack.c.bf16 %v4686, %v4686
    %v4689 = vld [vmem:[%s1] sm:$0xff]
    %v4690 = vld [vmem:[%s1 + $0x8] sm:$0xf]
    %v4691 = vld [vmem:[%s1 + $0xc] sm:$0xff]
    %v4692 = vld [vmem:[%s1 + $0x14] sm:$0xf]
    %v4693 = vld [vmem:[%s1 + $0x18] sm:$0xff]
    %v4694 = vld [vmem:[%s1 + $0x20] sm:$0xf]
    %v4695 = vld [vmem:[%s1 + $0x24] sm:$0xff]
    %v4696 = vld [vmem:[%s1 + $0x2c] sm:$0xf]
    %v4697 = vld [vmem:[%s1 + $0x30] sm:$0xff]
    %v4698 = vld [vmem:[%s1 + $0x38] sm:$0xf]
    %v4699 = vld [vmem:[%s1 + $0x3c] sm:$0xff]
    %v4700 = vld [vmem:[%s1 + $0x44] sm:$0xf]
    %v4701 = vld [vmem:[%s1 + $0x48] sm:$0xff]
    %v4702 = vld [vmem:[%s1 + $0x50] sm:$0xf]
    %v4703 = vld [vmem:[%s1 + $0x54] sm:$0xff]
    %v4704 = vld [vmem:[%s1 + $0x5c] sm:$0xf]
    %v4705 = vld [vmem:[%s1 + $0x60] sm:$0xff]
    %v4706 = vld [vmem:[%s1 + $0x68] sm:$0xf]
    %v4707 = vld [vmem:[%s1 + $0x6c] sm:$0xff]
    %v4708 = vld [vmem:[%s1 + $0x74] sm:$0xf]
    %v4709 = vld [vmem:[%s1 + $0x78] sm:$0xff]
    %v4710 = vld [vmem:[%s1 + $0x80] sm:$0xf]
    %v4711 = vld [vmem:[%s1 + $0x84] sm:$0xff]
    %v4712 = vld [vmem:[%s1 + $0x8c] sm:$0xf]
    %v4713 = vld [vmem:[%s1 + $0x90] sm:$0xff]
    %v4714 = vld [vmem:[%s1 + $0x98] sm:$0xf]
    %v4715 = vld [vmem:[%s1 + $0x9c] sm:$0xff]
    %v4716 = vld [vmem:[%s1 + $0xa4] sm:$0xf]
    %v4717 = vld [vmem:[%s1 + $0xa8] sm:$0xff]
    %v4718 = vld [vmem:[%s1 + $0xb0] sm:$0xf]
    %v4719 = vld [vmem:[%s1 + $0xb4] sm:$0xff]
    %v4720 = vld [vmem:[%s1 + $0xbc] sm:$0xf]
    %v4721 = vld [vmem:[%s1 + $0xc0] sm:$0xff]
    %v4722 = vld [vmem:[%s1 + $0xc8] sm:$0xf]
    %v4723 = vld [vmem:[%s1 + $0xcc] sm:$0xff]
    %v4724 = vld [vmem:[%s1 + $0xd4] sm:$0xf]
    %v4725 = vld [vmem:[%s1 + $0xd8] sm:$0xff]
    %v4726 = vld [vmem:[%s1 + $0xe0] sm:$0xf]
    %v4727 = vld [vmem:[%s1 + $0xe4] sm:$0xff]
    %v4728 = vld [vmem:[%s1 + $0xec] sm:$0xf]
    %v4729 = vld [vmem:[%s4044] sm:$0xff]
    %v4730 = vld [vmem:[%s4044 + $0x8] sm:$0xff]
    %v4731 = vpack.c.bf16 %v4729, %v4729
    %v4732 = vpack.c.bf16 %v4730, %v4730
    %v4733 = vld [vmem:[%s114] sm:$0xff]
    %v4734 = vld [vmem:[%s114 + $0x8] sm:$0xf]
    %v4735 = vld [vmem:[%s114 + $0xc] sm:$0xff]
    %v4736 = vld [vmem:[%s114 + $0x14] sm:$0xf]
    %v4737 = vld [vmem:[%s114 + $0x18] sm:$0xff]
    %v4738 = vld [vmem:[%s114 + $0x20] sm:$0xf]
    %v4739 = vld [vmem:[%s114 + $0x24] sm:$0xff]
    %v4740 = vld [vmem:[%s114 + $0x2c] sm:$0xf]
    %v4741 = vld [vmem:[%s114 + $0x30] sm:$0xff]
    %v4742 = vld [vmem:[%s114 + $0x38] sm:$0xf]
    %v4743 = vld [vmem:[%s114 + $0x3c] sm:$0xff]
    %v4744 = vld [vmem:[%s114 + $0x44] sm:$0xf]
    %v4745 = vld [vmem:[%s114 + $0x48] sm:$0xff]
    %v4746 = vld [vmem:[%s114 + $0x50] sm:$0xf]
    %v4747 = vld [vmem:[%s114 + $0x54] sm:$0xff]
    %v4748 = vld [vmem:[%s114 + $0x5c] sm:$0xf]
    %v4749 = vld [vmem:[%s114 + $0x60] sm:$0xff]
    %v4750 = vld [vmem:[%s114 + $0x68] sm:$0xf]
    %v4751 = vld [vmem:[%s114 + $0x6c] sm:$0xff]
    %v4752 = vld [vmem:[%s114 + $0x74] sm:$0xf]
    %v4753 = vld [vmem:[%s114 + $0x78] sm:$0xff]
    %v4754 = vld [vmem:[%s114 + $0x80] sm:$0xf]
    %v4755 = vld [vmem:[%s114 + $0x84] sm:$0xff]
    %v4756 = vld [vmem:[%s114 + $0x8c] sm:$0xf]
    %v4757 = vld [vmem:[%s114 + $0x90] sm:$0xff]
    %v4758 = vld [vmem:[%s114 + $0x98] sm:$0xf]
    %v4759 = vld [vmem:[%s114 + $0x9c] sm:$0xff]
    %v4760 = vld [vmem:[%s114 + $0xa4] sm:$0xf]
    %v4761 = vld [vmem:[%s114 + $0xa8] sm:$0xff]
    %v4762 = vld [vmem:[%s114 + $0xb0] sm:$0xf]
    %v4763 = vld [vmem:[%s114 + $0xb4] sm:$0xff]
    %v4764 = vld [vmem:[%s114 + $0xbc] sm:$0xf]
    %v4765 = vld [vmem:[%s114 + $0xc0] sm:$0xff]
    %v4766 = vld [vmem:[%s114 + $0xc8] sm:$0xf]
    %v4767 = vld [vmem:[%s114 + $0xcc] sm:$0xff]
    %v4768 = vld [vmem:[%s114 + $0xd4] sm:$0xf]
    %v4769 = vld [vmem:[%s114 + $0xd8] sm:$0xff]
    %v4770 = vld [vmem:[%s114 + $0xe0] sm:$0xf]
    %v4771 = vld [vmem:[%s114 + $0xe4] sm:$0xff]
    %v4772 = vld [vmem:[%s114 + $0xec] sm:$0xf]
    %v4813 = vunpack.c.l.b16 %v4733
    %v4814 = vunpack.c.h.b16 %v4733
    %v4815 = vunpack.c.l.b16 %v4734
    %v4816 = vunpack.c.l.b16 %v4735
    %v4817 = vunpack.c.h.b16 %v4735
    %v4818 = vunpack.c.l.b16 %v4736
    %v4819 = vunpack.c.l.b16 %v4737
    %v4820 = vunpack.c.h.b16 %v4737
    %v4821 = vunpack.c.l.b16 %v4738
    %v4822 = vunpack.c.l.b16 %v4739
    %v4823 = vunpack.c.h.b16 %v4739
    %v4824 = vunpack.c.l.b16 %v4740
    %v4825 = vunpack.c.l.b16 %v4741
    %v4826 = vunpack.c.h.b16 %v4741
    %v4827 = vunpack.c.l.b16 %v4742
    %v4828 = vunpack.c.l.b16 %v4743
    %v4829 = vunpack.c.h.b16 %v4743
    %v4830 = vunpack.c.l.b16 %v4744
    %v4831 = vunpack.c.l.b16 %v4745
    %v4832 = vunpack.c.h.b16 %v4745
    %v4833 = vunpack.c.l.b16 %v4746
    %v4834 = vunpack.c.l.b16 %v4747
    %v4835 = vunpack.c.h.b16 %v4747
    %v4836 = vunpack.c.l.b16 %v4748
    %v4837 = vunpack.c.l.b16 %v4749
    %v4838 = vunpack.c.h.b16 %v4749
    %v4839 = vunpack.c.l.b16 %v4750
    %v4840 = vunpack.c.l.b16 %v4751
    %v4841 = vunpack.c.h.b16 %v4751
    %v4842 = vunpack.c.l.b16 %v4752
    %v4843 = vunpack.c.l.b16 %v4753
    %v4844 = vunpack.c.h.b16 %v4753
    %v4845 = vunpack.c.l.b16 %v4754
    %v4846 = vunpack.c.l.b16 %v4755
    %v4847 = vunpack.c.h.b16 %v4755
    %v4848 = vunpack.c.l.b16 %v4756
    %v4849 = vunpack.c.l.b16 %v4757
    %v4850 = vunpack.c.h.b16 %v4757
    %v4851 = vunpack.c.l.b16 %v4758
    %v4852 = vunpack.c.l.b16 %v4759
    %v4853 = vunpack.c.h.b16 %v4759
    %v4854 = vunpack.c.l.b16 %v4760
    %v4855 = vunpack.c.l.b16 %v4761
    %v4856 = vunpack.c.h.b16 %v4761
    %v4857 = vunpack.c.l.b16 %v4762
    %v4858 = vunpack.c.l.b16 %v4763
    %v4859 = vunpack.c.h.b16 %v4763
    %v4860 = vunpack.c.l.b16 %v4764
    %v4861 = vunpack.c.l.b16 %v4765
    %v4862 = vunpack.c.h.b16 %v4765
    %v4863 = vunpack.c.l.b16 %v4766
    %v4864 = vunpack.c.l.b16 %v4767
    %v4865 = vunpack.c.h.b16 %v4767
    %v4866 = vunpack.c.l.b16 %v4768
    %v4867 = vunpack.c.l.b16 %v4769
    %v4868 = vunpack.c.h.b16 %v4769
    %v4869 = vunpack.c.l.b16 %v4770
    %v4870 = vunpack.c.l.b16 %v4771
    %v4871 = vunpack.c.h.b16 %v4771
    %v4872 = vunpack.c.l.b16 %v4772
    %v4873 = vpack.c.b16 %v4816, %v4813
    %v4874 = vpack.c.b16 %v4817, %v4814
    %v4875 = vpack.c.b16 %v4818, %v4815
    %v4876 = vpack.c.b16 %v4822, %v4819
    %v4877 = vpack.c.b16 %v4823, %v4820
    %v4878 = vpack.c.b16 %v4824, %v4821
    %v4879 = vpack.c.b16 %v4828, %v4825
    %v4880 = vpack.c.b16 %v4829, %v4826
    %v4881 = vpack.c.b16 %v4830, %v4827
    %v4882 = vpack.c.b16 %v4834, %v4831
    %v4883 = vpack.c.b16 %v4835, %v4832
    %v4884 = vpack.c.b16 %v4836, %v4833
    %v4885 = vpack.c.b16 %v4840, %v4837
    %v4886 = vpack.c.b16 %v4841, %v4838
    %v4887 = vpack.c.b16 %v4842, %v4839
    %v4888 = vpack.c.b16 %v4846, %v4843
    %v4889 = vpack.c.b16 %v4847, %v4844
    %v4890 = vpack.c.b16 %v4848, %v4845
    %v4891 = vpack.c.b16 %v4852, %v4849
    %v4892 = vpack.c.b16 %v4853, %v4850
    %v4893 = vpack.c.b16 %v4854, %v4851
    %v4894 = vpack.c.b16 %v4858, %v4855
    %v4895 = vpack.c.b16 %v4859, %v4856
    %v4896 = vpack.c.b16 %v4860, %v4857
    %v4897 = vpack.c.b16 %v4864, %v4861
    %v4898 = vpack.c.b16 %v4865, %v4862
    %v4899 = vpack.c.b16 %v4866, %v4863
    %v4900 = vpack.c.b16 %v4870, %v4867
    %v4901 = vpack.c.b16 %v4871, %v4868
    %v4902 = vpack.c.b16 %v4872, %v4869
    %v4934 = vsel %vm315, %v4732, 0
    %4936 = vmatprep.subr.bf16.mxu0 %v4874
    %4937 = vmatpush1.bf16.msra.mxu0 %v4873
    %4938 = vmatprep.subr.bf16.mxu0 %v4877
    %4939 = vmatpush1.bf16.msra.mxu0 %v4876
    %4940 = vmatprep.subr.bf16.mxu0 %v4880
    %4941 = vmatpush1.bf16.msra.mxu0 %v4879
    %4942 = vmatprep.subr.bf16.mxu0 %v4883
    %4943 = vmatpush1.bf16.msra.mxu0 %v4882
    %4944 = vmatprep.subr.bf16.mxu0 %v4886
    %4945 = vmatpush1.bf16.msra.mxu0 %v4885
    %4946 = vmatprep.subr.bf16.mxu0 %v4889
    %4947 = vmatpush1.bf16.msra.mxu0 %v4888
    %4948 = vmatprep.subr.bf16.mxu0 %v4892
    %4949 = vmatpush1.bf16.msra.mxu0 %v4891
    %4950 = vmatprep.subr.bf16.mxu0 %v4895
    %4951 = vmatpush1.bf16.msra.mxu0 %v4894
    %4952 = vmatprep.subr.bf16.mxu0 %v4898
    %4953 = vmatpush1.bf16.msra.mxu0 %v4897
    %4954 = vmatprep.subr.bf16.mxu0 %v4901
    %4955 = vmatpush1.bf16.msra.mxu0 %v4900
    %4956 = vmatprep.subr.bf16.mxu0 0
    %4957 = vmatpush1.bf16.msra.mxu0 0
    %4958 = vmatprep.subr.bf16.mxu0 0
    %4959 = vmatpush1.bf16.msra.mxu0 0
    %4960 = vmatprep.subr.bf16.mxu0 0
    %4961 = vmatpush1.bf16.msra.mxu0 0
    %4962 = vmatprep.subr.bf16.mxu0 0
    %4963 = vmatpush1.bf16.msra.mxu0 0
    %4964 = vmatprep.subr.bf16.mxu0 0
    %4965 = vmatpush1.bf16.msra.mxu0 0
    %4966 = vmatprep.subr.bf16.mxu0 0
    %4967 = vmatpush1.bf16.msra.mxu0 0
    %4968 = vmatprep.mubr.bf16.mxu0 %v4934
    %4969 = vmatmul.mubr.bf16.gmra.mrb[0].mxu0 %v4731
    %v4970 = vpop.f32.mrb[0].mxu0
    %v4971 = vadd.f32 0.0, %v4970
    %v4972 = vpop.f32.mrb[0].mxu0
    %v4973 = vadd.f32 0.0, %v4972
    %v4974 = vpop.f32.mrb[0].mxu0
    %v4975 = vpop.f32.mrb[0].mxu0
    %4976 = vdwg.mxu0
    %4977 = vmatprep.subr.bf16.mxu0 0
    %4978 = vmatpush1.bf16.msra.mxu0 %v4875
    %4979 = vmatprep.subr.bf16.mxu0 0
    %4980 = vmatpush1.bf16.msra.mxu0 %v4878
    %4981 = vmatprep.subr.bf16.mxu0 0
    %4982 = vmatpush1.bf16.msra.mxu0 %v4881
    %4983 = vmatprep.subr.bf16.mxu0 0
    %4984 = vmatpush1.bf16.msra.mxu0 %v4884
    %4985 = vmatprep.subr.bf16.mxu0 0
    %4986 = vmatpush1.bf16.msra.mxu0 %v4887
    %4987 = vmatprep.subr.bf16.mxu0 0
    %4988 = vmatpush1.bf16.msra.mxu0 %v4890
    %4989 = vmatprep.subr.bf16.mxu0 0
    %4990 = vmatpush1.bf16.msra.mxu0 %v4893
    %4991 = vmatprep.subr.bf16.mxu0 0
    %4992 = vmatpush1.bf16.msra.mxu0 %v4896
    %4993 = vmatprep.subr.bf16.mxu0 0
    %4994 = vmatpush1.bf16.msra.mxu0 %v4899
    %4995 = vmatprep.subr.bf16.mxu0 0
    %4996 = vmatpush1.bf16.msra.mxu0 %v4902
    %4997 = vmatprep.subr.bf16.mxu0 0
    %4998 = vmatpush1.bf16.msra.mxu0 0
    %4999 = vmatprep.subr.bf16.mxu0 0
    %5000 = vmatpush1.bf16.msra.mxu0 0
    %5001 = vmatprep.subr.bf16.mxu0 0
    %5002 = vmatpush1.bf16.msra.mxu0 0
    %5003 = vmatprep.subr.bf16.mxu0 0
    %5004 = vmatpush1.bf16.msra.mxu0 0
    %5005 = vmatprep.subr.bf16.mxu0 0
    %5006 = vmatpush1.bf16.msra.mxu0 0
    %5007 = vmatprep.subr.bf16.mxu0 0
    %5008 = vmatpush1.bf16.msra.mxu0 0
    %5009 = vmatprep.mubr.bf16.mxu0 %v4934
    %5010 = vmatmul.mubr.bf16.gmra.mrb[0].mxu0 %v4731
    %v5011 = vpop.f32.mrb[0].mxu0
    %v5012 = vadd.f32 0.0, %v5011
    %v5013 = vpop.f32.mrb[0].mxu0
    %v5014 = vpop.f32.mrb[0].mxu0
    %v5015 = vpop.f32.mrb[0].mxu0
    %5016 = vdwg.mxu0
    %v5057 = vunpack.c.l.b16 %v4689
    %v5058 = vunpack.c.h.b16 %v4689
    %v5059 = vunpack.c.l.b16 %v4690
    %v5060 = vunpack.c.l.b16 %v4691
    %v5061 = vunpack.c.h.b16 %v4691
    %v5062 = vunpack.c.l.b16 %v4692
    %v5063 = vunpack.c.l.b16 %v4693
    %v5064 = vunpack.c.h.b16 %v4693
    %v5065 = vunpack.c.l.b16 %v4694
    %v5066 = vunpack.c.l.b16 %v4695
    %v5067 = vunpack.c.h.b16 %v4695
    %v5068 = vunpack.c.l.b16 %v4696
    %v5069 = vunpack.c.l.b16 %v4697
    %v5070 = vunpack.c.h.b16 %v4697
    %v5071 = vunpack.c.l.b16 %v4698
    %v5072 = vunpack.c.l.b16 %v4699
    %v5073 = vunpack.c.h.b16 %v4699
    %v5074 = vunpack.c.l.b16 %v4700
    %v5075 = vunpack.c.l.b16 %v4701
    %v5076 = vunpack.c.h.b16 %v4701
    %v5077 = vunpack.c.l.b16 %v4702
    %v5078 = vunpack.c.l.b16 %v4703
    %v5079 = vunpack.c.h.b16 %v4703
    %v5080 = vunpack.c.l.b16 %v4704
    %v5081 = vunpack.c.l.b16 %v4705
    %v5082 = vunpack.c.h.b16 %v4705
    %v5083 = vunpack.c.l.b16 %v4706
    %v5084 = vunpack.c.l.b16 %v4707
    %v5085 = vunpack.c.h.b16 %v4707
    %v5086 = vunpack.c.l.b16 %v4708
    %v5087 = vunpack.c.l.b16 %v4709
    %v5088 = vunpack.c.h.b16 %v4709
    %v5089 = vunpack.c.l.b16 %v4710
    %v5090 = vunpack.c.l.b16 %v4711
    %v5091 = vunpack.c.h.b16 %v4711
    %v5092 = vunpack.c.l.b16 %v4712
    %v5093 = vunpack.c.l.b16 %v4713
    %v5094 = vunpack.c.h.b16 %v4713
    %v5095 = vunpack.c.l.b16 %v4714
    %v5096 = vunpack.c.l.b16 %v4715
    %v5097 = vunpack.c.h.b16 %v4715
    %v5098 = vunpack.c.l.b16 %v4716
    %v5099 = vunpack.c.l.b16 %v4717
    %v5100 = vunpack.c.h.b16 %v4717
    %v5101 = vunpack.c.l.b16 %v4718
    %v5102 = vunpack.c.l.b16 %v4719
    %v5103 = vunpack.c.h.b16 %v4719
    %v5104 = vunpack.c.l.b16 %v4720
    %v5105 = vunpack.c.l.b16 %v4721
    %v5106 = vunpack.c.h.b16 %v4721
    %v5107 = vunpack.c.l.b16 %v4722
    %v5108 = vunpack.c.l.b16 %v4723
    %v5109 = vunpack.c.h.b16 %v4723
    %v5110 = vunpack.c.l.b16 %v4724
    %v5111 = vunpack.c.l.b16 %v4725
    %v5112 = vunpack.c.h.b16 %v4725
    %v5113 = vunpack.c.l.b16 %v4726
    %v5114 = vunpack.c.l.b16 %v4727
    %v5115 = vunpack.c.h.b16 %v4727
    %v5116 = vunpack.c.l.b16 %v4728
    %v5117 = vpack.c.b16 %v5060, %v5057
    %v5118 = vpack.c.b16 %v5061, %v5058
    %v5119 = vpack.c.b16 %v5062, %v5059
    %v5120 = vpack.c.b16 %v5066, %v5063
    %v5121 = vpack.c.b16 %v5067, %v5064
    %v5122 = vpack.c.b16 %v5068, %v5065
    %v5123 = vpack.c.b16 %v5072, %v5069
    %v5124 = vpack.c.b16 %v5073, %v5070
    %v5125 = vpack.c.b16 %v5074, %v5071
    %v5126 = vpack.c.b16 %v5078, %v5075
    %v5127 = vpack.c.b16 %v5079, %v5076
    %v5128 = vpack.c.b16 %v5080, %v5077
    %v5129 = vpack.c.b16 %v5084, %v5081
    %v5130 = vpack.c.b16 %v5085, %v5082
    %v5131 = vpack.c.b16 %v5086, %v5083
    %v5132 = vpack.c.b16 %v5090, %v5087
    %v5133 = vpack.c.b16 %v5091, %v5088
    %v5134 = vpack.c.b16 %v5092, %v5089
    %v5135 = vpack.c.b16 %v5096, %v5093
    %v5136 = vpack.c.b16 %v5097, %v5094
    %v5137 = vpack.c.b16 %v5098, %v5095
    %v5138 = vpack.c.b16 %v5102, %v5099
    %v5139 = vpack.c.b16 %v5103, %v5100
    %v5140 = vpack.c.b16 %v5104, %v5101
    %v5141 = vpack.c.b16 %v5108, %v5105
    %v5142 = vpack.c.b16 %v5109, %v5106
    %v5143 = vpack.c.b16 %v5110, %v5107
    %v5144 = vpack.c.b16 %v5114, %v5111
    %v5145 = vpack.c.b16 %v5115, %v5112
    %v5146 = vpack.c.b16 %v5116, %v5113
    %v5178 = vsel %vm315, %v4688, 0
    %5180 = vmatprep.subr.bf16.mxu0 %v5118
    %5181 = vmatpush1.bf16.msra.mxu0 %v5117
    %5182 = vmatprep.subr.bf16.mxu0 %v5121
    %5183 = vmatpush1.bf16.msra.mxu0 %v5120
    %5184 = vmatprep.subr.bf16.mxu0 %v5124
    %5185 = vmatpush1.bf16.msra.mxu0 %v5123
    %5186 = vmatprep.subr.bf16.mxu0 %v5127
    %5187 = vmatpush1.bf16.msra.mxu0 %v5126
    %5188 = vmatprep.subr.bf16.mxu0 %v5130
    %5189 = vmatpush1.bf16.msra.mxu0 %v5129
    %5190 = vmatprep.subr.bf16.mxu0 %v5133
    %5191 = vmatpush1.bf16.msra.mxu0 %v5132
    %5192 = vmatprep.subr.bf16.mxu0 %v5136
    %5193 = vmatpush1.bf16.msra.mxu0 %v5135
    %5194 = vmatprep.subr.bf16.mxu0 %v5139
    %5195 = vmatpush1.bf16.msra.mxu0 %v5138
    %5196 = vmatprep.subr.bf16.mxu0 %v5142
    %5197 = vmatpush1.bf16.msra.mxu0 %v5141
    %5198 = vmatprep.subr.bf16.mxu0 %v5145
    %5199 = vmatpush1.bf16.msra.mxu0 %v5144
    %5200 = vmatprep.subr.bf16.mxu0 0
    %5201 = vmatpush1.bf16.msra.mxu0 0
    %5202 = vmatprep.subr.bf16.mxu0 0
    %5203 = vmatpush1.bf16.msra.mxu0 0
    %5204 = vmatprep.subr.bf16.mxu0 0
    %5205 = vmatpush1.bf16.msra.mxu0 0
    %5206 = vmatprep.subr.bf16.mxu0 0
    %5207 = vmatpush1.bf16.msra.mxu0 0
    %5208 = vmatprep.subr.bf16.mxu0 0
    %5209 = vmatpush1.bf16.msra.mxu0 0
    %5210 = vmatprep.subr.bf16.mxu0 0
    %5211 = vmatpush1.bf16.msra.mxu0 0
    %5212 = vmatprep.mubr.bf16.mxu0 %v5178
    %5213 = vmatmul.mubr.bf16.gmra.mrb[0].mxu0 %v4687
    %v5214 = vpop.f32.mrb[0].mxu0
    %v5215 = vadd.f32 %v4971, %v5214
    %v5216 = vpop.f32.mrb[0].mxu0
    %v5217 = vadd.f32 %v4973, %v5216
    %v5218 = vpop.f32.mrb[0].mxu0
    %v5219 = vpop.f32.mrb[0].mxu0
    %5220 = vdwg.mxu0
    %5221 = vmatprep.subr.bf16.mxu0 0
    %5222 = vmatpush1.bf16.msra.mxu0 %v5119
    %5223 = vmatprep.subr.bf16.mxu0 0
    %5224 = vmatpush1.bf16.msra.mxu0 %v5122
    %5225 = vmatprep.subr.bf16.mxu0 0
    %5226 = vmatpush1.bf16.msra.mxu0 %v5125
    %5227 = vmatprep.subr.bf16.mxu0 0
    %5228 = vmatpush1.bf16.msra.mxu0 %v5128
    %5229 = vmatprep.subr.bf16.mxu0 0
    %5230 = vmatpush1.bf16.msra.mxu0 %v5131
    %5231 = vmatprep.subr.bf16.mxu0 0
    %5232 = vmatpush1.bf16.msra.mxu0 %v5134
    %5233 = vmatprep.subr.bf16.mxu0 0
    %5234 = vmatpush1.bf16.msra.mxu0 %v5137
    %5235 = vmatprep.subr.bf16.mxu0 0
    %5236 = vmatpush1.bf16.msra.mxu0 %v5140
    %5237 = vmatprep.subr.bf16.mxu0 0
    %5238 = vmatpush1.bf16.msra.mxu0 %v5143
    %5239 = vmatprep.subr.bf16.mxu0 0
    %5240 = vmatpush1.bf16.msra.mxu0 %v5146
    %5241 = vmatprep.subr.bf16.mxu0 0
    %5242 = vmatpush1.bf16.msra.mxu0 0
    %5243 = vmatprep.subr.bf16.mxu0 0
    %5244 = vmatpush1.bf16.msra.mxu0 0
    %5245 = vmatprep.subr.bf16.mxu0 0
    %5246 = vmatpush1.bf16.msra.mxu0 0
    %5247 = vmatprep.subr.bf16.mxu0 0
    %5248 = vmatpush1.bf16.msra.mxu0 0
    %5249 = vmatprep.subr.bf16.mxu0 0
    %5250 = vmatpush1.bf16.msra.mxu0 0
    %5251 = vmatprep.subr.bf16.mxu0 0
    %5252 = vmatpush1.bf16.msra.mxu0 0
    %5253 = vmatprep.mubr.bf16.mxu0 %v5178
    %5254 = vmatmul.mubr.bf16.gmra.mrb[0].mxu0 %v4687
    %v5255 = vpop.f32.mrb[0].mxu0
    %v5256 = vadd.f32 %v5012, %v5255
    %v5257 = vpop.f32.mrb[0].mxu0
    %v5258 = vpop.f32.mrb[0].mxu0
    %v5259 = vpop.f32.mrb[0].mxu0
    %5260 = vdwg.mxu0
    %v5261 = vld [vmem:[%s0] sm:$0xfc]
    %v5262 = vld [vmem:[%s0 + $0x8] sm:$0xfc]
    %v5263 = vld [vmem:[%s0 + $0x10] sm:$0x3]
    %v5264 = vld [vmem:[%s0 + $0x18] sm:$0x3]
    %v5265 = vpack.c.bf16 %v5263, %v5261
    %v5266 = vpack.c.bf16 %v5264, %v5262
    %v5267 = vld [vmem:[%s657] sm:$0xff]
    %v5268 = vld [vmem:[%s657 + $0x8] sm:$0xf]
    %v5269 = vld [vmem:[%s657 + $0xc] sm:$0xff]
    %v5270 = vld [vmem:[%s657 + $0x14] sm:$0xf]
    %v5271 = vld [vmem:[%s657 + $0x18] sm:$0xff]
    %v5272 = vld [vmem:[%s657 + $0x20] sm:$0xf]
    %v5273 = vld [vmem:[%s657 + $0x24] sm:$0xff]
    %v5274 = vld [vmem:[%s657 + $0x2c] sm:$0xf]
    %v5275 = vld [vmem:[%s657 + $0x30] sm:$0xff]
    %v5276 = vld [vmem:[%s657 + $0x38] sm:$0xf]
    %v5277 = vld [vmem:[%s657 + $0x3c] sm:$0xff]
    %v5278 = vld [vmem:[%s657 + $0x44] sm:$0xf]
    %v5279 = vld [vmem:[%s657 + $0x48] sm:$0xff]
    %v5280 = vld [vmem:[%s657 + $0x50] sm:$0xf]
    %v5281 = vld [vmem:[%s657 + $0x54] sm:$0xff]
    %v5282 = vld [vmem:[%s657 + $0x5c] sm:$0xf]
    %v5283 = vld [vmem:[%s657 + $0x60] sm:$0xff]
    %v5284 = vld [vmem:[%s657 + $0x68] sm:$0xf]
    %v5285 = vld [vmem:[%s657 + $0x6c] sm:$0xff]
    %v5286 = vld [vmem:[%s657 + $0x74] sm:$0xf]
    %v5287 = vld [vmem:[%s657 + $0x78] sm:$0xff]
    %v5288 = vld [vmem:[%s657 + $0x80] sm:$0xf]
    %v5289 = vld [vmem:[%s657 + $0x84] sm:$0xff]
    %v5290 = vld [vmem:[%s657 + $0x8c] sm:$0xf]
    %v5291 = vld [vmem:[%s657 + $0x90] sm:$0xff]
    %v5292 = vld [vmem:[%s657 + $0x98] sm:$0xf]
    %v5293 = vld [vmem:[%s657 + $0x9c] sm:$0xff]
    %v5294 = vld [vmem:[%s657 + $0xa4] sm:$0xf]
    %v5295 = vld [vmem:[%s657 + $0xa8] sm:$0xff]
    %v5296 = vld [vmem:[%s657 + $0xb0] sm:$0xf]
    %v5297 = vld [vmem:[%s657 + $0xb4] sm:$0xff]
    %v5298 = vld [vmem:[%s657 + $0xbc] sm:$0xf]
    %v5299 = vld [vmem:[%s657 + $0xc0] sm:$0xff]
    %v5300 = vld [vmem:[%s657 + $0xc8] sm:$0xf]
    %v5301 = vld [vmem:[%s657 + $0xcc] sm:$0xff]
    %v5302 = vld [vmem:[%s657 + $0xd4] sm:$0xf]
    %v5303 = vld [vmem:[%s657 + $0xd8] sm:$0xff]
    %v5304 = vld [vmem:[%s657 + $0xe0] sm:$0xf]
    %v5305 = vld [vmem:[%s657 + $0xe4] sm:$0xff]
    %v5306 = vld [vmem:[%s657 + $0xec] sm:$0xf]
    %v5309 = vrot.slane %v5265, 1
    %v5310 = vrot.slane %v5266, 1
    %v5352 = vunpack.c.l.b16 %v5267
    %v5353 = vunpack.c.h.b16 %v5267
    %v5354 = vunpack.c.l.b16 %v5268
    %v5355 = vunpack.c.l.b16 %v5269
    %v5356 = vunpack.c.h.b16 %v5269
    %v5357 = vunpack.c.l.b16 %v5270
    %v5358 = vunpack.c.l.b16 %v5271
    %v5359 = vunpack.c.h.b16 %v5271
    %v5360 = vunpack.c.l.b16 %v5272
    %v5361 = vunpack.c.l.b16 %v5273
    %v5362 = vunpack.c.h.b16 %v5273
    %v5363 = vunpack.c.l.b16 %v5274
    %v5364 = vunpack.c.l.b16 %v5275
    %v5365 = vunpack.c.h.b16 %v5275
    %v5366 = vunpack.c.l.b16 %v5276
    %v5367 = vunpack.c.l.b16 %v5277
    %v5368 = vunpack.c.h.b16 %v5277
    %v5369 = vunpack.c.l.b16 %v5278
    %v5370 = vunpack.c.l.b16 %v5279
    %v5371 = vunpack.c.h.b16 %v5279
    %v5372 = vunpack.c.l.b16 %v5280
    %v5373 = vunpack.c.l.b16 %v5281
    %v5374 = vunpack.c.h.b16 %v5281
    %v5375 = vunpack.c.l.b16 %v5282
    %v5376 = vunpack.c.l.b16 %v5283
    %v5377 = vunpack.c.h.b16 %v5283
    %v5378 = vunpack.c.l.b16 %v5284
    %v5379 = vunpack.c.l.b16 %v5285
    %v5380 = vunpack.c.h.b16 %v5285
    %v5381 = vunpack.c.l.b16 %v5286
    %v5382 = vunpack.c.l.b16 %v5287
    %v5383 = vunpack.c.h.b16 %v5287
    %v5384 = vunpack.c.l.b16 %v5288
    %v5385 = vunpack.c.l.b16 %v5289
    %v5386 = vunpack.c.h.b16 %v5289
    %v5387 = vunpack.c.l.b16 %v5290
    %v5388 = vunpack.c.l.b16 %v5291
    %v5389 = vunpack.c.h.b16 %v5291
    %v5390 = vunpack.c.l.b16 %v5292
    %v5391 = vunpack.c.l.b16 %v5293
    %v5392 = vunpack.c.h.b16 %v5293
    %v5393 = vunpack.c.l.b16 %v5294
    %v5394 = vunpack.c.l.b16 %v5295
    %v5395 = vunpack.c.h.b16 %v5295
    %v5396 = vunpack.c.l.b16 %v5296
    %v5397 = vunpack.c.l.b16 %v5297
    %v5398 = vunpack.c.h.b16 %v5297
    %v5399 = vunpack.c.l.b16 %v5298
    %v5400 = vunpack.c.l.b16 %v5299
    %v5401 = vunpack.c.h.b16 %v5299
    %v5402 = vunpack.c.l.b16 %v5300
    %v5403 = vunpack.c.l.b16 %v5301
    %v5404 = vunpack.c.h.b16 %v5301
    %v5405 = vunpack.c.l.b16 %v5302
    %v5406 = vunpack.c.l.b16 %v5303
    %v5407 = vunpack.c.h.b16 %v5303
    %v5408 = vunpack.c.l.b16 %v5304
    %v5409 = vunpack.c.l.b16 %v5305
    %v5410 = vunpack.c.h.b16 %v5305
    %v5411 = vunpack.c.l.b16 %v5306
    %v5412 = vpack.c.b16 %v5355, %v5352
    %v5413 = vpack.c.b16 %v5356, %v5353
    %v5414 = vpack.c.b16 %v5357, %v5354
    %v5415 = vpack.c.b16 %v5361, %v5358
    %v5416 = vpack.c.b16 %v5362, %v5359
    %v5417 = vpack.c.b16 %v5363, %v5360
    %v5418 = vpack.c.b16 %v5367, %v5364
    %v5419 = vpack.c.b16 %v5368, %v5365
    %v5420 = vpack.c.b16 %v5369, %v5366
    %v5421 = vpack.c.b16 %v5373, %v5370
    %v5422 = vpack.c.b16 %v5374, %v5371
    %v5423 = vpack.c.b16 %v5375, %v5372
    %v5424 = vpack.c.b16 %v5379, %v5376
    %v5425 = vpack.c.b16 %v5380, %v5377
    %v5426 = vpack.c.b16 %v5381, %v5378
    %v5427 = vpack.c.b16 %v5385, %v5382
    %v5428 = vpack.c.b16 %v5386, %v5383
    %v5429 = vpack.c.b16 %v5387, %v5384
    %v5430 = vpack.c.b16 %v5391, %v5388
    %v5431 = vpack.c.b16 %v5392, %v5389
    %v5432 = vpack.c.b16 %v5393, %v5390
    %v5433 = vpack.c.b16 %v5397, %v5394
    %v5434 = vpack.c.b16 %v5398, %v5395
    %v5435 = vpack.c.b16 %v5399, %v5396
    %v5436 = vpack.c.b16 %v5403, %v5400
    %v5437 = vpack.c.b16 %v5404, %v5401
    %v5438 = vpack.c.b16 %v5405, %v5402
    %v5439 = vpack.c.b16 %v5409, %v5406
    %v5440 = vpack.c.b16 %v5410, %v5407
    %v5441 = vpack.c.b16 %v5411, %v5408
    %v5473 = vsel %vm315, %v5310, 0
    %5475 = vmatprep.subr.bf16.mxu0 %v5413
    %5476 = vmatpush1.bf16.msra.mxu0 %v5412
    %5477 = vmatprep.subr.bf16.mxu0 %v5416
    %5478 = vmatpush1.bf16.msra.mxu0 %v5415
    %5479 = vmatprep.subr.bf16.mxu0 %v5419
    %5480 = vmatpush1.bf16.msra.mxu0 %v5418
    %5481 = vmatprep.subr.bf16.mxu0 %v5422
    %5482 = vmatpush1.bf16.msra.mxu0 %v5421
    %5483 = vmatprep.subr.bf16.mxu0 %v5425
    %5484 = vmatpush1.bf16.msra.mxu0 %v5424
    %5485 = vmatprep.subr.bf16.mxu0 %v5428
    %5486 = vmatpush1.bf16.msra.mxu0 %v5427
    %5487 = vmatprep.subr.bf16.mxu0 %v5431
    %5488 = vmatpush1.bf16.msra.mxu0 %v5430
    %5489 = vmatprep.subr.bf16.mxu0 %v5434
    %5490 = vmatpush1.bf16.msra.mxu0 %v5433
    %5491 = vmatprep.subr.bf16.mxu0 %v5437
    %5492 = vmatpush1.bf16.msra.mxu0 %v5436
    %5493 = vmatprep.subr.bf16.mxu0 %v5440
    %5494 = vmatpush1.bf16.msra.mxu0 %v5439
    %5495 = vmatprep.subr.bf16.mxu0 0
    %5496 = vmatpush1.bf16.msra.mxu0 0
    %5497 = vmatprep.subr.bf16.mxu0 0
    %5498 = vmatpush1.bf16.msra.mxu0 0
    %5499 = vmatprep.subr.bf16.mxu0 0
    %5500 = vmatpush1.bf16.msra.mxu0 0
    %5501 = vmatprep.subr.bf16.mxu0 0
    %5502 = vmatpush1.bf16.msra.mxu0 0
    %5503 = vmatprep.subr.bf16.mxu0 0
    %5504 = vmatpush1.bf16.msra.mxu0 0
    %5505 = vmatprep.subr.bf16.mxu0 0
    %5506 = vmatpush1.bf16.msra.mxu0 0
    %5507 = vmatprep.mubr.bf16.mxu0 %v5473
    %5508 = vmatmul.mubr.bf16.gmra.mrb[0].mxu0 %v5309
    %v5509 = vpop.f32.mrb[0].mxu0
    %v5510 = vadd.f32 0.0, %v5509
    %v5511 = vpop.f32.mrb[0].mxu0
    %v5512 = vadd.f32 0.0, %v5511
    %v5513 = vpop.f32.mrb[0].mxu0
    %v5514 = vpop.f32.mrb[0].mxu0
    %5515 = vdwg.mxu0
    %5516 = vmatprep.subr.bf16.mxu0 0
    %5517 = vmatpush1.bf16.msra.mxu0 %v5414
    %5518 = vmatprep.subr.bf16.mxu0 0
    %5519 = vmatpush1.bf16.msra.mxu0 %v5417
    %5520 = vmatprep.subr.bf16.mxu0 0
    %5521 = vmatpush1.bf16.msra.mxu0 %v5420
    %5522 = vmatprep.subr.bf16.mxu0 0
    %5523 = vmatpush1.bf16.msra.mxu0 %v5423
    %5524 = vmatprep.subr.bf16.mxu0 0
    %5525 = vmatpush1.bf16.msra.mxu0 %v5426
    %5526 = vmatprep.subr.bf16.mxu0 0
    %5527 = vmatpush1.bf16.msra.mxu0 %v5429
    %5528 = vmatprep.subr.bf16.mxu0 0
    %5529 = vmatpush1.bf16.msra.mxu0 %v5432
    %5530 = vmatprep.subr.bf16.mxu0 0
    %5531 = vmatpush1.bf16.msra.mxu0 %v5435
    %5532 = vmatprep.subr.bf16.mxu0 0
    %5533 = vmatpush1.bf16.msra.mxu0 %v5438
    %5534 = vmatprep.subr.bf16.mxu0 0
    %5535 = vmatpush1.bf16.msra.mxu0 %v5441
    %5536 = vmatprep.subr.bf16.mxu0 0
    %5537 = vmatpush1.bf16.msra.mxu0 0
    %5538 = vmatprep.subr.bf16.mxu0 0
    %5539 = vmatpush1.bf16.msra.mxu0 0
    %5540 = vmatprep.subr.bf16.mxu0 0
    %5541 = vmatpush1.bf16.msra.mxu0 0
    %5542 = vmatprep.subr.bf16.mxu0 0
    %5543 = vmatpush1.bf16.msra.mxu0 0
    %5544 = vmatprep.subr.bf16.mxu0 0
    %5545 = vmatpush1.bf16.msra.mxu0 0
    %5546 = vmatprep.subr.bf16.mxu0 0
    %5547 = vmatpush1.bf16.msra.mxu0 0
    %5548 = vmatprep.mubr.bf16.mxu0 %v5473
    %5549 = vmatmul.mubr.bf16.gmra.mrb[0].mxu0 %v5309
    %v5550 = vpop.f32.mrb[0].mxu0
    %v5551 = vadd.f32 0.0, %v5550
    %v5552 = vpop.f32.mrb[0].mxu0
    %v5553 = vpop.f32.mrb[0].mxu0
    %v5554 = vpop.f32.mrb[0].mxu0
    %5555 = vdwg.mxu0
    %v5556 = vadd.f32 %v5215, %v5510
    %v5557 = vadd.f32 %v5217, %v5512
    %v5558 = vadd.f32 %v5256, %v5551
    %v5559 = vld [vmem:[%s107] sm:$0xfc]
    %v5560 = vld [vmem:[%s107 + $0x8] sm:$0xfc]
    %v5561 = vld [vmem:[%s107 + $0x10] sm:$0x3]
    %v5562 = vld [vmem:[%s107 + $0x18] sm:$0x3]
    %v5563 = vpack.c.bf16 %v5561, %v5559
    %v5564 = vpack.c.bf16 %v5562, %v5560
    %v5565 = vld [vmem:[%s958] sm:$0xff]
    %v5566 = vld [vmem:[%s958 + $0x8] sm:$0xf]
    %v5567 = vld [vmem:[%s958 + $0xc] sm:$0xff]
    %v5568 = vld [vmem:[%s958 + $0x14] sm:$0xf]
    %v5569 = vld [vmem:[%s958 + $0x18] sm:$0xff]
    %v5570 = vld [vmem:[%s958 + $0x20] sm:$0xf]
    %v5571 = vld [vmem:[%s958 + $0x24] sm:$0xff]
    %v5572 = vld [vmem:[%s958 + $0x2c] sm:$0xf]
    %v5573 = vld [vmem:[%s958 + $0x30] sm:$0xff]
    %v5574 = vld [vmem:[%s958 + $0x38] sm:$0xf]
    %v5575 = vld [vmem:[%s958 + $0x3c] sm:$0xff]
    %v5576 = vld [vmem:[%s958 + $0x44] sm:$0xf]
    %v5577 = vld [vmem:[%s958 + $0x48] sm:$0xff]
    %v5578 = vld [vmem:[%s958 + $0x50] sm:$0xf]
    %v5579 = vld [vmem:[%s958 + $0x54] sm:$0xff]
    %v5580 = vld [vmem:[%s958 + $0x5c] sm:$0xf]
    %v5581 = vld [vmem:[%s958 + $0x60] sm:$0xff]
    %v5582 = vld [vmem:[%s958 + $0x68] sm:$0xf]
    %v5583 = vld [vmem:[%s958 + $0x6c] sm:$0xff]
    %v5584 = vld [vmem:[%s958 + $0x74] sm:$0xf]
    %v5585 = vld [vmem:[%s958 + $0x78] sm:$0xff]
    %v5586 = vld [vmem:[%s958 + $0x80] sm:$0xf]
    %v5587 = vld [vmem:[%s958 + $0x84] sm:$0xff]
    %v5588 = vld [vmem:[%s958 + $0x8c] sm:$0xf]
    %v5589 = vld [vmem:[%s958 + $0x90] sm:$0xff]
    %v5590 = vld [vmem:[%s958 + $0x98] sm:$0xf]
    %v5591 = vld [vmem:[%s958 + $0x9c] sm:$0xff]
    %v5592 = vld [vmem:[%s958 + $0xa4] sm:$0xf]
    %v5593 = vld [vmem:[%s958 + $0xa8] sm:$0xff]
    %v5594 = vld [vmem:[%s958 + $0xb0] sm:$0xf]
    %v5595 = vld [vmem:[%s958 + $0xb4] sm:$0xff]
    %v5596 = vld [vmem:[%s958 + $0xbc] sm:$0xf]
    %v5597 = vld [vmem:[%s958 + $0xc0] sm:$0xff]
    %v5598 = vld [vmem:[%s958 + $0xc8] sm:$0xf]
    %v5599 = vld [vmem:[%s958 + $0xcc] sm:$0xff]
    %v5600 = vld [vmem:[%s958 + $0xd4] sm:$0xf]
    %v5601 = vld [vmem:[%s958 + $0xd8] sm:$0xff]
    %v5602 = vld [vmem:[%s958 + $0xe0] sm:$0xf]
    %v5603 = vld [vmem:[%s958 + $0xe4] sm:$0xff]
    %v5604 = vld [vmem:[%s958 + $0xec] sm:$0xf]
    %v5607 = vrot.slane %v5563, 1
    %v5608 = vrot.slane %v5564, 1
    %v5650 = vunpack.c.l.b16 %v5565
    %v5651 = vunpack.c.h.b16 %v5565
    %v5652 = vunpack.c.l.b16 %v5566
    %v5653 = vunpack.c.l.b16 %v5567
    %v5654 = vunpack.c.h.b16 %v5567
    %v5655 = vunpack.c.l.b16 %v5568
    %v5656 = vunpack.c.l.b16 %v5569
    %v5657 = vunpack.c.h.b16 %v5569
    %v5658 = vunpack.c.l.b16 %v5570
    %v5659 = vunpack.c.l.b16 %v5571
    %v5660 = vunpack.c.h.b16 %v5571
    %v5661 = vunpack.c.l.b16 %v5572
    %v5662 = vunpack.c.l.b16 %v5573
    %v5663 = vunpack.c.h.b16 %v5573
    %v5664 = vunpack.c.l.b16 %v5574
    %v5665 = vunpack.c.l.b16 %v5575
    %v5666 = vunpack.c.h.b16 %v5575
    %v5667 = vunpack.c.l.b16 %v5576
    %v5668 = vunpack.c.l.b16 %v5577
    %v5669 = vunpack.c.h.b16 %v5577
    %v5670 = vunpack.c.l.b16 %v5578
    %v5671 = vunpack.c.l.b16 %v5579
    %v5672 = vunpack.c.h.b16 %v5579
    %v5673 = vunpack.c.l.b16 %v5580
    %v5674 = vunpack.c.l.b16 %v5581
    %v5675 = vunpack.c.h.b16 %v5581
    %v5676 = vunpack.c.l.b16 %v5582
    %v5677 = vunpack.c.l.b16 %v5583
    %v5678 = vunpack.c.h.b16 %v5583
    %v5679 = vunpack.c.l.b16 %v5584
    %v5680 = vunpack.c.l.b16 %v5585
    %v5681 = vunpack.c.h.b16 %v5585
    %v5682 = vunpack.c.l.b16 %v5586
    %v5683 = vunpack.c.l.b16 %v5587
    %v5684 = vunpack.c.h.b16 %v5587
    %v5685 = vunpack.c.l.b16 %v5588
    %v5686 = vunpack.c.l.b16 %v5589
    %v5687 = vunpack.c.h.b16 %v5589
    %v5688 = vunpack.c.l.b16 %v5590
    %v5689 = vunpack.c.l.b16 %v5591
    %v5690 = vunpack.c.h.b16 %v5591
    %v5691 = vunpack.c.l.b16 %v5592
    %v5692 = vunpack.c.l.b16 %v5593
    %v5693 = vunpack.c.h.b16 %v5593
    %v5694 = vunpack.c.l.b16 %v5594
    %v5695 = vunpack.c.l.b16 %v5595
    %v5696 = vunpack.c.h.b16 %v5595
    %v5697 = vunpack.c.l.b16 %v5596
    %v5698 = vunpack.c.l.b16 %v5597
    %v5699 = vunpack.c.h.b16 %v5597
    %v5700 = vunpack.c.l.b16 %v5598
    %v5701 = vunpack.c.l.b16 %v5599
    %v5702 = vunpack.c.h.b16 %v5599
    %v5703 = vunpack.c.l.b16 %v5600
    %v5704 = vunpack.c.l.b16 %v5601
    %v5705 = vunpack.c.h.b16 %v5601
    %v5706 = vunpack.c.l.b16 %v5602
    %v5707 = vunpack.c.l.b16 %v5603
    %v5708 = vunpack.c.h.b16 %v5603
    %v5709 = vunpack.c.l.b16 %v5604
    %v5710 = vpack.c.b16 %v5653, %v5650
    %v5711 = vpack.c.b16 %v5654, %v5651
    %v5712 = vpack.c.b16 %v5655, %v5652
    %v5713 = vpack.c.b16 %v5659, %v5656
    %v5714 = vpack.c.b16 %v5660, %v5657
    %v5715 = vpack.c.b16 %v5661, %v5658
    %v5716 = vpack.c.b16 %v5665, %v5662
    %v5717 = vpack.c.b16 %v5666, %v5663
    %v5718 = vpack.c.b16 %v5667, %v5664
    %v5719 = vpack.c.b16 %v5671, %v5668
    %v5720 = vpack.c.b16 %v5672, %v5669
    %v5721 = vpack.c.b16 %v5673, %v5670
    %v5722 = vpack.c.b16 %v5677, %v5674
    %v5723 = vpack.c.b16 %v5678, %v5675
    %v5724 = vpack.c.b16 %v5679, %v5676
    %v5725 = vpack.c.b16 %v5683, %v5680
    %v5726 = vpack.c.b16 %v5684, %v5681
    %v5727 = vpack.c.b16 %v5685, %v5682
    %v5728 = vpack.c.b16 %v5689, %v5686
    %v5729 = vpack.c.b16 %v5690, %v5687
    %v5730 = vpack.c.b16 %v5691, %v5688
    %v5731 = vpack.c.b16 %v5695, %v5692
    %v5732 = vpack.c.b16 %v5696, %v5693
    %v5733 = vpack.c.b16 %v5697, %v5694
    %v5734 = vpack.c.b16 %v5701, %v5698
    %v5735 = vpack.c.b16 %v5702, %v5699
    %v5736 = vpack.c.b16 %v5703, %v5700
    %v5737 = vpack.c.b16 %v5707, %v5704
    %v5738 = vpack.c.b16 %v5708, %v5705
    %v5739 = vpack.c.b16 %v5709, %v5706
    %v5771 = vsel %vm315, %v5608, 0
    %5773 = vmatprep.subr.bf16.mxu0 %v5711
    %5774 = vmatpush1.bf16.msra.mxu0 %v5710
    %5775 = vmatprep.subr.bf16.mxu0 %v5714
    %5776 = vmatpush1.bf16.msra.mxu0 %v5713
    %5777 = vmatprep.subr.bf16.mxu0 %v5717
    %5778 = vmatpush1.bf16.msra.mxu0 %v5716
    %5779 = vmatprep.subr.bf16.mxu0 %v5720
    %5780 = vmatpush1.bf16.msra.mxu0 %v5719
    %5781 = vmatprep.subr.bf16.mxu0 %v5723
    %5782 = vmatpush1.bf16.msra.mxu0 %v5722
    %5783 = vmatprep.subr.bf16.mxu0 %v5726
    %5784 = vmatpush1.bf16.msra.mxu0 %v5725
    %5785 = vmatprep.subr.bf16.mxu0 %v5729
    %5786 = vmatpush1.bf16.msra.mxu0 %v5728
    %5787 = vmatprep.subr.bf16.mxu0 %v5732
    %5788 = vmatpush1.bf16.msra.mxu0 %v5731
    %5789 = vmatprep.subr.bf16.mxu0 %v5735
    %5790 = vmatpush1.bf16.msra.mxu0 %v5734
    %5791 = vmatprep.subr.bf16.mxu0 %v5738
    %5792 = vmatpush1.bf16.msra.mxu0 %v5737
    %5793 = vmatprep.subr.bf16.mxu0 0
    %5794 = vmatpush1.bf16.msra.mxu0 0
    %5795 = vmatprep.subr.bf16.mxu0 0
    %5796 = vmatpush1.bf16.msra.mxu0 0
    %5797 = vmatprep.subr.bf16.mxu0 0
    %5798 = vmatpush1.bf16.msra.mxu0 0
    %5799 = vmatprep.subr.bf16.mxu0 0
    %5800 = vmatpush1.bf16.msra.mxu0 0
    %5801 = vmatprep.subr.bf16.mxu0 0
    %5802 = vmatpush1.bf16.msra.mxu0 0
    %5803 = vmatprep.subr.bf16.mxu0 0
    %5804 = vmatpush1.bf16.msra.mxu0 0
    %5805 = vmatprep.mubr.bf16.mxu0 %v5771
    %5806 = vmatmul.mubr.bf16.gmra.mrb[0].mxu0 %v5607
    %v5807 = vpop.f32.mrb[0].mxu0
    %v5808 = vadd.f32 0.0, %v5807
    %v5809 = vpop.f32.mrb[0].mxu0
    %v5810 = vadd.f32 0.0, %v5809
    %v5811 = vpop.f32.mrb[0].mxu0
    %v5812 = vpop.f32.mrb[0].mxu0
    %5813 = vdwg.mxu0
    %5814 = vmatprep.subr.bf16.mxu0 0
    %5815 = vmatpush1.bf16.msra.mxu0 %v5712
    %5816 = vmatprep.subr.bf16.mxu0 0
    %5817 = vmatpush1.bf16.msra.mxu0 %v5715
    %5818 = vmatprep.subr.bf16.mxu0 0
    %5819 = vmatpush1.bf16.msra.mxu0 %v5718
    %5820 = vmatprep.subr.bf16.mxu0 0
    %5821 = vmatpush1.bf16.msra.mxu0 %v5721
    %5822 = vmatprep.subr.bf16.mxu0 0
    %5823 = vmatpush1.bf16.msra.mxu0 %v5724
    %5824 = vmatprep.subr.bf16.mxu0 0
    %5825 = vmatpush1.bf16.msra.mxu0 %v5727
    %5826 = vmatprep.subr.bf16.mxu0 0
    %5827 = vmatpush1.bf16.msra.mxu0 %v5730
    %5828 = vmatprep.subr.bf16.mxu0 0
    %5829 = vmatpush1.bf16.msra.mxu0 %v5733
    %5830 = vmatprep.subr.bf16.mxu0 0
    %5831 = vmatpush1.bf16.msra.mxu0 %v5736
    %5832 = vmatprep.subr.bf16.mxu0 0
    %5833 = vmatpush1.bf16.msra.mxu0 %v5739
    %5834 = vmatprep.subr.bf16.mxu0 0
    %5835 = vmatpush1.bf16.msra.mxu0 0
    %5836 = vmatprep.subr.bf16.mxu0 0
    %5837 = vmatpush1.bf16.msra.mxu0 0
    %5838 = vmatprep.subr.bf16.mxu0 0
    %5839 = vmatpush1.bf16.msra.mxu0 0
    %5840 = vmatprep.subr.bf16.mxu0 0
    %5841 = vmatpush1.bf16.msra.mxu0 0
    %5842 = vmatprep.subr.bf16.mxu0 0
    %5843 = vmatpush1.bf16.msra.mxu0 0
    %5844 = vmatprep.subr.bf16.mxu0 0
    %5845 = vmatpush1.bf16.msra.mxu0 0
    %5846 = vmatprep.mubr.bf16.mxu0 %v5771
    %5847 = vmatmul.mubr.bf16.gmra.mrb[0].mxu0 %v5607
    %v5848 = vpop.f32.mrb[0].mxu0
    %v5849 = vadd.f32 0.0, %v5848
    %v5850 = vpop.f32.mrb[0].mxu0
    %v5851 = vpop.f32.mrb[0].mxu0
    %v5852 = vpop.f32.mrb[0].mxu0
    %5853 = vdwg.mxu0
    %v5854 = vadd.f32 %v5556, %v5808
    %v5855 = vadd.f32 %v5557, %v5810
    %v5856 = vadd.f32 %v5558, %v5849
    %v5857 = vld [vmem:[%s650] sm:$0xfc]
    %v5858 = vld [vmem:[%s650 + $0x8] sm:$0xfc]
    %v5859 = vld [vmem:[%s650 + $0x10] sm:$0x3]
    %v5860 = vld [vmem:[%s650 + $0x18] sm:$0x3]
    %v5861 = vpack.c.bf16 %v5859, %v5857
    %v5862 = vpack.c.bf16 %v5860, %v5858
    %v5863 = vld [vmem:[%s1259] sm:$0xff]
    %v5864 = vld [vmem:[%s1259 + $0x8] sm:$0xf]
    %v5865 = vld [vmem:[%s1259 + $0xc] sm:$0xff]
    %v5866 = vld [vmem:[%s1259 + $0x14] sm:$0xf]
    %v5867 = vld [vmem:[%s1259 + $0x18] sm:$0xff]
    %v5868 = vld [vmem:[%s1259 + $0x20] sm:$0xf]
    %v5869 = vld [vmem:[%s1259 + $0x24] sm:$0xff]
    %v5870 = vld [vmem:[%s1259 + $0x2c] sm:$0xf]
    %v5871 = vld [vmem:[%s1259 + $0x30] sm:$0xff]
    %v5872 = vld [vmem:[%s1259 + $0x38] sm:$0xf]
    %v5873 = vld [vmem:[%s1259 + $0x3c] sm:$0xff]
    %v5874 = vld [vmem:[%s1259 + $0x44] sm:$0xf]
    %v5875 = vld [vmem:[%s1259 + $0x48] sm:$0xff]
    %v5876 = vld [vmem:[%s1259 + $0x50] sm:$0xf]
    %v5877 = vld [vmem:[%s1259 + $0x54] sm:$0xff]
    %v5878 = vld [vmem:[%s1259 + $0x5c] sm:$0xf]
    %v5879 = vld [vmem:[%s1259 + $0x60] sm:$0xff]
    %v5880 = vld [vmem:[%s1259 + $0x68] sm:$0xf]
    %v5881 = vld [vmem:[%s1259 + $0x6c] sm:$0xff]
    %v5882 = vld [vmem:[%s1259 + $0x74] sm:$0xf]
    %v5883 = vld [vmem:[%s1259 + $0x78] sm:$0xff]
    %v5884 = vld [vmem:[%s1259 + $0x80] sm:$0xf]
    %v5885 = vld [vmem:[%s1259 + $0x84] sm:$0xff]
    %v5886 = vld [vmem:[%s1259 + $0x8c] sm:$0xf]
    %v5887 = vld [vmem:[%s1259 + $0x90] sm:$0xff]
    %v5888 = vld [vmem:[%s1259 + $0x98] sm:$0xf]
    %v5889 = vld [vmem:[%s1259 + $0x9c] sm:$0xff]
    %v5890 = vld [vmem:[%s1259 + $0xa4] sm:$0xf]
    %v5891 = vld [vmem:[%s1259 + $0xa8] sm:$0xff]
    %v5892 = vld [vmem:[%s1259 + $0xb0] sm:$0xf]
    %v5893 = vld [vmem:[%s1259 + $0xb4] sm:$0xff]
    %v5894 = vld [vmem:[%s1259 + $0xbc] sm:$0xf]
    %v5895 = vld [vmem:[%s1259 + $0xc0] sm:$0xff]
    %v5896 = vld [vmem:[%s1259 + $0xc8] sm:$0xf]
    %v5897 = vld [vmem:[%s1259 + $0xcc] sm:$0xff]
    %v5898 = vld [vmem:[%s1259 + $0xd4] sm:$0xf]
    %v5899 = vld [vmem:[%s1259 + $0xd8] sm:$0xff]
    %v5900 = vld [vmem:[%s1259 + $0xe0] sm:$0xf]
    %v5901 = vld [vmem:[%s1259 + $0xe4] sm:$0xff]
    %v5902 = vld [vmem:[%s1259 + $0xec] sm:$0xf]
    %v5905 = vrot.slane %v5861, 1
    %v5906 = vrot.slane %v5862, 1
    %v5948 = vunpack.c.l.b16 %v5863
    %v5949 = vunpack.c.h.b16 %v5863
    %v5950 = vunpack.c.l.b16 %v5864
    %v5951 = vunpack.c.l.b16 %v5865
    %v5952 = vunpack.c.h.b16 %v5865
    %v5953 = vunpack.c.l.b16 %v5866
    %v5954 = vunpack.c.l.b16 %v5867
    %v5955 = vunpack.c.h.b16 %v5867
    %v5956 = vunpack.c.l.b16 %v5868
    %v5957 = vunpack.c.l.b16 %v5869
    %v5958 = vunpack.c.h.b16 %v5869
    %v5959 = vunpack.c.l.b16 %v5870
    %v5960 = vunpack.c.l.b16 %v5871
    %v5961 = vunpack.c.h.b16 %v5871
    %v5962 = vunpack.c.l.b16 %v5872
    %v5963 = vunpack.c.l.b16 %v5873
    %v5964 = vunpack.c.h.b16 %v5873
    %v5965 = vunpack.c.l.b16 %v5874
    %v5966 = vunpack.c.l.b16 %v5875
    %v5967 = vunpack.c.h.b16 %v5875
    %v5968 = vunpack.c.l.b16 %v5876
    %v5969 = vunpack.c.l.b16 %v5877
    %v5970 = vunpack.c.h.b16 %v5877
    %v5971 = vunpack.c.l.b16 %v5878
    %v5972 = vunpack.c.l.b16 %v5879
    %v5973 = vunpack.c.h.b16 %v5879
    %v5974 = vunpack.c.l.b16 %v5880
    %v5975 = vunpack.c.l.b16 %v5881
    %v5976 = vunpack.c.h.b16 %v5881
    %v5977 = vunpack.c.l.b16 %v5882
    %v5978 = vunpack.c.l.b16 %v5883
    %v5979 = vunpack.c.h.b16 %v5883
    %v5980 = vunpack.c.l.b16 %v5884
    %v5981 = vunpack.c.l.b16 %v5885
    %v5982 = vunpack.c.h.b16 %v5885
    %v5983 = vunpack.c.l.b16 %v5886
    %v5984 = vunpack.c.l.b16 %v5887
    %v5985 = vunpack.c.h.b16 %v5887
    %v5986 = vunpack.c.l.b16 %v5888
    %v5987 = vunpack.c.l.b16 %v5889
    %v5988 = vunpack.c.h.b16 %v5889
    %v5989 = vunpack.c.l.b16 %v5890
    %v5990 = vunpack.c.l.b16 %v5891
    %v5991 = vunpack.c.h.b16 %v5891
    %v5992 = vunpack.c.l.b16 %v5892
    %v5993 = vunpack.c.l.b16 %v5893
    %v5994 = vunpack.c.h.b16 %v5893
    %v5995 = vunpack.c.l.b16 %v5894
    %v5996 = vunpack.c.l.b16 %v5895
    %v5997 = vunpack.c.h.b16 %v5895
    %v5998 = vunpack.c.l.b16 %v5896
    %v5999 = vunpack.c.l.b16 %v5897
    %v6000 = vunpack.c.h.b16 %v5897
    %v6001 = vunpack.c.l.b16 %v5898
    %v6002 = vunpack.c.l.b16 %v5899
    %v6003 = vunpack.c.h.b16 %v5899
    %v6004 = vunpack.c.l.b16 %v5900
    %v6005 = vunpack.c.l.b16 %v5901
    %v6006 = vunpack.c.h.b16 %v5901
    %v6007 = vunpack.c.l.b16 %v5902
    %v6008 = vpack.c.b16 %v5951, %v5948
    %v6009 = vpack.c.b16 %v5952, %v5949
    %v6010 = vpack.c.b16 %v5953, %v5950
    %v6011 = vpack.c.b16 %v5957, %v5954
    %v6012 = vpack.c.b16 %v5958, %v5955
    %v6013 = vpack.c.b16 %v5959, %v5956
    %v6014 = vpack.c.b16 %v5963, %v5960
    %v6015 = vpack.c.b16 %v5964, %v5961
    %v6016 = vpack.c.b16 %v5965, %v5962
    %v6017 = vpack.c.b16 %v5969, %v5966
    %v6018 = vpack.c.b16 %v5970, %v5967
    %v6019 = vpack.c.b16 %v5971, %v5968
    %v6020 = vpack.c.b16 %v5975, %v5972
    %v6021 = vpack.c.b16 %v5976, %v5973
    %v6022 = vpack.c.b16 %v5977, %v5974
    %v6023 = vpack.c.b16 %v5981, %v5978
    %v6024 = vpack.c.b16 %v5982, %v5979
    %v6025 = vpack.c.b16 %v5983, %v5980
    %v6026 = vpack.c.b16 %v5987, %v5984
    %v6027 = vpack.c.b16 %v5988, %v5985
    %v6028 = vpack.c.b16 %v5989, %v5986
    %v6029 = vpack.c.b16 %v5993, %v5990
    %v6030 = vpack.c.b16 %v5994, %v5991
    %v6031 = vpack.c.b16 %v5995, %v5992
    %v6032 = vpack.c.b16 %v5999, %v5996
    %v6033 = vpack.c.b16 %v6000, %v5997
    %v6034 = vpack.c.b16 %v6001, %v5998
    %v6035 = vpack.c.b16 %v6005, %v6002
    %v6036 = vpack.c.b16 %v6006, %v6003
    %v6037 = vpack.c.b16 %v6007, %v6004
    %v6069 = vsel %vm315, %v5906, 0
    %6071 = vmatprep.subr.bf16.mxu0 %v6009
    %6072 = vmatpush1.bf16.msra.mxu0 %v6008
    %6073 = vmatprep.subr.bf16.mxu0 %v6012
    %6074 = vmatpush1.bf16.msra.mxu0 %v6011
    %6075 = vmatprep.subr.bf16.mxu0 %v6015
    %6076 = vmatpush1.bf16.msra.mxu0 %v6014
    %6077 = vmatprep.subr.bf16.mxu0 %v6018
    %6078 = vmatpush1.bf16.msra.mxu0 %v6017
    %6079 = vmatprep.subr.bf16.mxu0 %v6021
    %6080 = vmatpush1.bf16.msra.mxu0 %v6020
    %6081 = vmatprep.subr.bf16.mxu0 %v6024
    %6082 = vmatpush1.bf16.msra.mxu0 %v6023
    %6083 = vmatprep.subr.bf16.mxu0 %v6027
    %6084 = vmatpush1.bf16.msra.mxu0 %v6026
    %6085 = vmatprep.subr.bf16.mxu0 %v6030
    %6086 = vmatpush1.bf16.msra.mxu0 %v6029
    %6087 = vmatprep.subr.bf16.mxu0 %v6033
    %6088 = vmatpush1.bf16.msra.mxu0 %v6032
    %6089 = vmatprep.subr.bf16.mxu0 %v6036
    %6090 = vmatpush1.bf16.msra.mxu0 %v6035
    %6091 = vmatprep.subr.bf16.mxu0 0
    %6092 = vmatpush1.bf16.msra.mxu0 0
    %6093 = vmatprep.subr.bf16.mxu0 0
    %6094 = vmatpush1.bf16.msra.mxu0 0
    %6095 = vmatprep.subr.bf16.mxu0 0
    %6096 = vmatpush1.bf16.msra.mxu0 0
    %6097 = vmatprep.subr.bf16.mxu0 0
    %6098 = vmatpush1.bf16.msra.mxu0 0
    %6099 = vmatprep.subr.bf16.mxu0 0
    %6100 = vmatpush1.bf16.msra.mxu0 0
    %6101 = vmatprep.subr.bf16.mxu0 0
    %6102 = vmatpush1.bf16.msra.mxu0 0
    %6103 = vmatprep.mubr.bf16.mxu0 %v6069
    %6104 = vmatmul.mubr.bf16.gmra.mrb[0].mxu0 %v5905
    %v6105 = vpop.f32.mrb[0].mxu0
    %v6106 = vadd.f32 0.0, %v6105
    %v6107 = vpop.f32.mrb[0].mxu0
    %v6108 = vadd.f32 0.0, %v6107
    %v6109 = vpop.f32.mrb[0].mxu0
    %v6110 = vpop.f32.mrb[0].mxu0
    %6111 = vdwg.mxu0
    %6112 = vmatprep.subr.bf16.mxu0 0
    %6113 = vmatpush1.bf16.msra.mxu0 %v6010
    %6114 = vmatprep.subr.bf16.mxu0 0
    %6115 = vmatpush1.bf16.msra.mxu0 %v6013
    %6116 = vmatprep.subr.bf16.mxu0 0
    %6117 = vmatpush1.bf16.msra.mxu0 %v6016
    %6118 = vmatprep.subr.bf16.mxu0 0
    %6119 = vmatpush1.bf16.msra.mxu0 %v6019
    %6120 = vmatprep.subr.bf16.mxu0 0
    %6121 = vmatpush1.bf16.msra.mxu0 %v6022
    %6122 = vmatprep.subr.bf16.mxu0 0
    %6123 = vmatpush1.bf16.msra.mxu0 %v6025
    %6124 = vmatprep.subr.bf16.mxu0 0
    %6125 = vmatpush1.bf16.msra.mxu0 %v6028
    %6126 = vmatprep.subr.bf16.mxu0 0
    %6127 = vmatpush1.bf16.msra.mxu0 %v6031
    %6128 = vmatprep.subr.bf16.mxu0 0
    %6129 = vmatpush1.bf16.msra.mxu0 %v6034
    %6130 = vmatprep.subr.bf16.mxu0 0
    %6131 = vmatpush1.bf16.msra.mxu0 %v6037
    %6132 = vmatprep.subr.bf16.mxu0 0
    %6133 = vmatpush1.bf16.msra.mxu0 0
    %6134 = vmatprep.subr.bf16.mxu0 0
    %6135 = vmatpush1.bf16.msra.mxu0 0
    %6136 = vmatprep.subr.bf16.mxu0 0
    %6137 = vmatpush1.bf16.msra.mxu0 0
    %6138 = vmatprep.subr.bf16.mxu0 0
    %6139 = vmatpush1.bf16.msra.mxu0 0
    %6140 = vmatprep.subr.bf16.mxu0 0
    %6141 = vmatpush1.bf16.msra.mxu0 0
    %6142 = vmatprep.subr.bf16.mxu0 0
    %6143 = vmatpush1.bf16.msra.mxu0 0
    %6144 = vmatprep.mubr.bf16.mxu0 %v6069
    %6145 = vmatmul.mubr.bf16.gmra.mrb[0].mxu0 %v5905
    %v6146 = vpop.f32.mrb[0].mxu0
    %v6147 = vadd.f32 0.0, %v6146
    %v6148 = vpop.f32.mrb[0].mxu0
    %v6149 = vpop.f32.mrb[0].mxu0
    %v6150 = vpop.f32.mrb[0].mxu0
    %6151 = vdwg.mxu0
    %v6152 = vadd.f32 %v5854, %v6106
    %v6153 = vadd.f32 %v5855, %v6108
    %v6154 = vadd.f32 %v5856, %v6147
    %s6155 = scalar_lea.vmem [#allocation2], 144
    %6156 = vst [vmem:[%s6155] sm:$0xff] %v6152
    %6157 = vst [vmem:[%s6155 + $0x8] sm:$0xff] %v6153
    %6158 = vst.msk [vmem:[%s6155 + $0x10] sm:$0xff] %vm315, %v6154
    %v6159 = vrot.slane %v6152, 4
    %v6160 = vadd.f32 %v6152, %v6159
    %v6161 = vrot.slane %v6160, 2
    %v6162 = vadd.f32 %v6160, %v6161
    %v6163 = vrot.slane %v6162, 1
    %v6164 = vadd.f32 %v6162, %v6163
    %v6165 = vrot.slane %v6153, 4
    %v6166 = vadd.f32 %v6153, %v6165
    %v6167 = vrot.slane %v6166, 2
    %v6168 = vadd.f32 %v6166, %v6167
    %v6169 = vrot.slane %v6168, 1
    %v6170 = vadd.f32 %v6168, %v6169
    %v6171 = vsel %vm315, %v6154, 0.0
    %v6172 = vrot.slane %v6171, 4
    %v6173 = vadd.f32 %v6171, %v6172
    %v6174 = vrot.slane %v6173, 2
    %v6175 = vadd.f32 %v6173, %v6174
    %v6176 = vrot.slane %v6175, 1
    %v6177 = vadd.f32 %v6175, %v6176
    %v6178 = vadd.f32 %v4657, %v6164
    %v6179 = vadd.f32 %v4658, %v6170
    %v6180 = vadd.f32 %v4659, %v6177
    %v6181 = vmul.f32 %v6152, %v6152
    %v6182 = vmul.f32 %v6153, %v6153
    %v6183 = vmul.f32 %v6154, %v6154
    %v6184 = vrot.slane %v6181, 4
    %v6185 = vadd.f32 %v6181, %v6184
    %v6186 = vrot.slane %v6185, 2
    %v6187 = vadd.f32 %v6185, %v6186
    %v6188 = vrot.slane %v6187, 1
    %v6189 = vadd.f32 %v6187, %v6188
    %v6190 = vrot.slane %v6182, 4
    %v6191 = vadd.f32 %v6182, %v6190
    %v6192 = vrot.slane %v6191, 2
    %v6193 = vadd.f32 %v6191, %v6192
    %v6194 = vrot.slane %v6193, 1
    %v6195 = vadd.f32 %v6193, %v6194
    %v6196 = vsel %vm315, %v6183, 0.0
    %v6197 = vrot.slane %v6196, 4
    %v6198 = vadd.f32 %v6196, %v6197
    %v6199 = vrot.slane %v6198, 2
    %v6200 = vadd.f32 %v6198, %v6199
    %v6201 = vrot.slane %v6200, 1
    %v6202 = vadd.f32 %v6200, %v6201
    %v6203 = vadd.f32 %v4682, %v6189
    %v6204 = vadd.f32 %v4683, %v6195
    %v6205 = vadd.f32 %v4684, %v6202
    %vm6206 = vcmask 1040384
    %v6207 = vsel %vm6206, %v6178, %v6203
    %v6208 = vsel %vm6206, %v6179, %v6204
    %v6209 = vsel %vm6206, %v6180, %v6205
    %v6210 = vld [vmem:[%s4] sm:$0xff]
    %v6211 = vld [vmem:[%s4 + $0x8] sm:$0xff]
    %v6212 = vld [vmem:[%s4 + $0x10] sm:$0xff]
    %v6213 = vld [vmem:[%s4 + $0x18] sm:$0xff]
    %v6214 = vld [vmem:[%s4 + $0x20] sm:$0xff]
    %v6215 = vld [vmem:[%s4 + $0x28] sm:$0xff]
    %v6216 = vld [vmem:[%s4 + $0x30] sm:$0xff]
    %v6217 = vld [vmem:[%s4 + $0x38] sm:$0xff]
    %v6218 = vld [vmem:[%s4 + $0x40] sm:$0xff]
    %v6219 = vld [vmem:[%s4 + $0x48] sm:$0xff]
    %v6220 = vld [vmem:[%s4 + $0x50] sm:$0xff]
    %v6221 = vld [vmem:[%s4 + $0x58] sm:$0xff]
    %v6222 = vld [vmem:[%s4 + $0x60] sm:$0xff]
    %v6223 = vld [vmem:[%s4 + $0x68] sm:$0xff]
    %v6224 = vld [vmem:[%s4 + $0x70] sm:$0xff]
    %v6225 = vld [vmem:[%s4 + $0x78] sm:$0xff]
    %v6226 = vld [vmem:[%s4 + $0x80] sm:$0xff]
    %v6227 = vld [vmem:[%s4 + $0x88] sm:$0xff]
    %v6228 = vld [vmem:[%s4 + $0x90] sm:$0xff]
    %v6229 = vld [vmem:[%s4 + $0x98] sm:$0xff]
    %v6230 = vld [vmem:[%s4 + $0xa0] sm:$0xff]
    %v6231 = vld [vmem:[%s4 + $0xa8] sm:$0xff]
    %v6232 = vld [vmem:[%s4 + $0xb0] sm:$0xff]
    %v6233 = vld [vmem:[%s4 + $0xb8] sm:$0xff]
    %v6234 = vld [vmem:[%s4 + $0xc0] sm:$0xff]
    %v6235 = vld [vmem:[%s4 + $0xc8] sm:$0xff]
    %v6236 = vld [vmem:[%s4 + $0xd0] sm:$0xff]
    %v6237 = vld [vmem:[%s4 + $0xd8] sm:$0xff]
    %v6238 = vld [vmem:[%s4 + $0xe0] sm:$0xff]
    %v6239 = vld [vmem:[%s4 + $0xe8] sm:$0xff]
    %v6240 = vld [vmem:[%s4 + $0xf0] sm:$0xff]
    %v6241 = vld [vmem:[%s4 + $0xf8] sm:$0xff]
    %v6242 = vld [vmem:[%s4 + $0x100] sm:$0xff]
    %v6243 = vld [vmem:[%s4 + $0x108] sm:$0xff]
    %v6244 = vld [vmem:[%s4 + $0x110] sm:$0xff]
    %v6245 = vld [vmem:[%s4 + $0x118] sm:$0xff]
    %v6247 = vsel %vm315, %v6209, 0
    %6249 = vmatprep.subr.mxu0 0.0
    %6250 = vmatpush1.msra.mxu0 %v6210
    %6251 = vmatprep.subr.mxu0 0.0
    %6252 = vmatpush1.msra.mxu0 %v6211
    %6253 = vmatprep.subr.mxu0 0.0
    %6254 = vmatpush1.msra.mxu0 %v6212
    %6255 = vmatprep.subr.mxu0 0.0
    %6256 = vmatpush1.msra.mxu0 %v6213
    %6257 = vmatprep.subr.mxu0 0.0
    %6258 = vmatpush1.msra.mxu0 %v6214
    %6259 = vmatprep.subr.mxu0 0.0
    %6260 = vmatpush1.msra.mxu0 %v6215
    %6261 = vmatprep.subr.mxu0 0.0
    %6262 = vmatpush1.msra.mxu0 %v6216
    %6263 = vmatprep.subr.mxu0 0.0
    %6264 = vmatpush1.msra.mxu0 %v6217
    %6265 = vmatprep.subr.mxu0 0.0
    %6266 = vmatpush1.msra.mxu0 %v6218
    %6267 = vmatprep.subr.mxu0 0.0
    %6268 = vmatpush1.msra.mxu0 %v6219
    %6269 = vmatprep.subr.mxu0 0.0
    %6270 = vmatpush1.msra.mxu0 %v6220
    %6271 = vmatprep.subr.mxu0 0.0
    %6272 = vmatpush1.msra.mxu0 %v6221
    %6273 = vmatprep.subr.mxu0 0.0
    %6274 = vmatpush1.msra.mxu0 %v6222
    %6275 = vmatprep.subr.mxu0 0.0
    %6276 = vmatpush1.msra.mxu0 %v6223
    %6277 = vmatprep.subr.mxu0 0.0
    %6278 = vmatpush1.msra.mxu0 %v6224
    %6279 = vmatprep.subr.mxu0 0.0
    %6280 = vmatpush1.msra.mxu0 %v6225
    %6281 = vmatprep.subr.mxu0 0.0
    %6282 = vmatpush1.msra.mxu0 %v6226
    %6283 = vmatprep.subr.mxu0 0.0
    %6284 = vmatpush1.msra.mxu0 %v6227
    %6285 = vmatprep.subr.mxu0 0.0
    %6286 = vmatpush1.msra.mxu0 %v6228
    %6287 = vmatprep.subr.mxu0 0.0
    %6288 = vmatpush1.msra.mxu0 %v6229
    %6289 = vmatprep.subr.mxu0 0.0
    %6290 = vmatpush1.msra.mxu0 %v6230
    %6291 = vmatprep.subr.mxu0 0.0
    %6292 = vmatpush1.msra.mxu0 %v6231
    %6293 = vmatprep.subr.mxu0 0.0
    %6294 = vmatpush1.msra.mxu0 %v6232
    %6295 = vmatprep.subr.mxu0 0.0
    %6296 = vmatpush1.msra.mxu0 %v6233
    %6297 = vmatprep.subr.mxu0 0.0
    %6298 = vmatpush1.msra.mxu0 %v6234
    %6299 = vmatprep.subr.mxu0 0.0
    %6300 = vmatpush1.msra.mxu0 %v6235
    %6301 = vmatprep.subr.mxu0 0.0
    %6302 = vmatpush1.msra.mxu0 %v6236
    %6303 = vmatprep.subr.mxu0 0.0
    %6304 = vmatpush1.msra.mxu0 %v6237
    %6305 = vmatprep.subr.mxu0 0.0
    %6306 = vmatpush1.msra.mxu0 %v6238
    %6307 = vmatprep.subr.mxu0 0.0
    %6308 = vmatpush1.msra.mxu0 %v6239
    %6309 = vmatprep.subr.mxu0 0.0
    %6310 = vmatpush1.msra.mxu0 %v6240
    %6311 = vmatprep.subr.mxu0 0.0
    %6312 = vmatpush1.msra.mxu0 %v6241
    %6313 = vmatprep.mubr.f32.mxu0 %v6208
    %6314 = vmatmul.mubr.f32.gmra.mrb[0].mxu0 %v6207
    %v6315 = vpop.f32.mrb[0].mxu0
    %v6316 = vadd.f32 0.0, %v6315
    %v6317 = vpop.f32.mrb[0].mxu0
    %6318 = vdwg.mxu0
    %6319 = vmatprep.subr.mxu0 0.0
    %6320 = vmatpush1.msra.mxu0 %v6242
    %6321 = vmatprep.subr.mxu0 0.0
    %6322 = vmatpush1.msra.mxu0 %v6243
    %6323 = vmatprep.subr.mxu0 0.0
    %6324 = vmatpush1.msra.mxu0 %v6244
    %6325 = vmatprep.subr.mxu0 0.0
    %6326 = vmatpush1.msra.mxu0 %v6245
    %6327 = vmatprep.subr.mxu0 0.0
    %6328 = vmatpush1.msra.mxu0 0.0
    %6329 = vmatprep.subr.mxu0 0.0
    %6330 = vmatpush1.msra.mxu0 0.0
    %6331 = vmatprep.subr.mxu0 0.0
    %6332 = vmatpush1.msra.mxu0 0.0
    %6333 = vmatprep.subr.mxu0 0.0
    %6334 = vmatpush1.msra.mxu0 0.0
    %6335 = vmatprep.subr.mxu0 0.0
    %6336 = vmatpush1.msra.mxu0 0.0
    %6337 = vmatprep.subr.mxu0 0.0
    %6338 = vmatpush1.msra.mxu0 0.0
    %6339 = vmatprep.subr.mxu0 0.0
    %6340 = vmatpush1.msra.mxu0 0.0
    %6341 = vmatprep.subr.mxu0 0.0
    %6342 = vmatpush1.msra.mxu0 0.0
    %6343 = vmatprep.subr.mxu0 0.0
    %6344 = vmatpush1.msra.mxu0 0.0
    %6345 = vmatprep.subr.mxu0 0.0
    %6346 = vmatpush1.msra.mxu0 0.0
    %6347 = vmatprep.subr.mxu0 0.0
    %6348 = vmatpush1.msra.mxu0 0.0
    %6349 = vmatprep.subr.mxu0 0.0
    %6350 = vmatpush1.msra.mxu0 0.0
    %6351 = vmatprep.subr.mxu0 0.0
    %6352 = vmatpush1.msra.mxu0 0.0
    %6353 = vmatprep.subr.mxu0 0.0
    %6354 = vmatpush1.msra.mxu0 0.0
    %6355 = vmatprep.subr.mxu0 0.0
    %6356 = vmatpush1.msra.mxu0 0.0
    %6357 = vmatprep.subr.mxu0 0.0
    %6358 = vmatpush1.msra.mxu0 0.0
    %6359 = vmatprep.subr.mxu0 0.0
    %6360 = vmatpush1.msra.mxu0 0.0
    %6361 = vmatprep.subr.mxu0 0.0
    %6362 = vmatpush1.msra.mxu0 0.0
    %6363 = vmatprep.subr.mxu0 0.0
    %6364 = vmatpush1.msra.mxu0 0.0
    %6365 = vmatprep.subr.mxu0 0.0
    %6366 = vmatpush1.msra.mxu0 0.0
    %6367 = vmatprep.subr.mxu0 0.0
    %6368 = vmatpush1.msra.mxu0 0.0
    %6369 = vmatprep.subr.mxu0 0.0
    %6370 = vmatpush1.msra.mxu0 0.0
    %6371 = vmatprep.subr.mxu0 0.0
    %6372 = vmatpush1.msra.mxu0 0.0
    %6373 = vmatprep.subr.mxu0 0.0
    %6374 = vmatpush1.msra.mxu0 0.0
    %6375 = vmatprep.subr.mxu0 0.0
    %6376 = vmatpush1.msra.mxu0 0.0
    %6377 = vmatprep.subr.mxu0 0.0
    %6378 = vmatpush1.msra.mxu0 0.0
    %6379 = vmatprep.subr.mxu0 0.0
    %6380 = vmatpush1.msra.mxu0 0.0
    %6381 = vmatprep.subr.mxu0 0.0
    %6382 = vmatpush1.msra.mxu0 0.0
    %6383 = vmatprep.mubr.f32.mxu0 0.0
    %6384 = vmatmul.mubr.f32.gmra.mrb[0].mxu0 %v6247
    %v6385 = vpop.f32.mrb[0].mxu0
    %v6386 = vadd.f32 %v6316, %v6385
    %v6387 = vpop.f32.mrb[0].mxu0
    %6388 = vdwg.mxu0
    %v6389 = vrcp.pop 648.0
    %v6390 = vmul.f32 %v6386, %v6389
    %v6391 = vmul.f32 %v6390, %v6390
    %v6393 = vrot.slane %v6391, 7
    %v6395 = vsub.f32 %v6390, %v6393
    %v6396 = vmax.f32 %v6395, 0.0
    %v6397 = vld [vmem:[%s2] sm:$0x1]
    %v6398 = vadd.f32 %v6396, 1e-05
    %v6399 = vrsqrt.pop %v6398
    %v6402 = vunpack.c.l.s4 1966171168
    %v6403 = vunpack.c.0.s8 %v6402
    %v6404 = vlaneseq
    %v6405 = vshrl.u32 %v6404, 7
    %v6406 = vsub.s32 %v6403, %v6405
    %v6407 = vrot.slane %v6399, %v6406
    %v6408 = vcombine.high %v6407, %v6407
    %v6410 = vunpack.c.l.s4 1966171168
    %v6411 = vunpack.c.0.s8 %v6410
    %v6412 = vlaneseq
    %v6413 = vshrl.u32 %v6412, 7
    %v6414 = vsub.s32 %v6411, %v6413
    %v6415 = vrot.slane %v6408, %v6414
    %v6417 = vmul.f32 %v6397, %v6415
    %v6418 = vld [vmem:[%s3] sm:$0x1]
    %v6419 = vmul.f32 %v6390, %v6417
    %v6420 = vsub.f32 %v6418, %v6419
    %v6422 = vlaneseq
    %v6423 = vshrl.u32 %v6422, 7
    %v6424 = vsub.s32 0, %v6423
    %v6425 = vrot.slane %v6420, %v6424
    %v6427 = vsel %vm6206, %v6417, %v6425
    %v6428 = vld [vmem:[%s5] sm:$0xff]
    %v6429 = vld [vmem:[%s5 + $0x8] sm:$0xff]
    %v6430 = vld [vmem:[%s5 + $0x10] sm:$0xff]
    %v6431 = vld [vmem:[%s5 + $0x18] sm:$0xff]
    %v6432 = vld [vmem:[%s5 + $0x20] sm:$0xff]
    %v6433 = vld [vmem:[%s5 + $0x28] sm:$0xff]
    %vm6434 = vcmask 130048
    %v6436 = vsel %vm6434, %v6427, 0
    %6438 = vmatprep.subr.mxu0 %v6429
    %6439 = vmatpush1.msra.mxu0 %v6428
    %6440 = vmatprep.subr.mxu0 %v6432
    %6441 = vmatpush1.msra.mxu0 %v6431
    %6442 = vmatprep.subr.mxu0 0.0
    %6443 = vmatpush1.msra.mxu0 0.0
    %6444 = vmatprep.subr.mxu0 0.0
    %6445 = vmatpush1.msra.mxu0 0.0
    %6446 = vmatprep.subr.mxu0 0.0
    %6447 = vmatpush1.msra.mxu0 0.0
    %6448 = vmatprep.subr.mxu0 0.0
    %6449 = vmatpush1.msra.mxu0 0.0
    %6450 = vmatprep.subr.mxu0 0.0
    %6451 = vmatpush1.msra.mxu0 0.0
    %6452 = vmatprep.subr.mxu0 0.0
    %6453 = vmatpush1.msra.mxu0 0.0
    %6454 = vmatprep.subr.mxu0 0.0
    %6455 = vmatpush1.msra.mxu0 0.0
    %6456 = vmatprep.subr.mxu0 0.0
    %6457 = vmatpush1.msra.mxu0 0.0
    %6458 = vmatprep.subr.mxu0 0.0
    %6459 = vmatpush1.msra.mxu0 0.0
    %6460 = vmatprep.subr.mxu0 0.0
    %6461 = vmatpush1.msra.mxu0 0.0
    %6462 = vmatprep.subr.mxu0 0.0
    %6463 = vmatpush1.msra.mxu0 0.0
    %6464 = vmatprep.subr.mxu0 0.0
    %6465 = vmatpush1.msra.mxu0 0.0
    %6466 = vmatprep.subr.mxu0 0.0
    %6467 = vmatpush1.msra.mxu0 0.0
    %6468 = vmatprep.subr.mxu0 0.0
    %6469 = vmatpush1.msra.mxu0 0.0
    %6470 = vmatprep.subr.mxu0 0.0
    %6471 = vmatpush1.msra.mxu0 0.0
    %6472 = vmatprep.subr.mxu0 0.0
    %6473 = vmatpush1.msra.mxu0 0.0
    %6474 = vmatprep.subr.mxu0 0.0
    %6475 = vmatpush1.msra.mxu0 0.0
    %6476 = vmatprep.subr.mxu0 0.0
    %6477 = vmatpush1.msra.mxu0 0.0
    %6478 = vmatprep.subr.mxu0 0.0
    %6479 = vmatpush1.msra.mxu0 0.0
    %6480 = vmatprep.subr.mxu0 0.0
    %6481 = vmatpush1.msra.mxu0 0.0
    %6482 = vmatprep.subr.mxu0 0.0
    %6483 = vmatpush1.msra.mxu0 0.0
    %6484 = vmatprep.subr.mxu0 0.0
    %6485 = vmatpush1.msra.mxu0 0.0
    %6486 = vmatprep.subr.mxu0 0.0
    %6487 = vmatpush1.msra.mxu0 0.0
    %6488 = vmatprep.subr.mxu0 0.0
    %6489 = vmatpush1.msra.mxu0 0.0
    %6490 = vmatprep.subr.mxu0 0.0
    %6491 = vmatpush1.msra.mxu0 0.0
    %6492 = vmatprep.subr.mxu0 0.0
    %6493 = vmatpush1.msra.mxu0 0.0
    %6494 = vmatprep.subr.mxu0 0.0
    %6495 = vmatpush1.msra.mxu0 0.0
    %6496 = vmatprep.subr.mxu0 0.0
    %6497 = vmatpush1.msra.mxu0 0.0
    %6498 = vmatprep.subr.mxu0 0.0
    %6499 = vmatpush1.msra.mxu0 0.0
    %6500 = vmatprep.subr.mxu0 0.0
    %6501 = vmatpush1.msra.mxu0 0.0
    %6502 = vmatprep.mubr.f32.mxu0 0.0
    %6503 = vmatmul.mubr.f32.gmra.mrb[0].mxu0 %v6436
    %v6504 = vpop.f32.mrb[0].mxu0
    %v6505 = vadd.f32 0.0, %v6504
    %v6506 = vpop.f32.mrb[0].mxu0
    %v6507 = vadd.f32 0.0, %v6506
    %6508 = vdwg.mxu0
    %6509 = vmatprep.subr.mxu0 0.0
    %6510 = vmatpush1.msra.mxu0 %v6430
    %6511 = vmatprep.subr.mxu0 0.0
    %6512 = vmatpush1.msra.mxu0 %v6433
    %6513 = vmatprep.subr.mxu0 0.0
    %6514 = vmatpush1.msra.mxu0 0.0
    %6515 = vmatprep.subr.mxu0 0.0
    %6516 = vmatpush1.msra.mxu0 0.0
    %6517 = vmatprep.subr.mxu0 0.0
    %6518 = vmatpush1.msra.mxu0 0.0
    %6519 = vmatprep.subr.mxu0 0.0
    %6520 = vmatpush1.msra.mxu0 0.0
    %6521 = vmatprep.subr.mxu0 0.0
    %6522 = vmatpush1.msra.mxu0 0.0
    %6523 = vmatprep.subr.mxu0 0.0
    %6524 = vmatpush1.msra.mxu0 0.0
    %6525 = vmatprep.subr.mxu0 0.0
    %6526 = vmatpush1.msra.mxu0 0.0
    %6527 = vmatprep.subr.mxu0 0.0
    %6528 = vmatpush1.msra.mxu0 0.0
    %6529 = vmatprep.subr.mxu0 0.0
    %6530 = vmatpush1.msra.mxu0 0.0
    %6531 = vmatprep.subr.mxu0 0.0
    %6532 = vmatpush1.msra.mxu0 0.0
    %6533 = vmatprep.subr.mxu0 0.0
    %6534 = vmatpush1.msra.mxu0 0.0
    %6535 = vmatprep.subr.mxu0 0.0
    %6536 = vmatpush1.msra.mxu0 0.0
    %6537 = vmatprep.subr.mxu0 0.0
    %6538 = vmatpush1.msra.mxu0 0.0
    %6539 = vmatprep.subr.mxu0 0.0
    %6540 = vmatpush1.msra.mxu0 0.0
    %6541 = vmatprep.subr.mxu0 0.0
    %6542 = vmatpush1.msra.mxu0 0.0
    %6543 = vmatprep.subr.mxu0 0.0
    %6544 = vmatpush1.msra.mxu0 0.0
    %6545 = vmatprep.subr.mxu0 0.0
    %6546 = vmatpush1.msra.mxu0 0.0
    %6547 = vmatprep.subr.mxu0 0.0
    %6548 = vmatpush1.msra.mxu0 0.0
    %6549 = vmatprep.subr.mxu0 0.0
    %6550 = vmatpush1.msra.mxu0 0.0
    %6551 = vmatprep.subr.mxu0 0.0
    %6552 = vmatpush1.msra.mxu0 0.0
    %6553 = vmatprep.subr.mxu0 0.0
    %6554 = vmatpush1.msra.mxu0 0.0
    %6555 = vmatprep.subr.mxu0 0.0
    %6556 = vmatpush1.msra.mxu0 0.0
    %6557 = vmatprep.subr.mxu0 0.0
    %6558 = vmatpush1.msra.mxu0 0.0
    %6559 = vmatprep.subr.mxu0 0.0
    %6560 = vmatpush1.msra.mxu0 0.0
    %6561 = vmatprep.subr.mxu0 0.0
    %6562 = vmatpush1.msra.mxu0 0.0
    %6563 = vmatprep.subr.mxu0 0.0
    %6564 = vmatpush1.msra.mxu0 0.0
    %6565 = vmatprep.subr.mxu0 0.0
    %6566 = vmatpush1.msra.mxu0 0.0
    %6567 = vmatprep.subr.mxu0 0.0
    %6568 = vmatpush1.msra.mxu0 0.0
    %6569 = vmatprep.subr.mxu0 0.0
    %6570 = vmatpush1.msra.mxu0 0.0
    %6571 = vmatprep.subr.mxu0 0.0
    %6572 = vmatpush1.msra.mxu0 0.0
    %6573 = vmatprep.mubr.f32.mxu0 0.0
    %6574 = vmatmul.mubr.f32.gmra.mrb[0].mxu0 %v6436
    %v6575 = vpop.f32.mrb[0].mxu0
    %v6576 = vadd.f32 0.0, %v6575
    %v6577 = vpop.f32.mrb[0].mxu0
    %6578 = vdwg.mxu0
    %v6579 = vld [vmem:[#allocation2] sm:$0xff]
    %v6580 = vld [vmem:[#allocation2 + $0x8] sm:$0xff]
    %v6581 = vld [vmem:[#allocation2 + $0x10] sm:$0xff]
    %v6582 = vld [vmem:[#allocation2 + $0x18] sm:$0x3]
    %v6583 = vld [vmem:[#allocation2 + $0x20] sm:$0x3]
    %v6584 = vld [vmem:[#allocation2 + $0x28] sm:$0x3]
    %v6585 = vlaneseq
    %v6586 = vshrl.u32 %v6585, 7
    %v6587 = vsub.s32 0, %v6586
    %v6588 = vrot.slane %v6505, %v6587
    %v6589 = vlaneseq
    %v6590 = vshrl.u32 %v6589, 7
    %v6591 = vsub.s32 0, %v6590
    %v6592 = vrot.slane %v6507, %v6591
    %v6593 = vlaneseq
    %v6594 = vshrl.u32 %v6593, 7
    %v6595 = vsub.s32 0, %v6594
    %v6596 = vrot.slane %v6576, %v6595
    %v6597 = vmul.f32 %v6579, %v6588
    %v6598 = vmul.f32 %v6580, %v6592
    %v6599 = vmul.f32 %v6581, %v6596
    %v6600 = vmul.f32 %v6582, %v6588
    %v6601 = vmul.f32 %v6583, %v6592
    %v6602 = vmul.f32 %v6584, %v6596
    %v6603 = vlaneseq
    %v6604 = vshrl.u32 %v6603, 7
    %v6605 = vsub.s32 1, %v6604
    %v6606 = vrot.slane %v6505, %v6605
    %v6607 = vlaneseq
    %v6608 = vshrl.u32 %v6607, 7
    %v6609 = vsub.s32 1, %v6608
    %v6610 = vrot.slane %v6507, %v6609
    %v6611 = vlaneseq
    %v6612 = vshrl.u32 %v6611, 7
    %v6613 = vsub.s32 1, %v6612
    %v6614 = vrot.slane %v6576, %v6613
    %v6615 = vadd.f32 %v6597, %v6606
    %v6616 = vadd.f32 %v6598, %v6610
    %v6617 = vadd.f32 %v6599, %v6614
    %v6618 = vadd.f32 %v6600, %v6606
    %v6619 = vadd.f32 %v6601, %v6610
    %v6620 = vadd.f32 %v6602, %v6614
    %v6621 = vmax.f32 %v6615, 0.0
    %v6622 = vmax.f32 %v6616, 0.0
    %v6623 = vmax.f32 %v6617, 0.0
    %v6624 = vmax.f32 %v6618, 0.0
    %v6625 = vmax.f32 %v6619, 0.0
    %v6626 = vmax.f32 %v6620, 0.0
    %6627 = vst [vmem:[#allocation2] sm:$0xff] %v6621
    %6628 = vst [vmem:[#allocation2 + $0x8] sm:$0xff] %v6622
    %6629 = vst.msk [vmem:[#allocation2 + $0x10] sm:$0xff] %vm315, %v6623
    %6630 = vst [vmem:[#allocation2 + $0x18] sm:$0x3] %v6624
    %6631 = vst [vmem:[#allocation2 + $0x20] sm:$0x3] %v6625
    %6632 = vst.msk [vmem:[#allocation2 + $0x28] sm:$0x3] %vm1558, %v6626
    %v6633 = vld [vmem:[%s3108] sm:$0xff]
    %v6634 = vld [vmem:[%s3108 + $0x8] sm:$0xff]
    %v6635 = vld [vmem:[%s3108 + $0x10] sm:$0xff]
    %v6636 = vld [vmem:[%s3108 + $0x18] sm:$0x3]
    %v6637 = vld [vmem:[%s3108 + $0x20] sm:$0x3]
    %v6638 = vld [vmem:[%s3108 + $0x28] sm:$0x3]
    %v6639 = vmul.f32 %v6633, %v6588
    %v6640 = vmul.f32 %v6634, %v6592
    %v6641 = vmul.f32 %v6635, %v6596
    %v6642 = vmul.f32 %v6636, %v6588
    %v6643 = vmul.f32 %v6637, %v6592
    %v6644 = vmul.f32 %v6638, %v6596
    %v6645 = vadd.f32 %v6639, %v6606
    %v6646 = vadd.f32 %v6640, %v6610
    %v6647 = vadd.f32 %v6641, %v6614
    %v6648 = vadd.f32 %v6642, %v6606
    %v6649 = vadd.f32 %v6643, %v6610
    %v6650 = vadd.f32 %v6644, %v6614
    %v6651 = vmax.f32 %v6645, 0.0
    %v6652 = vmax.f32 %v6646, 0.0
    %v6653 = vmax.f32 %v6647, 0.0
    %v6654 = vmax.f32 %v6648, 0.0
    %v6655 = vmax.f32 %v6649, 0.0
    %v6656 = vmax.f32 %v6650, 0.0
    %6657 = vst [vmem:[%s3108] sm:$0xff] %v6651
    %6658 = vst [vmem:[%s3108 + $0x8] sm:$0xff] %v6652
    %6659 = vst.msk [vmem:[%s3108 + $0x10] sm:$0xff] %vm315, %v6653
    %6660 = vst [vmem:[%s3108 + $0x18] sm:$0x3] %v6654
    %6661 = vst [vmem:[%s3108 + $0x20] sm:$0x3] %v6655
    %6662 = vst.msk [vmem:[%s3108 + $0x28] sm:$0x3] %vm1558, %v6656
    %v6663 = vld [vmem:[%s4634] sm:$0xff]
    %v6664 = vld [vmem:[%s4634 + $0x8] sm:$0xff]
    %v6665 = vld [vmem:[%s4634 + $0x10] sm:$0xff]
    %v6666 = vmul.f32 %v6663, %v6588
    %v6667 = vmul.f32 %v6664, %v6592
    %v6668 = vmul.f32 %v6665, %v6596
    %v6669 = vadd.f32 %v6666, %v6606
    %v6670 = vadd.f32 %v6667, %v6610
    %v6671 = vadd.f32 %v6668, %v6614
    %v6672 = vmax.f32 %v6669, 0.0
    %v6673 = vmax.f32 %v6670, 0.0
    %v6674 = vmax.f32 %v6671, 0.0
    %6675 = vst [vmem:[%s4634] sm:$0xff] %v6672
    %6676 = vst [vmem:[%s4634 + $0x8] sm:$0xff] %v6673
    %6677 = vst.msk [vmem:[%s4634 + $0x10] sm:$0xff] %vm315, %v6674
    %v6678 = vld [vmem:[%s6155] sm:$0xff]
    %v6679 = vld [vmem:[%s6155 + $0x8] sm:$0xff]
    %v6680 = vld [vmem:[%s6155 + $0x10] sm:$0xff]
    %v6681 = vmul.f32 %v6678, %v6588
    %v6682 = vmul.f32 %v6679, %v6592
    %v6683 = vmul.f32 %v6680, %v6596
    %v6684 = vadd.f32 %v6681, %v6606
    %v6685 = vadd.f32 %v6682, %v6610
    %v6686 = vadd.f32 %v6683, %v6614
    %v6687 = vmax.f32 %v6684, 0.0
    %v6688 = vmax.f32 %v6685, 0.0
    %v6689 = vmax.f32 %v6686, 0.0
    %6690 = vst [vmem:[%s6155] sm:$0xff] %v6687
    %6691 = vst [vmem:[%s6155 + $0x8] sm:$0xff] %v6688
    %6692 = vst.msk [vmem:[%s6155 + $0x10] sm:$0xff] %vm315, %v6689
    %v6693 = vld [vmem:[#allocation2] sm:$0xff]
    %v6694 = vld [vmem:[#allocation2 + $0x8] sm:$0xff]
    %v6695 = vld [vmem:[#allocation2 + $0x10] sm:$0xff]
    %v6696 = vpack.c.bf16 %v6693, %v6693
    %v6697 = vpack.c.bf16 %v6694, %v6694
    %v6698 = vpack.c.bf16 %v6695, %v6695
    %v6699 = vld [vmem:[%s6] sm:$0xff]
    %v6700 = vld [vmem:[%s6 + $0x8] sm:$0xff]
    %v6701 = vld [vmem:[%s6 + $0x10] sm:$0xff]
    %v6702 = vld [vmem:[%s6 + $0x18] sm:$0xff]
    %v6703 = vld [vmem:[%s6 + $0x20] sm:$0xff]
    %v6704 = vld [vmem:[%s6 + $0x28] sm:$0xff]
    %v6705 = vld [vmem:[%s6 + $0x30] sm:$0xff]
    %v6706 = vld [vmem:[%s6 + $0x38] sm:$0xff]
    %v6707 = vld [vmem:[%s6 + $0x40] sm:$0xff]
    %v6708 = vld [vmem:[%s6 + $0x48] sm:$0xff]
    %v6709 = vld [vmem:[%s6 + $0x50] sm:$0xff]
    %v6710 = vld [vmem:[%s6 + $0x58] sm:$0xff]
    %v6711 = vld [vmem:[%s6 + $0x60] sm:$0xff]
    %v6712 = vld [vmem:[%s6 + $0x68] sm:$0xff]
    %v6713 = vld [vmem:[%s6 + $0x70] sm:$0xff]
    %v6714 = vld [vmem:[%s6 + $0x78] sm:$0xff]
    %v6715 = vld [vmem:[%s6 + $0x80] sm:$0xff]
    %v6716 = vld [vmem:[%s6 + $0x88] sm:$0xff]
    %v6717 = vld [vmem:[%s6 + $0x90] sm:$0xff]
    %v6718 = vld [vmem:[%s6 + $0x98] sm:$0xff]
    %v6719 = vld [vmem:[%s6 + $0xa0] sm:$0xff]
    %v6720 = vld [vmem:[%s6 + $0xa8] sm:$0xff]
    %v6721 = vld [vmem:[%s6 + $0xb0] sm:$0xff]
    %v6722 = vld [vmem:[%s6 + $0xb8] sm:$0xff]
    %v6723 = vld [vmem:[%s6 + $0xc0] sm:$0xff]
    %v6724 = vld [vmem:[%s6 + $0xc8] sm:$0xff]
    %v6725 = vld [vmem:[%s6 + $0xd0] sm:$0xff]
    %v6726 = vld [vmem:[%s6 + $0xd8] sm:$0xff]
    %v6727 = vld [vmem:[%s6 + $0xe0] sm:$0xff]
    %v6728 = vld [vmem:[%s6 + $0xe8] sm:$0xff]
    %v6729 = vld [vmem:[%s6 + $0xf0] sm:$0xff]
    %v6730 = vld [vmem:[%s6 + $0xf8] sm:$0xff]
    %v6731 = vld [vmem:[%s6 + $0x100] sm:$0xff]
    %v6732 = vld [vmem:[%s6 + $0x108] sm:$0xff]
    %v6733 = vld [vmem:[%s6 + $0x110] sm:$0xff]
    %v6734 = vld [vmem:[%s6 + $0x118] sm:$0xff]
    %v6735 = vld [vmem:[%s3108] sm:$0xff]
    %v6736 = vld [vmem:[%s3108 + $0x8] sm:$0xff]
    %v6737 = vld [vmem:[%s3108 + $0x10] sm:$0xff]
    %v6738 = vpack.c.bf16 %v6735, %v6735
    %v6739 = vpack.c.bf16 %v6736, %v6736
    %v6740 = vpack.c.bf16 %v6737, %v6737
    %s6741 = scalar_lea.vmem %s6, 288
    %v6742 = vld [vmem:[%s6741] sm:$0xff]
    %v6743 = vld [vmem:[%s6741 + $0x8] sm:$0xff]
    %v6744 = vld [vmem:[%s6741 + $0x10] sm:$0xff]
    %v6745 = vld [vmem:[%s6741 + $0x18] sm:$0xff]
    %v6746 = vld [vmem:[%s6741 + $0x20] sm:$0xff]
    %v6747 = vld [vmem:[%s6741 + $0x28] sm:$0xff]
    %v6748 = vld [vmem:[%s6741 + $0x30] sm:$0xff]
    %v6749 = vld [vmem:[%s6741 + $0x38] sm:$0xff]
    %v6750 = vld [vmem:[%s6741 + $0x40] sm:$0xff]
    %v6751 = vld [vmem:[%s6741 + $0x48] sm:$0xff]
    %v6752 = vld [vmem:[%s6741 + $0x50] sm:$0xff]
    %v6753 = vld [vmem:[%s6741 + $0x58] sm:$0xff]
    %v6754 = vld [vmem:[%s6741 + $0x60] sm:$0xff]
    %v6755 = vld [vmem:[%s6741 + $0x68] sm:$0xff]
    %v6756 = vld [vmem:[%s6741 + $0x70] sm:$0xff]
    %v6757 = vld [vmem:[%s6741 + $0x78] sm:$0xff]
    %v6758 = vld [vmem:[%s6741 + $0x80] sm:$0xff]
    %v6759 = vld [vmem:[%s6741 + $0x88] sm:$0xff]
    %v6760 = vld [vmem:[%s6741 + $0x90] sm:$0xff]
    %v6761 = vld [vmem:[%s6741 + $0x98] sm:$0xff]
    %v6762 = vld [vmem:[%s6741 + $0xa0] sm:$0xff]
    %v6763 = vld [vmem:[%s6741 + $0xa8] sm:$0xff]
    %v6764 = vld [vmem:[%s6741 + $0xb0] sm:$0xff]
    %v6765 = vld [vmem:[%s6741 + $0xb8] sm:$0xff]
    %v6766 = vld [vmem:[%s6741 + $0xc0] sm:$0xff]
    %v6767 = vld [vmem:[%s6741 + $0xc8] sm:$0xff]
    %v6768 = vld [vmem:[%s6741 + $0xd0] sm:$0xff]
    %v6769 = vld [vmem:[%s6741 + $0xd8] sm:$0xff]
    %v6770 = vld [vmem:[%s6741 + $0xe0] sm:$0xff]
    %v6771 = vld [vmem:[%s6741 + $0xe8] sm:$0xff]
    %v6772 = vld [vmem:[%s6741 + $0xf0] sm:$0xff]
    %v6773 = vld [vmem:[%s6741 + $0xf8] sm:$0xff]
    %v6774 = vld [vmem:[%s6741 + $0x100] sm:$0xff]
    %v6775 = vld [vmem:[%s6741 + $0x108] sm:$0xff]
    %v6776 = vld [vmem:[%s6741 + $0x110] sm:$0xff]
    %v6777 = vld [vmem:[%s6741 + $0x118] sm:$0xff]
    %v6814 = vunpack.c.l.b16 %v6742
    %v6815 = vunpack.c.h.b16 %v6742
    %v6816 = vunpack.c.l.b16 %v6743
    %v6817 = vunpack.c.h.b16 %v6743
    %v6818 = vunpack.c.l.b16 %v6744
    %v6819 = vunpack.c.h.b16 %v6744
    %v6820 = vunpack.c.l.b16 %v6745
    %v6821 = vunpack.c.h.b16 %v6745
    %v6822 = vunpack.c.l.b16 %v6746
    %v6823 = vunpack.c.h.b16 %v6746
    %v6824 = vunpack.c.l.b16 %v6747
    %v6825 = vunpack.c.h.b16 %v6747
    %v6826 = vunpack.c.l.b16 %v6748
    %v6827 = vunpack.c.h.b16 %v6748
    %v6828 = vunpack.c.l.b16 %v6749
    %v6829 = vunpack.c.h.b16 %v6749
    %v6830 = vunpack.c.l.b16 %v6750
    %v6831 = vunpack.c.h.b16 %v6750
    %v6832 = vunpack.c.l.b16 %v6751
    %v6833 = vunpack.c.h.b16 %v6751
    %v6834 = vunpack.c.l.b16 %v6752
    %v6835 = vunpack.c.h.b16 %v6752
    %v6836 = vunpack.c.l.b16 %v6753
    %v6837 = vunpack.c.h.b16 %v6753
    %v6838 = vunpack.c.l.b16 %v6754
    %v6839 = vunpack.c.h.b16 %v6754
    %v6840 = vunpack.c.l.b16 %v6755
    %v6841 = vunpack.c.h.b16 %v6755
    %v6842 = vunpack.c.l.b16 %v6756
    %v6843 = vunpack.c.h.b16 %v6756
    %v6844 = vunpack.c.l.b16 %v6757
    %v6845 = vunpack.c.h.b16 %v6757
    %v6846 = vunpack.c.l.b16 %v6758
    %v6847 = vunpack.c.h.b16 %v6758
    %v6848 = vunpack.c.l.b16 %v6759
    %v6849 = vunpack.c.h.b16 %v6759
    %v6850 = vunpack.c.l.b16 %v6760
    %v6851 = vunpack.c.h.b16 %v6760
    %v6852 = vunpack.c.l.b16 %v6761
    %v6853 = vunpack.c.h.b16 %v6761
    %v6854 = vunpack.c.l.b16 %v6762
    %v6855 = vunpack.c.h.b16 %v6762
    %v6856 = vunpack.c.l.b16 %v6763
    %v6857 = vunpack.c.h.b16 %v6763
    %v6858 = vunpack.c.l.b16 %v6764
    %v6859 = vunpack.c.h.b16 %v6764
    %v6860 = vunpack.c.l.b16 %v6765
    %v6861 = vunpack.c.h.b16 %v6765
    %v6862 = vunpack.c.l.b16 %v6766
    %v6863 = vunpack.c.h.b16 %v6766
    %v6864 = vunpack.c.l.b16 %v6767
    %v6865 = vunpack.c.h.b16 %v6767
    %v6866 = vunpack.c.l.b16 %v6768
    %v6867 = vunpack.c.h.b16 %v6768
    %v6868 = vunpack.c.l.b16 %v6769
    %v6869 = vunpack.c.h.b16 %v6769
    %v6870 = vunpack.c.l.b16 %v6770
    %v6871 = vunpack.c.h.b16 %v6770
    %v6872 = vunpack.c.l.b16 %v6771
    %v6873 = vunpack.c.h.b16 %v6771
    %v6874 = vunpack.c.l.b16 %v6772
    %v6875 = vunpack.c.h.b16 %v6772
    %v6876 = vunpack.c.l.b16 %v6773
    %v6877 = vunpack.c.h.b16 %v6773
    %v6878 = vunpack.c.l.b16 %v6774
    %v6879 = vunpack.c.h.b16 %v6774
    %v6880 = vunpack.c.l.b16 %v6775
    %v6881 = vunpack.c.h.b16 %v6775
    %v6882 = vunpack.c.l.b16 %v6776
    %v6883 = vunpack.c.h.b16 %v6776
    %v6884 = vunpack.c.l.b16 %v6777
    %v6885 = vunpack.c.h.b16 %v6777
    %v6886 = vpack.c.b16 %v6816, %v6814
    %v6887 = vpack.c.b16 %v6817, %v6815
    %v6888 = vpack.c.b16 %v6820, %v6818
    %v6889 = vpack.c.b16 %v6821, %v6819
    %v6890 = vpack.c.b16 %v6824, %v6822
    %v6891 = vpack.c.b16 %v6825, %v6823
    %v6892 = vpack.c.b16 %v6828, %v6826
    %v6893 = vpack.c.b16 %v6829, %v6827
    %v6894 = vpack.c.b16 %v6832, %v6830
    %v6895 = vpack.c.b16 %v6833, %v6831
    %v6896 = vpack.c.b16 %v6836, %v6834
    %v6897 = vpack.c.b16 %v6837, %v6835
    %v6898 = vpack.c.b16 %v6840, %v6838
    %v6899 = vpack.c.b16 %v6841, %v6839
    %v6900 = vpack.c.b16 %v6844, %v6842
    %v6901 = vpack.c.b16 %v6845, %v6843
    %v6902 = vpack.c.b16 %v6848, %v6846
    %v6903 = vpack.c.b16 %v6849, %v6847
    %v6904 = vpack.c.b16 %v6852, %v6850
    %v6905 = vpack.c.b16 %v6853, %v6851
    %v6906 = vpack.c.b16 %v6856, %v6854
    %v6907 = vpack.c.b16 %v6857, %v6855
    %v6908 = vpack.c.b16 %v6860, %v6858
    %v6909 = vpack.c.b16 %v6861, %v6859
    %v6910 = vpack.c.b16 %v6864, %v6862
    %v6911 = vpack.c.b16 %v6865, %v6863
    %v6912 = vpack.c.b16 %v6868, %v6866
    %v6913 = vpack.c.b16 %v6869, %v6867
    %v6914 = vpack.c.b16 %v6872, %v6870
    %v6915 = vpack.c.b16 %v6873, %v6871
    %v6916 = vpack.c.b16 %v6876, %v6874
    %v6917 = vpack.c.b16 %v6877, %v6875
    %v6918 = vpack.c.b16 %v6880, %v6878
    %v6919 = vpack.c.b16 %v6881, %v6879
    %v6920 = vpack.c.b16 %v6884, %v6882
    %v6921 = vpack.c.b16 %v6885, %v6883
    %v6959 = vsel %vm315, %v6740, 0
    %6961 = vmatprep.subr.bf16.mxu0 %v6887
    %6962 = vmatpush1.bf16.msra.mxu0 %v6886
    %6963 = vmatprep.subr.bf16.mxu0 %v6889
    %6964 = vmatpush1.bf16.msra.mxu0 %v6888
    %6965 = vmatprep.subr.bf16.mxu0 %v6891
    %6966 = vmatpush1.bf16.msra.mxu0 %v6890
    %6967 = vmatprep.subr.bf16.mxu0 %v6893
    %6968 = vmatpush1.bf16.msra.mxu0 %v6892
    %6969 = vmatprep.subr.bf16.mxu0 %v6895
    %6970 = vmatpush1.bf16.msra.mxu0 %v6894
    %6971 = vmatprep.subr.bf16.mxu0 %v6897
    %6972 = vmatpush1.bf16.msra.mxu0 %v6896
    %6973 = vmatprep.subr.bf16.mxu0 %v6899
    %6974 = vmatpush1.bf16.msra.mxu0 %v6898
    %6975 = vmatprep.subr.bf16.mxu0 %v6901
    %6976 = vmatpush1.bf16.msra.mxu0 %v6900
    %6977 = vmatprep.subr.bf16.mxu0 %v6903
    %6978 = vmatpush1.bf16.msra.mxu0 %v6902
    %6979 = vmatprep.subr.bf16.mxu0 %v6905
    %6980 = vmatpush1.bf16.msra.mxu0 %v6904
    %6981 = vmatprep.subr.bf16.mxu0 %v6907
    %6982 = vmatpush1.bf16.msra.mxu0 %v6906
    %6983 = vmatprep.subr.bf16.mxu0 %v6909
    %6984 = vmatpush1.bf16.msra.mxu0 %v6908
    %6985 = vmatprep.subr.bf16.mxu0 %v6911
    %6986 = vmatpush1.bf16.msra.mxu0 %v6910
    %6987 = vmatprep.subr.bf16.mxu0 %v6913
    %6988 = vmatpush1.bf16.msra.mxu0 %v6912
    %6989 = vmatprep.subr.bf16.mxu0 %v6915
    %6990 = vmatpush1.bf16.msra.mxu0 %v6914
    %6991 = vmatprep.subr.bf16.mxu0 %v6917
    %6992 = vmatpush1.bf16.msra.mxu0 %v6916
    %6993 = vmatprep.mubr.bf16.mxu0 %v6739
    %6994 = vmatmul.mubr.bf16.gmra.mrb[0].mxu0 %v6738
    %v6995 = vpop.f32.mrb[0].mxu0
    %v6996 = vadd.f32 0.0, %v6995
    %v6997 = vpop.f32.mrb[0].mxu0
    %v6998 = vadd.f32 0.0, %v6997
    %v6999 = vpop.f32.mrb[0].mxu0
    %v7000 = vpop.f32.mrb[0].mxu0
    %7001 = vdwg.mxu0
    %7002 = vmatprep.subr.bf16.mxu0 %v6919
    %7003 = vmatpush1.bf16.msra.mxu0 %v6918
    %7004 = vmatprep.subr.bf16.mxu0 %v6921
    %7005 = vmatpush1.bf16.msra.mxu0 %v6920
    %7006 = vmatprep.subr.bf16.mxu0 0
    %7007 = vmatpush1.bf16.msra.mxu0 0
    %7008 = vmatprep.subr.bf16.mxu0 0
    %7009 = vmatpush1.bf16.msra.mxu0 0
    %7010 = vmatprep.subr.bf16.mxu0 0
    %7011 = vmatpush1.bf16.msra.mxu0 0
    %7012 = vmatprep.subr.bf16.mxu0 0
    %7013 = vmatpush1.bf16.msra.mxu0 0
    %7014 = vmatprep.subr.bf16.mxu0 0
    %7015 = vmatpush1.bf16.msra.mxu0 0
    %7016 = vmatprep.subr.bf16.mxu0 0
    %7017 = vmatpush1.bf16.msra.mxu0 0
    %7018 = vmatprep.subr.bf16.mxu0 0
    %7019 = vmatpush1.bf16.msra.mxu0 0
    %7020 = vmatprep.subr.bf16.mxu0 0
    %7021 = vmatpush1.bf16.msra.mxu0 0
    %7022 = vmatprep.subr.bf16.mxu0 0
    %7023 = vmatpush1.bf16.msra.mxu0 0
    %7024 = vmatprep.subr.bf16.mxu0 0
    %7025 = vmatpush1.bf16.msra.mxu0 0
    %7026 = vmatprep.subr.bf16.mxu0 0
    %7027 = vmatpush1.bf16.msra.mxu0 0
    %7028 = vmatprep.subr.bf16.mxu0 0
    %7029 = vmatpush1.bf16.msra.mxu0 0
    %7030 = vmatprep.subr.bf16.mxu0 0
    %7031 = vmatpush1.bf16.msra.mxu0 0
    %7032 = vmatprep.subr.bf16.mxu0 0
    %7033 = vmatpush1.bf16.msra.mxu0 0
    %7034 = vmatprep.mubr.bf16.mxu0 0
    %7035 = vmatmul.mubr.bf16.gmra.mrb[0].mxu0 %v6959
    %v7036 = vpop.f32.mrb[0].mxu0
    %v7037 = vadd.f32 %v6996, %v7036
    %v7038 = vpop.f32.mrb[0].mxu0
    %v7039 = vadd.f32 %v6998, %v7038
    %v7040 = vpop.f32.mrb[0].mxu0
    %v7041 = vpop.f32.mrb[0].mxu0
    %7042 = vdwg.mxu0
    %v7079 = vunpack.c.l.b16 %v6699
    %v7080 = vunpack.c.h.b16 %v6699
    %v7081 = vunpack.c.l.b16 %v6700
    %v7082 = vunpack.c.h.b16 %v6700
    %v7083 = vunpack.c.l.b16 %v6701
    %v7084 = vunpack.c.h.b16 %v6701
    %v7085 = vunpack.c.l.b16 %v6702
    %v7086 = vunpack.c.h.b16 %v6702
    %v7087 = vunpack.c.l.b16 %v6703
    %v7088 = vunpack.c.h.b16 %v6703
    %v7089 = vunpack.c.l.b16 %v6704
    %v7090 = vunpack.c.h.b16 %v6704
    %v7091 = vunpack.c.l.b16 %v6705
    %v7092 = vunpack.c.h.b16 %v6705
    %v7093 = vunpack.c.l.b16 %v6706
    %v7094 = vunpack.c.h.b16 %v6706
    %v7095 = vunpack.c.l.b16 %v6707
    %v7096 = vunpack.c.h.b16 %v6707
    %v7097 = vunpack.c.l.b16 %v6708
    %v7098 = vunpack.c.h.b16 %v6708
    %v7099 = vunpack.c.l.b16 %v6709
    %v7100 = vunpack.c.h.b16 %v6709
    %v7101 = vunpack.c.l.b16 %v6710
    %v7102 = vunpack.c.h.b16 %v6710
    %v7103 = vunpack.c.l.b16 %v6711
    %v7104 = vunpack.c.h.b16 %v6711
    %v7105 = vunpack.c.l.b16 %v6712
    %v7106 = vunpack.c.h.b16 %v6712
    %v7107 = vunpack.c.l.b16 %v6713
    %v7108 = vunpack.c.h.b16 %v6713
    %v7109 = vunpack.c.l.b16 %v6714
    %v7110 = vunpack.c.h.b16 %v6714
    %v7111 = vunpack.c.l.b16 %v6715
    %v7112 = vunpack.c.h.b16 %v6715
    %v7113 = vunpack.c.l.b16 %v6716
    %v7114 = vunpack.c.h.b16 %v6716
    %v7115 = vunpack.c.l.b16 %v6717
    %v7116 = vunpack.c.h.b16 %v6717
    %v7117 = vunpack.c.l.b16 %v6718
    %v7118 = vunpack.c.h.b16 %v6718
    %v7119 = vunpack.c.l.b16 %v6719
    %v7120 = vunpack.c.h.b16 %v6719
    %v7121 = vunpack.c.l.b16 %v6720
    %v7122 = vunpack.c.h.b16 %v6720
    %v7123 = vunpack.c.l.b16 %v6721
    %v7124 = vunpack.c.h.b16 %v6721
    %v7125 = vunpack.c.l.b16 %v6722
    %v7126 = vunpack.c.h.b16 %v6722
    %v7127 = vunpack.c.l.b16 %v6723
    %v7128 = vunpack.c.h.b16 %v6723
    %v7129 = vunpack.c.l.b16 %v6724
    %v7130 = vunpack.c.h.b16 %v6724
    %v7131 = vunpack.c.l.b16 %v6725
    %v7132 = vunpack.c.h.b16 %v6725
    %v7133 = vunpack.c.l.b16 %v6726
    %v7134 = vunpack.c.h.b16 %v6726
    %v7135 = vunpack.c.l.b16 %v6727
    %v7136 = vunpack.c.h.b16 %v6727
    %v7137 = vunpack.c.l.b16 %v6728
    %v7138 = vunpack.c.h.b16 %v6728
    %v7139 = vunpack.c.l.b16 %v6729
    %v7140 = vunpack.c.h.b16 %v6729
    %v7141 = vunpack.c.l.b16 %v6730
    %v7142 = vunpack.c.h.b16 %v6730
    %v7143 = vunpack.c.l.b16 %v6731
    %v7144 = vunpack.c.h.b16 %v6731
    %v7145 = vunpack.c.l.b16 %v6732
    %v7146 = vunpack.c.h.b16 %v6732
    %v7147 = vunpack.c.l.b16 %v6733
    %v7148 = vunpack.c.h.b16 %v6733
    %v7149 = vunpack.c.l.b16 %v6734
    %v7150 = vunpack.c.h.b16 %v6734
    %v7151 = vpack.c.b16 %v7081, %v7079
    %v7152 = vpack.c.b16 %v7082, %v7080
    %v7153 = vpack.c.b16 %v7085, %v7083
    %v7154 = vpack.c.b16 %v7086, %v7084
    %v7155 = vpack.c.b16 %v7089, %v7087
    %v7156 = vpack.c.b16 %v7090, %v7088
    %v7157 = vpack.c.b16 %v7093, %v7091
    %v7158 = vpack.c.b16 %v7094, %v7092
    %v7159 = vpack.c.b16 %v7097, %v7095
    %v7160 = vpack.c.b16 %v7098, %v7096
    %v7161 = vpack.c.b16 %v7101, %v7099
    %v7162 = vpack.c.b16 %v7102, %v7100
    %v7163 = vpack.c.b16 %v7105, %v7103
    %v7164 = vpack.c.b16 %v7106, %v7104
    %v7165 = vpack.c.b16 %v7109, %v7107
    %v7166 = vpack.c.b16 %v7110, %v7108
    %v7167 = vpack.c.b16 %v7113, %v7111
    %v7168 = vpack.c.b16 %v7114, %v7112
    %v7169 = vpack.c.b16 %v7117, %v7115
    %v7170 = vpack.c.b16 %v7118, %v7116
    %v7171 = vpack.c.b16 %v7121, %v7119
    %v7172 = vpack.c.b16 %v7122, %v7120
    %v7173 = vpack.c.b16 %v7125, %v7123
    %v7174 = vpack.c.b16 %v7126, %v7124
    %v7175 = vpack.c.b16 %v7129, %v7127
    %v7176 = vpack.c.b16 %v7130, %v7128
    %v7177 = vpack.c.b16 %v7133, %v7131
    %v7178 = vpack.c.b16 %v7134, %v7132
    %v7179 = vpack.c.b16 %v7137, %v7135
    %v7180 = vpack.c.b16 %v7138, %v7136
    %v7181 = vpack.c.b16 %v7141, %v7139
    %v7182 = vpack.c.b16 %v7142, %v7140
    %v7183 = vpack.c.b16 %v7145, %v7143
    %v7184 = vpack.c.b16 %v7146, %v7144
    %v7185 = vpack.c.b16 %v7149, %v7147
    %v7186 = vpack.c.b16 %v7150, %v7148
    %v7224 = vsel %vm315, %v6698, 0
    %7226 = vmatprep.subr.bf16.mxu0 %v7152
    %7227 = vmatpush1.bf16.msra.mxu0 %v7151
    %7228 = vmatprep.subr.bf16.mxu0 %v7154
    %7229 = vmatpush1.bf16.msra.mxu0 %v7153
    %7230 = vmatprep.subr.bf16.mxu0 %v7156
    %7231 = vmatpush1.bf16.msra.mxu0 %v7155
    %7232 = vmatprep.subr.bf16.mxu0 %v7158
    %7233 = vmatpush1.bf16.msra.mxu0 %v7157
    %7234 = vmatprep.subr.bf16.mxu0 %v7160
    %7235 = vmatpush1.bf16.msra.mxu0 %v7159
    %7236 = vmatprep.subr.bf16.mxu0 %v7162
    %7237 = vmatpush1.bf16.msra.mxu0 %v7161
    %7238 = vmatprep.subr.bf16.mxu0 %v7164
    %7239 = vmatpush1.bf16.msra.mxu0 %v7163
    %7240 = vmatprep.subr.bf16.mxu0 %v7166
    %7241 = vmatpush1.bf16.msra.mxu0 %v7165
    %7242 = vmatprep.subr.bf16.mxu0 %v7168
    %7243 = vmatpush1.bf16.msra.mxu0 %v7167
    %7244 = vmatprep.subr.bf16.mxu0 %v7170
    %7245 = vmatpush1.bf16.msra.mxu0 %v7169
    %7246 = vmatprep.subr.bf16.mxu0 %v7172
    %7247 = vmatpush1.bf16.msra.mxu0 %v7171
    %7248 = vmatprep.subr.bf16.mxu0 %v7174
    %7249 = vmatpush1.bf16.msra.mxu0 %v7173
    %7250 = vmatprep.subr.bf16.mxu0 %v7176
    %7251 = vmatpush1.bf16.msra.mxu0 %v7175
    %7252 = vmatprep.subr.bf16.mxu0 %v7178
    %7253 = vmatpush1.bf16.msra.mxu0 %v7177
    %7254 = vmatprep.subr.bf16.mxu0 %v7180
    %7255 = vmatpush1.bf16.msra.mxu0 %v7179
    %7256 = vmatprep.subr.bf16.mxu0 %v7182
    %7257 = vmatpush1.bf16.msra.mxu0 %v7181
    %7258 = vmatprep.mubr.bf16.mxu0 %v6697
    %7259 = vmatmul.mubr.bf16.gmra.mrb[0].mxu0 %v6696
    %v7260 = vpop.f32.mrb[0].mxu0
    %v7261 = vadd.f32 %v7037, %v7260
    %v7262 = vpop.f32.mrb[0].mxu0
    %v7263 = vadd.f32 %v7039, %v7262
    %v7264 = vpop.f32.mrb[0].mxu0
    %v7265 = vpop.f32.mrb[0].mxu0
    %7266 = vdwg.mxu0
    %7267 = vmatprep.subr.bf16.mxu0 %v7184
    %7268 = vmatpush1.bf16.msra.mxu0 %v7183
    %7269 = vmatprep.subr.bf16.mxu0 %v7186
    %7270 = vmatpush1.bf16.msra.mxu0 %v7185
    %7271 = vmatprep.subr.bf16.mxu0 0
    %7272 = vmatpush1.bf16.msra.mxu0 0
    %7273 = vmatprep.subr.bf16.mxu0 0
    %7274 = vmatpush1.bf16.msra.mxu0 0
    %7275 = vmatprep.subr.bf16.mxu0 0
    %7276 = vmatpush1.bf16.msra.mxu0 0
    %7277 = vmatprep.subr.bf16.mxu0 0
    %7278 = vmatpush1.bf16.msra.mxu0 0
    %7279 = vmatprep.subr.bf16.mxu0 0
    %7280 = vmatpush1.bf16.msra.mxu0 0
    %7281 = vmatprep.subr.bf16.mxu0 0
    %7282 = vmatpush1.bf16.msra.mxu0 0
    %7283 = vmatprep.subr.bf16.mxu0 0
    %7284 = vmatpush1.bf16.msra.mxu0 0
    %7285 = vmatprep.subr.bf16.mxu0 0
    %7286 = vmatpush1.bf16.msra.mxu0 0
    %7287 = vmatprep.subr.bf16.mxu0 0
    %7288 = vmatpush1.bf16.msra.mxu0 0
    %7289 = vmatprep.subr.bf16.mxu0 0
    %7290 = vmatpush1.bf16.msra.mxu0 0
    %7291 = vmatprep.subr.bf16.mxu0 0
    %7292 = vmatpush1.bf16.msra.mxu0 0
    %7293 = vmatprep.subr.bf16.mxu0 0
    %7294 = vmatpush1.bf16.msra.mxu0 0
    %7295 = vmatprep.subr.bf16.mxu0 0
    %7296 = vmatpush1.bf16.msra.mxu0 0
    %7297 = vmatprep.subr.bf16.mxu0 0
    %7298 = vmatpush1.bf16.msra.mxu0 0
    %7299 = vmatprep.mubr.bf16.mxu0 0
    %7300 = vmatmul.mubr.bf16.gmra.mrb[0].mxu0 %v7224
    %v7301 = vpop.f32.mrb[0].mxu0
    %v7302 = vadd.f32 %v7261, %v7301
    %v7303 = vpop.f32.mrb[0].mxu0
    %v7304 = vadd.f32 %v7263, %v7303
    %v7305 = vpop.f32.mrb[0].mxu0
    %v7306 = vpop.f32.mrb[0].mxu0
    %7307 = vdwg.mxu0
    %v7308 = vld [vmem:[%s4634] sm:$0xff]
    %v7309 = vld [vmem:[%s4634 + $0x8] sm:$0xff]
    %v7310 = vld [vmem:[%s4634 + $0x10] sm:$0xff]
    %v7311 = vpack.c.bf16 %v7308, %v7308
    %v7312 = vpack.c.bf16 %v7309, %v7309
    %v7313 = vpack.c.bf16 %v7310, %v7310
    %s7314 = scalar_lea.vmem %s6, 576
    %v7315 = vld [vmem:[%s7314] sm:$0xff]
    %v7316 = vld [vmem:[%s7314 + $0x8] sm:$0xff]
    %v7317 = vld [vmem:[%s7314 + $0x10] sm:$0xff]
    %v7318 = vld [vmem:[%s7314 + $0x18] sm:$0xff]
    %v7319 = vld [vmem:[%s7314 + $0x20] sm:$0xff]
    %v7320 = vld [vmem:[%s7314 + $0x28] sm:$0xff]
    %v7321 = vld [vmem:[%s7314 + $0x30] sm:$0xff]
    %v7322 = vld [vmem:[%s7314 + $0x38] sm:$0xff]
    %v7323 = vld [vmem:[%s7314 + $0x40] sm:$0xff]
    %v7324 = vld [vmem:[%s7314 + $0x48] sm:$0xff]
    %v7325 = vld [vmem:[%s7314 + $0x50] sm:$0xff]
    %v7326 = vld [vmem:[%s7314 + $0x58] sm:$0xff]
    %v7327 = vld [vmem:[%s7314 + $0x60] sm:$0xff]
    %v7328 = vld [vmem:[%s7314 + $0x68] sm:$0xff]
    %v7329 = vld [vmem:[%s7314 + $0x70] sm:$0xff]
    %v7330 = vld [vmem:[%s7314 + $0x78] sm:$0xff]
    %v7331 = vld [vmem:[%s7314 + $0x80] sm:$0xff]
    %v7332 = vld [vmem:[%s7314 + $0x88] sm:$0xff]
    %v7333 = vld [vmem:[%s7314 + $0x90] sm:$0xff]
    %v7334 = vld [vmem:[%s7314 + $0x98] sm:$0xff]
    %v7335 = vld [vmem:[%s7314 + $0xa0] sm:$0xff]
    %v7336 = vld [vmem:[%s7314 + $0xa8] sm:$0xff]
    %v7337 = vld [vmem:[%s7314 + $0xb0] sm:$0xff]
    %v7338 = vld [vmem:[%s7314 + $0xb8] sm:$0xff]
    %v7339 = vld [vmem:[%s7314 + $0xc0] sm:$0xff]
    %v7340 = vld [vmem:[%s7314 + $0xc8] sm:$0xff]
    %v7341 = vld [vmem:[%s7314 + $0xd0] sm:$0xff]
    %v7342 = vld [vmem:[%s7314 + $0xd8] sm:$0xff]
    %v7343 = vld [vmem:[%s7314 + $0xe0] sm:$0xff]
    %v7344 = vld [vmem:[%s7314 + $0xe8] sm:$0xff]
    %v7345 = vld [vmem:[%s7314 + $0xf0] sm:$0xff]
    %v7346 = vld [vmem:[%s7314 + $0xf8] sm:$0xff]
    %v7347 = vld [vmem:[%s7314 + $0x100] sm:$0xff]
    %v7348 = vld [vmem:[%s7314 + $0x108] sm:$0xff]
    %v7349 = vld [vmem:[%s7314 + $0x110] sm:$0xff]
    %v7350 = vld [vmem:[%s7314 + $0x118] sm:$0xff]
    %v7387 = vunpack.c.l.b16 %v7315
    %v7388 = vunpack.c.h.b16 %v7315
    %v7389 = vunpack.c.l.b16 %v7316
    %v7390 = vunpack.c.h.b16 %v7316
    %v7391 = vunpack.c.l.b16 %v7317
    %v7392 = vunpack.c.h.b16 %v7317
    %v7393 = vunpack.c.l.b16 %v7318
    %v7394 = vunpack.c.h.b16 %v7318
    %v7395 = vunpack.c.l.b16 %v7319
    %v7396 = vunpack.c.h.b16 %v7319
    %v7397 = vunpack.c.l.b16 %v7320
    %v7398 = vunpack.c.h.b16 %v7320
    %v7399 = vunpack.c.l.b16 %v7321
    %v7400 = vunpack.c.h.b16 %v7321
    %v7401 = vunpack.c.l.b16 %v7322
    %v7402 = vunpack.c.h.b16 %v7322
    %v7403 = vunpack.c.l.b16 %v7323
    %v7404 = vunpack.c.h.b16 %v7323
    %v7405 = vunpack.c.l.b16 %v7324
    %v7406 = vunpack.c.h.b16 %v7324
    %v7407 = vunpack.c.l.b16 %v7325
    %v7408 = vunpack.c.h.b16 %v7325
    %v7409 = vunpack.c.l.b16 %v7326
    %v7410 = vunpack.c.h.b16 %v7326
    %v7411 = vunpack.c.l.b16 %v7327
    %v7412 = vunpack.c.h.b16 %v7327
    %v7413 = vunpack.c.l.b16 %v7328
    %v7414 = vunpack.c.h.b16 %v7328
    %v7415 = vunpack.c.l.b16 %v7329
    %v7416 = vunpack.c.h.b16 %v7329
    %v7417 = vunpack.c.l.b16 %v7330
    %v7418 = vunpack.c.h.b16 %v7330
    %v7419 = vunpack.c.l.b16 %v7331
    %v7420 = vunpack.c.h.b16 %v7331
    %v7421 = vunpack.c.l.b16 %v7332
    %v7422 = vunpack.c.h.b16 %v7332
    %v7423 = vunpack.c.l.b16 %v7333
    %v7424 = vunpack.c.h.b16 %v7333
    %v7425 = vunpack.c.l.b16 %v7334
    %v7426 = vunpack.c.h.b16 %v7334
    %v7427 = vunpack.c.l.b16 %v7335
    %v7428 = vunpack.c.h.b16 %v7335
    %v7429 = vunpack.c.l.b16 %v7336
    %v7430 = vunpack.c.h.b16 %v7336
    %v7431 = vunpack.c.l.b16 %v7337
    %v7432 = vunpack.c.h.b16 %v7337
    %v7433 = vunpack.c.l.b16 %v7338
    %v7434 = vunpack.c.h.b16 %v7338
    %v7435 = vunpack.c.l.b16 %v7339
    %v7436 = vunpack.c.h.b16 %v7339
    %v7437 = vunpack.c.l.b16 %v7340
    %v7438 = vunpack.c.h.b16 %v7340
    %v7439 = vunpack.c.l.b16 %v7341
    %v7440 = vunpack.c.h.b16 %v7341
    %v7441 = vunpack.c.l.b16 %v7342
    %v7442 = vunpack.c.h.b16 %v7342
    %v7443 = vunpack.c.l.b16 %v7343
    %v7444 = vunpack.c.h.b16 %v7343
    %v7445 = vunpack.c.l.b16 %v7344
    %v7446 = vunpack.c.h.b16 %v7344
    %v7447 = vunpack.c.l.b16 %v7345
    %v7448 = vunpack.c.h.b16 %v7345
    %v7449 = vunpack.c.l.b16 %v7346
    %v7450 = vunpack.c.h.b16 %v7346
    %v7451 = vunpack.c.l.b16 %v7347
    %v7452 = vunpack.c.h.b16 %v7347
    %v7453 = vunpack.c.l.b16 %v7348
    %v7454 = vunpack.c.h.b16 %v7348
    %v7455 = vunpack.c.l.b16 %v7349
    %v7456 = vunpack.c.h.b16 %v7349
    %v7457 = vunpack.c.l.b16 %v7350
    %v7458 = vunpack.c.h.b16 %v7350
    %v7459 = vpack.c.b16 %v7389, %v7387
    %v7460 = vpack.c.b16 %v7390, %v7388
    %v7461 = vpack.c.b16 %v7393, %v7391
    %v7462 = vpack.c.b16 %v7394, %v7392
    %v7463 = vpack.c.b16 %v7397, %v7395
    %v7464 = vpack.c.b16 %v7398, %v7396
    %v7465 = vpack.c.b16 %v7401, %v7399
    %v7466 = vpack.c.b16 %v7402, %v7400
    %v7467 = vpack.c.b16 %v7405, %v7403
    %v7468 = vpack.c.b16 %v7406, %v7404
    %v7469 = vpack.c.b16 %v7409, %v7407
    %v7470 = vpack.c.b16 %v7410, %v7408
    %v7471 = vpack.c.b16 %v7413, %v7411
    %v7472 = vpack.c.b16 %v7414, %v7412
    %v7473 = vpack.c.b16 %v7417, %v7415
    %v7474 = vpack.c.b16 %v7418, %v7416
    %v7475 = vpack.c.b16 %v7421, %v7419
    %v7476 = vpack.c.b16 %v7422, %v7420
    %v7477 = vpack.c.b16 %v7425, %v7423
    %v7478 = vpack.c.b16 %v7426, %v7424
    %v7479 = vpack.c.b16 %v7429, %v7427
    %v7480 = vpack.c.b16 %v7430, %v7428
    %v7481 = vpack.c.b16 %v7433, %v7431
    %v7482 = vpack.c.b16 %v7434, %v7432
    %v7483 = vpack.c.b16 %v7437, %v7435
    %v7484 = vpack.c.b16 %v7438, %v7436
    %v7485 = vpack.c.b16 %v7441, %v7439
    %v7486 = vpack.c.b16 %v7442, %v7440
    %v7487 = vpack.c.b16 %v7445, %v7443
    %v7488 = vpack.c.b16 %v7446, %v7444
    %v7489 = vpack.c.b16 %v7449, %v7447
    %v7490 = vpack.c.b16 %v7450, %v7448
    %v7491 = vpack.c.b16 %v7453, %v7451
    %v7492 = vpack.c.b16 %v7454, %v7452
    %v7493 = vpack.c.b16 %v7457, %v7455
    %v7494 = vpack.c.b16 %v7458, %v7456
    %v7532 = vsel %vm315, %v7313, 0
    %7534 = vmatprep.subr.bf16.mxu0 %v7460
    %7535 = vmatpush1.bf16.msra.mxu0 %v7459
    %7536 = vmatprep.subr.bf16.mxu0 %v7462
    %7537 = vmatpush1.bf16.msra.mxu0 %v7461
    %7538 = vmatprep.subr.bf16.mxu0 %v7464
    %7539 = vmatpush1.bf16.msra.mxu0 %v7463
    %7540 = vmatprep.subr.bf16.mxu0 %v7466
    %7541 = vmatpush1.bf16.msra.mxu0 %v7465
    %7542 = vmatprep.subr.bf16.mxu0 %v7468
    %7543 = vmatpush1.bf16.msra.mxu0 %v7467
    %7544 = vmatprep.subr.bf16.mxu0 %v7470
    %7545 = vmatpush1.bf16.msra.mxu0 %v7469
    %7546 = vmatprep.subr.bf16.mxu0 %v7472
    %7547 = vmatpush1.bf16.msra.mxu0 %v7471
    %7548 = vmatprep.subr.bf16.mxu0 %v7474
    %7549 = vmatpush1.bf16.msra.mxu0 %v7473
    %7550 = vmatprep.subr.bf16.mxu0 %v7476
    %7551 = vmatpush1.bf16.msra.mxu0 %v7475
    %7552 = vmatprep.subr.bf16.mxu0 %v7478
    %7553 = vmatpush1.bf16.msra.mxu0 %v7477
    %7554 = vmatprep.subr.bf16.mxu0 %v7480
    %7555 = vmatpush1.bf16.msra.mxu0 %v7479
    %7556 = vmatprep.subr.bf16.mxu0 %v7482
    %7557 = vmatpush1.bf16.msra.mxu0 %v7481
    %7558 = vmatprep.subr.bf16.mxu0 %v7484
    %7559 = vmatpush1.bf16.msra.mxu0 %v7483
    %7560 = vmatprep.subr.bf16.mxu0 %v7486
    %7561 = vmatpush1.bf16.msra.mxu0 %v7485
    %7562 = vmatprep.subr.bf16.mxu0 %v7488
    %7563 = vmatpush1.bf16.msra.mxu0 %v7487
    %7564 = vmatprep.subr.bf16.mxu0 %v7490
    %7565 = vmatpush1.bf16.msra.mxu0 %v7489
    %7566 = vmatprep.mubr.bf16.mxu0 %v7312
    %7567 = vmatmul.mubr.bf16.gmra.mrb[0].mxu0 %v7311
    %v7568 = vpop.f32.mrb[0].mxu0
    %v7569 = vadd.f32 0.0, %v7568
    %v7570 = vpop.f32.mrb[0].mxu0
    %v7571 = vadd.f32 0.0, %v7570
    %v7572 = vpop.f32.mrb[0].mxu0
    %v7573 = vpop.f32.mrb[0].mxu0
    %7574 = vdwg.mxu0
    %7575 = vmatprep.subr.bf16.mxu0 %v7492
    %7576 = vmatpush1.bf16.msra.mxu0 %v7491
    %7577 = vmatprep.subr.bf16.mxu0 %v7494
    %7578 = vmatpush1.bf16.msra.mxu0 %v7493
    %7579 = vmatprep.subr.bf16.mxu0 0
    %7580 = vmatpush1.bf16.msra.mxu0 0
    %7581 = vmatprep.subr.bf16.mxu0 0
    %7582 = vmatpush1.bf16.msra.mxu0 0
    %7583 = vmatprep.subr.bf16.mxu0 0
    %7584 = vmatpush1.bf16.msra.mxu0 0
    %7585 = vmatprep.subr.bf16.mxu0 0
    %7586 = vmatpush1.bf16.msra.mxu0 0
    %7587 = vmatprep.subr.bf16.mxu0 0
    %7588 = vmatpush1.bf16.msra.mxu0 0
    %7589 = vmatprep.subr.bf16.mxu0 0
    %7590 = vmatpush1.bf16.msra.mxu0 0
    %7591 = vmatprep.subr.bf16.mxu0 0
    %7592 = vmatpush1.bf16.msra.mxu0 0
    %7593 = vmatprep.subr.bf16.mxu0 0
    %7594 = vmatpush1.bf16.msra.mxu0 0
    %7595 = vmatprep.subr.bf16.mxu0 0
    %7596 = vmatpush1.bf16.msra.mxu0 0
    %7597 = vmatprep.subr.bf16.mxu0 0
    %7598 = vmatpush1.bf16.msra.mxu0 0
    %7599 = vmatprep.subr.bf16.mxu0 0
    %7600 = vmatpush1.bf16.msra.mxu0 0
    %7601 = vmatprep.subr.bf16.mxu0 0
    %7602 = vmatpush1.bf16.msra.mxu0 0
    %7603 = vmatprep.subr.bf16.mxu0 0
    %7604 = vmatpush1.bf16.msra.mxu0 0
    %7605 = vmatprep.subr.bf16.mxu0 0
    %7606 = vmatpush1.bf16.msra.mxu0 0
    %7607 = vmatprep.mubr.bf16.mxu0 0
    %7608 = vmatmul.mubr.bf16.gmra.mrb[0].mxu0 %v7532
    %v7609 = vpop.f32.mrb[0].mxu0
    %v7610 = vadd.f32 %v7569, %v7609
    %v7611 = vpop.f32.mrb[0].mxu0
    %v7612 = vadd.f32 %v7571, %v7611
    %v7613 = vpop.f32.mrb[0].mxu0
    %v7614 = vpop.f32.mrb[0].mxu0
    %7615 = vdwg.mxu0
    %v7616 = vadd.f32 %v7302, %v7610
    %v7617 = vadd.f32 %v7304, %v7612
    %v7618 = vld [vmem:[%s6155] sm:$0xff]
    %v7619 = vld [vmem:[%s6155 + $0x8] sm:$0xff]
    %v7620 = vld [vmem:[%s6155 + $0x10] sm:$0xff]
    %v7621 = vpack.c.bf16 %v7618, %v7618
    %v7622 = vpack.c.bf16 %v7619, %v7619
    %v7623 = vpack.c.bf16 %v7620, %v7620
    %s7624 = scalar_lea.vmem %s6, 864
    %v7625 = vld [vmem:[%s7624] sm:$0xff]
    %v7626 = vld [vmem:[%s7624 + $0x8] sm:$0xff]
    %v7627 = vld [vmem:[%s7624 + $0x10] sm:$0xff]
    %v7628 = vld [vmem:[%s7624 + $0x18] sm:$0xff]
    %v7629 = vld [vmem:[%s7624 + $0x20] sm:$0xff]
    %v7630 = vld [vmem:[%s7624 + $0x28] sm:$0xff]
    %v7631 = vld [vmem:[%s7624 + $0x30] sm:$0xff]
    %v7632 = vld [vmem:[%s7624 + $0x38] sm:$0xff]
    %v7633 = vld [vmem:[%s7624 + $0x40] sm:$0xff]
    %v7634 = vld [vmem:[%s7624 + $0x48] sm:$0xff]
    %v7635 = vld [vmem:[%s7624 + $0x50] sm:$0xff]
    %v7636 = vld [vmem:[%s7624 + $0x58] sm:$0xff]
    %v7637 = vld [vmem:[%s7624 + $0x60] sm:$0xff]
    %v7638 = vld [vmem:[%s7624 + $0x68] sm:$0xff]
    %v7639 = vld [vmem:[%s7624 + $0x70] sm:$0xff]
    %v7640 = vld [vmem:[%s7624 + $0x78] sm:$0xff]
    %v7641 = vld [vmem:[%s7624 + $0x80] sm:$0xff]
    %v7642 = vld [vmem:[%s7624 + $0x88] sm:$0xff]
    %v7643 = vld [vmem:[%s7624 + $0x90] sm:$0xff]
    %v7644 = vld [vmem:[%s7624 + $0x98] sm:$0xff]
    %v7645 = vld [vmem:[%s7624 + $0xa0] sm:$0xff]
    %v7646 = vld [vmem:[%s7624 + $0xa8] sm:$0xff]
    %v7647 = vld [vmem:[%s7624 + $0xb0] sm:$0xff]
    %v7648 = vld [vmem:[%s7624 + $0xb8] sm:$0xff]
    %v7649 = vld [vmem:[%s7624 + $0xc0] sm:$0xff]
    %v7650 = vld [vmem:[%s7624 + $0xc8] sm:$0xff]
    %v7651 = vld [vmem:[%s7624 + $0xd0] sm:$0xff]
    %v7652 = vld [vmem:[%s7624 + $0xd8] sm:$0xff]
    %v7653 = vld [vmem:[%s7624 + $0xe0] sm:$0xff]
    %v7654 = vld [vmem:[%s7624 + $0xe8] sm:$0xff]
    %v7655 = vld [vmem:[%s7624 + $0xf0] sm:$0xff]
    %v7656 = vld [vmem:[%s7624 + $0xf8] sm:$0xff]
    %v7657 = vld [vmem:[%s7624 + $0x100] sm:$0xff]
    %v7658 = vld [vmem:[%s7624 + $0x108] sm:$0xff]
    %v7659 = vld [vmem:[%s7624 + $0x110] sm:$0xff]
    %v7660 = vld [vmem:[%s7624 + $0x118] sm:$0xff]
    %v7697 = vunpack.c.l.b16 %v7625
    %v7698 = vunpack.c.h.b16 %v7625
    %v7699 = vunpack.c.l.b16 %v7626
    %v7700 = vunpack.c.h.b16 %v7626
    %v7701 = vunpack.c.l.b16 %v7627
    %v7702 = vunpack.c.h.b16 %v7627
    %v7703 = vunpack.c.l.b16 %v7628
    %v7704 = vunpack.c.h.b16 %v7628
    %v7705 = vunpack.c.l.b16 %v7629
    %v7706 = vunpack.c.h.b16 %v7629
    %v7707 = vunpack.c.l.b16 %v7630
    %v7708 = vunpack.c.h.b16 %v7630
    %v7709 = vunpack.c.l.b16 %v7631
    %v7710 = vunpack.c.h.b16 %v7631
    %v7711 = vunpack.c.l.b16 %v7632
    %v7712 = vunpack.c.h.b16 %v7632
    %v7713 = vunpack.c.l.b16 %v7633
    %v7714 = vunpack.c.h.b16 %v7633
    %v7715 = vunpack.c.l.b16 %v7634
    %v7716 = vunpack.c.h.b16 %v7634
    %v7717 = vunpack.c.l.b16 %v7635
    %v7718 = vunpack.c.h.b16 %v7635
    %v7719 = vunpack.c.l.b16 %v7636
    %v7720 = vunpack.c.h.b16 %v7636
    %v7721 = vunpack.c.l.b16 %v7637
    %v7722 = vunpack.c.h.b16 %v7637
    %v7723 = vunpack.c.l.b16 %v7638
    %v7724 = vunpack.c.h.b16 %v7638
    %v7725 = vunpack.c.l.b16 %v7639
    %v7726 = vunpack.c.h.b16 %v7639
    %v7727 = vunpack.c.l.b16 %v7640
    %v7728 = vunpack.c.h.b16 %v7640
    %v7729 = vunpack.c.l.b16 %v7641
    %v7730 = vunpack.c.h.b16 %v7641
    %v7731 = vunpack.c.l.b16 %v7642
    %v7732 = vunpack.c.h.b16 %v7642
    %v7733 = vunpack.c.l.b16 %v7643
    %v7734 = vunpack.c.h.b16 %v7643
    %v7735 = vunpack.c.l.b16 %v7644
    %v7736 = vunpack.c.h.b16 %v7644
    %v7737 = vunpack.c.l.b16 %v7645
    %v7738 = vunpack.c.h.b16 %v7645
    %v7739 = vunpack.c.l.b16 %v7646
    %v7740 = vunpack.c.h.b16 %v7646
    %v7741 = vunpack.c.l.b16 %v7647
    %v7742 = vunpack.c.h.b16 %v7647
    %v7743 = vunpack.c.l.b16 %v7648
    %v7744 = vunpack.c.h.b16 %v7648
    %v7745 = vunpack.c.l.b16 %v7649
    %v7746 = vunpack.c.h.b16 %v7649
    %v7747 = vunpack.c.l.b16 %v7650
    %v7748 = vunpack.c.h.b16 %v7650
    %v7749 = vunpack.c.l.b16 %v7651
    %v7750 = vunpack.c.h.b16 %v7651
    %v7751 = vunpack.c.l.b16 %v7652
    %v7752 = vunpack.c.h.b16 %v7652
    %v7753 = vunpack.c.l.b16 %v7653
    %v7754 = vunpack.c.h.b16 %v7653
    %v7755 = vunpack.c.l.b16 %v7654
    %v7756 = vunpack.c.h.b16 %v7654
    %v7757 = vunpack.c.l.b16 %v7655
    %v7758 = vunpack.c.h.b16 %v7655
    %v7759 = vunpack.c.l.b16 %v7656
    %v7760 = vunpack.c.h.b16 %v7656
    %v7761 = vunpack.c.l.b16 %v7657
    %v7762 = vunpack.c.h.b16 %v7657
    %v7763 = vunpack.c.l.b16 %v7658
    %v7764 = vunpack.c.h.b16 %v7658
    %v7765 = vunpack.c.l.b16 %v7659
    %v7766 = vunpack.c.h.b16 %v7659
    %v7767 = vunpack.c.l.b16 %v7660
    %v7768 = vunpack.c.h.b16 %v7660
    %v7769 = vpack.c.b16 %v7699, %v7697
    %v7770 = vpack.c.b16 %v7700, %v7698
    %v7771 = vpack.c.b16 %v7703, %v7701
    %v7772 = vpack.c.b16 %v7704, %v7702
    %v7773 = vpack.c.b16 %v7707, %v7705
    %v7774 = vpack.c.b16 %v7708, %v7706
    %v7775 = vpack.c.b16 %v7711, %v7709
    %v7776 = vpack.c.b16 %v7712, %v7710
    %v7777 = vpack.c.b16 %v7715, %v7713
    %v7778 = vpack.c.b16 %v7716, %v7714
    %v7779 = vpack.c.b16 %v7719, %v7717
    %v7780 = vpack.c.b16 %v7720, %v7718
    %v7781 = vpack.c.b16 %v7723, %v7721
    %v7782 = vpack.c.b16 %v7724, %v7722
    %v7783 = vpack.c.b16 %v7727, %v7725
    %v7784 = vpack.c.b16 %v7728, %v7726
    %v7785 = vpack.c.b16 %v7731, %v7729
    %v7786 = vpack.c.b16 %v7732, %v7730
    %v7787 = vpack.c.b16 %v7735, %v7733
    %v7788 = vpack.c.b16 %v7736, %v7734
    %v7789 = vpack.c.b16 %v7739, %v7737
    %v7790 = vpack.c.b16 %v7740, %v7738
    %v7791 = vpack.c.b16 %v7743, %v7741
    %v7792 = vpack.c.b16 %v7744, %v7742
    %v7793 = vpack.c.b16 %v7747, %v7745
    %v7794 = vpack.c.b16 %v7748, %v7746
    %v7795 = vpack.c.b16 %v7751, %v7749
    %v7796 = vpack.c.b16 %v7752, %v7750
    %v7797 = vpack.c.b16 %v7755, %v7753
    %v7798 = vpack.c.b16 %v7756, %v7754
    %v7799 = vpack.c.b16 %v7759, %v7757
    %v7800 = vpack.c.b16 %v7760, %v7758
    %v7801 = vpack.c.b16 %v7763, %v7761
    %v7802 = vpack.c.b16 %v7764, %v7762
    %v7803 = vpack.c.b16 %v7767, %v7765
    %v7804 = vpack.c.b16 %v7768, %v7766
    %v7842 = vsel %vm315, %v7623, 0
    %7844 = vmatprep.subr.bf16.mxu0 %v7770
    %7845 = vmatpush1.bf16.msra.mxu0 %v7769
    %7846 = vmatprep.subr.bf16.mxu0 %v7772
    %7847 = vmatpush1.bf16.msra.mxu0 %v7771
    %7848 = vmatprep.subr.bf16.mxu0 %v7774
    %7849 = vmatpush1.bf16.msra.mxu0 %v7773
    %7850 = vmatprep.subr.bf16.mxu0 %v7776
    %7851 = vmatpush1.bf16.msra.mxu0 %v7775
    %7852 = vmatprep.subr.bf16.mxu0 %v7778
    %7853 = vmatpush1.bf16.msra.mxu0 %v7777
    %7854 = vmatprep.subr.bf16.mxu0 %v7780
    %7855 = vmatpush1.bf16.msra.mxu0 %v7779
    %7856 = vmatprep.subr.bf16.mxu0 %v7782
    %7857 = vmatpush1.bf16.msra.mxu0 %v7781
    %7858 = vmatprep.subr.bf16.mxu0 %v7784
    %7859 = vmatpush1.bf16.msra.mxu0 %v7783
    %7860 = vmatprep.subr.bf16.mxu0 %v7786
    %7861 = vmatpush1.bf16.msra.mxu0 %v7785
    %7862 = vmatprep.subr.bf16.mxu0 %v7788
    %7863 = vmatpush1.bf16.msra.mxu0 %v7787
    %7864 = vmatprep.subr.bf16.mxu0 %v7790
    %7865 = vmatpush1.bf16.msra.mxu0 %v7789
    %7866 = vmatprep.subr.bf16.mxu0 %v7792
    %7867 = vmatpush1.bf16.msra.mxu0 %v7791
    %7868 = vmatprep.subr.bf16.mxu0 %v7794
    %7869 = vmatpush1.bf16.msra.mxu0 %v7793
    %7870 = vmatprep.subr.bf16.mxu0 %v7796
    %7871 = vmatpush1.bf16.msra.mxu0 %v7795
    %7872 = vmatprep.subr.bf16.mxu0 %v7798
    %7873 = vmatpush1.bf16.msra.mxu0 %v7797
    %7874 = vmatprep.subr.bf16.mxu0 %v7800
    %7875 = vmatpush1.bf16.msra.mxu0 %v7799
    %7876 = vmatprep.mubr.bf16.mxu0 %v7622
    %7877 = vmatmul.mubr.bf16.gmra.mrb[0].mxu0 %v7621
    %v7878 = vpop.f32.mrb[0].mxu0
    %v7879 = vadd.f32 0.0, %v7878
    %v7880 = vpop.f32.mrb[0].mxu0
    %v7881 = vadd.f32 0.0, %v7880
    %v7882 = vpop.f32.mrb[0].mxu0
    %v7883 = vpop.f32.mrb[0].mxu0
    %7884 = vdwg.mxu0
    %7885 = vmatprep.subr.bf16.mxu0 %v7802
    %7886 = vmatpush1.bf16.msra.mxu0 %v7801
    %7887 = vmatprep.subr.bf16.mxu0 %v7804
    %7888 = vmatpush1.bf16.msra.mxu0 %v7803
    %7889 = vmatprep.subr.bf16.mxu0 0
    %7890 = vmatpush1.bf16.msra.mxu0 0
    %7891 = vmatprep.subr.bf16.mxu0 0
    %7892 = vmatpush1.bf16.msra.mxu0 0
    %7893 = vmatprep.subr.bf16.mxu0 0
    %7894 = vmatpush1.bf16.msra.mxu0 0
    %7895 = vmatprep.subr.bf16.mxu0 0
    %7896 = vmatpush1.bf16.msra.mxu0 0
    %7897 = vmatprep.subr.bf16.mxu0 0
    %7898 = vmatpush1.bf16.msra.mxu0 0
    %7899 = vmatprep.subr.bf16.mxu0 0
    %7900 = vmatpush1.bf16.msra.mxu0 0
    %7901 = vmatprep.subr.bf16.mxu0 0
    %7902 = vmatpush1.bf16.msra.mxu0 0
    %7903 = vmatprep.subr.bf16.mxu0 0
    %7904 = vmatpush1.bf16.msra.mxu0 0
    %7905 = vmatprep.subr.bf16.mxu0 0
    %7906 = vmatpush1.bf16.msra.mxu0 0
    %7907 = vmatprep.subr.bf16.mxu0 0
    %7908 = vmatpush1.bf16.msra.mxu0 0
    %7909 = vmatprep.subr.bf16.mxu0 0
    %7910 = vmatpush1.bf16.msra.mxu0 0
    %7911 = vmatprep.subr.bf16.mxu0 0
    %7912 = vmatpush1.bf16.msra.mxu0 0
    %7913 = vmatprep.subr.bf16.mxu0 0
    %7914 = vmatpush1.bf16.msra.mxu0 0
    %7915 = vmatprep.subr.bf16.mxu0 0
    %7916 = vmatpush1.bf16.msra.mxu0 0
    %7917 = vmatprep.mubr.bf16.mxu0 0
    %7918 = vmatmul.mubr.bf16.gmra.mrb[0].mxu0 %v7842
    %v7919 = vpop.f32.mrb[0].mxu0
    %v7920 = vadd.f32 %v7879, %v7919
    %v7921 = vpop.f32.mrb[0].mxu0
    %v7922 = vadd.f32 %v7881, %v7921
    %v7923 = vpop.f32.mrb[0].mxu0
    %v7924 = vpop.f32.mrb[0].mxu0
    %7925 = vdwg.mxu0
    %v7926 = vadd.f32 %v7616, %v7920
    %v7927 = vadd.f32 %v7617, %v7922
    %v7928 = vld [vmem:[#allocation2] sm:$0xfc]
    %v7929 = vld [vmem:[#allocation2 + $0x8] sm:$0xfc]
    %v7930 = vld [vmem:[#allocation2 + $0x10] sm:$0xfc]
    %v7931 = vld [vmem:[#allocation2 + $0x18] sm:$0x3]
    %v7932 = vld [vmem:[#allocation2 + $0x20] sm:$0x3]
    %v7933 = vld [vmem:[#allocation2 + $0x28] sm:$0x3]
    %v7934 = vpack.c.bf16 %v7931, %v7928
    %v7935 = vpack.c.bf16 %v7932, %v7929
    %v7936 = vpack.c.bf16 %v7933, %v7930
    %s7937 = scalar_lea.vmem %s6, 1152
    %v7938 = vld [vmem:[%s7937] sm:$0xff]
    %v7939 = vld [vmem:[%s7937 + $0x8] sm:$0xff]
    %v7940 = vld [vmem:[%s7937 + $0x10] sm:$0xff]
    %v7941 = vld [vmem:[%s7937 + $0x18] sm:$0xff]
    %v7942 = vld [vmem:[%s7937 + $0x20] sm:$0xff]
    %v7943 = vld [vmem:[%s7937 + $0x28] sm:$0xff]
    %v7944 = vld [vmem:[%s7937 + $0x30] sm:$0xff]
    %v7945 = vld [vmem:[%s7937 + $0x38] sm:$0xff]
    %v7946 = vld [vmem:[%s7937 + $0x40] sm:$0xff]
    %v7947 = vld [vmem:[%s7937 + $0x48] sm:$0xff]
    %v7948 = vld [vmem:[%s7937 + $0x50] sm:$0xff]
    %v7949 = vld [vmem:[%s7937 + $0x58] sm:$0xff]
    %v7950 = vld [vmem:[%s7937 + $0x60] sm:$0xff]
    %v7951 = vld [vmem:[%s7937 + $0x68] sm:$0xff]
    %v7952 = vld [vmem:[%s7937 + $0x70] sm:$0xff]
    %v7953 = vld [vmem:[%s7937 + $0x78] sm:$0xff]
    %v7954 = vld [vmem:[%s7937 + $0x80] sm:$0xff]
    %v7955 = vld [vmem:[%s7937 + $0x88] sm:$0xff]
    %v7956 = vld [vmem:[%s7937 + $0x90] sm:$0xff]
    %v7957 = vld [vmem:[%s7937 + $0x98] sm:$0xff]
    %v7958 = vld [vmem:[%s7937 + $0xa0] sm:$0xff]
    %v7959 = vld [vmem:[%s7937 + $0xa8] sm:$0xff]
    %v7960 = vld [vmem:[%s7937 + $0xb0] sm:$0xff]
    %v7961 = vld [vmem:[%s7937 + $0xb8] sm:$0xff]
    %v7962 = vld [vmem:[%s7937 + $0xc0] sm:$0xff]
    %v7963 = vld [vmem:[%s7937 + $0xc8] sm:$0xff]
    %v7964 = vld [vmem:[%s7937 + $0xd0] sm:$0xff]
    %v7965 = vld [vmem:[%s7937 + $0xd8] sm:$0xff]
    %v7966 = vld [vmem:[%s7937 + $0xe0] sm:$0xff]
    %v7967 = vld [vmem:[%s7937 + $0xe8] sm:$0xff]
    %v7968 = vld [vmem:[%s7937 + $0xf0] sm:$0xff]
    %v7969 = vld [vmem:[%s7937 + $0xf8] sm:$0xff]
    %v7970 = vld [vmem:[%s7937 + $0x100] sm:$0xff]
    %v7971 = vld [vmem:[%s7937 + $0x108] sm:$0xff]
    %v7972 = vld [vmem:[%s7937 + $0x110] sm:$0xff]
    %v7973 = vld [vmem:[%s7937 + $0x118] sm:$0xff]
    %v7977 = vrot.slane %v7934, 1
    %v7978 = vrot.slane %v7935, 1
    %v7979 = vrot.slane %v7936, 1
    %v8018 = vunpack.c.l.b16 %v7938
    %v8019 = vunpack.c.h.b16 %v7938
    %v8020 = vunpack.c.l.b16 %v7939
    %v8021 = vunpack.c.h.b16 %v7939
    %v8022 = vunpack.c.l.b16 %v7940
    %v8023 = vunpack.c.h.b16 %v7940
    %v8024 = vunpack.c.l.b16 %v7941
    %v8025 = vunpack.c.h.b16 %v7941
    %v8026 = vunpack.c.l.b16 %v7942
    %v8027 = vunpack.c.h.b16 %v7942
    %v8028 = vunpack.c.l.b16 %v7943
    %v8029 = vunpack.c.h.b16 %v7943
    %v8030 = vunpack.c.l.b16 %v7944
    %v8031 = vunpack.c.h.b16 %v7944
    %v8032 = vunpack.c.l.b16 %v7945
    %v8033 = vunpack.c.h.b16 %v7945
    %v8034 = vunpack.c.l.b16 %v7946
    %v8035 = vunpack.c.h.b16 %v7946
    %v8036 = vunpack.c.l.b16 %v7947
    %v8037 = vunpack.c.h.b16 %v7947
    %v8038 = vunpack.c.l.b16 %v7948
    %v8039 = vunpack.c.h.b16 %v7948
    %v8040 = vunpack.c.l.b16 %v7949
    %v8041 = vunpack.c.h.b16 %v7949
    %v8042 = vunpack.c.l.b16 %v7950
    %v8043 = vunpack.c.h.b16 %v7950
    %v8044 = vunpack.c.l.b16 %v7951
    %v8045 = vunpack.c.h.b16 %v7951
    %v8046 = vunpack.c.l.b16 %v7952
    %v8047 = vunpack.c.h.b16 %v7952
    %v8048 = vunpack.c.l.b16 %v7953
    %v8049 = vunpack.c.h.b16 %v7953
    %v8050 = vunpack.c.l.b16 %v7954
    %v8051 = vunpack.c.h.b16 %v7954
    %v8052 = vunpack.c.l.b16 %v7955
    %v8053 = vunpack.c.h.b16 %v7955
    %v8054 = vunpack.c.l.b16 %v7956
    %v8055 = vunpack.c.h.b16 %v7956
    %v8056 = vunpack.c.l.b16 %v7957
    %v8057 = vunpack.c.h.b16 %v7957
    %v8058 = vunpack.c.l.b16 %v7958
    %v8059 = vunpack.c.h.b16 %v7958
    %v8060 = vunpack.c.l.b16 %v7959
    %v8061 = vunpack.c.h.b16 %v7959
    %v8062 = vunpack.c.l.b16 %v7960
    %v8063 = vunpack.c.h.b16 %v7960
    %v8064 = vunpack.c.l.b16 %v7961
    %v8065 = vunpack.c.h.b16 %v7961
    %v8066 = vunpack.c.l.b16 %v7962
    %v8067 = vunpack.c.h.b16 %v7962
    %v8068 = vunpack.c.l.b16 %v7963
    %v8069 = vunpack.c.h.b16 %v7963
    %v8070 = vunpack.c.l.b16 %v7964
    %v8071 = vunpack.c.h.b16 %v7964
    %v8072 = vunpack.c.l.b16 %v7965
    %v8073 = vunpack.c.h.b16 %v7965
    %v8074 = vunpack.c.l.b16 %v7966
    %v8075 = vunpack.c.h.b16 %v7966
    %v8076 = vunpack.c.l.b16 %v7967
    %v8077 = vunpack.c.h.b16 %v7967
    %v8078 = vunpack.c.l.b16 %v7968
    %v8079 = vunpack.c.h.b16 %v7968
    %v8080 = vunpack.c.l.b16 %v7969
    %v8081 = vunpack.c.h.b16 %v7969
    %v8082 = vunpack.c.l.b16 %v7970
    %v8083 = vunpack.c.h.b16 %v7970
    %v8084 = vunpack.c.l.b16 %v7971
    %v8085 = vunpack.c.h.b16 %v7971
    %v8086 = vunpack.c.l.b16 %v7972
    %v8087 = vunpack.c.h.b16 %v7972
    %v8088 = vunpack.c.l.b16 %v7973
    %v8089 = vunpack.c.h.b16 %v7973
    %v8090 = vpack.c.b16 %v8020, %v8018
    %v8091 = vpack.c.b16 %v8021, %v8019
    %v8092 = vpack.c.b16 %v8024, %v8022
    %v8093 = vpack.c.b16 %v8025, %v8023
    %v8094 = vpack.c.b16 %v8028, %v8026
    %v8095 = vpack.c.b16 %v8029, %v8027
    %v8096 = vpack.c.b16 %v8032, %v8030
    %v8097 = vpack.c.b16 %v8033, %v8031
    %v8098 = vpack.c.b16 %v8036, %v8034
    %v8099 = vpack.c.b16 %v8037, %v8035
    %v8100 = vpack.c.b16 %v8040, %v8038
    %v8101 = vpack.c.b16 %v8041, %v8039
    %v8102 = vpack.c.b16 %v8044, %v8042
    %v8103 = vpack.c.b16 %v8045, %v8043
    %v8104 = vpack.c.b16 %v8048, %v8046
    %v8105 = vpack.c.b16 %v8049, %v8047
    %v8106 = vpack.c.b16 %v8052, %v8050
    %v8107 = vpack.c.b16 %v8053, %v8051
    %v8108 = vpack.c.b16 %v8056, %v8054
    %v8109 = vpack.c.b16 %v8057, %v8055
    %v8110 = vpack.c.b16 %v8060, %v8058
    %v8111 = vpack.c.b16 %v8061, %v8059
    %v8112 = vpack.c.b16 %v8064, %v8062
    %v8113 = vpack.c.b16 %v8065, %v8063
    %v8114 = vpack.c.b16 %v8068, %v8066
    %v8115 = vpack.c.b16 %v8069, %v8067
    %v8116 = vpack.c.b16 %v8072, %v8070
    %v8117 = vpack.c.b16 %v8073, %v8071
    %v8118 = vpack.c.b16 %v8076, %v8074
    %v8119 = vpack.c.b16 %v8077, %v8075
    %v8120 = vpack.c.b16 %v8080, %v8078
    %v8121 = vpack.c.b16 %v8081, %v8079
    %v8122 = vpack.c.b16 %v8084, %v8082
    %v8123 = vpack.c.b16 %v8085, %v8083
    %v8124 = vpack.c.b16 %v8088, %v8086
    %v8125 = vpack.c.b16 %v8089, %v8087
    %v8163 = vsel %vm315, %v7979, 0
    %8165 = vmatprep.subr.bf16.mxu0 %v8091
    %8166 = vmatpush1.bf16.msra.mxu0 %v8090
    %8167 = vmatprep.subr.bf16.mxu0 %v8093
    %8168 = vmatpush1.bf16.msra.mxu0 %v8092
    %8169 = vmatprep.subr.bf16.mxu0 %v8095
    %8170 = vmatpush1.bf16.msra.mxu0 %v8094
    %8171 = vmatprep.subr.bf16.mxu0 %v8097
    %8172 = vmatpush1.bf16.msra.mxu0 %v8096
    %8173 = vmatprep.subr.bf16.mxu0 %v8099
    %8174 = vmatpush1.bf16.msra.mxu0 %v8098
    %8175 = vmatprep.subr.bf16.mxu0 %v8101
    %8176 = vmatpush1.bf16.msra.mxu0 %v8100
    %8177 = vmatprep.subr.bf16.mxu0 %v8103
    %8178 = vmatpush1.bf16.msra.mxu0 %v8102
    %8179 = vmatprep.subr.bf16.mxu0 %v8105
    %8180 = vmatpush1.bf16.msra.mxu0 %v8104
    %8181 = vmatprep.subr.bf16.mxu0 %v8107
    %8182 = vmatpush1.bf16.msra.mxu0 %v8106
    %8183 = vmatprep.subr.bf16.mxu0 %v8109
    %8184 = vmatpush1.bf16.msra.mxu0 %v8108
    %8185 = vmatprep.subr.bf16.mxu0 %v8111
    %8186 = vmatpush1.bf16.msra.mxu0 %v8110
    %8187 = vmatprep.subr.bf16.mxu0 %v8113
    %8188 = vmatpush1.bf16.msra.mxu0 %v8112
    %8189 = vmatprep.subr.bf16.mxu0 %v8115
    %8190 = vmatpush1.bf16.msra.mxu0 %v8114
    %8191 = vmatprep.subr.bf16.mxu0 %v8117
    %8192 = vmatpush1.bf16.msra.mxu0 %v8116
    %8193 = vmatprep.subr.bf16.mxu0 %v8119
    %8194 = vmatpush1.bf16.msra.mxu0 %v8118
    %8195 = vmatprep.subr.bf16.mxu0 %v8121
    %8196 = vmatpush1.bf16.msra.mxu0 %v8120
    %8197 = vmatprep.mubr.bf16.mxu0 %v7978
    %8198 = vmatmul.mubr.bf16.gmra.mrb[0].mxu0 %v7977
    %v8199 = vpop.f32.mrb[0].mxu0
    %v8200 = vadd.f32 0.0, %v8199
    %v8201 = vpop.f32.mrb[0].mxu0
    %v8202 = vadd.f32 0.0, %v8201
    %v8203 = vpop.f32.mrb[0].mxu0
    %v8204 = vpop.f32.mrb[0].mxu0
    %8205 = vdwg.mxu0
    %8206 = vmatprep.subr.bf16.mxu0 %v8123
    %8207 = vmatpush1.bf16.msra.mxu0 %v8122
    %8208 = vmatprep.subr.bf16.mxu0 %v8125
    %8209 = vmatpush1.bf16.msra.mxu0 %v8124
    %8210 = vmatprep.subr.bf16.mxu0 0
    %8211 = vmatpush1.bf16.msra.mxu0 0
    %8212 = vmatprep.subr.bf16.mxu0 0
    %8213 = vmatpush1.bf16.msra.mxu0 0
    %8214 = vmatprep.subr.bf16.mxu0 0
    %8215 = vmatpush1.bf16.msra.mxu0 0
    %8216 = vmatprep.subr.bf16.mxu0 0
    %8217 = vmatpush1.bf16.msra.mxu0 0
    %8218 = vmatprep.subr.bf16.mxu0 0
    %8219 = vmatpush1.bf16.msra.mxu0 0
    %8220 = vmatprep.subr.bf16.mxu0 0
    %8221 = vmatpush1.bf16.msra.mxu0 0
    %8222 = vmatprep.subr.bf16.mxu0 0
    %8223 = vmatpush1.bf16.msra.mxu0 0
    %8224 = vmatprep.subr.bf16.mxu0 0
    %8225 = vmatpush1.bf16.msra.mxu0 0
    %8226 = vmatprep.subr.bf16.mxu0 0
    %8227 = vmatpush1.bf16.msra.mxu0 0
    %8228 = vmatprep.subr.bf16.mxu0 0
    %8229 = vmatpush1.bf16.msra.mxu0 0
    %8230 = vmatprep.subr.bf16.mxu0 0
    %8231 = vmatpush1.bf16.msra.mxu0 0
    %8232 = vmatprep.subr.bf16.mxu0 0
    %8233 = vmatpush1.bf16.msra.mxu0 0
    %8234 = vmatprep.subr.bf16.mxu0 0
    %8235 = vmatpush1.bf16.msra.mxu0 0
    %8236 = vmatprep.subr.bf16.mxu0 0
    %8237 = vmatpush1.bf16.msra.mxu0 0
    %8238 = vmatprep.mubr.bf16.mxu0 0
    %8239 = vmatmul.mubr.bf16.gmra.mrb[0].mxu0 %v8163
    %v8240 = vpop.f32.mrb[0].mxu0
    %v8241 = vadd.f32 %v8200, %v8240
    %v8242 = vpop.f32.mrb[0].mxu0
    %v8243 = vadd.f32 %v8202, %v8242
    %v8244 = vpop.f32.mrb[0].mxu0
    %v8245 = vpop.f32.mrb[0].mxu0
    %8246 = vdwg.mxu0
    %v8247 = vadd.f32 %v7926, %v8241
    %v8248 = vadd.f32 %v7927, %v8243
    %8249 = vst [vmem:[#allocation3] sm:$0xff] %v8247
    %vm8250 = vcmask 785408
    %8251 = vst.msk [vmem:[#allocation3 + $0x8] sm:$0xff] %vm8250, %v8248
    %v8252 = vrot.slane %v8247, 4
    %v8253 = vadd.f32 %v8247, %v8252
    %v8254 = vrot.slane %v8253, 2
    %v8255 = vadd.f32 %v8253, %v8254
    %v8256 = vrot.slane %v8255, 1
    %v8257 = vadd.f32 %v8255, %v8256
    %v8258 = vsel %vm8250, %v8248, 0.0
    %v8259 = vrot.slane %v8258, 4
    %v8260 = vadd.f32 %v8258, %v8259
    %v8261 = vrot.slane %v8260, 2
    %v8262 = vadd.f32 %v8260, %v8261
    %v8263 = vrot.slane %v8262, 1
    %v8264 = vadd.f32 %v8262, %v8263
    %v8265 = vadd.f32 %v8257, 0.0
    %v8266 = vadd.f32 %v8264, 0.0
    %v8267 = vmul.f32 %v8247, %v8247
    %v8268 = vmul.f32 %v8248, %v8248
    %v8269 = vrot.slane %v8267, 4
    %v8270 = vadd.f32 %v8267, %v8269
    %v8271 = vrot.slane %v8270, 2
    %v8272 = vadd.f32 %v8270, %v8271
    %v8273 = vrot.slane %v8272, 1
    %v8274 = vadd.f32 %v8272, %v8273
    %v8275 = vsel %vm8250, %v8268, 0.0
    %v8276 = vrot.slane %v8275, 4
    %v8277 = vadd.f32 %v8275, %v8276
    %v8278 = vrot.slane %v8277, 2
    %v8279 = vadd.f32 %v8277, %v8278
    %v8280 = vrot.slane %v8279, 1
    %v8281 = vadd.f32 %v8279, %v8280
    %v8282 = vadd.f32 %v8274, 0.0
    %v8283 = vadd.f32 %v8281, 0.0
    %v8284 = vld [vmem:[%s4634] sm:$0x3f]
    %v8285 = vld [vmem:[%s4634 + $0x8] sm:$0x3f]
    %v8286 = vld [vmem:[%s4634 + $0x10] sm:$0x3f]
    %v8287 = vpack.c.bf16 %v8284, %v8284
    %v8288 = vpack.c.bf16 %v8285, %v8285
    %v8289 = vpack.c.bf16 %v8286, %v8286
    %v8290 = vld [vmem:[%s6] sm:$0xff]
    %v8291 = vld [vmem:[%s6 + $0x8] sm:$0xff]
    %v8292 = vld [vmem:[%s6 + $0x10] sm:$0xff]
    %v8293 = vld [vmem:[%s6 + $0x18] sm:$0xff]
    %v8294 = vld [vmem:[%s6 + $0x20] sm:$0xff]
    %v8295 = vld [vmem:[%s6 + $0x28] sm:$0xff]
    %v8296 = vld [vmem:[%s6 + $0x30] sm:$0xff]
    %v8297 = vld [vmem:[%s6 + $0x38] sm:$0xff]
    %v8298 = vld [vmem:[%s6 + $0x40] sm:$0xff]
    %v8299 = vld [vmem:[%s6 + $0x48] sm:$0xff]
    %v8300 = vld [vmem:[%s6 + $0x50] sm:$0xff]
    %v8301 = vld [vmem:[%s6 + $0x58] sm:$0xff]
    %v8302 = vld [vmem:[%s6 + $0x60] sm:$0xff]
    %v8303 = vld [vmem:[%s6 + $0x68] sm:$0xff]
    %v8304 = vld [vmem:[%s6 + $0x70] sm:$0xff]
    %v8305 = vld [vmem:[%s6 + $0x78] sm:$0xff]
    %v8306 = vld [vmem:[%s6 + $0x80] sm:$0xff]
    %v8307 = vld [vmem:[%s6 + $0x88] sm:$0xff]
    %v8308 = vld [vmem:[%s6 + $0x90] sm:$0xff]
    %v8309 = vld [vmem:[%s6 + $0x98] sm:$0xff]
    %v8310 = vld [vmem:[%s6 + $0xa0] sm:$0xff]
    %v8311 = vld [vmem:[%s6 + $0xa8] sm:$0xff]
    %v8312 = vld [vmem:[%s6 + $0xb0] sm:$0xff]
    %v8313 = vld [vmem:[%s6 + $0xb8] sm:$0xff]
    %v8314 = vld [vmem:[%s6 + $0xc0] sm:$0xff]
    %v8315 = vld [vmem:[%s6 + $0xc8] sm:$0xff]
    %v8316 = vld [vmem:[%s6 + $0xd0] sm:$0xff]
    %v8317 = vld [vmem:[%s6 + $0xd8] sm:$0xff]
    %v8318 = vld [vmem:[%s6 + $0xe0] sm:$0xff]
    %v8319 = vld [vmem:[%s6 + $0xe8] sm:$0xff]
    %v8320 = vld [vmem:[%s6 + $0xf0] sm:$0xff]
    %v8321 = vld [vmem:[%s6 + $0xf8] sm:$0xff]
    %v8322 = vld [vmem:[%s6 + $0x100] sm:$0xff]
    %v8323 = vld [vmem:[%s6 + $0x108] sm:$0xff]
    %v8324 = vld [vmem:[%s6 + $0x110] sm:$0xff]
    %v8325 = vld [vmem:[%s6 + $0x118] sm:$0xff]
    %v8326 = vld [vmem:[%s6155] sm:$0x3f]
    %v8327 = vld [vmem:[%s6155 + $0x8] sm:$0x3f]
    %v8328 = vld [vmem:[%s6155 + $0x10] sm:$0x3f]
    %v8329 = vpack.c.bf16 %v8326, %v8326
    %v8330 = vpack.c.bf16 %v8327, %v8327
    %v8331 = vpack.c.bf16 %v8328, %v8328
    %v8332 = vld [vmem:[%s6741] sm:$0xff]
    %v8333 = vld [vmem:[%s6741 + $0x8] sm:$0xff]
    %v8334 = vld [vmem:[%s6741 + $0x10] sm:$0xff]
    %v8335 = vld [vmem:[%s6741 + $0x18] sm:$0xff]
    %v8336 = vld [vmem:[%s6741 + $0x20] sm:$0xff]
    %v8337 = vld [vmem:[%s6741 + $0x28] sm:$0xff]
    %v8338 = vld [vmem:[%s6741 + $0x30] sm:$0xff]
    %v8339 = vld [vmem:[%s6741 + $0x38] sm:$0xff]
    %v8340 = vld [vmem:[%s6741 + $0x40] sm:$0xff]
    %v8341 = vld [vmem:[%s6741 + $0x48] sm:$0xff]
    %v8342 = vld [vmem:[%s6741 + $0x50] sm:$0xff]
    %v8343 = vld [vmem:[%s6741 + $0x58] sm:$0xff]
    %v8344 = vld [vmem:[%s6741 + $0x60] sm:$0xff]
    %v8345 = vld [vmem:[%s6741 + $0x68] sm:$0xff]
    %v8346 = vld [vmem:[%s6741 + $0x70] sm:$0xff]
    %v8347 = vld [vmem:[%s6741 + $0x78] sm:$0xff]
    %v8348 = vld [vmem:[%s6741 + $0x80] sm:$0xff]
    %v8349 = vld [vmem:[%s6741 + $0x88] sm:$0xff]
    %v8350 = vld [vmem:[%s6741 + $0x90] sm:$0xff]
    %v8351 = vld [vmem:[%s6741 + $0x98] sm:$0xff]
    %v8352 = vld [vmem:[%s6741 + $0xa0] sm:$0xff]
    %v8353 = vld [vmem:[%s6741 + $0xa8] sm:$0xff]
    %v8354 = vld [vmem:[%s6741 + $0xb0] sm:$0xff]
    %v8355 = vld [vmem:[%s6741 + $0xb8] sm:$0xff]
    %v8356 = vld [vmem:[%s6741 + $0xc0] sm:$0xff]
    %v8357 = vld [vmem:[%s6741 + $0xc8] sm:$0xff]
    %v8358 = vld [vmem:[%s6741 + $0xd0] sm:$0xff]
    %v8359 = vld [vmem:[%s6741 + $0xd8] sm:$0xff]
    %v8360 = vld [vmem:[%s6741 + $0xe0] sm:$0xff]
    %v8361 = vld [vmem:[%s6741 + $0xe8] sm:$0xff]
    %v8362 = vld [vmem:[%s6741 + $0xf0] sm:$0xff]
    %v8363 = vld [vmem:[%s6741 + $0xf8] sm:$0xff]
    %v8364 = vld [vmem:[%s6741 + $0x100] sm:$0xff]
    %v8365 = vld [vmem:[%s6741 + $0x108] sm:$0xff]
    %v8366 = vld [vmem:[%s6741 + $0x110] sm:$0xff]
    %v8367 = vld [vmem:[%s6741 + $0x118] sm:$0xff]
    %v8404 = vunpack.c.l.b16 %v8332
    %v8405 = vunpack.c.h.b16 %v8332
    %v8406 = vunpack.c.l.b16 %v8333
    %v8407 = vunpack.c.h.b16 %v8333
    %v8408 = vunpack.c.l.b16 %v8334
    %v8409 = vunpack.c.h.b16 %v8334
    %v8410 = vunpack.c.l.b16 %v8335
    %v8411 = vunpack.c.h.b16 %v8335
    %v8412 = vunpack.c.l.b16 %v8336
    %v8413 = vunpack.c.h.b16 %v8336
    %v8414 = vunpack.c.l.b16 %v8337
    %v8415 = vunpack.c.h.b16 %v8337
    %v8416 = vunpack.c.l.b16 %v8338
    %v8417 = vunpack.c.h.b16 %v8338
    %v8418 = vunpack.c.l.b16 %v8339
    %v8419 = vunpack.c.h.b16 %v8339
    %v8420 = vunpack.c.l.b16 %v8340
    %v8421 = vunpack.c.h.b16 %v8340
    %v8422 = vunpack.c.l.b16 %v8341
    %v8423 = vunpack.c.h.b16 %v8341
    %v8424 = vunpack.c.l.b16 %v8342
    %v8425 = vunpack.c.h.b16 %v8342
    %v8426 = vunpack.c.l.b16 %v8343
    %v8427 = vunpack.c.h.b16 %v8343
    %v8428 = vunpack.c.l.b16 %v8344
    %v8429 = vunpack.c.h.b16 %v8344
    %v8430 = vunpack.c.l.b16 %v8345
    %v8431 = vunpack.c.h.b16 %v8345
    %v8432 = vunpack.c.l.b16 %v8346
    %v8433 = vunpack.c.h.b16 %v8346
    %v8434 = vunpack.c.l.b16 %v8347
    %v8435 = vunpack.c.h.b16 %v8347
    %v8436 = vunpack.c.l.b16 %v8348
    %v8437 = vunpack.c.h.b16 %v8348
    %v8438 = vunpack.c.l.b16 %v8349
    %v8439 = vunpack.c.h.b16 %v8349
    %v8440 = vunpack.c.l.b16 %v8350
    %v8441 = vunpack.c.h.b16 %v8350
    %v8442 = vunpack.c.l.b16 %v8351
    %v8443 = vunpack.c.h.b16 %v8351
    %v8444 = vunpack.c.l.b16 %v8352
    %v8445 = vunpack.c.h.b16 %v8352
    %v8446 = vunpack.c.l.b16 %v8353
    %v8447 = vunpack.c.h.b16 %v8353
    %v8448 = vunpack.c.l.b16 %v8354
    %v8449 = vunpack.c.h.b16 %v8354
    %v8450 = vunpack.c.l.b16 %v8355
    %v8451 = vunpack.c.h.b16 %v8355
    %v8452 = vunpack.c.l.b16 %v8356
    %v8453 = vunpack.c.h.b16 %v8356
    %v8454 = vunpack.c.l.b16 %v8357
    %v8455 = vunpack.c.h.b16 %v8357
    %v8456 = vunpack.c.l.b16 %v8358
    %v8457 = vunpack.c.h.b16 %v8358
    %v8458 = vunpack.c.l.b16 %v8359
    %v8459 = vunpack.c.h.b16 %v8359
    %v8460 = vunpack.c.l.b16 %v8360
    %v8461 = vunpack.c.h.b16 %v8360
    %v8462 = vunpack.c.l.b16 %v8361
    %v8463 = vunpack.c.h.b16 %v8361
    %v8464 = vunpack.c.l.b16 %v8362
    %v8465 = vunpack.c.h.b16 %v8362
    %v8466 = vunpack.c.l.b16 %v8363
    %v8467 = vunpack.c.h.b16 %v8363
    %v8468 = vunpack.c.l.b16 %v8364
    %v8469 = vunpack.c.h.b16 %v8364
    %v8470 = vunpack.c.l.b16 %v8365
    %v8471 = vunpack.c.h.b16 %v8365
    %v8472 = vunpack.c.l.b16 %v8366
    %v8473 = vunpack.c.h.b16 %v8366
    %v8474 = vunpack.c.l.b16 %v8367
    %v8475 = vunpack.c.h.b16 %v8367
    %v8476 = vpack.c.b16 %v8406, %v8404
    %v8477 = vpack.c.b16 %v8407, %v8405
    %v8478 = vpack.c.b16 %v8410, %v8408
    %v8479 = vpack.c.b16 %v8411, %v8409
    %v8480 = vpack.c.b16 %v8414, %v8412
    %v8481 = vpack.c.b16 %v8415, %v8413
    %v8482 = vpack.c.b16 %v8418, %v8416
    %v8483 = vpack.c.b16 %v8419, %v8417
    %v8484 = vpack.c.b16 %v8422, %v8420
    %v8485 = vpack.c.b16 %v8423, %v8421
    %v8486 = vpack.c.b16 %v8426, %v8424
    %v8487 = vpack.c.b16 %v8427, %v8425
    %v8488 = vpack.c.b16 %v8430, %v8428
    %v8489 = vpack.c.b16 %v8431, %v8429
    %v8490 = vpack.c.b16 %v8434, %v8432
    %v8491 = vpack.c.b16 %v8435, %v8433
    %v8492 = vpack.c.b16 %v8438, %v8436
    %v8493 = vpack.c.b16 %v8439, %v8437
    %v8494 = vpack.c.b16 %v8442, %v8440
    %v8495 = vpack.c.b16 %v8443, %v8441
    %v8496 = vpack.c.b16 %v8446, %v8444
    %v8497 = vpack.c.b16 %v8447, %v8445
    %v8498 = vpack.c.b16 %v8450, %v8448
    %v8499 = vpack.c.b16 %v8451, %v8449
    %v8500 = vpack.c.b16 %v8454, %v8452
    %v8501 = vpack.c.b16 %v8455, %v8453
    %v8502 = vpack.c.b16 %v8458, %v8456
    %v8503 = vpack.c.b16 %v8459, %v8457
    %v8504 = vpack.c.b16 %v8462, %v8460
    %v8505 = vpack.c.b16 %v8463, %v8461
    %v8506 = vpack.c.b16 %v8466, %v8464
    %v8507 = vpack.c.b16 %v8467, %v8465
    %v8508 = vpack.c.b16 %v8470, %v8468
    %v8509 = vpack.c.b16 %v8471, %v8469
    %v8510 = vpack.c.b16 %v8474, %v8472
    %v8511 = vpack.c.b16 %v8475, %v8473
    %v8549 = vsel %vm315, %v8331, 0
    %8551 = vmatprep.subr.bf16.mxu0 %v8477
    %8552 = vmatpush1.bf16.msra.mxu0 %v8476
    %8553 = vmatprep.subr.bf16.mxu0 %v8479
    %8554 = vmatpush1.bf16.msra.mxu0 %v8478
    %8555 = vmatprep.subr.bf16.mxu0 %v8481
    %8556 = vmatpush1.bf16.msra.mxu0 %v8480
    %8557 = vmatprep.subr.bf16.mxu0 %v8483
    %8558 = vmatpush1.bf16.msra.mxu0 %v8482
    %8559 = vmatprep.subr.bf16.mxu0 %v8485
    %8560 = vmatpush1.bf16.msra.mxu0 %v8484
    %8561 = vmatprep.subr.bf16.mxu0 %v8487
    %8562 = vmatpush1.bf16.msra.mxu0 %v8486
    %8563 = vmatprep.subr.bf16.mxu0 %v8489
    %8564 = vmatpush1.bf16.msra.mxu0 %v8488
    %8565 = vmatprep.subr.bf16.mxu0 %v8491
    %8566 = vmatpush1.bf16.msra.mxu0 %v8490
    %8567 = vmatprep.subr.bf16.mxu0 %v8493
    %8568 = vmatpush1.bf16.msra.mxu0 %v8492
    %8569 = vmatprep.subr.bf16.mxu0 %v8495
    %8570 = vmatpush1.bf16.msra.mxu0 %v8494
    %8571 = vmatprep.subr.bf16.mxu0 %v8497
    %8572 = vmatpush1.bf16.msra.mxu0 %v8496
    %8573 = vmatprep.subr.bf16.mxu0 %v8499
    %8574 = vmatpush1.bf16.msra.mxu0 %v8498
    %8575 = vmatprep.subr.bf16.mxu0 %v8501
    %8576 = vmatpush1.bf16.msra.mxu0 %v8500
    %8577 = vmatprep.subr.bf16.mxu0 %v8503
    %8578 = vmatpush1.bf16.msra.mxu0 %v8502
    %8579 = vmatprep.subr.bf16.mxu0 %v8505
    %8580 = vmatpush1.bf16.msra.mxu0 %v8504
    %8581 = vmatprep.subr.bf16.mxu0 %v8507
    %8582 = vmatpush1.bf16.msra.mxu0 %v8506
    %8583 = vmatprep.mubr.bf16.mxu0 %v8330
    %8584 = vmatmul.mubr.bf16.gmra.mrb[0].mxu0 %v8329
    %v8585 = vpop.f32.mrb[0].mxu0
    %v8586 = vadd.f32 0.0, %v8585
    %v8587 = vpop.f32.mrb[0].mxu0
    %v8588 = vadd.f32 0.0, %v8587
    %v8589 = vpop.f32.mrb[0].mxu0
    %v8590 = vpop.f32.mrb[0].mxu0
    %8591 = vdwg.mxu0
    %8592 = vmatprep.subr.bf16.mxu0 %v8509
    %8593 = vmatpush1.bf16.msra.mxu0 %v8508
    %8594 = vmatprep.subr.bf16.mxu0 %v8511
    %8595 = vmatpush1.bf16.msra.mxu0 %v8510
    %8596 = vmatprep.subr.bf16.mxu0 0
    %8597 = vmatpush1.bf16.msra.mxu0 0
    %8598 = vmatprep.subr.bf16.mxu0 0
    %8599 = vmatpush1.bf16.msra.mxu0 0
    %8600 = vmatprep.subr.bf16.mxu0 0
    %8601 = vmatpush1.bf16.msra.mxu0 0
    %8602 = vmatprep.subr.bf16.mxu0 0
    %8603 = vmatpush1.bf16.msra.mxu0 0
    %8604 = vmatprep.subr.bf16.mxu0 0
    %8605 = vmatpush1.bf16.msra.mxu0 0
    %8606 = vmatprep.subr.bf16.mxu0 0
    %8607 = vmatpush1.bf16.msra.mxu0 0
    %8608 = vmatprep.subr.bf16.mxu0 0
    %8609 = vmatpush1.bf16.msra.mxu0 0
    %8610 = vmatprep.subr.bf16.mxu0 0
    %8611 = vmatpush1.bf16.msra.mxu0 0
    %8612 = vmatprep.subr.bf16.mxu0 0
    %8613 = vmatpush1.bf16.msra.mxu0 0
    %8614 = vmatprep.subr.bf16.mxu0 0
    %8615 = vmatpush1.bf16.msra.mxu0 0
    %8616 = vmatprep.subr.bf16.mxu0 0
    %8617 = vmatpush1.bf16.msra.mxu0 0
    %8618 = vmatprep.subr.bf16.mxu0 0
    %8619 = vmatpush1.bf16.msra.mxu0 0
    %8620 = vmatprep.subr.bf16.mxu0 0
    %8621 = vmatpush1.bf16.msra.mxu0 0
    %8622 = vmatprep.subr.bf16.mxu0 0
    %8623 = vmatpush1.bf16.msra.mxu0 0
    %8624 = vmatprep.mubr.bf16.mxu0 0
    %8625 = vmatmul.mubr.bf16.gmra.mrb[0].mxu0 %v8549
    %v8626 = vpop.f32.mrb[0].mxu0
    %v8627 = vadd.f32 %v8586, %v8626
    %v8628 = vpop.f32.mrb[0].mxu0
    %v8629 = vadd.f32 %v8588, %v8628
    %v8630 = vpop.f32.mrb[0].mxu0
    %v8631 = vpop.f32.mrb[0].mxu0
    %8632 = vdwg.mxu0
    %v8669 = vunpack.c.l.b16 %v8290
    %v8670 = vunpack.c.h.b16 %v8290
    %v8671 = vunpack.c.l.b16 %v8291
    %v8672 = vunpack.c.h.b16 %v8291
    %v8673 = vunpack.c.l.b16 %v8292
    %v8674 = vunpack.c.h.b16 %v8292
    %v8675 = vunpack.c.l.b16 %v8293
    %v8676 = vunpack.c.h.b16 %v8293
    %v8677 = vunpack.c.l.b16 %v8294
    %v8678 = vunpack.c.h.b16 %v8294
    %v8679 = vunpack.c.l.b16 %v8295
    %v8680 = vunpack.c.h.b16 %v8295
    %v8681 = vunpack.c.l.b16 %v8296
    %v8682 = vunpack.c.h.b16 %v8296
    %v8683 = vunpack.c.l.b16 %v8297
    %v8684 = vunpack.c.h.b16 %v8297
    %v8685 = vunpack.c.l.b16 %v8298
    %v8686 = vunpack.c.h.b16 %v8298
    %v8687 = vunpack.c.l.b16 %v8299
    %v8688 = vunpack.c.h.b16 %v8299
    %v8689 = vunpack.c.l.b16 %v8300
    %v8690 = vunpack.c.h.b16 %v8300
    %v8691 = vunpack.c.l.b16 %v8301
    %v8692 = vunpack.c.h.b16 %v8301
    %v8693 = vunpack.c.l.b16 %v8302
    %v8694 = vunpack.c.h.b16 %v8302
    %v8695 = vunpack.c.l.b16 %v8303
    %v8696 = vunpack.c.h.b16 %v8303
    %v8697 = vunpack.c.l.b16 %v8304
    %v8698 = vunpack.c.h.b16 %v8304
    %v8699 = vunpack.c.l.b16 %v8305
    %v8700 = vunpack.c.h.b16 %v8305
    %v8701 = vunpack.c.l.b16 %v8306
    %v8702 = vunpack.c.h.b16 %v8306
    %v8703 = vunpack.c.l.b16 %v8307
    %v8704 = vunpack.c.h.b16 %v8307
    %v8705 = vunpack.c.l.b16 %v8308
    %v8706 = vunpack.c.h.b16 %v8308
    %v8707 = vunpack.c.l.b16 %v8309
    %v8708 = vunpack.c.h.b16 %v8309
    %v8709 = vunpack.c.l.b16 %v8310
    %v8710 = vunpack.c.h.b16 %v8310
    %v8711 = vunpack.c.l.b16 %v8311
    %v8712 = vunpack.c.h.b16 %v8311
    %v8713 = vunpack.c.l.b16 %v8312
    %v8714 = vunpack.c.h.b16 %v8312
    %v8715 = vunpack.c.l.b16 %v8313
    %v8716 = vunpack.c.h.b16 %v8313
    %v8717 = vunpack.c.l.b16 %v8314
    %v8718 = vunpack.c.h.b16 %v8314
    %v8719 = vunpack.c.l.b16 %v8315
    %v8720 = vunpack.c.h.b16 %v8315
    %v8721 = vunpack.c.l.b16 %v8316
    %v8722 = vunpack.c.h.b16 %v8316
    %v8723 = vunpack.c.l.b16 %v8317
    %v8724 = vunpack.c.h.b16 %v8317
    %v8725 = vunpack.c.l.b16 %v8318
    %v8726 = vunpack.c.h.b16 %v8318
    %v8727 = vunpack.c.l.b16 %v8319
    %v8728 = vunpack.c.h.b16 %v8319
    %v8729 = vunpack.c.l.b16 %v8320
    %v8730 = vunpack.c.h.b16 %v8320
    %v8731 = vunpack.c.l.b16 %v8321
    %v8732 = vunpack.c.h.b16 %v8321
    %v8733 = vunpack.c.l.b16 %v8322
    %v8734 = vunpack.c.h.b16 %v8322
    %v8735 = vunpack.c.l.b16 %v8323
    %v8736 = vunpack.c.h.b16 %v8323
    %v8737 = vunpack.c.l.b16 %v8324
    %v8738 = vunpack.c.h.b16 %v8324
    %v8739 = vunpack.c.l.b16 %v8325
    %v8740 = vunpack.c.h.b16 %v8325
    %v8741 = vpack.c.b16 %v8671, %v8669
    %v8742 = vpack.c.b16 %v8672, %v8670
    %v8743 = vpack.c.b16 %v8675, %v8673
    %v8744 = vpack.c.b16 %v8676, %v8674
    %v8745 = vpack.c.b16 %v8679, %v8677
    %v8746 = vpack.c.b16 %v8680, %v8678
    %v8747 = vpack.c.b16 %v8683, %v8681
    %v8748 = vpack.c.b16 %v8684, %v8682
    %v8749 = vpack.c.b16 %v8687, %v8685
    %v8750 = vpack.c.b16 %v8688, %v8686
    %v8751 = vpack.c.b16 %v8691, %v8689
    %v8752 = vpack.c.b16 %v8692, %v8690
    %v8753 = vpack.c.b16 %v8695, %v8693
    %v8754 = vpack.c.b16 %v8696, %v8694
    %v8755 = vpack.c.b16 %v8699, %v8697
    %v8756 = vpack.c.b16 %v8700, %v8698
    %v8757 = vpack.c.b16 %v8703, %v8701
    %v8758 = vpack.c.b16 %v8704, %v8702
    %v8759 = vpack.c.b16 %v8707, %v8705
    %v8760 = vpack.c.b16 %v8708, %v8706
    %v8761 = vpack.c.b16 %v8711, %v8709
    %v8762 = vpack.c.b16 %v8712, %v8710
    %v8763 = vpack.c.b16 %v8715, %v8713
    %v8764 = vpack.c.b16 %v8716, %v8714
    %v8765 = vpack.c.b16 %v8719, %v8717
    %v8766 = vpack.c.b16 %v8720, %v8718
    %v8767 = vpack.c.b16 %v8723, %v8721
    %v8768 = vpack.c.b16 %v8724, %v8722
    %v8769 = vpack.c.b16 %v8727, %v8725
    %v8770 = vpack.c.b16 %v8728, %v8726
    %v8771 = vpack.c.b16 %v8731, %v8729
    %v8772 = vpack.c.b16 %v8732, %v8730
    %v8773 = vpack.c.b16 %v8735, %v8733
    %v8774 = vpack.c.b16 %v8736, %v8734
    %v8775 = vpack.c.b16 %v8739, %v8737
    %v8776 = vpack.c.b16 %v8740, %v8738
    %v8814 = vsel %vm315, %v8289, 0
    %8816 = vmatprep.subr.bf16.mxu0 %v8742
    %8817 = vmatpush1.bf16.msra.mxu0 %v8741
    %8818 = vmatprep.subr.bf16.mxu0 %v8744
    %8819 = vmatpush1.bf16.msra.mxu0 %v8743
    %8820 = vmatprep.subr.bf16.mxu0 %v8746
    %8821 = vmatpush1.bf16.msra.mxu0 %v8745
    %8822 = vmatprep.subr.bf16.mxu0 %v8748
    %8823 = vmatpush1.bf16.msra.mxu0 %v8747
    %8824 = vmatprep.subr.bf16.mxu0 %v8750
    %8825 = vmatpush1.bf16.msra.mxu0 %v8749
    %8826 = vmatprep.subr.bf16.mxu0 %v8752
    %8827 = vmatpush1.bf16.msra.mxu0 %v8751
    %8828 = vmatprep.subr.bf16.mxu0 %v8754
    %8829 = vmatpush1.bf16.msra.mxu0 %v8753
    %8830 = vmatprep.subr.bf16.mxu0 %v8756
    %8831 = vmatpush1.bf16.msra.mxu0 %v8755
    %8832 = vmatprep.subr.bf16.mxu0 %v8758
    %8833 = vmatpush1.bf16.msra.mxu0 %v8757
    %8834 = vmatprep.subr.bf16.mxu0 %v8760
    %8835 = vmatpush1.bf16.msra.mxu0 %v8759
    %8836 = vmatprep.subr.bf16.mxu0 %v8762
    %8837 = vmatpush1.bf16.msra.mxu0 %v8761
    %8838 = vmatprep.subr.bf16.mxu0 %v8764
    %8839 = vmatpush1.bf16.msra.mxu0 %v8763
    %8840 = vmatprep.subr.bf16.mxu0 %v8766
    %8841 = vmatpush1.bf16.msra.mxu0 %v8765
    %8842 = vmatprep.subr.bf16.mxu0 %v8768
    %8843 = vmatpush1.bf16.msra.mxu0 %v8767
    %8844 = vmatprep.subr.bf16.mxu0 %v8770
    %8845 = vmatpush1.bf16.msra.mxu0 %v8769
    %8846 = vmatprep.subr.bf16.mxu0 %v8772
    %8847 = vmatpush1.bf16.msra.mxu0 %v8771
    %8848 = vmatprep.mubr.bf16.mxu0 %v8288
    %8849 = vmatmul.mubr.bf16.gmra.mrb[0].mxu0 %v8287
    %v8850 = vpop.f32.mrb[0].mxu0
    %v8851 = vadd.f32 %v8627, %v8850
    %v8852 = vpop.f32.mrb[0].mxu0
    %v8853 = vadd.f32 %v8629, %v8852
    %v8854 = vpop.f32.mrb[0].mxu0
    %v8855 = vpop.f32.mrb[0].mxu0
    %8856 = vdwg.mxu0
    %8857 = vmatprep.subr.bf16.mxu0 %v8774
    %8858 = vmatpush1.bf16.msra.mxu0 %v8773
    %8859 = vmatprep.subr.bf16.mxu0 %v8776
    %8860 = vmatpush1.bf16.msra.mxu0 %v8775
    %8861 = vmatprep.subr.bf16.mxu0 0
    %8862 = vmatpush1.bf16.msra.mxu0 0
    %8863 = vmatprep.subr.bf16.mxu0 0
    %8864 = vmatpush1.bf16.msra.mxu0 0
    %8865 = vmatprep.subr.bf16.mxu0 0
    %8866 = vmatpush1.bf16.msra.mxu0 0
    %8867 = vmatprep.subr.bf16.mxu0 0
    %8868 = vmatpush1.bf16.msra.mxu0 0
    %8869 = vmatprep.subr.bf16.mxu0 0
    %8870 = vmatpush1.bf16.msra.mxu0 0
    %8871 = vmatprep.subr.bf16.mxu0 0
    %8872 = vmatpush1.bf16.msra.mxu0 0
    %8873 = vmatprep.subr.bf16.mxu0 0
    %8874 = vmatpush1.bf16.msra.mxu0 0
    %8875 = vmatprep.subr.bf16.mxu0 0
    %8876 = vmatpush1.bf16.msra.mxu0 0
    %8877 = vmatprep.subr.bf16.mxu0 0
    %8878 = vmatpush1.bf16.msra.mxu0 0
    %8879 = vmatprep.subr.bf16.mxu0 0
    %8880 = vmatpush1.bf16.msra.mxu0 0
    %8881 = vmatprep.subr.bf16.mxu0 0
    %8882 = vmatpush1.bf16.msra.mxu0 0
    %8883 = vmatprep.subr.bf16.mxu0 0
    %8884 = vmatpush1.bf16.msra.mxu0 0
    %8885 = vmatprep.subr.bf16.mxu0 0
    %8886 = vmatpush1.bf16.msra.mxu0 0
    %8887 = vmatprep.subr.bf16.mxu0 0
    %8888 = vmatpush1.bf16.msra.mxu0 0
    %8889 = vmatprep.mubr.bf16.mxu0 0
    %8890 = vmatmul.mubr.bf16.gmra.mrb[0].mxu0 %v8814
    %v8891 = vpop.f32.mrb[0].mxu0
    %v8892 = vadd.f32 %v8851, %v8891
    %v8893 = vpop.f32.mrb[0].mxu0
    %v8894 = vadd.f32 %v8853, %v8893
    %v8895 = vpop.f32.mrb[0].mxu0
    %v8896 = vpop.f32.mrb[0].mxu0
    %8897 = vdwg.mxu0
    %v8898 = vld [vmem:[#allocation2] sm:$0xfc]
    %v8899 = vld [vmem:[#allocation2 + $0x8] sm:$0xfc]
    %v8900 = vld [vmem:[#allocation2 + $0x10] sm:$0xfc]
    %v8901 = vpack.c.bf16 %v8898, %v8898
    %v8902 = vpack.c.bf16 %v8899, %v8899
    %v8903 = vpack.c.bf16 %v8900, %v8900
    %v8904 = vld [vmem:[%s7314] sm:$0xff]
    %v8905 = vld [vmem:[%s7314 + $0x8] sm:$0xff]
    %v8906 = vld [vmem:[%s7314 + $0x10] sm:$0xff]
    %v8907 = vld [vmem:[%s7314 + $0x18] sm:$0xff]
    %v8908 = vld [vmem:[%s7314 + $0x20] sm:$0xff]
    %v8909 = vld [vmem:[%s7314 + $0x28] sm:$0xff]
    %v8910 = vld [vmem:[%s7314 + $0x30] sm:$0xff]
    %v8911 = vld [vmem:[%s7314 + $0x38] sm:$0xff]
    %v8912 = vld [vmem:[%s7314 + $0x40] sm:$0xff]
    %v8913 = vld [vmem:[%s7314 + $0x48] sm:$0xff]
    %v8914 = vld [vmem:[%s7314 + $0x50] sm:$0xff]
    %v8915 = vld [vmem:[%s7314 + $0x58] sm:$0xff]
    %v8916 = vld [vmem:[%s7314 + $0x60] sm:$0xff]
    %v8917 = vld [vmem:[%s7314 + $0x68] sm:$0xff]
    %v8918 = vld [vmem:[%s7314 + $0x70] sm:$0xff]
    %v8919 = vld [vmem:[%s7314 + $0x78] sm:$0xff]
    %v8920 = vld [vmem:[%s7314 + $0x80] sm:$0xff]
    %v8921 = vld [vmem:[%s7314 + $0x88] sm:$0xff]
    %v8922 = vld [vmem:[%s7314 + $0x90] sm:$0xff]
    %v8923 = vld [vmem:[%s7314 + $0x98] sm:$0xff]
    %v8924 = vld [vmem:[%s7314 + $0xa0] sm:$0xff]
    %v8925 = vld [vmem:[%s7314 + $0xa8] sm:$0xff]
    %v8926 = vld [vmem:[%s7314 + $0xb0] sm:$0xff]
    %v8927 = vld [vmem:[%s7314 + $0xb8] sm:$0xff]
    %v8928 = vld [vmem:[%s7314 + $0xc0] sm:$0xff]
    %v8929 = vld [vmem:[%s7314 + $0xc8] sm:$0xff]
    %v8930 = vld [vmem:[%s7314 + $0xd0] sm:$0xff]
    %v8931 = vld [vmem:[%s7314 + $0xd8] sm:$0xff]
    %v8932 = vld [vmem:[%s7314 + $0xe0] sm:$0xff]
    %v8933 = vld [vmem:[%s7314 + $0xe8] sm:$0xff]
    %v8934 = vld [vmem:[%s7314 + $0xf0] sm:$0xff]
    %v8935 = vld [vmem:[%s7314 + $0xf8] sm:$0xff]
    %v8936 = vld [vmem:[%s7314 + $0x100] sm:$0xff]
    %v8937 = vld [vmem:[%s7314 + $0x108] sm:$0xff]
    %v8938 = vld [vmem:[%s7314 + $0x110] sm:$0xff]
    %v8939 = vld [vmem:[%s7314 + $0x118] sm:$0xff]
    %v8943 = vrot.slane %v8901, 1
    %v8944 = vrot.slane %v8902, 1
    %v8945 = vrot.slane %v8903, 1
    %v8984 = vunpack.c.l.b16 %v8904
    %v8985 = vunpack.c.h.b16 %v8904
    %v8986 = vunpack.c.l.b16 %v8905
    %v8987 = vunpack.c.h.b16 %v8905
    %v8988 = vunpack.c.l.b16 %v8906
    %v8989 = vunpack.c.h.b16 %v8906
    %v8990 = vunpack.c.l.b16 %v8907
    %v8991 = vunpack.c.h.b16 %v8907
    %v8992 = vunpack.c.l.b16 %v8908
    %v8993 = vunpack.c.h.b16 %v8908
    %v8994 = vunpack.c.l.b16 %v8909
    %v8995 = vunpack.c.h.b16 %v8909
    %v8996 = vunpack.c.l.b16 %v8910
    %v8997 = vunpack.c.h.b16 %v8910
    %v8998 = vunpack.c.l.b16 %v8911
    %v8999 = vunpack.c.h.b16 %v8911
    %v9000 = vunpack.c.l.b16 %v8912
    %v9001 = vunpack.c.h.b16 %v8912
    %v9002 = vunpack.c.l.b16 %v8913
    %v9003 = vunpack.c.h.b16 %v8913
    %v9004 = vunpack.c.l.b16 %v8914
    %v9005 = vunpack.c.h.b16 %v8914
    %v9006 = vunpack.c.l.b16 %v8915
    %v9007 = vunpack.c.h.b16 %v8915
    %v9008 = vunpack.c.l.b16 %v8916
    %v9009 = vunpack.c.h.b16 %v8916
    %v9010 = vunpack.c.l.b16 %v8917
    %v9011 = vunpack.c.h.b16 %v8917
    %v9012 = vunpack.c.l.b16 %v8918
    %v9013 = vunpack.c.h.b16 %v8918
    %v9014 = vunpack.c.l.b16 %v8919
    %v9015 = vunpack.c.h.b16 %v8919
    %v9016 = vunpack.c.l.b16 %v8920
    %v9017 = vunpack.c.h.b16 %v8920
    %v9018 = vunpack.c.l.b16 %v8921
    %v9019 = vunpack.c.h.b16 %v8921
    %v9020 = vunpack.c.l.b16 %v8922
    %v9021 = vunpack.c.h.b16 %v8922
    %v9022 = vunpack.c.l.b16 %v8923
    %v9023 = vunpack.c.h.b16 %v8923
    %v9024 = vunpack.c.l.b16 %v8924
    %v9025 = vunpack.c.h.b16 %v8924
    %v9026 = vunpack.c.l.b16 %v8925
    %v9027 = vunpack.c.h.b16 %v8925
    %v9028 = vunpack.c.l.b16 %v8926
    %v9029 = vunpack.c.h.b16 %v8926
    %v9030 = vunpack.c.l.b16 %v8927
    %v9031 = vunpack.c.h.b16 %v8927
    %v9032 = vunpack.c.l.b16 %v8928
    %v9033 = vunpack.c.h.b16 %v8928
    %v9034 = vunpack.c.l.b16 %v8929
    %v9035 = vunpack.c.h.b16 %v8929
    %v9036 = vunpack.c.l.b16 %v8930
    %v9037 = vunpack.c.h.b16 %v8930
    %v9038 = vunpack.c.l.b16 %v8931
    %v9039 = vunpack.c.h.b16 %v8931
    %v9040 = vunpack.c.l.b16 %v8932
    %v9041 = vunpack.c.h.b16 %v8932
    %v9042 = vunpack.c.l.b16 %v8933
    %v9043 = vunpack.c.h.b16 %v8933
    %v9044 = vunpack.c.l.b16 %v8934
    %v9045 = vunpack.c.h.b16 %v8934
    %v9046 = vunpack.c.l.b16 %v8935
    %v9047 = vunpack.c.h.b16 %v8935
    %v9048 = vunpack.c.l.b16 %v8936
    %v9049 = vunpack.c.h.b16 %v8936
    %v9050 = vunpack.c.l.b16 %v8937
    %v9051 = vunpack.c.h.b16 %v8937
    %v9052 = vunpack.c.l.b16 %v8938
    %v9053 = vunpack.c.h.b16 %v8938
    %v9054 = vunpack.c.l.b16 %v8939
    %v9055 = vunpack.c.h.b16 %v8939
    %v9056 = vpack.c.b16 %v8986, %v8984
    %v9057 = vpack.c.b16 %v8987, %v8985
    %v9058 = vpack.c.b16 %v8990, %v8988
    %v9059 = vpack.c.b16 %v8991, %v8989
    %v9060 = vpack.c.b16 %v8994, %v8992
    %v9061 = vpack.c.b16 %v8995, %v8993
    %v9062 = vpack.c.b16 %v8998, %v8996
    %v9063 = vpack.c.b16 %v8999, %v8997
    %v9064 = vpack.c.b16 %v9002, %v9000
    %v9065 = vpack.c.b16 %v9003, %v9001
    %v9066 = vpack.c.b16 %v9006, %v9004
    %v9067 = vpack.c.b16 %v9007, %v9005
    %v9068 = vpack.c.b16 %v9010, %v9008
    %v9069 = vpack.c.b16 %v9011, %v9009
    %v9070 = vpack.c.b16 %v9014, %v9012
    %v9071 = vpack.c.b16 %v9015, %v9013
    %v9072 = vpack.c.b16 %v9018, %v9016
    %v9073 = vpack.c.b16 %v9019, %v9017
    %v9074 = vpack.c.b16 %v9022, %v9020
    %v9075 = vpack.c.b16 %v9023, %v9021
    %v9076 = vpack.c.b16 %v9026, %v9024
    %v9077 = vpack.c.b16 %v9027, %v9025
    %v9078 = vpack.c.b16 %v9030, %v9028
    %v9079 = vpack.c.b16 %v9031, %v9029
    %v9080 = vpack.c.b16 %v9034, %v9032
    %v9081 = vpack.c.b16 %v9035, %v9033
    %v9082 = vpack.c.b16 %v9038, %v9036
    %v9083 = vpack.c.b16 %v9039, %v9037
    %v9084 = vpack.c.b16 %v9042, %v9040
    %v9085 = vpack.c.b16 %v9043, %v9041
    %v9086 = vpack.c.b16 %v9046, %v9044
    %v9087 = vpack.c.b16 %v9047, %v9045
    %v9088 = vpack.c.b16 %v9050, %v9048
    %v9089 = vpack.c.b16 %v9051, %v9049
    %v9090 = vpack.c.b16 %v9054, %v9052
    %v9091 = vpack.c.b16 %v9055, %v9053
    %v9129 = vsel %vm315, %v8945, 0
    %9131 = vmatprep.subr.bf16.mxu0 %v9057
    %9132 = vmatpush1.bf16.msra.mxu0 %v9056
    %9133 = vmatprep.subr.bf16.mxu0 %v9059
    %9134 = vmatpush1.bf16.msra.mxu0 %v9058
    %9135 = vmatprep.subr.bf16.mxu0 %v9061
    %9136 = vmatpush1.bf16.msra.mxu0 %v9060
    %9137 = vmatprep.subr.bf16.mxu0 %v9063
    %9138 = vmatpush1.bf16.msra.mxu0 %v9062
    %9139 = vmatprep.subr.bf16.mxu0 %v9065
    %9140 = vmatpush1.bf16.msra.mxu0 %v9064
    %9141 = vmatprep.subr.bf16.mxu0 %v9067
    %9142 = vmatpush1.bf16.msra.mxu0 %v9066
    %9143 = vmatprep.subr.bf16.mxu0 %v9069
    %9144 = vmatpush1.bf16.msra.mxu0 %v9068
    %9145 = vmatprep.subr.bf16.mxu0 %v9071
    %9146 = vmatpush1.bf16.msra.mxu0 %v9070
    %9147 = vmatprep.subr.bf16.mxu0 %v9073
    %9148 = vmatpush1.bf16.msra.mxu0 %v9072
    %9149 = vmatprep.subr.bf16.mxu0 %v9075
    %9150 = vmatpush1.bf16.msra.mxu0 %v9074
    %9151 = vmatprep.subr.bf16.mxu0 %v9077
    %9152 = vmatpush1.bf16.msra.mxu0 %v9076
    %9153 = vmatprep.subr.bf16.mxu0 %v9079
    %9154 = vmatpush1.bf16.msra.mxu0 %v9078
    %9155 = vmatprep.subr.bf16.mxu0 %v9081
    %9156 = vmatpush1.bf16.msra.mxu0 %v9080
    %9157 = vmatprep.subr.bf16.mxu0 %v9083
    %9158 = vmatpush1.bf16.msra.mxu0 %v9082
    %9159 = vmatprep.subr.bf16.mxu0 %v9085
    %9160 = vmatpush1.bf16.msra.mxu0 %v9084
    %9161 = vmatprep.subr.bf16.mxu0 %v9087
    %9162 = vmatpush1.bf16.msra.mxu0 %v9086
    %9163 = vmatprep.mubr.bf16.mxu0 %v8944
    %9164 = vmatmul.mubr.bf16.gmra.mrb[0].mxu0 %v8943
    %v9165 = vpop.f32.mrb[0].mxu0
    %v9166 = vadd.f32 0.0, %v9165
    %v9167 = vpop.f32.mrb[0].mxu0
    %v9168 = vadd.f32 0.0, %v9167
    %v9169 = vpop.f32.mrb[0].mxu0
    %v9170 = vpop.f32.mrb[0].mxu0
    %9171 = vdwg.mxu0
    %9172 = vmatprep.subr.bf16.mxu0 %v9089
    %9173 = vmatpush1.bf16.msra.mxu0 %v9088
    %9174 = vmatprep.subr.bf16.mxu0 %v9091
    %9175 = vmatpush1.bf16.msra.mxu0 %v9090
    %9176 = vmatprep.subr.bf16.mxu0 0
    %9177 = vmatpush1.bf16.msra.mxu0 0
    %9178 = vmatprep.subr.bf16.mxu0 0
    %9179 = vmatpush1.bf16.msra.mxu0 0
    %9180 = vmatprep.subr.bf16.mxu0 0
    %9181 = vmatpush1.bf16.msra.mxu0 0
    %9182 = vmatprep.subr.bf16.mxu0 0
    %9183 = vmatpush1.bf16.msra.mxu0 0
    %9184 = vmatprep.subr.bf16.mxu0 0
    %9185 = vmatpush1.bf16.msra.mxu0 0
    %9186 = vmatprep.subr.bf16.mxu0 0
    %9187 = vmatpush1.bf16.msra.mxu0 0
    %9188 = vmatprep.subr.bf16.mxu0 0
    %9189 = vmatpush1.bf16.msra.mxu0 0
    %9190 = vmatprep.subr.bf16.mxu0 0
    %9191 = vmatpush1.bf16.msra.mxu0 0
    %9192 = vmatprep.subr.bf16.mxu0 0
    %9193 = vmatpush1.bf16.msra.mxu0 0
    %9194 = vmatprep.subr.bf16.mxu0 0
    %9195 = vmatpush1.bf16.msra.mxu0 0
    %9196 = vmatprep.subr.bf16.mxu0 0
    %9197 = vmatpush1.bf16.msra.mxu0 0
    %9198 = vmatprep.subr.bf16.mxu0 0
    %9199 = vmatpush1.bf16.msra.mxu0 0
    %9200 = vmatprep.subr.bf16.mxu0 0
    %9201 = vmatpush1.bf16.msra.mxu0 0
    %9202 = vmatprep.subr.bf16.mxu0 0
    %9203 = vmatpush1.bf16.msra.mxu0 0
    %9204 = vmatprep.mubr.bf16.mxu0 0
    %9205 = vmatmul.mubr.bf16.gmra.mrb[0].mxu0 %v9129
    %v9206 = vpop.f32.mrb[0].mxu0
    %v9207 = vadd.f32 %v9166, %v9206
    %v9208 = vpop.f32.mrb[0].mxu0
    %v9209 = vadd.f32 %v9168, %v9208
    %v9210 = vpop.f32.mrb[0].mxu0
    %v9211 = vpop.f32.mrb[0].mxu0
    %9212 = vdwg.mxu0
    %v9213 = vadd.f32 %v8892, %v9207
    %v9214 = vadd.f32 %v8894, %v9209
    %v9215 = vld [vmem:[%s3108] sm:$0xfc]
    %v9216 = vld [vmem:[%s3108 + $0x8] sm:$0xfc]
    %v9217 = vld [vmem:[%s3108 + $0x10] sm:$0xfc]
    %v9218 = vpack.c.bf16 %v9215, %v9215
    %v9219 = vpack.c.bf16 %v9216, %v9216
    %v9220 = vpack.c.bf16 %v9217, %v9217
    %v9221 = vld [vmem:[%s7624] sm:$0xff]
    %v9222 = vld [vmem:[%s7624 + $0x8] sm:$0xff]
    %v9223 = vld [vmem:[%s7624 + $0x10] sm:$0xff]
    %v9224 = vld [vmem:[%s7624 + $0x18] sm:$0xff]
    %v9225 = vld [vmem:[%s7624 + $0x20] sm:$0xff]
    %v9226 = vld [vmem:[%s7624 + $0x28] sm:$0xff]
    %v9227 = vld [vmem:[%s7624 + $0x30] sm:$0xff]
    %v9228 = vld [vmem:[%s7624 + $0x38] sm:$0xff]
    %v9229 = vld [vmem:[%s7624 + $0x40] sm:$0xff]
    %v9230 = vld [vmem:[%s7624 + $0x48] sm:$0xff]
    %v9231 = vld [vmem:[%s7624 + $0x50] sm:$0xff]
    %v9232 = vld [vmem:[%s7624 + $0x58] sm:$0xff]
    %v9233 = vld [vmem:[%s7624 + $0x60] sm:$0xff]
    %v9234 = vld [vmem:[%s7624 + $0x68] sm:$0xff]
    %v9235 = vld [vmem:[%s7624 + $0x70] sm:$0xff]
    %v9236 = vld [vmem:[%s7624 + $0x78] sm:$0xff]
    %v9237 = vld [vmem:[%s7624 + $0x80] sm:$0xff]
    %v9238 = vld [vmem:[%s7624 + $0x88] sm:$0xff]
    %v9239 = vld [vmem:[%s7624 + $0x90] sm:$0xff]
    %v9240 = vld [vmem:[%s7624 + $0x98] sm:$0xff]
    %v9241 = vld [vmem:[%s7624 + $0xa0] sm:$0xff]
    %v9242 = vld [vmem:[%s7624 + $0xa8] sm:$0xff]
    %v9243 = vld [vmem:[%s7624 + $0xb0] sm:$0xff]
    %v9244 = vld [vmem:[%s7624 + $0xb8] sm:$0xff]
    %v9245 = vld [vmem:[%s7624 + $0xc0] sm:$0xff]
    %v9246 = vld [vmem:[%s7624 + $0xc8] sm:$0xff]
    %v9247 = vld [vmem:[%s7624 + $0xd0] sm:$0xff]
    %v9248 = vld [vmem:[%s7624 + $0xd8] sm:$0xff]
    %v9249 = vld [vmem:[%s7624 + $0xe0] sm:$0xff]
    %v9250 = vld [vmem:[%s7624 + $0xe8] sm:$0xff]
    %v9251 = vld [vmem:[%s7624 + $0xf0] sm:$0xff]
    %v9252 = vld [vmem:[%s7624 + $0xf8] sm:$0xff]
    %v9253 = vld [vmem:[%s7624 + $0x100] sm:$0xff]
    %v9254 = vld [vmem:[%s7624 + $0x108] sm:$0xff]
    %v9255 = vld [vmem:[%s7624 + $0x110] sm:$0xff]
    %v9256 = vld [vmem:[%s7624 + $0x118] sm:$0xff]
    %v9260 = vrot.slane %v9218, 1
    %v9261 = vrot.slane %v9219, 1
    %v9262 = vrot.slane %v9220, 1
    %v9301 = vunpack.c.l.b16 %v9221
    %v9302 = vunpack.c.h.b16 %v9221
    %v9303 = vunpack.c.l.b16 %v9222
    %v9304 = vunpack.c.h.b16 %v9222
    %v9305 = vunpack.c.l.b16 %v9223
    %v9306 = vunpack.c.h.b16 %v9223
    %v9307 = vunpack.c.l.b16 %v9224
    %v9308 = vunpack.c.h.b16 %v9224
    %v9309 = vunpack.c.l.b16 %v9225
    %v9310 = vunpack.c.h.b16 %v9225
    %v9311 = vunpack.c.l.b16 %v9226
    %v9312 = vunpack.c.h.b16 %v9226
    %v9313 = vunpack.c.l.b16 %v9227
    %v9314 = vunpack.c.h.b16 %v9227
    %v9315 = vunpack.c.l.b16 %v9228
    %v9316 = vunpack.c.h.b16 %v9228
    %v9317 = vunpack.c.l.b16 %v9229
    %v9318 = vunpack.c.h.b16 %v9229
    %v9319 = vunpack.c.l.b16 %v9230
    %v9320 = vunpack.c.h.b16 %v9230
    %v9321 = vunpack.c.l.b16 %v9231
    %v9322 = vunpack.c.h.b16 %v9231
    %v9323 = vunpack.c.l.b16 %v9232
    %v9324 = vunpack.c.h.b16 %v9232
    %v9325 = vunpack.c.l.b16 %v9233
    %v9326 = vunpack.c.h.b16 %v9233
    %v9327 = vunpack.c.l.b16 %v9234
    %v9328 = vunpack.c.h.b16 %v9234
    %v9329 = vunpack.c.l.b16 %v9235
    %v9330 = vunpack.c.h.b16 %v9235
    %v9331 = vunpack.c.l.b16 %v9236
    %v9332 = vunpack.c.h.b16 %v9236
    %v9333 = vunpack.c.l.b16 %v9237
    %v9334 = vunpack.c.h.b16 %v9237
    %v9335 = vunpack.c.l.b16 %v9238
    %v9336 = vunpack.c.h.b16 %v9238
    %v9337 = vunpack.c.l.b16 %v9239
    %v9338 = vunpack.c.h.b16 %v9239
    %v9339 = vunpack.c.l.b16 %v9240
    %v9340 = vunpack.c.h.b16 %v9240
    %v9341 = vunpack.c.l.b16 %v9241
    %v9342 = vunpack.c.h.b16 %v9241
    %v9343 = vunpack.c.l.b16 %v9242
    %v9344 = vunpack.c.h.b16 %v9242
    %v9345 = vunpack.c.l.b16 %v9243
    %v9346 = vunpack.c.h.b16 %v9243
    %v9347 = vunpack.c.l.b16 %v9244
    %v9348 = vunpack.c.h.b16 %v9244
    %v9349 = vunpack.c.l.b16 %v9245
    %v9350 = vunpack.c.h.b16 %v9245
    %v9351 = vunpack.c.l.b16 %v9246
    %v9352 = vunpack.c.h.b16 %v9246
    %v9353 = vunpack.c.l.b16 %v9247
    %v9354 = vunpack.c.h.b16 %v9247
    %v9355 = vunpack.c.l.b16 %v9248
    %v9356 = vunpack.c.h.b16 %v9248
    %v9357 = vunpack.c.l.b16 %v9249
    %v9358 = vunpack.c.h.b16 %v9249
    %v9359 = vunpack.c.l.b16 %v9250
    %v9360 = vunpack.c.h.b16 %v9250
    %v9361 = vunpack.c.l.b16 %v9251
    %v9362 = vunpack.c.h.b16 %v9251
    %v9363 = vunpack.c.l.b16 %v9252
    %v9364 = vunpack.c.h.b16 %v9252
    %v9365 = vunpack.c.l.b16 %v9253
    %v9366 = vunpack.c.h.b16 %v9253
    %v9367 = vunpack.c.l.b16 %v9254
    %v9368 = vunpack.c.h.b16 %v9254
    %v9369 = vunpack.c.l.b16 %v9255
    %v9370 = vunpack.c.h.b16 %v9255
    %v9371 = vunpack.c.l.b16 %v9256
    %v9372 = vunpack.c.h.b16 %v9256
    %v9373 = vpack.c.b16 %v9303, %v9301
    %v9374 = vpack.c.b16 %v9304, %v9302
    %v9375 = vpack.c.b16 %v9307, %v9305
    %v9376 = vpack.c.b16 %v9308, %v9306
    %v9377 = vpack.c.b16 %v9311, %v9309
    %v9378 = vpack.c.b16 %v9312, %v9310
    %v9379 = vpack.c.b16 %v9315, %v9313
    %v9380 = vpack.c.b16 %v9316, %v9314
    %v9381 = vpack.c.b16 %v9319, %v9317
    %v9382 = vpack.c.b16 %v9320, %v9318
    %v9383 = vpack.c.b16 %v9323, %v9321
    %v9384 = vpack.c.b16 %v9324, %v9322
    %v9385 = vpack.c.b16 %v9327, %v9325
    %v9386 = vpack.c.b16 %v9328, %v9326
    %v9387 = vpack.c.b16 %v9331, %v9329
    %v9388 = vpack.c.b16 %v9332, %v9330
    %v9389 = vpack.c.b16 %v9335, %v9333
    %v9390 = vpack.c.b16 %v9336, %v9334
    %v9391 = vpack.c.b16 %v9339, %v9337
    %v9392 = vpack.c.b16 %v9340, %v9338
    %v9393 = vpack.c.b16 %v9343, %v9341
    %v9394 = vpack.c.b16 %v9344, %v9342
    %v9395 = vpack.c.b16 %v9347, %v9345
    %v9396 = vpack.c.b16 %v9348, %v9346
    %v9397 = vpack.c.b16 %v9351, %v9349
    %v9398 = vpack.c.b16 %v9352, %v9350
    %v9399 = vpack.c.b16 %v9355, %v9353
    %v9400 = vpack.c.b16 %v9356, %v9354
    %v9401 = vpack.c.b16 %v9359, %v9357
    %v9402 = vpack.c.b16 %v9360, %v9358
    %v9403 = vpack.c.b16 %v9363, %v9361
    %v9404 = vpack.c.b16 %v9364, %v9362
    %v9405 = vpack.c.b16 %v9367, %v9365
    %v9406 = vpack.c.b16 %v9368, %v9366
    %v9407 = vpack.c.b16 %v9371, %v9369
    %v9408 = vpack.c.b16 %v9372, %v9370
    %v9446 = vsel %vm315, %v9262, 0
    %9448 = vmatprep.subr.bf16.mxu0 %v9374
    %9449 = vmatpush1.bf16.msra.mxu0 %v9373
    %9450 = vmatprep.subr.bf16.mxu0 %v9376
    %9451 = vmatpush1.bf16.msra.mxu0 %v9375
    %9452 = vmatprep.subr.bf16.mxu0 %v9378
    %9453 = vmatpush1.bf16.msra.mxu0 %v9377
    %9454 = vmatprep.subr.bf16.mxu0 %v9380
    %9455 = vmatpush1.bf16.msra.mxu0 %v9379
    %9456 = vmatprep.subr.bf16.mxu0 %v9382
    %9457 = vmatpush1.bf16.msra.mxu0 %v9381
    %9458 = vmatprep.subr.bf16.mxu0 %v9384
    %9459 = vmatpush1.bf16.msra.mxu0 %v9383
    %9460 = vmatprep.subr.bf16.mxu0 %v9386
    %9461 = vmatpush1.bf16.msra.mxu0 %v9385
    %9462 = vmatprep.subr.bf16.mxu0 %v9388
    %9463 = vmatpush1.bf16.msra.mxu0 %v9387
    %9464 = vmatprep.subr.bf16.mxu0 %v9390
    %9465 = vmatpush1.bf16.msra.mxu0 %v9389
    %9466 = vmatprep.subr.bf16.mxu0 %v9392
    %9467 = vmatpush1.bf16.msra.mxu0 %v9391
    %9468 = vmatprep.subr.bf16.mxu0 %v9394
    %9469 = vmatpush1.bf16.msra.mxu0 %v9393
    %9470 = vmatprep.subr.bf16.mxu0 %v9396
    %9471 = vmatpush1.bf16.msra.mxu0 %v9395
    %9472 = vmatprep.subr.bf16.mxu0 %v9398
    %9473 = vmatpush1.bf16.msra.mxu0 %v9397
    %9474 = vmatprep.subr.bf16.mxu0 %v9400
    %9475 = vmatpush1.bf16.msra.mxu0 %v9399
    %9476 = vmatprep.subr.bf16.mxu0 %v9402
    %9477 = vmatpush1.bf16.msra.mxu0 %v9401
    %9478 = vmatprep.subr.bf16.mxu0 %v9404
    %9479 = vmatpush1.bf16.msra.mxu0 %v9403
    %9480 = vmatprep.mubr.bf16.mxu0 %v9261
    %9481 = vmatmul.mubr.bf16.gmra.mrb[0].mxu0 %v9260
    %v9482 = vpop.f32.mrb[0].mxu0
    %v9483 = vadd.f32 0.0, %v9482
    %v9484 = vpop.f32.mrb[0].mxu0
    %v9485 = vadd.f32 0.0, %v9484
    %v9486 = vpop.f32.mrb[0].mxu0
    %v9487 = vpop.f32.mrb[0].mxu0
    %9488 = vdwg.mxu0
    %9489 = vmatprep.subr.bf16.mxu0 %v9406
    %9490 = vmatpush1.bf16.msra.mxu0 %v9405
    %9491 = vmatprep.subr.bf16.mxu0 %v9408
    %9492 = vmatpush1.bf16.msra.mxu0 %v9407
    %9493 = vmatprep.subr.bf16.mxu0 0
    %9494 = vmatpush1.bf16.msra.mxu0 0
    %9495 = vmatprep.subr.bf16.mxu0 0
    %9496 = vmatpush1.bf16.msra.mxu0 0
    %9497 = vmatprep.subr.bf16.mxu0 0
    %9498 = vmatpush1.bf16.msra.mxu0 0
    %9499 = vmatprep.subr.bf16.mxu0 0
    %9500 = vmatpush1.bf16.msra.mxu0 0
    %9501 = vmatprep.subr.bf16.mxu0 0
    %9502 = vmatpush1.bf16.msra.mxu0 0
    %9503 = vmatprep.subr.bf16.mxu0 0
    %9504 = vmatpush1.bf16.msra.mxu0 0
    %9505 = vmatprep.subr.bf16.mxu0 0
    %9506 = vmatpush1.bf16.msra.mxu0 0
    %9507 = vmatprep.subr.bf16.mxu0 0
    %9508 = vmatpush1.bf16.msra.mxu0 0
    %9509 = vmatprep.subr.bf16.mxu0 0
    %9510 = vmatpush1.bf16.msra.mxu0 0
    %9511 = vmatprep.subr.bf16.mxu0 0
    %9512 = vmatpush1.bf16.msra.mxu0 0
    %9513 = vmatprep.subr.bf16.mxu0 0
    %9514 = vmatpush1.bf16.msra.mxu0 0
    %9515 = vmatprep.subr.bf16.mxu0 0
    %9516 = vmatpush1.bf16.msra.mxu0 0
    %9517 = vmatprep.subr.bf16.mxu0 0
    %9518 = vmatpush1.bf16.msra.mxu0 0
    %9519 = vmatprep.subr.bf16.mxu0 0
    %9520 = vmatpush1.bf16.msra.mxu0 0
    %9521 = vmatprep.mubr.bf16.mxu0 0
    %9522 = vmatmul.mubr.bf16.gmra.mrb[0].mxu0 %v9446
    %v9523 = vpop.f32.mrb[0].mxu0
    %v9524 = vadd.f32 %v9483, %v9523
    %v9525 = vpop.f32.mrb[0].mxu0
    %v9526 = vadd.f32 %v9485, %v9525
    %v9527 = vpop.f32.mrb[0].mxu0
    %v9528 = vpop.f32.mrb[0].mxu0
    %9529 = vdwg.mxu0
    %v9530 = vadd.f32 %v9213, %v9524
    %v9531 = vadd.f32 %v9214, %v9526
    %v9532 = vld [vmem:[%s4634] sm:$0xfc]
    %v9533 = vld [vmem:[%s4634 + $0x8] sm:$0xfc]
    %v9534 = vld [vmem:[%s4634 + $0x10] sm:$0xfc]
    %v9535 = vpack.c.bf16 %v9532, %v9532
    %v9536 = vpack.c.bf16 %v9533, %v9533
    %v9537 = vpack.c.bf16 %v9534, %v9534
    %v9538 = vld [vmem:[%s7937] sm:$0xff]
    %v9539 = vld [vmem:[%s7937 + $0x8] sm:$0xff]
    %v9540 = vld [vmem:[%s7937 + $0x10] sm:$0xff]
    %v9541 = vld [vmem:[%s7937 + $0x18] sm:$0xff]
    %v9542 = vld [vmem:[%s7937 + $0x20] sm:$0xff]
    %v9543 = vld [vmem:[%s7937 + $0x28] sm:$0xff]
    %v9544 = vld [vmem:[%s7937 + $0x30] sm:$0xff]
    %v9545 = vld [vmem:[%s7937 + $0x38] sm:$0xff]
    %v9546 = vld [vmem:[%s7937 + $0x40] sm:$0xff]
    %v9547 = vld [vmem:[%s7937 + $0x48] sm:$0xff]
    %v9548 = vld [vmem:[%s7937 + $0x50] sm:$0xff]
    %v9549 = vld [vmem:[%s7937 + $0x58] sm:$0xff]
    %v9550 = vld [vmem:[%s7937 + $0x60] sm:$0xff]
    %v9551 = vld [vmem:[%s7937 + $0x68] sm:$0xff]
    %v9552 = vld [vmem:[%s7937 + $0x70] sm:$0xff]
    %v9553 = vld [vmem:[%s7937 + $0x78] sm:$0xff]
    %v9554 = vld [vmem:[%s7937 + $0x80] sm:$0xff]
    %v9555 = vld [vmem:[%s7937 + $0x88] sm:$0xff]
    %v9556 = vld [vmem:[%s7937 + $0x90] sm:$0xff]
    %v9557 = vld [vmem:[%s7937 + $0x98] sm:$0xff]
    %v9558 = vld [vmem:[%s7937 + $0xa0] sm:$0xff]
    %v9559 = vld [vmem:[%s7937 + $0xa8] sm:$0xff]
    %v9560 = vld [vmem:[%s7937 + $0xb0] sm:$0xff]
    %v9561 = vld [vmem:[%s7937 + $0xb8] sm:$0xff]
    %v9562 = vld [vmem:[%s7937 + $0xc0] sm:$0xff]
    %v9563 = vld [vmem:[%s7937 + $0xc8] sm:$0xff]
    %v9564 = vld [vmem:[%s7937 + $0xd0] sm:$0xff]
    %v9565 = vld [vmem:[%s7937 + $0xd8] sm:$0xff]
    %v9566 = vld [vmem:[%s7937 + $0xe0] sm:$0xff]
    %v9567 = vld [vmem:[%s7937 + $0xe8] sm:$0xff]
    %v9568 = vld [vmem:[%s7937 + $0xf0] sm:$0xff]
    %v9569 = vld [vmem:[%s7937 + $0xf8] sm:$0xff]
    %v9570 = vld [vmem:[%s7937 + $0x100] sm:$0xff]
    %v9571 = vld [vmem:[%s7937 + $0x108] sm:$0xff]
    %v9572 = vld [vmem:[%s7937 + $0x110] sm:$0xff]
    %v9573 = vld [vmem:[%s7937 + $0x118] sm:$0xff]
    %v9577 = vrot.slane %v9535, 1
    %v9578 = vrot.slane %v9536, 1
    %v9579 = vrot.slane %v9537, 1
    %v9618 = vunpack.c.l.b16 %v9538
    %v9619 = vunpack.c.h.b16 %v9538
    %v9620 = vunpack.c.l.b16 %v9539
    %v9621 = vunpack.c.h.b16 %v9539
    %v9622 = vunpack.c.l.b16 %v9540
    %v9623 = vunpack.c.h.b16 %v9540
    %v9624 = vunpack.c.l.b16 %v9541
    %v9625 = vunpack.c.h.b16 %v9541
    %v9626 = vunpack.c.l.b16 %v9542
    %v9627 = vunpack.c.h.b16 %v9542
    %v9628 = vunpack.c.l.b16 %v9543
    %v9629 = vunpack.c.h.b16 %v9543
    %v9630 = vunpack.c.l.b16 %v9544
    %v9631 = vunpack.c.h.b16 %v9544
    %v9632 = vunpack.c.l.b16 %v9545
    %v9633 = vunpack.c.h.b16 %v9545
    %v9634 = vunpack.c.l.b16 %v9546
    %v9635 = vunpack.c.h.b16 %v9546
    %v9636 = vunpack.c.l.b16 %v9547
    %v9637 = vunpack.c.h.b16 %v9547
    %v9638 = vunpack.c.l.b16 %v9548
    %v9639 = vunpack.c.h.b16 %v9548
    %v9640 = vunpack.c.l.b16 %v9549
    %v9641 = vunpack.c.h.b16 %v9549
    %v9642 = vunpack.c.l.b16 %v9550
    %v9643 = vunpack.c.h.b16 %v9550
    %v9644 = vunpack.c.l.b16 %v9551
    %v9645 = vunpack.c.h.b16 %v9551
    %v9646 = vunpack.c.l.b16 %v9552
    %v9647 = vunpack.c.h.b16 %v9552
    %v9648 = vunpack.c.l.b16 %v9553
    %v9649 = vunpack.c.h.b16 %v9553
    %v9650 = vunpack.c.l.b16 %v9554
    %v9651 = vunpack.c.h.b16 %v9554
    %v9652 = vunpack.c.l.b16 %v9555
    %v9653 = vunpack.c.h.b16 %v9555
    %v9654 = vunpack.c.l.b16 %v9556
    %v9655 = vunpack.c.h.b16 %v9556
    %v9656 = vunpack.c.l.b16 %v9557
    %v9657 = vunpack.c.h.b16 %v9557
    %v9658 = vunpack.c.l.b16 %v9558
    %v9659 = vunpack.c.h.b16 %v9558
    %v9660 = vunpack.c.l.b16 %v9559
    %v9661 = vunpack.c.h.b16 %v9559
    %v9662 = vunpack.c.l.b16 %v9560
    %v9663 = vunpack.c.h.b16 %v9560
    %v9664 = vunpack.c.l.b16 %v9561
    %v9665 = vunpack.c.h.b16 %v9561
    %v9666 = vunpack.c.l.b16 %v9562
    %v9667 = vunpack.c.h.b16 %v9562
    %v9668 = vunpack.c.l.b16 %v9563
    %v9669 = vunpack.c.h.b16 %v9563
    %v9670 = vunpack.c.l.b16 %v9564
    %v9671 = vunpack.c.h.b16 %v9564
    %v9672 = vunpack.c.l.b16 %v9565
    %v9673 = vunpack.c.h.b16 %v9565
    %v9674 = vunpack.c.l.b16 %v9566
    %v9675 = vunpack.c.h.b16 %v9566
    %v9676 = vunpack.c.l.b16 %v9567
    %v9677 = vunpack.c.h.b16 %v9567
    %v9678 = vunpack.c.l.b16 %v9568
    %v9679 = vunpack.c.h.b16 %v9568
    %v9680 = vunpack.c.l.b16 %v9569
    %v9681 = vunpack.c.h.b16 %v9569
    %v9682 = vunpack.c.l.b16 %v9570
    %v9683 = vunpack.c.h.b16 %v9570
    %v9684 = vunpack.c.l.b16 %v9571
    %v9685 = vunpack.c.h.b16 %v9571
    %v9686 = vunpack.c.l.b16 %v9572
    %v9687 = vunpack.c.h.b16 %v9572
    %v9688 = vunpack.c.l.b16 %v9573
    %v9689 = vunpack.c.h.b16 %v9573
    %v9690 = vpack.c.b16 %v9620, %v9618
    %v9691 = vpack.c.b16 %v9621, %v9619
    %v9692 = vpack.c.b16 %v9624, %v9622
    %v9693 = vpack.c.b16 %v9625, %v9623
    %v9694 = vpack.c.b16 %v9628, %v9626
    %v9695 = vpack.c.b16 %v9629, %v9627
    %v9696 = vpack.c.b16 %v9632, %v9630
    %v9697 = vpack.c.b16 %v9633, %v9631
    %v9698 = vpack.c.b16 %v9636, %v9634
    %v9699 = vpack.c.b16 %v9637, %v9635
    %v9700 = vpack.c.b16 %v9640, %v9638
    %v9701 = vpack.c.b16 %v9641, %v9639
    %v9702 = vpack.c.b16 %v9644, %v9642
    %v9703 = vpack.c.b16 %v9645, %v9643
    %v9704 = vpack.c.b16 %v9648, %v9646
    %v9705 = vpack.c.b16 %v9649, %v9647
    %v9706 = vpack.c.b16 %v9652, %v9650
    %v9707 = vpack.c.b16 %v9653, %v9651
    %v9708 = vpack.c.b16 %v9656, %v9654
    %v9709 = vpack.c.b16 %v9657, %v9655
    %v9710 = vpack.c.b16 %v9660, %v9658
    %v9711 = vpack.c.b16 %v9661, %v9659
    %v9712 = vpack.c.b16 %v9664, %v9662
    %v9713 = vpack.c.b16 %v9665, %v9663
    %v9714 = vpack.c.b16 %v9668, %v9666
    %v9715 = vpack.c.b16 %v9669, %v9667
    %v9716 = vpack.c.b16 %v9672, %v9670
    %v9717 = vpack.c.b16 %v9673, %v9671
    %v9718 = vpack.c.b16 %v9676, %v9674
    %v9719 = vpack.c.b16 %v9677, %v9675
    %v9720 = vpack.c.b16 %v9680, %v9678
    %v9721 = vpack.c.b16 %v9681, %v9679
    %v9722 = vpack.c.b16 %v9684, %v9682
    %v9723 = vpack.c.b16 %v9685, %v9683
    %v9724 = vpack.c.b16 %v9688, %v9686
    %v9725 = vpack.c.b16 %v9689, %v9687
    %v9763 = vsel %vm315, %v9579, 0
    %9765 = vmatprep.subr.bf16.mxu0 %v9691
    %9766 = vmatpush1.bf16.msra.mxu0 %v9690
    %9767 = vmatprep.subr.bf16.mxu0 %v9693
    %9768 = vmatpush1.bf16.msra.mxu0 %v9692
    %9769 = vmatprep.subr.bf16.mxu0 %v9695
    %9770 = vmatpush1.bf16.msra.mxu0 %v9694
    %9771 = vmatprep.subr.bf16.mxu0 %v9697
    %9772 = vmatpush1.bf16.msra.mxu0 %v9696
    %9773 = vmatprep.subr.bf16.mxu0 %v9699
    %9774 = vmatpush1.bf16.msra.mxu0 %v9698
    %9775 = vmatprep.subr.bf16.mxu0 %v9701
    %9776 = vmatpush1.bf16.msra.mxu0 %v9700
    %9777 = vmatprep.subr.bf16.mxu0 %v9703
    %9778 = vmatpush1.bf16.msra.mxu0 %v9702
    %9779 = vmatprep.subr.bf16.mxu0 %v9705
    %9780 = vmatpush1.bf16.msra.mxu0 %v9704
    %9781 = vmatprep.subr.bf16.mxu0 %v9707
    %9782 = vmatpush1.bf16.msra.mxu0 %v9706
    %9783 = vmatprep.subr.bf16.mxu0 %v9709
    %9784 = vmatpush1.bf16.msra.mxu0 %v9708
    %9785 = vmatprep.subr.bf16.mxu0 %v9711
    %9786 = vmatpush1.bf16.msra.mxu0 %v9710
    %9787 = vmatprep.subr.bf16.mxu0 %v9713
    %9788 = vmatpush1.bf16.msra.mxu0 %v9712
    %9789 = vmatprep.subr.bf16.mxu0 %v9715
    %9790 = vmatpush1.bf16.msra.mxu0 %v9714
    %9791 = vmatprep.subr.bf16.mxu0 %v9717
    %9792 = vmatpush1.bf16.msra.mxu0 %v9716
    %9793 = vmatprep.subr.bf16.mxu0 %v9719
    %9794 = vmatpush1.bf16.msra.mxu0 %v9718
    %9795 = vmatprep.subr.bf16.mxu0 %v9721
    %9796 = vmatpush1.bf16.msra.mxu0 %v9720
    %9797 = vmatprep.mubr.bf16.mxu0 %v9578
    %9798 = vmatmul.mubr.bf16.gmra.mrb[0].mxu0 %v9577
    %v9799 = vpop.f32.mrb[0].mxu0
    %v9800 = vadd.f32 0.0, %v9799
    %v9801 = vpop.f32.mrb[0].mxu0
    %v9802 = vadd.f32 0.0, %v9801
    %v9803 = vpop.f32.mrb[0].mxu0
    %v9804 = vpop.f32.mrb[0].mxu0
    %9805 = vdwg.mxu0
    %9806 = vmatprep.subr.bf16.mxu0 %v9723
    %9807 = vmatpush1.bf16.msra.mxu0 %v9722
    %9808 = vmatprep.subr.bf16.mxu0 %v9725
    %9809 = vmatpush1.bf16.msra.mxu0 %v9724
    %9810 = vmatprep.subr.bf16.mxu0 0
    %9811 = vmatpush1.bf16.msra.mxu0 0
    %9812 = vmatprep.subr.bf16.mxu0 0
    %9813 = vmatpush1.bf16.msra.mxu0 0
    %9814 = vmatprep.subr.bf16.mxu0 0
    %9815 = vmatpush1.bf16.msra.mxu0 0
    %9816 = vmatprep.subr.bf16.mxu0 0
    %9817 = vmatpush1.bf16.msra.mxu0 0
    %9818 = vmatprep.subr.bf16.mxu0 0
    %9819 = vmatpush1.bf16.msra.mxu0 0
    %9820 = vmatprep.subr.bf16.mxu0 0
    %9821 = vmatpush1.bf16.msra.mxu0 0
    %9822 = vmatprep.subr.bf16.mxu0 0
    %9823 = vmatpush1.bf16.msra.mxu0 0
    %9824 = vmatprep.subr.bf16.mxu0 0
    %9825 = vmatpush1.bf16.msra.mxu0 0
    %9826 = vmatprep.subr.bf16.mxu0 0
    %9827 = vmatpush1.bf16.msra.mxu0 0
    %9828 = vmatprep.subr.bf16.mxu0 0
    %9829 = vmatpush1.bf16.msra.mxu0 0
    %9830 = vmatprep.subr.bf16.mxu0 0
    %9831 = vmatpush1.bf16.msra.mxu0 0
    %9832 = vmatprep.subr.bf16.mxu0 0
    %9833 = vmatpush1.bf16.msra.mxu0 0
    %9834 = vmatprep.subr.bf16.mxu0 0
    %9835 = vmatpush1.bf16.msra.mxu0 0
    %9836 = vmatprep.subr.bf16.mxu0 0
    %9837 = vmatpush1.bf16.msra.mxu0 0
    %9838 = vmatprep.mubr.bf16.mxu0 0
    %9839 = vmatmul.mubr.bf16.gmra.mrb[0].mxu0 %v9763
    %v9840 = vpop.f32.mrb[0].mxu0
    %v9841 = vadd.f32 %v9800, %v9840
    %v9842 = vpop.f32.mrb[0].mxu0
    %v9843 = vadd.f32 %v9802, %v9842
    %v9844 = vpop.f32.mrb[0].mxu0
    %v9845 = vpop.f32.mrb[0].mxu0
    %9846 = vdwg.mxu0
    %v9847 = vadd.f32 %v9530, %v9841
    %v9848 = vadd.f32 %v9531, %v9843
    %s9849 = scalar_lea.vmem [#allocation3], 16
    %9850 = vst [vmem:[%s9849] sm:$0x3f] %v9847
    %vm9851 = vcmask 783360
    %9852 = vst.msk [vmem:[%s9849 + $0x8] sm:$0x3f] %vm9851, %v9848
    %vm9853 = vcmask 1045504
    %v9854 = vsel %vm9853, %v9847, 0.0
    %v9855 = vrot.slane %v9854, 4
    %v9856 = vadd.f32 %v9854, %v9855
    %v9857 = vrot.slane %v9856, 2
    %v9858 = vadd.f32 %v9856, %v9857
    %v9859 = vrot.slane %v9858, 1
    %v9860 = vadd.f32 %v9858, %v9859
    %v9861 = vsel %vm9851, %v9848, 0.0
    %v9862 = vrot.slane %v9861, 4
    %v9863 = vadd.f32 %v9861, %v9862
    %v9864 = vrot.slane %v9863, 2
    %v9865 = vadd.f32 %v9863, %v9864
    %v9866 = vrot.slane %v9865, 1
    %v9867 = vadd.f32 %v9865, %v9866
    %v9868 = vadd.f32 %v8265, %v9860
    %v9869 = vadd.f32 %v8266, %v9867
    %v9870 = vmul.f32 %v9847, %v9847
    %v9871 = vmul.f32 %v9848, %v9848
    %v9872 = vsel %vm9853, %v9870, 0.0
    %v9873 = vrot.slane %v9872, 4
    %v9874 = vadd.f32 %v9872, %v9873
    %v9875 = vrot.slane %v9874, 2
    %v9876 = vadd.f32 %v9874, %v9875
    %v9877 = vrot.slane %v9876, 1
    %v9878 = vadd.f32 %v9876, %v9877
    %v9879 = vsel %vm9851, %v9871, 0.0
    %v9880 = vrot.slane %v9879, 4
    %v9881 = vadd.f32 %v9879, %v9880
    %v9882 = vrot.slane %v9881, 2
    %v9883 = vadd.f32 %v9881, %v9882
    %v9884 = vrot.slane %v9883, 1
    %v9885 = vadd.f32 %v9883, %v9884
    %v9886 = vadd.f32 %v8282, %v9878
    %v9887 = vadd.f32 %v8283, %v9885
    %v9888 = vsel %vm6206, %v9868, %v9886
    %v9889 = vsel %vm6206, %v9869, %v9887
    %v9890 = vld [vmem:[%s9] sm:$0xff]
    %v9891 = vld [vmem:[%s9 + $0x8] sm:$0xff]
    %v9892 = vld [vmem:[%s9 + $0x10] sm:$0xff]
    %v9893 = vld [vmem:[%s9 + $0x18] sm:$0xff]
    %v9894 = vld [vmem:[%s9 + $0x20] sm:$0xff]
    %v9895 = vld [vmem:[%s9 + $0x28] sm:$0xff]
    %v9896 = vld [vmem:[%s9 + $0x30] sm:$0xff]
    %v9897 = vld [vmem:[%s9 + $0x38] sm:$0xff]
    %v9898 = vld [vmem:[%s9 + $0x40] sm:$0xff]
    %v9899 = vld [vmem:[%s9 + $0x48] sm:$0xff]
    %v9900 = vld [vmem:[%s9 + $0x50] sm:$0xff]
    %v9901 = vld [vmem:[%s9 + $0x58] sm:$0xff]
    %v9902 = vld [vmem:[%s9 + $0x60] sm:$0xff]
    %v9903 = vld [vmem:[%s9 + $0x68] sm:$0xff]
    %v9904 = vld [vmem:[%s9 + $0x70] sm:$0xff]
    %v9905 = vld [vmem:[%s9 + $0x78] sm:$0xff]
    %v9906 = vld [vmem:[%s9 + $0x80] sm:$0xff]
    %v9907 = vld [vmem:[%s9 + $0x88] sm:$0xff]
    %v9908 = vld [vmem:[%s9 + $0x90] sm:$0xff]
    %v9909 = vld [vmem:[%s9 + $0x98] sm:$0xff]
    %v9910 = vld [vmem:[%s9 + $0xa0] sm:$0xff]
    %v9911 = vld [vmem:[%s9 + $0xa8] sm:$0xff]
    %v9912 = vld [vmem:[%s9 + $0xb0] sm:$0xff]
    %v9913 = vld [vmem:[%s9 + $0xb8] sm:$0xff]
    %v9914 = vld [vmem:[%s9 + $0xc0] sm:$0xff]
    %v9915 = vld [vmem:[%s9 + $0xc8] sm:$0xff]
    %v9916 = vld [vmem:[%s9 + $0xd0] sm:$0xff]
    %v9917 = vld [vmem:[%s9 + $0xd8] sm:$0xff]
    %v9919 = vsel %vm8250, %v9889, 0
    %9921 = vmatprep.subr.mxu0 0.0
    %9922 = vmatpush1.msra.mxu0 %v9890
    %9923 = vmatprep.subr.mxu0 0.0
    %9924 = vmatpush1.msra.mxu0 %v9891
    %9925 = vmatprep.subr.mxu0 0.0
    %9926 = vmatpush1.msra.mxu0 %v9892
    %9927 = vmatprep.subr.mxu0 0.0
    %9928 = vmatpush1.msra.mxu0 %v9893
    %9929 = vmatprep.subr.mxu0 0.0
    %9930 = vmatpush1.msra.mxu0 %v9894
    %9931 = vmatprep.subr.mxu0 0.0
    %9932 = vmatpush1.msra.mxu0 %v9895
    %9933 = vmatprep.subr.mxu0 0.0
    %9934 = vmatpush1.msra.mxu0 %v9896
    %9935 = vmatprep.subr.mxu0 0.0
    %9936 = vmatpush1.msra.mxu0 %v9897
    %9937 = vmatprep.subr.mxu0 0.0
    %9938 = vmatpush1.msra.mxu0 %v9898
    %9939 = vmatprep.subr.mxu0 0.0
    %9940 = vmatpush1.msra.mxu0 %v9899
    %9941 = vmatprep.subr.mxu0 0.0
    %9942 = vmatpush1.msra.mxu0 %v9900
    %9943 = vmatprep.subr.mxu0 0.0
    %9944 = vmatpush1.msra.mxu0 %v9901
    %9945 = vmatprep.subr.mxu0 0.0
    %9946 = vmatpush1.msra.mxu0 %v9902
    %9947 = vmatprep.subr.mxu0 0.0
    %9948 = vmatpush1.msra.mxu0 %v9903
    %9949 = vmatprep.subr.mxu0 0.0
    %9950 = vmatpush1.msra.mxu0 %v9904
    %9951 = vmatprep.subr.mxu0 0.0
    %9952 = vmatpush1.msra.mxu0 %v9905
    %9953 = vmatprep.subr.mxu0 0.0
    %9954 = vmatpush1.msra.mxu0 %v9906
    %9955 = vmatprep.subr.mxu0 0.0
    %9956 = vmatpush1.msra.mxu0 %v9907
    %9957 = vmatprep.subr.mxu0 0.0
    %9958 = vmatpush1.msra.mxu0 %v9908
    %9959 = vmatprep.subr.mxu0 0.0
    %9960 = vmatpush1.msra.mxu0 %v9909
    %9961 = vmatprep.subr.mxu0 0.0
    %9962 = vmatpush1.msra.mxu0 %v9910
    %9963 = vmatprep.subr.mxu0 0.0
    %9964 = vmatpush1.msra.mxu0 %v9911
    %9965 = vmatprep.subr.mxu0 0.0
    %9966 = vmatpush1.msra.mxu0 %v9912
    %9967 = vmatprep.subr.mxu0 0.0
    %9968 = vmatpush1.msra.mxu0 %v9913
    %9969 = vmatprep.subr.mxu0 0.0
    %9970 = vmatpush1.msra.mxu0 %v9914
    %9971 = vmatprep.subr.mxu0 0.0
    %9972 = vmatpush1.msra.mxu0 %v9915
    %9973 = vmatprep.subr.mxu0 0.0
    %9974 = vmatpush1.msra.mxu0 %v9916
    %9975 = vmatprep.subr.mxu0 0.0
    %9976 = vmatpush1.msra.mxu0 %v9917
    %9977 = vmatprep.subr.mxu0 0.0
    %9978 = vmatpush1.msra.mxu0 0.0
    %9979 = vmatprep.subr.mxu0 0.0
    %9980 = vmatpush1.msra.mxu0 0.0
    %9981 = vmatprep.subr.mxu0 0.0
    %9982 = vmatpush1.msra.mxu0 0.0
    %9983 = vmatprep.subr.mxu0 0.0
    %9984 = vmatpush1.msra.mxu0 0.0
    %9985 = vmatprep.mubr.f32.mxu0 %v9919
    %9986 = vmatmul.mubr.f32.gmra.mrb[0].mxu0 %v9888
    %v9987 = vpop.f32.mrb[0].mxu0
    %v9988 = vadd.f32 0.0, %v9987
    %v9989 = vpop.f32.mrb[0].mxu0
    %9990 = vdwg.mxu0
    %v9991 = vrcp.pop 98.0
    %v9992 = vmul.f32 %v9988, %v9991
    %v9993 = vmul.f32 %v9992, %v9992
    %v9995 = vrot.slane %v9993, 7
    %v9997 = vsub.f32 %v9992, %v9995
    %v9998 = vmax.f32 %v9997, 0.0
    %v9999 = vld [vmem:[%s7] sm:$0x1]
    %v10000 = vadd.f32 %v9998, 1e-05
    %v10001 = vrsqrt.pop %v10000
    %v10004 = vunpack.c.l.s4 1966171168
    %v10005 = vunpack.c.0.s8 %v10004
    %v10006 = vlaneseq
    %v10007 = vshrl.u32 %v10006, 7
    %v10008 = vsub.s32 %v10005, %v10007
    %v10009 = vrot.slane %v10001, %v10008
    %v10010 = vcombine.high %v10009, %v10009
    %v10012 = vunpack.c.l.s4 1966171168
    %v10013 = vunpack.c.0.s8 %v10012
    %v10014 = vlaneseq
    %v10015 = vshrl.u32 %v10014, 7
    %v10016 = vsub.s32 %v10013, %v10015
    %v10017 = vrot.slane %v10010, %v10016
    %v10019 = vmul.f32 %v9999, %v10017
    %v10020 = vld [vmem:[%s8] sm:$0x1]
    %v10021 = vmul.f32 %v9992, %v10019
    %v10022 = vsub.f32 %v10020, %v10021
    %v10024 = vlaneseq
    %v10025 = vshrl.u32 %v10024, 7
    %v10026 = vsub.s32 0, %v10025
    %v10027 = vrot.slane %v10022, %v10026
    %v10029 = vsel %vm6206, %v10019, %v10027
    %v10030 = vld [vmem:[%s10] sm:$0xff]
    %v10031 = vld [vmem:[%s10 + $0x8] sm:$0xff]
    %v10032 = vld [vmem:[%s10 + $0x10] sm:$0xff]
    %v10033 = vld [vmem:[%s10 + $0x18] sm:$0xff]
    %v10034 = vld [vmem:[%s10 + $0x20] sm:$0xff]
    %v10035 = vld [vmem:[%s10 + $0x28] sm:$0xff]
    %v10036 = vld [vmem:[%s10 + $0x30] sm:$0xff]
    %v10037 = vld [vmem:[%s10 + $0x38] sm:$0xff]
    %v10039 = vsel %vm315, %v10029, 0
    %10041 = vmatprep.subr.mxu0 %v10031
    %10042 = vmatpush1.msra.mxu0 %v10030
    %10043 = vmatprep.subr.mxu0 %v10033
    %10044 = vmatpush1.msra.mxu0 %v10032
    %10045 = vmatprep.subr.mxu0 %v10035
    %10046 = vmatpush1.msra.mxu0 %v10034
    %10047 = vmatprep.subr.mxu0 %v10037
    %10048 = vmatpush1.msra.mxu0 %v10036
    %10049 = vmatprep.subr.mxu0 0.0
    %10050 = vmatpush1.msra.mxu0 0.0
    %10051 = vmatprep.subr.mxu0 0.0
    %10052 = vmatpush1.msra.mxu0 0.0
    %10053 = vmatprep.subr.mxu0 0.0
    %10054 = vmatpush1.msra.mxu0 0.0
    %10055 = vmatprep.subr.mxu0 0.0
    %10056 = vmatpush1.msra.mxu0 0.0
    %10057 = vmatprep.subr.mxu0 0.0
    %10058 = vmatpush1.msra.mxu0 0.0
    %10059 = vmatprep.subr.mxu0 0.0
    %10060 = vmatpush1.msra.mxu0 0.0
    %10061 = vmatprep.subr.mxu0 0.0
    %10062 = vmatpush1.msra.mxu0 0.0
    %10063 = vmatprep.subr.mxu0 0.0
    %10064 = vmatpush1.msra.mxu0 0.0
    %10065 = vmatprep.subr.mxu0 0.0
    %10066 = vmatpush1.msra.mxu0 0.0
    %10067 = vmatprep.subr.mxu0 0.0
    %10068 = vmatpush1.msra.mxu0 0.0
    %10069 = vmatprep.subr.mxu0 0.0
    %10070 = vmatpush1.msra.mxu0 0.0
    %10071 = vmatprep.subr.mxu0 0.0
    %10072 = vmatpush1.msra.mxu0 0.0
    %10073 = vmatprep.subr.mxu0 0.0
    %10074 = vmatpush1.msra.mxu0 0.0
    %10075 = vmatprep.subr.mxu0 0.0
    %10076 = vmatpush1.msra.mxu0 0.0
    %10077 = vmatprep.subr.mxu0 0.0
    %10078 = vmatpush1.msra.mxu0 0.0
    %10079 = vmatprep.subr.mxu0 0.0
    %10080 = vmatpush1.msra.mxu0 0.0
    %10081 = vmatprep.subr.mxu0 0.0
    %10082 = vmatpush1.msra.mxu0 0.0
    %10083 = vmatprep.subr.mxu0 0.0
    %10084 = vmatpush1.msra.mxu0 0.0
    %10085 = vmatprep.subr.mxu0 0.0
    %10086 = vmatpush1.msra.mxu0 0.0
    %10087 = vmatprep.subr.mxu0 0.0
    %10088 = vmatpush1.msra.mxu0 0.0
    %10089 = vmatprep.subr.mxu0 0.0
    %10090 = vmatpush1.msra.mxu0 0.0
    %10091 = vmatprep.subr.mxu0 0.0
    %10092 = vmatpush1.msra.mxu0 0.0
    %10093 = vmatprep.subr.mxu0 0.0
    %10094 = vmatpush1.msra.mxu0 0.0
    %10095 = vmatprep.subr.mxu0 0.0
    %10096 = vmatpush1.msra.mxu0 0.0
    %10097 = vmatprep.subr.mxu0 0.0
    %10098 = vmatpush1.msra.mxu0 0.0
    %10099 = vmatprep.subr.mxu0 0.0
    %10100 = vmatpush1.msra.mxu0 0.0
    %10101 = vmatprep.subr.mxu0 0.0
    %10102 = vmatpush1.msra.mxu0 0.0
    %10103 = vmatprep.subr.mxu0 0.0
    %10104 = vmatpush1.msra.mxu0 0.0
    %10105 = vmatprep.mubr.f32.mxu0 0.0
    %10106 = vmatmul.mubr.f32.gmra.mrb[0].mxu0 %v10039
    %v10107 = vpop.f32.mrb[0].mxu0
    %v10108 = vadd.f32 0.0, %v10107
    %v10109 = vpop.f32.mrb[0].mxu0
    %v10110 = vadd.f32 0.0, %v10109
    %10111 = vdwg.mxu0
    %v10112 = vld [vmem:[#allocation3] sm:$0xff]
    %v10113 = vld [vmem:[#allocation3 + $0x8] sm:$0xff]
    %v10114 = vlaneseq
    %v10115 = vshrl.u32 %v10114, 7
    %v10116 = vsub.s32 0, %v10115
    %v10117 = vrot.slane %v10108, %v10116
    %v10118 = vlaneseq
    %v10119 = vshrl.u32 %v10118, 7
    %v10120 = vsub.s32 0, %v10119
    %v10121 = vrot.slane %v10110, %v10120
    %v10122 = vmul.f32 %v10112, %v10117
    %v10123 = vmul.f32 %v10113, %v10121
    %v10124 = vlaneseq
    %v10125 = vshrl.u32 %v10124, 7
    %v10126 = vsub.s32 1, %v10125
    %v10127 = vrot.slane %v10108, %v10126
    %v10128 = vlaneseq
    %v10129 = vshrl.u32 %v10128, 7
    %v10130 = vsub.s32 1, %v10129
    %v10131 = vrot.slane %v10110, %v10130
    %v10132 = vadd.f32 %v10122, %v10127
    %v10133 = vadd.f32 %v10123, %v10131
    %v10134 = vmax.f32 %v10132, 0.0
    %v10135 = vmax.f32 %v10133, 0.0
    %10136 = vst [vmem:[#allocation3] sm:$0xff] %v10134
    %10137 = vst.msk [vmem:[#allocation3 + $0x8] sm:$0xff] %vm8250, %v10135
    %v10138 = vld [vmem:[%s9849] sm:$0x3f]
    %v10139 = vld [vmem:[%s9849 + $0x8] sm:$0x3f]
    %v10140 = vmul.f32 %v10138, %v10117
    %v10141 = vmul.f32 %v10139, %v10121
    %v10142 = vadd.f32 %v10140, %v10127
    %v10143 = vadd.f32 %v10141, %v10131
    %v10144 = vmax.f32 %v10142, 0.0
    %v10145 = vmax.f32 %v10143, 0.0
    %10146 = vst [vmem:[%s9849] sm:$0x3f] %v10144
    %10147 = vst.msk [vmem:[%s9849 + $0x8] sm:$0x3f] %vm9851, %v10145
    %v10148 = vld [vmem:[#allocation3] sm:$0xf]
    %v10149 = vld [vmem:[#allocation3 + $0x8] sm:$0xf]
    %v10150 = vpack.c.bf16 %v10148, %v10148
    %v10151 = vpack.c.bf16 %v10149, %v10149
    %v10152 = vld [vmem:[%s11] sm:$0xf]
    %v10153 = vld [vmem:[%s11 + $0x4] sm:$0xf]
    %v10154 = vld [vmem:[%s11 + $0x8] sm:$0xf]
    %v10155 = vld [vmem:[%s11 + $0xc] sm:$0xf]
    %v10156 = vld [vmem:[%s11 + $0x10] sm:$0xf]
    %v10157 = vld [vmem:[%s11 + $0x14] sm:$0xf]
    %v10158 = vld [vmem:[%s11 + $0x18] sm:$0xf]
    %v10159 = vld [vmem:[%s11 + $0x1c] sm:$0xf]
    %v10160 = vld [vmem:[%s11 + $0x20] sm:$0xf]
    %v10161 = vld [vmem:[%s11 + $0x24] sm:$0xf]
    %v10162 = vld [vmem:[%s11 + $0x28] sm:$0xf]
    %v10163 = vld [vmem:[%s11 + $0x2c] sm:$0xf]
    %v10164 = vld [vmem:[%s11 + $0x30] sm:$0xf]
    %v10165 = vld [vmem:[%s11 + $0x34] sm:$0xf]
    %v10166 = vld [vmem:[%s11 + $0x38] sm:$0xf]
    %v10167 = vld [vmem:[%s11 + $0x3c] sm:$0xf]
    %v10168 = vld [vmem:[%s11 + $0x40] sm:$0xf]
    %v10169 = vld [vmem:[%s11 + $0x44] sm:$0xf]
    %v10170 = vld [vmem:[%s11 + $0x48] sm:$0xf]
    %v10171 = vld [vmem:[%s11 + $0x4c] sm:$0xf]
    %v10172 = vld [vmem:[%s11 + $0x50] sm:$0xf]
    %v10173 = vld [vmem:[%s11 + $0x54] sm:$0xf]
    %v10174 = vld [vmem:[%s11 + $0x58] sm:$0xf]
    %v10175 = vld [vmem:[%s11 + $0x5c] sm:$0xf]
    %v10176 = vld [vmem:[%s11 + $0x60] sm:$0xf]
    %v10177 = vld [vmem:[%s11 + $0x64] sm:$0xf]
    %v10178 = vld [vmem:[%s11 + $0x68] sm:$0xf]
    %v10179 = vld [vmem:[%s11 + $0x6c] sm:$0xf]
    %v10180 = vld [vmem:[%s9849] sm:$0xf]
    %v10181 = vld [vmem:[%s9849 + $0x8] sm:$0xf]
    %v10182 = vpack.c.bf16 %v10180, %v10180
    %v10183 = vpack.c.bf16 %v10181, %v10181
    %s10184 = scalar_lea.vmem %s11, 112
    %v10185 = vld [vmem:[%s10184] sm:$0xf]
    %v10186 = vld [vmem:[%s10184 + $0x4] sm:$0xf]
    %v10187 = vld [vmem:[%s10184 + $0x8] sm:$0xf]
    %v10188 = vld [vmem:[%s10184 + $0xc] sm:$0xf]
    %v10189 = vld [vmem:[%s10184 + $0x10] sm:$0xf]
    %v10190 = vld [vmem:[%s10184 + $0x14] sm:$0xf]
    %v10191 = vld [vmem:[%s10184 + $0x18] sm:$0xf]
    %v10192 = vld [vmem:[%s10184 + $0x1c] sm:$0xf]
    %v10193 = vld [vmem:[%s10184 + $0x20] sm:$0xf]
    %v10194 = vld [vmem:[%s10184 + $0x24] sm:$0xf]
    %v10195 = vld [vmem:[%s10184 + $0x28] sm:$0xf]
    %v10196 = vld [vmem:[%s10184 + $0x2c] sm:$0xf]
    %v10197 = vld [vmem:[%s10184 + $0x30] sm:$0xf]
    %v10198 = vld [vmem:[%s10184 + $0x34] sm:$0xf]
    %v10199 = vld [vmem:[%s10184 + $0x38] sm:$0xf]
    %v10200 = vld [vmem:[%s10184 + $0x3c] sm:$0xf]
    %v10201 = vld [vmem:[%s10184 + $0x40] sm:$0xf]
    %v10202 = vld [vmem:[%s10184 + $0x44] sm:$0xf]
    %v10203 = vld [vmem:[%s10184 + $0x48] sm:$0xf]
    %v10204 = vld [vmem:[%s10184 + $0x4c] sm:$0xf]
    %v10205 = vld [vmem:[%s10184 + $0x50] sm:$0xf]
    %v10206 = vld [vmem:[%s10184 + $0x54] sm:$0xf]
    %v10207 = vld [vmem:[%s10184 + $0x58] sm:$0xf]
    %v10208 = vld [vmem:[%s10184 + $0x5c] sm:$0xf]
    %v10209 = vld [vmem:[%s10184 + $0x60] sm:$0xf]
    %v10210 = vld [vmem:[%s10184 + $0x64] sm:$0xf]
    %v10211 = vld [vmem:[%s10184 + $0x68] sm:$0xf]
    %v10212 = vld [vmem:[%s10184 + $0x6c] sm:$0xf]
    %v10241 = vunpack.c.l.b16 %v10185
    %v10242 = vunpack.c.l.b16 %v10186
    %v10243 = vunpack.c.l.b16 %v10187
    %v10244 = vunpack.c.l.b16 %v10188
    %v10245 = vunpack.c.l.b16 %v10189
    %v10246 = vunpack.c.l.b16 %v10190
    %v10247 = vunpack.c.l.b16 %v10191
    %v10248 = vunpack.c.l.b16 %v10192
    %v10249 = vunpack.c.l.b16 %v10193
    %v10250 = vunpack.c.l.b16 %v10194
    %v10251 = vunpack.c.l.b16 %v10195
    %v10252 = vunpack.c.l.b16 %v10196
    %v10253 = vunpack.c.l.b16 %v10197
    %v10254 = vunpack.c.l.b16 %v10198
    %v10255 = vunpack.c.l.b16 %v10199
    %v10256 = vunpack.c.l.b16 %v10200
    %v10257 = vunpack.c.l.b16 %v10201
    %v10258 = vunpack.c.l.b16 %v10202
    %v10259 = vunpack.c.l.b16 %v10203
    %v10260 = vunpack.c.l.b16 %v10204
    %v10261 = vunpack.c.l.b16 %v10205
    %v10262 = vunpack.c.l.b16 %v10206
    %v10263 = vunpack.c.l.b16 %v10207
    %v10264 = vunpack.c.l.b16 %v10208
    %v10265 = vunpack.c.l.b16 %v10209
    %v10266 = vunpack.c.l.b16 %v10210
    %v10267 = vunpack.c.l.b16 %v10211
    %v10268 = vunpack.c.l.b16 %v10212
    %v10269 = vpack.c.b16 %v10242, %v10241
    %v10270 = vpack.c.b16 %v10244, %v10243
    %v10271 = vpack.c.b16 %v10246, %v10245
    %v10272 = vpack.c.b16 %v10248, %v10247
    %v10273 = vpack.c.b16 %v10250, %v10249
    %v10274 = vpack.c.b16 %v10252, %v10251
    %v10275 = vpack.c.b16 %v10254, %v10253
    %v10276 = vpack.c.b16 %v10256, %v10255
    %v10277 = vpack.c.b16 %v10258, %v10257
    %v10278 = vpack.c.b16 %v10260, %v10259
    %v10279 = vpack.c.b16 %v10262, %v10261
    %v10280 = vpack.c.b16 %v10264, %v10263
    %v10281 = vpack.c.b16 %v10266, %v10265
    %v10282 = vpack.c.b16 %v10268, %v10267
    %v10298 = vsel %vm8250, %v10183, 0
    %10300 = vmatprep.subr.bf16.mxu0 0
    %10301 = vmatpush1.bf16.msra.mxu0 %v10269
    %10302 = vmatprep.subr.bf16.mxu0 0
    %10303 = vmatpush1.bf16.msra.mxu0 %v10270
    %10304 = vmatprep.subr.bf16.mxu0 0
    %10305 = vmatpush1.bf16.msra.mxu0 %v10271
    %10306 = vmatprep.subr.bf16.mxu0 0
    %10307 = vmatpush1.bf16.msra.mxu0 %v10272
    %10308 = vmatprep.subr.bf16.mxu0 0
    %10309 = vmatpush1.bf16.msra.mxu0 %v10273
    %10310 = vmatprep.subr.bf16.mxu0 0
    %10311 = vmatpush1.bf16.msra.mxu0 %v10274
    %10312 = vmatprep.subr.bf16.mxu0 0
    %10313 = vmatpush1.bf16.msra.mxu0 %v10275
    %10314 = vmatprep.subr.bf16.mxu0 0
    %10315 = vmatpush1.bf16.msra.mxu0 %v10276
    %10316 = vmatprep.subr.bf16.mxu0 0
    %10317 = vmatpush1.bf16.msra.mxu0 %v10277
    %10318 = vmatprep.subr.bf16.mxu0 0
    %10319 = vmatpush1.bf16.msra.mxu0 %v10278
    %10320 = vmatprep.subr.bf16.mxu0 0
    %10321 = vmatpush1.bf16.msra.mxu0 %v10279
    %10322 = vmatprep.subr.bf16.mxu0 0
    %10323 = vmatpush1.bf16.msra.mxu0 %v10280
    %10324 = vmatprep.subr.bf16.mxu0 0
    %10325 = vmatpush1.bf16.msra.mxu0 %v10281
    %10326 = vmatprep.subr.bf16.mxu0 0
    %10327 = vmatpush1.bf16.msra.mxu0 %v10282
    %10328 = vmatprep.subr.bf16.mxu0 0
    %10329 = vmatpush1.bf16.msra.mxu0 0
    %10330 = vmatprep.subr.bf16.mxu0 0
    %10331 = vmatpush1.bf16.msra.mxu0 0
    %10332 = vmatprep.mubr.bf16.mxu0 %v10298
    %10333 = vmatmul.mubr.bf16.gmra.mrb[0].mxu0 %v10182
    %v10334 = vpop.f32.mrb[0].mxu0
    %v10335 = vadd.f32 0.0, %v10334
    %v10336 = vpop.f32.mrb[0].mxu0
    %v10337 = vpop.f32.mrb[0].mxu0
    %v10338 = vpop.f32.mrb[0].mxu0
    %10339 = vdwg.mxu0
    %v10368 = vunpack.c.l.b16 %v10152
    %v10369 = vunpack.c.l.b16 %v10153
    %v10370 = vunpack.c.l.b16 %v10154
    %v10371 = vunpack.c.l.b16 %v10155
    %v10372 = vunpack.c.l.b16 %v10156
    %v10373 = vunpack.c.l.b16 %v10157
    %v10374 = vunpack.c.l.b16 %v10158
    %v10375 = vunpack.c.l.b16 %v10159
    %v10376 = vunpack.c.l.b16 %v10160
    %v10377 = vunpack.c.l.b16 %v10161
    %v10378 = vunpack.c.l.b16 %v10162
    %v10379 = vunpack.c.l.b16 %v10163
    %v10380 = vunpack.c.l.b16 %v10164
    %v10381 = vunpack.c.l.b16 %v10165
    %v10382 = vunpack.c.l.b16 %v10166
    %v10383 = vunpack.c.l.b16 %v10167
    %v10384 = vunpack.c.l.b16 %v10168
    %v10385 = vunpack.c.l.b16 %v10169
    %v10386 = vunpack.c.l.b16 %v10170
    %v10387 = vunpack.c.l.b16 %v10171
    %v10388 = vunpack.c.l.b16 %v10172
    %v10389 = vunpack.c.l.b16 %v10173
    %v10390 = vunpack.c.l.b16 %v10174
    %v10391 = vunpack.c.l.b16 %v10175
    %v10392 = vunpack.c.l.b16 %v10176
    %v10393 = vunpack.c.l.b16 %v10177
    %v10394 = vunpack.c.l.b16 %v10178
    %v10395 = vunpack.c.l.b16 %v10179
    %v10396 = vpack.c.b16 %v10369, %v10368
    %v10397 = vpack.c.b16 %v10371, %v10370
    %v10398 = vpack.c.b16 %v10373, %v10372
    %v10399 = vpack.c.b16 %v10375, %v10374
    %v10400 = vpack.c.b16 %v10377, %v10376
    %v10401 = vpack.c.b16 %v10379, %v10378
    %v10402 = vpack.c.b16 %v10381, %v10380
    %v10403 = vpack.c.b16 %v10383, %v10382
    %v10404 = vpack.c.b16 %v10385, %v10384
    %v10405 = vpack.c.b16 %v10387, %v10386
    %v10406 = vpack.c.b16 %v10389, %v10388
    %v10407 = vpack.c.b16 %v10391, %v10390
    %v10408 = vpack.c.b16 %v10393, %v10392
    %v10409 = vpack.c.b16 %v10395, %v10394
    %v10425 = vsel %vm8250, %v10151, 0
    %10427 = vmatprep.subr.bf16.mxu0 0
    %10428 = vmatpush1.bf16.msra.mxu0 %v10396
    %10429 = vmatprep.subr.bf16.mxu0 0
    %10430 = vmatpush1.bf16.msra.mxu0 %v10397
    %10431 = vmatprep.subr.bf16.mxu0 0
    %10432 = vmatpush1.bf16.msra.mxu0 %v10398
    %10433 = vmatprep.subr.bf16.mxu0 0
    %10434 = vmatpush1.bf16.msra.mxu0 %v10399
    %10435 = vmatprep.subr.bf16.mxu0 0
    %10436 = vmatpush1.bf16.msra.mxu0 %v10400
    %10437 = vmatprep.subr.bf16.mxu0 0
    %10438 = vmatpush1.bf16.msra.mxu0 %v10401
    %10439 = vmatprep.subr.bf16.mxu0 0
    %10440 = vmatpush1.bf16.msra.mxu0 %v10402
    %10441 = vmatprep.subr.bf16.mxu0 0
    %10442 = vmatpush1.bf16.msra.mxu0 %v10403
    %10443 = vmatprep.subr.bf16.mxu0 0
    %10444 = vmatpush1.bf16.msra.mxu0 %v10404
    %10445 = vmatprep.subr.bf16.mxu0 0
    %10446 = vmatpush1.bf16.msra.mxu0 %v10405
    %10447 = vmatprep.subr.bf16.mxu0 0
    %10448 = vmatpush1.bf16.msra.mxu0 %v10406
    %10449 = vmatprep.subr.bf16.mxu0 0
    %10450 = vmatpush1.bf16.msra.mxu0 %v10407
    %10451 = vmatprep.subr.bf16.mxu0 0
    %10452 = vmatpush1.bf16.msra.mxu0 %v10408
    %10453 = vmatprep.subr.bf16.mxu0 0
    %10454 = vmatpush1.bf16.msra.mxu0 %v10409
    %10455 = vmatprep.subr.bf16.mxu0 0
    %10456 = vmatpush1.bf16.msra.mxu0 0
    %10457 = vmatprep.subr.bf16.mxu0 0
    %10458 = vmatpush1.bf16.msra.mxu0 0
    %10459 = vmatprep.mubr.bf16.mxu0 %v10425
    %10460 = vmatmul.mubr.bf16.gmra.mrb[0].mxu0 %v10150
    %v10461 = vpop.f32.mrb[0].mxu0
    %v10462 = vadd.f32 %v10335, %v10461
    %v10463 = vpop.f32.mrb[0].mxu0
    %v10464 = vpop.f32.mrb[0].mxu0
    %v10465 = vpop.f32.mrb[0].mxu0
    %10466 = vdwg.mxu0
    %v10467 = vld [vmem:[#allocation3] sm:$0x3c]
    %v10468 = vld [vmem:[#allocation3 + $0x8] sm:$0x3c]
    %v10469 = vpack.c.bf16 %v10467, %v10467
    %v10470 = vpack.c.bf16 %v10468, %v10468
    %s10471 = scalar_lea.vmem %s11, 224
    %v10472 = vld [vmem:[%s10471] sm:$0xf]
    %v10473 = vld [vmem:[%s10471 + $0x4] sm:$0xf]
    %v10474 = vld [vmem:[%s10471 + $0x8] sm:$0xf]
    %v10475 = vld [vmem:[%s10471 + $0xc] sm:$0xf]
    %v10476 = vld [vmem:[%s10471 + $0x10] sm:$0xf]
    %v10477 = vld [vmem:[%s10471 + $0x14] sm:$0xf]
    %v10478 = vld [vmem:[%s10471 + $0x18] sm:$0xf]
    %v10479 = vld [vmem:[%s10471 + $0x1c] sm:$0xf]
    %v10480 = vld [vmem:[%s10471 + $0x20] sm:$0xf]
    %v10481 = vld [vmem:[%s10471 + $0x24] sm:$0xf]
    %v10482 = vld [vmem:[%s10471 + $0x28] sm:$0xf]
    %v10483 = vld [vmem:[%s10471 + $0x2c] sm:$0xf]
    %v10484 = vld [vmem:[%s10471 + $0x30] sm:$0xf]
    %v10485 = vld [vmem:[%s10471 + $0x34] sm:$0xf]
    %v10486 = vld [vmem:[%s10471 + $0x38] sm:$0xf]
    %v10487 = vld [vmem:[%s10471 + $0x3c] sm:$0xf]
    %v10488 = vld [vmem:[%s10471 + $0x40] sm:$0xf]
    %v10489 = vld [vmem:[%s10471 + $0x44] sm:$0xf]
    %v10490 = vld [vmem:[%s10471 + $0x48] sm:$0xf]
    %v10491 = vld [vmem:[%s10471 + $0x4c] sm:$0xf]
    %v10492 = vld [vmem:[%s10471 + $0x50] sm:$0xf]
    %v10493 = vld [vmem:[%s10471 + $0x54] sm:$0xf]
    %v10494 = vld [vmem:[%s10471 + $0x58] sm:$0xf]
    %v10495 = vld [vmem:[%s10471 + $0x5c] sm:$0xf]
    %v10496 = vld [vmem:[%s10471 + $0x60] sm:$0xf]
    %v10497 = vld [vmem:[%s10471 + $0x64] sm:$0xf]
    %v10498 = vld [vmem:[%s10471 + $0x68] sm:$0xf]
    %v10499 = vld [vmem:[%s10471 + $0x6c] sm:$0xf]
    %v10502 = vrot.slane %v10469, 1
    %v10503 = vrot.slane %v10470, 1
    %v10533 = vunpack.c.l.b16 %v10472
    %v10534 = vunpack.c.l.b16 %v10473
    %v10535 = vunpack.c.l.b16 %v10474
    %v10536 = vunpack.c.l.b16 %v10475
    %v10537 = vunpack.c.l.b16 %v10476
    %v10538 = vunpack.c.l.b16 %v10477
    %v10539 = vunpack.c.l.b16 %v10478
    %v10540 = vunpack.c.l.b16 %v10479
    %v10541 = vunpack.c.l.b16 %v10480
    %v10542 = vunpack.c.l.b16 %v10481
    %v10543 = vunpack.c.l.b16 %v10482
    %v10544 = vunpack.c.l.b16 %v10483
    %v10545 = vunpack.c.l.b16 %v10484
    %v10546 = vunpack.c.l.b16 %v10485
    %v10547 = vunpack.c.l.b16 %v10486
    %v10548 = vunpack.c.l.b16 %v10487
    %v10549 = vunpack.c.l.b16 %v10488
    %v10550 = vunpack.c.l.b16 %v10489
    %v10551 = vunpack.c.l.b16 %v10490
    %v10552 = vunpack.c.l.b16 %v10491
    %v10553 = vunpack.c.l.b16 %v10492
    %v10554 = vunpack.c.l.b16 %v10493
    %v10555 = vunpack.c.l.b16 %v10494
    %v10556 = vunpack.c.l.b16 %v10495
    %v10557 = vunpack.c.l.b16 %v10496
    %v10558 = vunpack.c.l.b16 %v10497
    %v10559 = vunpack.c.l.b16 %v10498
    %v10560 = vunpack.c.l.b16 %v10499
    %v10561 = vpack.c.b16 %v10534, %v10533
    %v10562 = vpack.c.b16 %v10536, %v10535
    %v10563 = vpack.c.b16 %v10538, %v10537
    %v10564 = vpack.c.b16 %v10540, %v10539
    %v10565 = vpack.c.b16 %v10542, %v10541
    %v10566 = vpack.c.b16 %v10544, %v10543
    %v10567 = vpack.c.b16 %v10546, %v10545
    %v10568 = vpack.c.b16 %v10548, %v10547
    %v10569 = vpack.c.b16 %v10550, %v10549
    %v10570 = vpack.c.b16 %v10552, %v10551
    %v10571 = vpack.c.b16 %v10554, %v10553
    %v10572 = vpack.c.b16 %v10556, %v10555
    %v10573 = vpack.c.b16 %v10558, %v10557
    %v10574 = vpack.c.b16 %v10560, %v10559
    %v10590 = vsel %vm8250, %v10503, 0
    %10592 = vmatprep.subr.bf16.mxu0 0
    %10593 = vmatpush1.bf16.msra.mxu0 %v10561
    %10594 = vmatprep.subr.bf16.mxu0 0
    %10595 = vmatpush1.bf16.msra.mxu0 %v10562
    %10596 = vmatprep.subr.bf16.mxu0 0
    %10597 = vmatpush1.bf16.msra.mxu0 %v10563
    %10598 = vmatprep.subr.bf16.mxu0 0
    %10599 = vmatpush1.bf16.msra.mxu0 %v10564
    %10600 = vmatprep.subr.bf16.mxu0 0
    %10601 = vmatpush1.bf16.msra.mxu0 %v10565
    %10602 = vmatprep.subr.bf16.mxu0 0
    %10603 = vmatpush1.bf16.msra.mxu0 %v10566
    %10604 = vmatprep.subr.bf16.mxu0 0
    %10605 = vmatpush1.bf16.msra.mxu0 %v10567
    %10606 = vmatprep.subr.bf16.mxu0 0
    %10607 = vmatpush1.bf16.msra.mxu0 %v10568
    %10608 = vmatprep.subr.bf16.mxu0 0
    %10609 = vmatpush1.bf16.msra.mxu0 %v10569
    %10610 = vmatprep.subr.bf16.mxu0 0
    %10611 = vmatpush1.bf16.msra.mxu0 %v10570
    %10612 = vmatprep.subr.bf16.mxu0 0
    %10613 = vmatpush1.bf16.msra.mxu0 %v10571
    %10614 = vmatprep.subr.bf16.mxu0 0
    %10615 = vmatpush1.bf16.msra.mxu0 %v10572
    %10616 = vmatprep.subr.bf16.mxu0 0
    %10617 = vmatpush1.bf16.msra.mxu0 %v10573
    %10618 = vmatprep.subr.bf16.mxu0 0
    %10619 = vmatpush1.bf16.msra.mxu0 %v10574
    %10620 = vmatprep.subr.bf16.mxu0 0
    %10621 = vmatpush1.bf16.msra.mxu0 0
    %10622 = vmatprep.subr.bf16.mxu0 0
    %10623 = vmatpush1.bf16.msra.mxu0 0
    %10624 = vmatprep.mubr.bf16.mxu0 %v10590
    %10625 = vmatmul.mubr.bf16.gmra.mrb[0].mxu0 %v10502
    %v10626 = vpop.f32.mrb[0].mxu0
    %v10627 = vadd.f32 0.0, %v10626
    %v10628 = vpop.f32.mrb[0].mxu0
    %v10629 = vpop.f32.mrb[0].mxu0
    %v10630 = vpop.f32.mrb[0].mxu0
    %10631 = vdwg.mxu0
    %v10632 = vadd.f32 %v10462, %v10627
    %v10633 = vld [vmem:[%s9849] sm:$0x3c]
    %v10634 = vld [vmem:[%s9849 + $0x8] sm:$0x3c]
    %v10635 = vpack.c.bf16 %v10633, %v10633
    %v10636 = vpack.c.bf16 %v10634, %v10634
    %s10637 = scalar_lea.vmem %s11, 336
    %v10638 = vld [vmem:[%s10637] sm:$0xf]
    %v10639 = vld [vmem:[%s10637 + $0x4] sm:$0xf]
    %v10640 = vld [vmem:[%s10637 + $0x8] sm:$0xf]
    %v10641 = vld [vmem:[%s10637 + $0xc] sm:$0xf]
    %v10642 = vld [vmem:[%s10637 + $0x10] sm:$0xf]
    %v10643 = vld [vmem:[%s10637 + $0x14] sm:$0xf]
    %v10644 = vld [vmem:[%s10637 + $0x18] sm:$0xf]
    %v10645 = vld [vmem:[%s10637 + $0x1c] sm:$0xf]
    %v10646 = vld [vmem:[%s10637 + $0x20] sm:$0xf]
    %v10647 = vld [vmem:[%s10637 + $0x24] sm:$0xf]
    %v10648 = vld [vmem:[%s10637 + $0x28] sm:$0xf]
    %v10649 = vld [vmem:[%s10637 + $0x2c] sm:$0xf]
    %v10650 = vld [vmem:[%s10637 + $0x30] sm:$0xf]
    %v10651 = vld [vmem:[%s10637 + $0x34] sm:$0xf]
    %v10652 = vld [vmem:[%s10637 + $0x38] sm:$0xf]
    %v10653 = vld [vmem:[%s10637 + $0x3c] sm:$0xf]
    %v10654 = vld [vmem:[%s10637 + $0x40] sm:$0xf]
    %v10655 = vld [vmem:[%s10637 + $0x44] sm:$0xf]
    %v10656 = vld [vmem:[%s10637 + $0x48] sm:$0xf]
    %v10657 = vld [vmem:[%s10637 + $0x4c] sm:$0xf]
    %v10658 = vld [vmem:[%s10637 + $0x50] sm:$0xf]
    %v10659 = vld [vmem:[%s10637 + $0x54] sm:$0xf]
    %v10660 = vld [vmem:[%s10637 + $0x58] sm:$0xf]
    %v10661 = vld [vmem:[%s10637 + $0x5c] sm:$0xf]
    %v10662 = vld [vmem:[%s10637 + $0x60] sm:$0xf]
    %v10663 = vld [vmem:[%s10637 + $0x64] sm:$0xf]
    %v10664 = vld [vmem:[%s10637 + $0x68] sm:$0xf]
    %v10665 = vld [vmem:[%s10637 + $0x6c] sm:$0xf]
    %v10668 = vrot.slane %v10635, 1
    %v10669 = vrot.slane %v10636, 1
    %v10699 = vunpack.c.l.b16 %v10638
    %v10700 = vunpack.c.l.b16 %v10639
    %v10701 = vunpack.c.l.b16 %v10640
    %v10702 = vunpack.c.l.b16 %v10641
    %v10703 = vunpack.c.l.b16 %v10642
    %v10704 = vunpack.c.l.b16 %v10643
    %v10705 = vunpack.c.l.b16 %v10644
    %v10706 = vunpack.c.l.b16 %v10645
    %v10707 = vunpack.c.l.b16 %v10646
    %v10708 = vunpack.c.l.b16 %v10647
    %v10709 = vunpack.c.l.b16 %v10648
    %v10710 = vunpack.c.l.b16 %v10649
    %v10711 = vunpack.c.l.b16 %v10650
    %v10712 = vunpack.c.l.b16 %v10651
    %v10713 = vunpack.c.l.b16 %v10652
    %v10714 = vunpack.c.l.b16 %v10653
    %v10715 = vunpack.c.l.b16 %v10654
    %v10716 = vunpack.c.l.b16 %v10655
    %v10717 = vunpack.c.l.b16 %v10656
    %v10718 = vunpack.c.l.b16 %v10657
    %v10719 = vunpack.c.l.b16 %v10658
    %v10720 = vunpack.c.l.b16 %v10659
    %v10721 = vunpack.c.l.b16 %v10660
    %v10722 = vunpack.c.l.b16 %v10661
    %v10723 = vunpack.c.l.b16 %v10662
    %v10724 = vunpack.c.l.b16 %v10663
    %v10725 = vunpack.c.l.b16 %v10664
    %v10726 = vunpack.c.l.b16 %v10665
    %v10727 = vpack.c.b16 %v10700, %v10699
    %v10728 = vpack.c.b16 %v10702, %v10701
    %v10729 = vpack.c.b16 %v10704, %v10703
    %v10730 = vpack.c.b16 %v10706, %v10705
    %v10731 = vpack.c.b16 %v10708, %v10707
    %v10732 = vpack.c.b16 %v10710, %v10709
    %v10733 = vpack.c.b16 %v10712, %v10711
    %v10734 = vpack.c.b16 %v10714, %v10713
    %v10735 = vpack.c.b16 %v10716, %v10715
    %v10736 = vpack.c.b16 %v10718, %v10717
    %v10737 = vpack.c.b16 %v10720, %v10719
    %v10738 = vpack.c.b16 %v10722, %v10721
    %v10739 = vpack.c.b16 %v10724, %v10723
    %v10740 = vpack.c.b16 %v10726, %v10725
    %v10756 = vsel %vm8250, %v10669, 0
    %10758 = vmatprep.subr.bf16.mxu0 0
    %10759 = vmatpush1.bf16.msra.mxu0 %v10727
    %10760 = vmatprep.subr.bf16.mxu0 0
    %10761 = vmatpush1.bf16.msra.mxu0 %v10728
    %10762 = vmatprep.subr.bf16.mxu0 0
    %10763 = vmatpush1.bf16.msra.mxu0 %v10729
    %10764 = vmatprep.subr.bf16.mxu0 0
    %10765 = vmatpush1.bf16.msra.mxu0 %v10730
    %10766 = vmatprep.subr.bf16.mxu0 0
    %10767 = vmatpush1.bf16.msra.mxu0 %v10731
    %10768 = vmatprep.subr.bf16.mxu0 0
    %10769 = vmatpush1.bf16.msra.mxu0 %v10732
    %10770 = vmatprep.subr.bf16.mxu0 0
    %10771 = vmatpush1.bf16.msra.mxu0 %v10733
    %10772 = vmatprep.subr.bf16.mxu0 0
    %10773 = vmatpush1.bf16.msra.mxu0 %v10734
    %10774 = vmatprep.subr.bf16.mxu0 0
    %10775 = vmatpush1.bf16.msra.mxu0 %v10735
    %10776 = vmatprep.subr.bf16.mxu0 0
    %10777 = vmatpush1.bf16.msra.mxu0 %v10736
    %10778 = vmatprep.subr.bf16.mxu0 0
    %10779 = vmatpush1.bf16.msra.mxu0 %v10737
    %10780 = vmatprep.subr.bf16.mxu0 0
    %10781 = vmatpush1.bf16.msra.mxu0 %v10738
    %10782 = vmatprep.subr.bf16.mxu0 0
    %10783 = vmatpush1.bf16.msra.mxu0 %v10739
    %10784 = vmatprep.subr.bf16.mxu0 0
    %10785 = vmatpush1.bf16.msra.mxu0 %v10740
    %10786 = vmatprep.subr.bf16.mxu0 0
    %10787 = vmatpush1.bf16.msra.mxu0 0
    %10788 = vmatprep.subr.bf16.mxu0 0
    %10789 = vmatpush1.bf16.msra.mxu0 0
    %10790 = vmatprep.mubr.bf16.mxu0 %v10756
    %10791 = vmatmul.mubr.bf16.gmra.mrb[0].mxu0 %v10668
    %v10792 = vpop.f32.mrb[0].mxu0
    %v10793 = vadd.f32 0.0, %v10792
    %v10794 = vpop.f32.mrb[0].mxu0
    %v10795 = vpop.f32.mrb[0].mxu0
    %v10796 = vpop.f32.mrb[0].mxu0
    %10797 = vdwg.mxu0
    %v10798 = vadd.f32 %v10632, %v10793
    %v10799 = vld [vmem:[#allocation3] sm:$0xf0]
    %v10800 = vld [vmem:[#allocation3 + $0x8] sm:$0xf0]
    %v10801 = vpack.c.bf16 %v10799, %v10799
    %v10802 = vpack.c.bf16 %v10800, %v10800
    %s10803 = scalar_lea.vmem %s11, 448
    %v10804 = vld [vmem:[%s10803] sm:$0xf]
    %v10805 = vld [vmem:[%s10803 + $0x4] sm:$0xf]
    %v10806 = vld [vmem:[%s10803 + $0x8] sm:$0xf]
    %v10807 = vld [vmem:[%s10803 + $0xc] sm:$0xf]
    %v10808 = vld [vmem:[%s10803 + $0x10] sm:$0xf]
    %v10809 = vld [vmem:[%s10803 + $0x14] sm:$0xf]
    %v10810 = vld [vmem:[%s10803 + $0x18] sm:$0xf]
    %v10811 = vld [vmem:[%s10803 + $0x1c] sm:$0xf]
    %v10812 = vld [vmem:[%s10803 + $0x20] sm:$0xf]
    %v10813 = vld [vmem:[%s10803 + $0x24] sm:$0xf]
    %v10814 = vld [vmem:[%s10803 + $0x28] sm:$0xf]
    %v10815 = vld [vmem:[%s10803 + $0x2c] sm:$0xf]
    %v10816 = vld [vmem:[%s10803 + $0x30] sm:$0xf]
    %v10817 = vld [vmem:[%s10803 + $0x34] sm:$0xf]
    %v10818 = vld [vmem:[%s10803 + $0x38] sm:$0xf]
    %v10819 = vld [vmem:[%s10803 + $0x3c] sm:$0xf]
    %v10820 = vld [vmem:[%s10803 + $0x40] sm:$0xf]
    %v10821 = vld [vmem:[%s10803 + $0x44] sm:$0xf]
    %v10822 = vld [vmem:[%s10803 + $0x48] sm:$0xf]
    %v10823 = vld [vmem:[%s10803 + $0x4c] sm:$0xf]
    %v10824 = vld [vmem:[%s10803 + $0x50] sm:$0xf]
    %v10825 = vld [vmem:[%s10803 + $0x54] sm:$0xf]
    %v10826 = vld [vmem:[%s10803 + $0x58] sm:$0xf]
    %v10827 = vld [vmem:[%s10803 + $0x5c] sm:$0xf]
    %v10828 = vld [vmem:[%s10803 + $0x60] sm:$0xf]
    %v10829 = vld [vmem:[%s10803 + $0x64] sm:$0xf]
    %v10830 = vld [vmem:[%s10803 + $0x68] sm:$0xf]
    %v10831 = vld [vmem:[%s10803 + $0x6c] sm:$0xf]
    %v10834 = vrot.slane %v10801, 2
    %v10835 = vrot.slane %v10802, 2
    %v10865 = vunpack.c.l.b16 %v10804
    %v10866 = vunpack.c.l.b16 %v10805
    %v10867 = vunpack.c.l.b16 %v10806
    %v10868 = vunpack.c.l.b16 %v10807
    %v10869 = vunpack.c.l.b16 %v10808
    %v10870 = vunpack.c.l.b16 %v10809
    %v10871 = vunpack.c.l.b16 %v10810
    %v10872 = vunpack.c.l.b16 %v10811
    %v10873 = vunpack.c.l.b16 %v10812
    %v10874 = vunpack.c.l.b16 %v10813
    %v10875 = vunpack.c.l.b16 %v10814
    %v10876 = vunpack.c.l.b16 %v10815
    %v10877 = vunpack.c.l.b16 %v10816
    %v10878 = vunpack.c.l.b16 %v10817
    %v10879 = vunpack.c.l.b16 %v10818
    %v10880 = vunpack.c.l.b16 %v10819
    %v10881 = vunpack.c.l.b16 %v10820
    %v10882 = vunpack.c.l.b16 %v10821
    %v10883 = vunpack.c.l.b16 %v10822
    %v10884 = vunpack.c.l.b16 %v10823
    %v10885 = vunpack.c.l.b16 %v10824
    %v10886 = vunpack.c.l.b16 %v10825
    %v10887 = vunpack.c.l.b16 %v10826
    %v10888 = vunpack.c.l.b16 %v10827
    %v10889 = vunpack.c.l.b16 %v10828
    %v10890 = vunpack.c.l.b16 %v10829
    %v10891 = vunpack.c.l.b16 %v10830
    %v10892 = vunpack.c.l.b16 %v10831
    %v10893 = vpack.c.b16 %v10866, %v10865
    %v10894 = vpack.c.b16 %v10868, %v10867
    %v10895 = vpack.c.b16 %v10870, %v10869
    %v10896 = vpack.c.b16 %v10872, %v10871
    %v10897 = vpack.c.b16 %v10874, %v10873
    %v10898 = vpack.c.b16 %v10876, %v10875
    %v10899 = vpack.c.b16 %v10878, %v10877
    %v10900 = vpack.c.b16 %v10880, %v10879
    %v10901 = vpack.c.b16 %v10882, %v10881
    %v10902 = vpack.c.b16 %v10884, %v10883
    %v10903 = vpack.c.b16 %v10886, %v10885
    %v10904 = vpack.c.b16 %v10888, %v10887
    %v10905 = vpack.c.b16 %v10890, %v10889
    %v10906 = vpack.c.b16 %v10892, %v10891
    %v10922 = vsel %vm8250, %v10835, 0
    %10924 = vmatprep.subr.bf16.mxu0 0
    %10925 = vmatpush1.bf16.msra.mxu0 %v10893
    %10926 = vmatprep.subr.bf16.mxu0 0
    %10927 = vmatpush1.bf16.msra.mxu0 %v10894
    %10928 = vmatprep.subr.bf16.mxu0 0
    %10929 = vmatpush1.bf16.msra.mxu0 %v10895
    %10930 = vmatprep.subr.bf16.mxu0 0
    %10931 = vmatpush1.bf16.msra.mxu0 %v10896
    %10932 = vmatprep.subr.bf16.mxu0 0
    %10933 = vmatpush1.bf16.msra.mxu0 %v10897
    %10934 = vmatprep.subr.bf16.mxu0 0
    %10935 = vmatpush1.bf16.msra.mxu0 %v10898
    %10936 = vmatprep.subr.bf16.mxu0 0
    %10937 = vmatpush1.bf16.msra.mxu0 %v10899
    %10938 = vmatprep.subr.bf16.mxu0 0
    %10939 = vmatpush1.bf16.msra.mxu0 %v10900
    %10940 = vmatprep.subr.bf16.mxu0 0
    %10941 = vmatpush1.bf16.msra.mxu0 %v10901
    %10942 = vmatprep.subr.bf16.mxu0 0
    %10943 = vmatpush1.bf16.msra.mxu0 %v10902
    %10944 = vmatprep.subr.bf16.mxu0 0
    %10945 = vmatpush1.bf16.msra.mxu0 %v10903
    %10946 = vmatprep.subr.bf16.mxu0 0
    %10947 = vmatpush1.bf16.msra.mxu0 %v10904
    %10948 = vmatprep.subr.bf16.mxu0 0
    %10949 = vmatpush1.bf16.msra.mxu0 %v10905
    %10950 = vmatprep.subr.bf16.mxu0 0
    %10951 = vmatpush1.bf16.msra.mxu0 %v10906
    %10952 = vmatprep.subr.bf16.mxu0 0
    %10953 = vmatpush1.bf16.msra.mxu0 0
    %10954 = vmatprep.subr.bf16.mxu0 0
    %10955 = vmatpush1.bf16.msra.mxu0 0
    %10956 = vmatprep.mubr.bf16.mxu0 %v10922
    %10957 = vmatmul.mubr.bf16.gmra.mrb[0].mxu0 %v10834
    %v10958 = vpop.f32.mrb[0].mxu0
    %v10959 = vadd.f32 0.0, %v10958
    %v10960 = vpop.f32.mrb[0].mxu0
    %v10961 = vpop.f32.mrb[0].mxu0
    %v10962 = vpop.f32.mrb[0].mxu0
    %10963 = vdwg.mxu0
    %v10964 = vadd.f32 %v10798, %v10959
    %vm10965 = vcmask 519168
    %10966 = vst.msk [vmem:[#allocation4] sm:$0xf] %vm10965, %v10964
    %v10967 = vsel %vm10965, %v10964, 0.0
    %v10968 = vrot.slane %v10967, 4
    %v10969 = vadd.f32 %v10967, %v10968
    %v10970 = vrot.slane %v10969, 2
    %v10971 = vadd.f32 %v10969, %v10970
    %v10972 = vrot.slane %v10971, 1
    %v10973 = vadd.f32 %v10971, %v10972
    %v10974 = vadd.f32 %v10973, 0.0
    %v10975 = vmul.f32 %v10964, %v10964
    %v10976 = vsel %vm10965, %v10975, 0.0
    %v10977 = vrot.slane %v10976, 4
    %v10978 = vadd.f32 %v10976, %v10977
    %v10979 = vrot.slane %v10978, 2
    %v10980 = vadd.f32 %v10978, %v10979
    %v10981 = vrot.slane %v10980, 1
    %v10982 = vadd.f32 %v10980, %v10981
    %v10983 = vadd.f32 %v10982, 0.0
    %v10984 = vsel %vm6206, %v10974, %v10983
    %v10985 = vld [vmem:[%s14] sm:$0xff]
    %v10986 = vld [vmem:[%s14 + $0x8] sm:$0xff]
    %v10987 = vld [vmem:[%s14 + $0x10] sm:$0xff]
    %v10988 = vld [vmem:[%s14 + $0x18] sm:$0xff]
    %v10989 = vld [vmem:[%s14 + $0x20] sm:$0xff]
    %v10990 = vld [vmem:[%s14 + $0x28] sm:$0xff]
    %v10991 = vld [vmem:[%s14 + $0x30] sm:$0xff]
    %v10992 = vld [vmem:[%s14 + $0x38] sm:$0xff]
    %vm10993 = vcmask 523264
    %v10995 = vsel %vm10993, %v10984, 0
    %10997 = vmatprep.subr.mxu0 0.0
    %10998 = vmatpush1.msra.mxu0 %v10985
    %10999 = vmatprep.subr.mxu0 0.0
    %11000 = vmatpush1.msra.mxu0 %v10986
    %11001 = vmatprep.subr.mxu0 0.0
    %11002 = vmatpush1.msra.mxu0 %v10987
    %11003 = vmatprep.subr.mxu0 0.0
    %11004 = vmatpush1.msra.mxu0 %v10988
    %11005 = vmatprep.subr.mxu0 0.0
    %11006 = vmatpush1.msra.mxu0 %v10989
    %11007 = vmatprep.subr.mxu0 0.0
    %11008 = vmatpush1.msra.mxu0 %v10990
    %11009 = vmatprep.subr.mxu0 0.0
    %11010 = vmatpush1.msra.mxu0 %v10991
    %11011 = vmatprep.subr.mxu0 0.0
    %11012 = vmatpush1.msra.mxu0 %v10992
    %11013 = vmatprep.subr.mxu0 0.0
    %11014 = vmatpush1.msra.mxu0 0.0
    %11015 = vmatprep.subr.mxu0 0.0
    %11016 = vmatpush1.msra.mxu0 0.0
    %11017 = vmatprep.subr.mxu0 0.0
    %11018 = vmatpush1.msra.mxu0 0.0
    %11019 = vmatprep.subr.mxu0 0.0
    %11020 = vmatpush1.msra.mxu0 0.0
    %11021 = vmatprep.subr.mxu0 0.0
    %11022 = vmatpush1.msra.mxu0 0.0
    %11023 = vmatprep.subr.mxu0 0.0
    %11024 = vmatpush1.msra.mxu0 0.0
    %11025 = vmatprep.subr.mxu0 0.0
    %11026 = vmatpush1.msra.mxu0 0.0
    %11027 = vmatprep.subr.mxu0 0.0
    %11028 = vmatpush1.msra.mxu0 0.0
    %11029 = vmatprep.subr.mxu0 0.0
    %11030 = vmatpush1.msra.mxu0 0.0
    %11031 = vmatprep.subr.mxu0 0.0
    %11032 = vmatpush1.msra.mxu0 0.0
    %11033 = vmatprep.subr.mxu0 0.0
    %11034 = vmatpush1.msra.mxu0 0.0
    %11035 = vmatprep.subr.mxu0 0.0
    %11036 = vmatpush1.msra.mxu0 0.0
    %11037 = vmatprep.subr.mxu0 0.0
    %11038 = vmatpush1.msra.mxu0 0.0
    %11039 = vmatprep.subr.mxu0 0.0
    %11040 = vmatpush1.msra.mxu0 0.0
    %11041 = vmatprep.subr.mxu0 0.0
    %11042 = vmatpush1.msra.mxu0 0.0
    %11043 = vmatprep.subr.mxu0 0.0
    %11044 = vmatpush1.msra.mxu0 0.0
    %11045 = vmatprep.subr.mxu0 0.0
    %11046 = vmatpush1.msra.mxu0 0.0
    %11047 = vmatprep.subr.mxu0 0.0
    %11048 = vmatpush1.msra.mxu0 0.0
    %11049 = vmatprep.subr.mxu0 0.0
    %11050 = vmatpush1.msra.mxu0 0.0
    %11051 = vmatprep.subr.mxu0 0.0
    %11052 = vmatpush1.msra.mxu0 0.0
    %11053 = vmatprep.subr.mxu0 0.0
    %11054 = vmatpush1.msra.mxu0 0.0
    %11055 = vmatprep.subr.mxu0 0.0
    %11056 = vmatpush1.msra.mxu0 0.0
    %11057 = vmatprep.subr.mxu0 0.0
    %11058 = vmatpush1.msra.mxu0 0.0
    %11059 = vmatprep.subr.mxu0 0.0
    %11060 = vmatpush1.msra.mxu0 0.0
    %11061 = vmatprep.mubr.f32.mxu0 0.0
    %11062 = vmatmul.mubr.f32.gmra.mrb[0].mxu0 %v10995
    %v11063 = vpop.f32.mrb[0].mxu0
    %v11064 = vadd.f32 0.0, %v11063
    %v11065 = vpop.f32.mrb[0].mxu0
    %11066 = vdwg.mxu0
    %v11067 = vrcp.pop 8.0
    %v11068 = vmul.f32 %v11064, %v11067
    %v11069 = vmul.f32 %v11068, %v11068
    %v11071 = vrot.slane %v11069, 7
    %v11073 = vsub.f32 %v11068, %v11071
    %v11074 = vmax.f32 %v11073, 0.0
    %v11075 = vld [vmem:[%s12] sm:$0x1]
    %v11076 = vadd.f32 %v11074, 1e-05
    %v11077 = vrsqrt.pop %v11076
    %v11080 = vunpack.c.l.s4 1966171168
    %v11081 = vunpack.c.0.s8 %v11080
    %v11082 = vlaneseq
    %v11083 = vshrl.u32 %v11082, 7
    %v11084 = vsub.s32 %v11081, %v11083
    %v11085 = vrot.slane %v11077, %v11084
    %v11086 = vcombine.high %v11085, %v11085
    %v11088 = vunpack.c.l.s4 1966171168
    %v11089 = vunpack.c.0.s8 %v11088
    %v11090 = vlaneseq
    %v11091 = vshrl.u32 %v11090, 7
    %v11092 = vsub.s32 %v11089, %v11091
    %v11093 = vrot.slane %v11086, %v11092
    %v11095 = vmul.f32 %v11075, %v11093
    %v11096 = vld [vmem:[%s13] sm:$0x1]
    %v11097 = vmul.f32 %v11068, %v11095
    %v11098 = vsub.f32 %v11096, %v11097
    %v11100 = vlaneseq
    %v11101 = vshrl.u32 %v11100, 7
    %v11102 = vsub.s32 0, %v11101
    %v11103 = vrot.slane %v11098, %v11102
    %v11105 = vsel %vm6206, %v11095, %v11103
    %v11106 = vld [vmem:[%s15] sm:$0xff]
    %v11107 = vld [vmem:[%s15 + $0x8] sm:$0xff]
    %v11108 = vld [vmem:[%s15 + $0x10] sm:$0xff]
    %v11109 = vld [vmem:[%s15 + $0x18] sm:$0xff]
    %v11111 = vsel %vm315, %v11105, 0
    %11113 = vmatprep.subr.mxu0 0.0
    %11114 = vmatpush1.msra.mxu0 %v11106
    %11115 = vmatprep.subr.mxu0 0.0
    %11116 = vmatpush1.msra.mxu0 %v11107
    %11117 = vmatprep.subr.mxu0 0.0
    %11118 = vmatpush1.msra.mxu0 %v11108
    %11119 = vmatprep.subr.mxu0 0.0
    %11120 = vmatpush1.msra.mxu0 %v11109
    %11121 = vmatprep.subr.mxu0 0.0
    %11122 = vmatpush1.msra.mxu0 0.0
    %11123 = vmatprep.subr.mxu0 0.0
    %11124 = vmatpush1.msra.mxu0 0.0
    %11125 = vmatprep.subr.mxu0 0.0
    %11126 = vmatpush1.msra.mxu0 0.0
    %11127 = vmatprep.subr.mxu0 0.0
    %11128 = vmatpush1.msra.mxu0 0.0
    %11129 = vmatprep.subr.mxu0 0.0
    %11130 = vmatpush1.msra.mxu0 0.0
    %11131 = vmatprep.subr.mxu0 0.0
    %11132 = vmatpush1.msra.mxu0 0.0
    %11133 = vmatprep.subr.mxu0 0.0
    %11134 = vmatpush1.msra.mxu0 0.0
    %11135 = vmatprep.subr.mxu0 0.0
    %11136 = vmatpush1.msra.mxu0 0.0
    %11137 = vmatprep.subr.mxu0 0.0
    %11138 = vmatpush1.msra.mxu0 0.0
    %11139 = vmatprep.subr.mxu0 0.0
    %11140 = vmatpush1.msra.mxu0 0.0
    %11141 = vmatprep.subr.mxu0 0.0
    %11142 = vmatpush1.msra.mxu0 0.0
    %11143 = vmatprep.subr.mxu0 0.0
    %11144 = vmatpush1.msra.mxu0 0.0
    %11145 = vmatprep.subr.mxu0 0.0
    %11146 = vmatpush1.msra.mxu0 0.0
    %11147 = vmatprep.subr.mxu0 0.0
    %11148 = vmatpush1.msra.mxu0 0.0
    %11149 = vmatprep.subr.mxu0 0.0
    %11150 = vmatpush1.msra.mxu0 0.0
    %11151 = vmatprep.subr.mxu0 0.0
    %11152 = vmatpush1.msra.mxu0 0.0
    %11153 = vmatprep.subr.mxu0 0.0
    %11154 = vmatpush1.msra.mxu0 0.0
    %11155 = vmatprep.subr.mxu0 0.0
    %11156 = vmatpush1.msra.mxu0 0.0
    %11157 = vmatprep.subr.mxu0 0.0
    %11158 = vmatpush1.msra.mxu0 0.0
    %11159 = vmatprep.subr.mxu0 0.0
    %11160 = vmatpush1.msra.mxu0 0.0
    %11161 = vmatprep.subr.mxu0 0.0
    %11162 = vmatpush1.msra.mxu0 0.0
    %11163 = vmatprep.subr.mxu0 0.0
    %11164 = vmatpush1.msra.mxu0 0.0
    %11165 = vmatprep.subr.mxu0 0.0
    %11166 = vmatpush1.msra.mxu0 0.0
    %11167 = vmatprep.subr.mxu0 0.0
    %11168 = vmatpush1.msra.mxu0 0.0
    %11169 = vmatprep.subr.mxu0 0.0
    %11170 = vmatpush1.msra.mxu0 0.0
    %11171 = vmatprep.subr.mxu0 0.0
    %11172 = vmatpush1.msra.mxu0 0.0
    %11173 = vmatprep.subr.mxu0 0.0
    %11174 = vmatpush1.msra.mxu0 0.0
    %11175 = vmatprep.subr.mxu0 0.0
    %11176 = vmatpush1.msra.mxu0 0.0
    %11177 = vmatprep.mubr.f32.mxu0 0.0
    %11178 = vmatmul.mubr.f32.gmra.mrb[0].mxu0 %v11111
    %v11179 = vpop.f32.mrb[0].mxu0
    %v11180 = vadd.f32 0.0, %v11179
    %v11181 = vpop.f32.mrb[0].mxu0
    %11182 = vdwg.mxu0
    %v11183 = vld [vmem:[#allocation4] sm:$0xf]
    %v11184 = vlaneseq
    %v11185 = vshrl.u32 %v11184, 7
    %v11186 = vsub.s32 0, %v11185
    %v11187 = vrot.slane %v11180, %v11186
    %v11188 = vmul.f32 %v11183, %v11187
    %v11189 = vlaneseq
    %v11190 = vshrl.u32 %v11189, 7
    %v11191 = vsub.s32 1, %v11190
    %v11192 = vrot.slane %v11180, %v11191
    %v11193 = vadd.f32 %v11188, %v11192
    %v11194 = vmax.f32 %v11193, 0.0
    %11195 = vst.msk [vmem:[#allocation4] sm:$0xf] %vm10965, %v11194
    %v11196 = vld [vmem:[#allocation4] sm:$0x3]
    %v11197 = vld [vmem:[%s16] sm:$0xff]
    %v11198 = vld [vmem:[%s16 + $0x8] sm:$0xff]
    %v11199 = vld [vmem:[%s16 + $0x10] sm:$0xff]
    %v11200 = vld [vmem:[%s16 + $0x18] sm:$0xff]
    %v11201 = vld [vmem:[%s16 + $0x20] sm:$0xff]
    %v11202 = vld [vmem:[%s16 + $0x28] sm:$0xff]
    %v11203 = vld [vmem:[%s16 + $0x30] sm:$0xff]
    %v11204 = vld [vmem:[%s16 + $0x38] sm:$0xff]
    %v11205 = vld [vmem:[#allocation4 + $0x2] sm:$0x3]
    %s11206 = scalar_lea.vmem %s16, 64
    %v11207 = vld [vmem:[%s11206] sm:$0xff]
    %v11208 = vld [vmem:[%s11206 + $0x8] sm:$0xff]
    %v11209 = vld [vmem:[%s11206 + $0x10] sm:$0xff]
    %v11210 = vld [vmem:[%s11206 + $0x18] sm:$0xff]
    %v11211 = vld [vmem:[%s11206 + $0x20] sm:$0xff]
    %v11212 = vld [vmem:[%s11206 + $0x28] sm:$0xff]
    %v11213 = vld [vmem:[%s11206 + $0x30] sm:$0xff]
    %v11214 = vld [vmem:[%s11206 + $0x38] sm:$0xff]
    %v11216 = vsel %vm10993, %v11205, 0
    %11218 = vmatprep.subr.mxu0 0.0
    %11219 = vmatpush1.msra.mxu0 %v11207
    %11220 = vmatprep.subr.mxu0 0.0
    %11221 = vmatpush1.msra.mxu0 %v11208
    %11222 = vmatprep.subr.mxu0 0.0
    %11223 = vmatpush1.msra.mxu0 %v11209
    %11224 = vmatprep.subr.mxu0 0.0
    %11225 = vmatpush1.msra.mxu0 %v11210
    %11226 = vmatprep.subr.mxu0 0.0
    %11227 = vmatpush1.msra.mxu0 %v11211
    %11228 = vmatprep.subr.mxu0 0.0
    %11229 = vmatpush1.msra.mxu0 %v11212
    %11230 = vmatprep.subr.mxu0 0.0
    %11231 = vmatpush1.msra.mxu0 %v11213
    %11232 = vmatprep.subr.mxu0 0.0
    %11233 = vmatpush1.msra.mxu0 %v11214
    %11234 = vmatprep.subr.mxu0 0.0
    %11235 = vmatpush1.msra.mxu0 0.0
    %11236 = vmatprep.subr.mxu0 0.0
    %11237 = vmatpush1.msra.mxu0 0.0
    %11238 = vmatprep.subr.mxu0 0.0
    %11239 = vmatpush1.msra.mxu0 0.0
    %11240 = vmatprep.subr.mxu0 0.0
    %11241 = vmatpush1.msra.mxu0 0.0
    %11242 = vmatprep.subr.mxu0 0.0
    %11243 = vmatpush1.msra.mxu0 0.0
    %11244 = vmatprep.subr.mxu0 0.0
    %11245 = vmatpush1.msra.mxu0 0.0
    %11246 = vmatprep.subr.mxu0 0.0
    %11247 = vmatpush1.msra.mxu0 0.0
    %11248 = vmatprep.subr.mxu0 0.0
    %11249 = vmatpush1.msra.mxu0 0.0
    %11250 = vmatprep.subr.mxu0 0.0
    %11251 = vmatpush1.msra.mxu0 0.0
    %11252 = vmatprep.subr.mxu0 0.0
    %11253 = vmatpush1.msra.mxu0 0.0
    %11254 = vmatprep.subr.mxu0 0.0
    %11255 = vmatpush1.msra.mxu0 0.0
    %11256 = vmatprep.subr.mxu0 0.0
    %11257 = vmatpush1.msra.mxu0 0.0
    %11258 = vmatprep.subr.mxu0 0.0
    %11259 = vmatpush1.msra.mxu0 0.0
    %11260 = vmatprep.subr.mxu0 0.0
    %11261 = vmatpush1.msra.mxu0 0.0
    %11262 = vmatprep.subr.mxu0 0.0
    %11263 = vmatpush1.msra.mxu0 0.0
    %11264 = vmatprep.subr.mxu0 0.0
    %11265 = vmatpush1.msra.mxu0 0.0
    %11266 = vmatprep.subr.mxu0 0.0
    %11267 = vmatpush1.msra.mxu0 0.0
    %11268 = vmatprep.subr.mxu0 0.0
    %11269 = vmatpush1.msra.mxu0 0.0
    %11270 = vmatprep.subr.mxu0 0.0
    %11271 = vmatpush1.msra.mxu0 0.0
    %11272 = vmatprep.subr.mxu0 0.0
    %11273 = vmatpush1.msra.mxu0 0.0
    %11274 = vmatprep.subr.mxu0 0.0
    %11275 = vmatpush1.msra.mxu0 0.0
    %11276 = vmatprep.subr.mxu0 0.0
    %11277 = vmatpush1.msra.mxu0 0.0
    %11278 = vmatprep.subr.mxu0 0.0
    %11279 = vmatpush1.msra.mxu0 0.0
    %11280 = vmatprep.subr.mxu0 0.0
    %11281 = vmatpush1.msra.mxu0 0.0
    %11282 = vmatprep.mubr.f32.mxu0 0.0
    %11283 = vmatmul.mubr.f32.gmra.mrb[0].mxu0 %v11216
    %v11284 = vpop.f32.mrb[0].mxu0
    %v11285 = vadd.f32 0.0, %v11284
    %v11286 = vpop.f32.mrb[0].mxu0
    %11287 = vdwg.mxu0
    %v11289 = vsel %vm10993, %v11196, 0
    %11291 = vmatprep.subr.mxu0 0.0
    %11292 = vmatpush1.msra.mxu0 %v11197
    %11293 = vmatprep.subr.mxu0 0.0
    %11294 = vmatpush1.msra.mxu0 %v11198
    %11295 = vmatprep.subr.mxu0 0.0
    %11296 = vmatpush1.msra.mxu0 %v11199
    %11297 = vmatprep.subr.mxu0 0.0
    %11298 = vmatpush1.msra.mxu0 %v11200
    %11299 = vmatprep.subr.mxu0 0.0
    %11300 = vmatpush1.msra.mxu0 %v11201
    %11301 = vmatprep.subr.mxu0 0.0
    %11302 = vmatpush1.msra.mxu0 %v11202
    %11303 = vmatprep.subr.mxu0 0.0
    %11304 = vmatpush1.msra.mxu0 %v11203
    %11305 = vmatprep.subr.mxu0 0.0
    %11306 = vmatpush1.msra.mxu0 %v11204
    %11307 = vmatprep.subr.mxu0 0.0
    %11308 = vmatpush1.msra.mxu0 0.0
    %11309 = vmatprep.subr.mxu0 0.0
    %11310 = vmatpush1.msra.mxu0 0.0
    %11311 = vmatprep.subr.mxu0 0.0
    %11312 = vmatpush1.msra.mxu0 0.0
    %11313 = vmatprep.subr.mxu0 0.0
    %11314 = vmatpush1.msra.mxu0 0.0
    %11315 = vmatprep.subr.mxu0 0.0
    %11316 = vmatpush1.msra.mxu0 0.0
    %11317 = vmatprep.subr.mxu0 0.0
    %11318 = vmatpush1.msra.mxu0 0.0
    %11319 = vmatprep.subr.mxu0 0.0
    %11320 = vmatpush1.msra.mxu0 0.0
    %11321 = vmatprep.subr.mxu0 0.0
    %11322 = vmatpush1.msra.mxu0 0.0
    %11323 = vmatprep.subr.mxu0 0.0
    %11324 = vmatpush1.msra.mxu0 0.0
    %11325 = vmatprep.subr.mxu0 0.0
    %11326 = vmatpush1.msra.mxu0 0.0
    %11327 = vmatprep.subr.mxu0 0.0
    %11328 = vmatpush1.msra.mxu0 0.0
    %11329 = vmatprep.subr.mxu0 0.0
    %11330 = vmatpush1.msra.mxu0 0.0
    %11331 = vmatprep.subr.mxu0 0.0
    %11332 = vmatpush1.msra.mxu0 0.0
    %11333 = vmatprep.subr.mxu0 0.0
    %11334 = vmatpush1.msra.mxu0 0.0
    %11335 = vmatprep.subr.mxu0 0.0
    %11336 = vmatpush1.msra.mxu0 0.0
    %11337 = vmatprep.subr.mxu0 0.0
    %11338 = vmatpush1.msra.mxu0 0.0
    %11339 = vmatprep.subr.mxu0 0.0
    %11340 = vmatpush1.msra.mxu0 0.0
    %11341 = vmatprep.subr.mxu0 0.0
    %11342 = vmatpush1.msra.mxu0 0.0
    %11343 = vmatprep.subr.mxu0 0.0
    %11344 = vmatpush1.msra.mxu0 0.0
    %11345 = vmatprep.subr.mxu0 0.0
    %11346 = vmatpush1.msra.mxu0 0.0
    %11347 = vmatprep.subr.mxu0 0.0
    %11348 = vmatpush1.msra.mxu0 0.0
    %11349 = vmatprep.subr.mxu0 0.0
    %11350 = vmatpush1.msra.mxu0 0.0
    %11351 = vmatprep.subr.mxu0 0.0
    %11352 = vmatpush1.msra.mxu0 0.0
    %11353 = vmatprep.subr.mxu0 0.0
    %11354 = vmatpush1.msra.mxu0 0.0
    %11355 = vmatprep.mubr.f32.mxu0 0.0
    %11356 = vmatmul.mubr.f32.gmra.mrb[0].mxu0 %v11289
    %v11357 = vpop.f32.mrb[0].mxu0
    %v11358 = vadd.f32 %v11285, %v11357
    %v11359 = vpop.f32.mrb[0].mxu0
    %11360 = vdwg.mxu0
    %v11361 = vld [vmem:[%s17] sm:$0x1]
    %v11363 = vlaneseq
    %v11364 = vshrl.u32 %v11363, 7
    %v11365 = vsub.s32 0, %v11364
    %v11366 = vrot.slane %v11361, %v11365
    %v11368 = vadd.f32 %v11358, %v11366
    %vm11369 = vcmask 25600
    %11370 = vst.msk [vmem:[#allocation5] sm:$0x3] %vm11369, %v11368
    // Predicated region
    $region74: #{dqn_forward.1} parent=1 // pred_check
      _
    $region75: #{dqn_forward.1} parent=1 // pred_check_branch
      %11372 = sbr.rel (0) target = $region77
    $region76: #{dqn_forward.1} parent=1 // pred_region
      %s11374 = ssub.s32 32, 32
      %11375 = vsyncadd [#allocation6], %s11374
      %s11377 = sshll.u32 [#allocation5], 4
      %s11378 = int_to_ptr.vmem [resolvable:$true] %s11377
      %11380 = dma.vmem_to_hbm [thread:$0]  %s11378, 32, %s18, [#allocation6]
    $region77: #{dqn_forward.1} parent=1 // pred_fallthru
      _
    // Predicated region
    $region78: #{dqn_forward.1} parent=1 // pred_check
      _
    $region79: #{dqn_forward.1} parent=1 // pred_check_branch
      %11382 = sbr.rel (0) target = $region81
    $region80: #{dqn_forward.1} parent=1 // pred_region
      %11383 = dma.done [#allocation6], 32
    $region81: #{dqn_forward.1} parent=1 // pred_fallthru
      _
    %11384 = vsyncpa [#allocation6], 1

</llo_original>
